<compile_context>
chip_gen: v5e
topology: v5e:2x2
jax: 0.10.0
libtpu: 0.0.40
codegen_flags: <defaults>
</compile_context>

<pallas_src>
import jax
import jax.numpy as jnp
from jax.experimental import pallas as pl
from jax.experimental.pallas import tpu as pltpu

KSIZE = 3
BN_EPS = 1e-5


def _round_up(x, m):
    return (x + m - 1) // m * m


# -----------------------------------------------------------------------------
# In-kernel fused layer: im2col conv3x3 (same) -> bias -> [ReLU] -> [BatchNorm]
# -----------------------------------------------------------------------------
def _fused_layer(act, w, pvec, mask, *, Wp, L_pad, ext_w, nhw_inv, relu, bn):
    """act: (Cin, L_pad) f32, zero outside interior pixels.
    w: (Cout, 9*Cin) bf16 im2col weights.  pvec: (Cout, 3) = [bias|gamma|beta].
    mask: (1, L_pad) f32, 1 at interior pixels.  Returns (Cout, L_pad) f32."""
    cin = act.shape[0]
    # Cast once to bf16, then zero-extend on lanes; all 9 shifted views and the
    # patch concat operate on bf16 (half the copy traffic of an f32 im2col).
    zpad = jnp.zeros((cin, ext_w), jnp.bfloat16)
    ext = jnp.concatenate([zpad, act.astype(jnp.bfloat16), zpad], axis=1)

    # One im2col patch tensor: 9 lane-shifted views stacked on the contraction
    # (sublane) axis -> a single MXU matmul instead of 9 narrow ones.
    slices = []
    for dy in range(KSIZE):
        for dx in range(KSIZE):
            start = ext_w + (dy - 1) * Wp + (dx - 1)
            slices.append(ext[:, start:start + L_pad])
    patches = jnp.concatenate(slices, axis=0)                 # (9*Cin, L_pad) bf16

    acc = jnp.dot(w, patches, preferred_element_type=jnp.float32)  # (Cout, L_pad)
    acc = acc + pvec[:, 0:1]                                        # bias
    if relu:
        acc = jnp.maximum(acc, 0.0)
    if bn:
        # Training-mode BatchNorm2d over the N*H*W interior pixels (masked),
        # applied as one fused per-channel scale/shift.
        masked = acc * mask
        mean = jnp.sum(masked, axis=1, keepdims=True) * nhw_inv
        ctr = (acc - mean) * mask
        var = jnp.sum(ctr * ctr, axis=1, keepdims=True) * nhw_inv
        s = pvec[:, 1:2] * jax.lax.rsqrt(var + BN_EPS)        # gamma * inv_std
        t = pvec[:, 2:3] - mean * s                           # beta - mean*s
        acc = acc * s + t
    # Re-zero halo / lane-padding columns so they act as zero padding for the
    # next layer and never pollute BN statistics.
    return acc * mask


def _make_chain_kernel(layer_cfgs, *, Wp, L_pad, ext_w, nhw_inv):
    """Kernel running a chain of fused layers fully VMEM-resident.
    refs = (x, mask, w0, p0, ..., w{n-1}, p{n-1}, out).  layer_cfgs is a
    static Python list of (relu, bn) bools (never traced)."""
    def kernel(*refs):
        x_ref, mask_ref, out_ref = refs[0], refs[1], refs[-1]
        mask = mask_ref[...]
        act = x_ref[...]
        for j, (relu, bn) in enumerate(layer_cfgs):
            w = refs[2 + 2 * j][...]
            p = refs[3 + 2 * j][...]
            act = _fused_layer(act, w, p, mask, Wp=Wp, L_pad=L_pad, ext_w=ext_w,
                               nhw_inv=nhw_inv, relu=relu, bn=bn)
        out_ref[...] = act
    return kernel


# -----------------------------------------------------------------------------
# Parameter construction / packing (glue, runs once under jit)
# -----------------------------------------------------------------------------
def _pack_conv_weight(w_conv):
    """(Cout, Cin, K, K) conv weight -> (Cout, K*K*Cin_pad) bf16 im2col matrix.
    Cin is zero-padded to a multiple of 8 to keep the patch layout sublane
    aligned (only matters for the very first layer)."""
    cout, cin, k, _ = w_conv.shape
    cin_pad = _round_up(cin, 8)
    if cin_pad != cin:
        w_conv = jnp.pad(w_conv, ((0, 0), (0, cin_pad - cin), (0, 0), (0, 0)))
    return (jnp.transpose(w_conv, (0, 2, 3, 1))
            .reshape(cout, k * k * cin_pad).astype(jnp.bfloat16))


def _convT_to_conv(w_t):
    """torch ConvTranspose2d weight (Cin, Cout, K, K), stride=1, pad=K//2 ->
    equivalent same-conv weight (Cout, Cin, K, K): flip taps, swap channels."""
    return jnp.transpose(jnp.flip(w_t, axis=(2, 3)), (1, 0, 2, 3))


def _param_block(bias, cout):
    return jnp.stack([bias, jnp.ones((cout,), jnp.float32),
                      jnp.zeros((cout,), jnp.float32)], axis=1)   # (Cout, 3)


def init_params(key, in_channels, out_channels, kernel_size=KSIZE,
                filters=(8, 16, 16, 32)):
    assert kernel_size == KSIZE
    K = kernel_size
    n_layers = len(filters) * (1 + out_channels)
    keys = iter(jax.random.split(key, 2 * n_layers))

    # weight_norm(dim=0) with a fresh init: g == ||v||  =>  effective w == v.
    enc_w, enc_p = [], []
    cin = in_channels
    for f in filters:
        v = 0.1 * jax.random.normal(next(keys), (f, cin, K, K), jnp.float32)
        b = 0.05 * jax.random.normal(next(keys), (f,), jnp.float32)
        enc_w.append(_pack_conv_weight(v))
        enc_p.append(_param_block(b, f))
        cin = f

    n_dec_layers = len(filters)
    dec_w = [[] for _ in range(n_dec_layers)]
    dec_p = [[] for _ in range(n_dec_layers)]
    for _c in range(out_channels):
        # Decoder forward order (layers were prepended): filters[-1]->...->1.
        for j, i in enumerate(range(len(filters) - 1, -1, -1)):
            cin_j = filters[i]
            cout_j = filters[i - 1] if i > 0 else 1
            v = 0.1 * jax.random.normal(next(keys), (cin_j, cout_j, K, K),
                                        jnp.float32)
            b = 0.05 * jax.random.normal(next(keys), (cout_j,), jnp.float32)
            dec_w[j].append(_pack_conv_weight(_convT_to_conv(v)))
            dec_p[j].append(_param_block(b, cout_j))
    dec_w = [jnp.stack(ws) for ws in dec_w]   # (out_channels, Cout_j, 9*Cin_j) bf16
    dec_p = [jnp.stack(ps) for ps in dec_p]   # (out_channels, Cout_j, 3) f32
    return dict(enc_w=enc_w, enc_p=enc_p, dec_w=dec_w, dec_p=dec_p)


# -----------------------------------------------------------------------------
# Full forward pass (PyTorch-compatible NCHW in / NCHW out)
# -----------------------------------------------------------------------------
def autoencoder_ex_forward(params, x_nchw):
    x = x_nchw.astype(jnp.float32)
    N, C_in, H, W = x.shape
    Hp, Wp = H + 2, W + 2
    L = N * Hp * Wp
    L_pad = _round_up(L, 128)
    ext_w = _round_up(Wp + 1, 128)
    nhw_inv = 1.0 / float(N * H * W)

    enc_w, enc_p = params["enc_w"], params["enc_p"]
    dec_w, dec_p = params["dec_w"], params["dec_p"]
    out_channels = int(dec_w[0].shape[0])
    c_enc_out = int(enc_w[-1].shape[0])
    cin0_pad = _round_up(C_in, 8)

    # Glue: pad the input spatially ONCE, flatten to channels x pixels with the
    # long pixel axis on lanes, and build the interior mask.
    xp = jnp.pad(x, ((0, 0), (0, 0), (1, 1), (1, 1)))            # (N, C, Hp, Wp)
    x_flat = jnp.transpose(xp, (1, 0, 2, 3)).reshape(C_in, L)
    x_flat = jnp.pad(x_flat, ((0, cin0_pad - C_in), (0, L_pad - L)))
    mask = jnp.pad(jnp.ones((N, H, W), jnp.float32),
                   ((0, 0), (1, 1), (1, 1))).reshape(1, L)
    mask = jnp.pad(mask, ((0, 0), (0, L_pad - L)))

    vmem = pl.BlockSpec(memory_space=pltpu.MemorySpace.VMEM)

    # ---- Encoder: all 4 layers fused into a single VMEM-resident kernel ----
    enc_cfgs = [(True, True)] * len(enc_w)
    enc_kernel = _make_chain_kernel(enc_cfgs, Wp=Wp, L_pad=L_pad, ext_w=ext_w,
                                    nhw_inv=nhw_inv)
    enc_args = [x_flat, mask]
    for w_, p_ in zip(enc_w, enc_p):
        enc_args += [w_, p_]
    enc_out = pl.pallas_call(
        enc_kernel,
        out_shape=jax.ShapeDtypeStruct((c_enc_out, L_pad), jnp.float32),
        in_specs=[vmem] * len(enc_args),
        out_specs=vmem,
    )(*enc_args)

    # ---- Decoders: one fused 4-layer chain per decoder, gridded over the
    # independent decoders ("parallel" -> 2-TC sharding on v7x). ----
    n_dec_layers = len(dec_w)
    dec_cfgs = [(j < n_dec_layers - 1, j < n_dec_layers - 1)
                for j in range(n_dec_layers)]
    dec_kernel = _make_chain_kernel(dec_cfgs, Wp=Wp, L_pad=L_pad, ext_w=ext_w,
                                    nhw_inv=nhw_inv)
    in_specs = [
        pl.BlockSpec((c_enc_out, L_pad), lambda c: (0, 0)),
        pl.BlockSpec((1, L_pad), lambda c: (0, 0)),
    ]
    dec_args = [enc_out, mask]
    for w_, p_ in zip(dec_w, dec_p):
        in_specs.append(pl.BlockSpec((None,) + tuple(w_.shape[1:]),
                                     lambda c: (c, 0, 0)))
        in_specs.append(pl.BlockSpec((None,) + tuple(p_.shape[1:]),
                                     lambda c: (c, 0, 0)))
        dec_args += [w_, p_]
    dec_out = pl.pallas_call(
        dec_kernel,
        grid=(out_channels,),
        out_shape=jax.ShapeDtypeStruct((out_channels, 1, L_pad), jnp.float32),
        in_specs=in_specs,
        out_specs=pl.BlockSpec((None, 1, L_pad), lambda c: (c, 0, 0)),
        compiler_params=pltpu.CompilerParams(
            dimension_semantics=("parallel",)),
    )(*dec_args)

    # Glue: extract interior pixels; equivalent to torch.cat(y, dim=1) in NCHW.
    y = dec_out[:, 0, :L].reshape(out_channels, N, Hp, Wp)[:, :, 1:H + 1, 1:W + 1]
    return jnp.transpose(y, (1, 0, 2, 3))


if __name__ == "__main__":
    N, IN_C, H, W = 2, 4, 16, 16
    OUT_C = 4

    key = jax.random.PRNGKey(0)
    kx, kp = jax.random.split(key)
    x = jax.random.normal(kx, (N, IN_C, H, W), jnp.float32)
    params = init_params(kp, IN_C, OUT_C)

    fwd = jax.jit(autoencoder_ex_forward)
    y = fwd(params, x)
    jax.block_until_ready(y)

    assert y.shape == (N, OUT_C, H, W), y.shape
    assert y.dtype == jnp.float32
    assert bool(jnp.all(jnp.isfinite(y)))
    print("KERNEL_OK")
</pallas_src>

<mosaic_0001>
module attributes {stable_mosaic.version = 11 : i64} {
  func.func @kernel(%arg0: memref<8x768xf32, #tpu.memory_space<vmem>>, %arg1: memref<1x768xf32, #tpu.memory_space<vmem>>, %arg2: memref<8x72xbf16, #tpu.memory_space<vmem>>, %arg3: memref<8x3xf32, #tpu.memory_space<vmem>>, %arg4: memref<16x72xbf16, #tpu.memory_space<vmem>>, %arg5: memref<16x3xf32, #tpu.memory_space<vmem>>, %arg6: memref<16x144xbf16, #tpu.memory_space<vmem>>, %arg7: memref<16x3xf32, #tpu.memory_space<vmem>>, %arg8: memref<32x144xbf16, #tpu.memory_space<vmem>>, %arg9: memref<32x3xf32, #tpu.memory_space<vmem>>, %arg10: memref<32x768xf32, #tpu.memory_space<vmem>>) attributes {dimension_semantics = [], scalar_prefetch = 0 : i64, scratch_operands = 0 : i64, tpu.core_type = #tpu.core_type<tc>} {
    %c0 = arith.constant 0 : index
    %c0_0 = arith.constant 0 : index
    %0 = vector.load %arg1[%c0, %c0_0] : memref<1x768xf32, #tpu.memory_space<vmem>>, vector<1x768xf32>
    %c0_1 = arith.constant 0 : index
    %c0_2 = arith.constant 0 : index
    %1 = vector.load %arg0[%c0_1, %c0_2] : memref<8x768xf32, #tpu.memory_space<vmem>>, vector<8x768xf32>
    %c0_3 = arith.constant 0 : index
    %c0_4 = arith.constant 0 : index
    %2 = vector.load %arg2[%c0_3, %c0_4] : memref<8x72xbf16, #tpu.memory_space<vmem>>, vector<8x72xbf16>
    %c0_5 = arith.constant 0 : index
    %c0_6 = arith.constant 0 : index
    %3 = vector.load %arg3[%c0_5, %c0_6] : memref<8x3xf32, #tpu.memory_space<vmem>>, vector<8x3xf32>
    %cst = arith.constant 0.000000e+00 : bf16
    %4 = vector.broadcast %cst : bf16 to vector<8x128xbf16>
    %5 = arith.truncf %1 : vector<8x768xf32> to vector<8x768xbf16>
    %6 = tpu.concatenate %4, %5, %4 in 1 : vector<8x128xbf16>, vector<8x768xbf16>, vector<8x128xbf16> -> vector<8x1024xbf16>
    %7 = vector.extract_strided_slice %6 {offsets = [0, 109], sizes = [8, 768], strides = [1, 1]} : vector<8x1024xbf16> to vector<8x768xbf16>
    %8 = vector.extract_strided_slice %6 {offsets = [0, 110], sizes = [8, 768], strides = [1, 1]} : vector<8x1024xbf16> to vector<8x768xbf16>
    %9 = vector.extract_strided_slice %6 {offsets = [0, 111], sizes = [8, 768], strides = [1, 1]} : vector<8x1024xbf16> to vector<8x768xbf16>
    %10 = vector.extract_strided_slice %6 {offsets = [0, 127], sizes = [8, 768], strides = [1, 1]} : vector<8x1024xbf16> to vector<8x768xbf16>
    %11 = vector.extract_strided_slice %6 {offsets = [0, 128], sizes = [8, 768], strides = [1, 1]} : vector<8x1024xbf16> to vector<8x768xbf16>
    %12 = vector.extract_strided_slice %6 {offsets = [0, 129], sizes = [8, 768], strides = [1, 1]} : vector<8x1024xbf16> to vector<8x768xbf16>
    %13 = vector.extract_strided_slice %6 {offsets = [0, 145], sizes = [8, 768], strides = [1, 1]} : vector<8x1024xbf16> to vector<8x768xbf16>
    %14 = vector.extract_strided_slice %6 {offsets = [0, 146], sizes = [8, 768], strides = [1, 1]} : vector<8x1024xbf16> to vector<8x768xbf16>
    %15 = vector.extract_strided_slice %6 {offsets = [0, 147], sizes = [8, 768], strides = [1, 1]} : vector<8x1024xbf16> to vector<8x768xbf16>
    %16 = tpu.concatenate %7, %8, %9, %10, %11, %12, %13, %14, %15 in 0 : vector<8x768xbf16>, vector<8x768xbf16>, vector<8x768xbf16>, vector<8x768xbf16>, vector<8x768xbf16>, vector<8x768xbf16>, vector<8x768xbf16>, vector<8x768xbf16>, vector<8x768xbf16> -> vector<72x768xbf16>
    %cst_7 = arith.constant dense<0.000000e+00> : vector<8x768xf32>
    %17 = tpu.matmul %2, %16, %cst_7 {dimension_numbers = #tpu.dot_dimension_numbers<[1], [0], [0], [1], [0, 0, 1, 1], [], []>} : vector<8x72xbf16>, vector<72x768xbf16>, vector<8x768xf32> -> vector<8x768xf32>
    %18 = vector.extract_strided_slice %3 {offsets = [0, 0], sizes = [8, 1], strides = [1, 1]} : vector<8x3xf32> to vector<8x1xf32>
    %19 = vector.broadcast %18 : vector<8x1xf32> to vector<8x768xf32>
    %20 = arith.addf %17, %19 : vector<8x768xf32>
    %cst_8 = arith.constant 0.000000e+00 : f32
    %21 = vector.broadcast %cst_8 : f32 to vector<8x768xf32>
    %22 = arith.maximumf %20, %21 : vector<8x768xf32>
    %23 = vector.broadcast %0 : vector<1x768xf32> to vector<8x768xf32>
    %24 = arith.mulf %22, %23 : vector<8x768xf32>
    %cst_9 = arith.constant dense<0.000000e+00> : vector<8xf32>
    %25 = vector.multi_reduction <add>, %24, %cst_9 [1] : vector<8x768xf32> to vector<8xf32>
    %26 = vector.shape_cast %25 : vector<8xf32> to vector<8x1xf32>
    %cst_10 = arith.constant 0.001953125 : f32
    %27 = vector.broadcast %cst_10 : f32 to vector<8x1xf32>
    %28 = arith.mulf %26, %27 : vector<8x1xf32>
    %29 = vector.broadcast %28 : vector<8x1xf32> to vector<8x768xf32>
    %30 = arith.subf %22, %29 : vector<8x768xf32>
    %31 = vector.broadcast %0 : vector<1x768xf32> to vector<8x768xf32>
    %32 = arith.mulf %30, %31 : vector<8x768xf32>
    %33 = arith.mulf %32, %32 : vector<8x768xf32>
    %cst_11 = arith.constant dense<0.000000e+00> : vector<8xf32>
    %34 = vector.multi_reduction <add>, %33, %cst_11 [1] : vector<8x768xf32> to vector<8xf32>
    %35 = vector.shape_cast %34 : vector<8xf32> to vector<8x1xf32>
    %cst_12 = arith.constant 0.001953125 : f32
    %36 = vector.broadcast %cst_12 : f32 to vector<8x1xf32>
    %37 = arith.mulf %35, %36 : vector<8x1xf32>
    %38 = vector.extract_strided_slice %3 {offsets = [0, 1], sizes = [8, 1], strides = [1, 1]} : vector<8x3xf32> to vector<8x1xf32>
    %cst_13 = arith.constant 9.99999974E-6 : f32
    %39 = vector.broadcast %cst_13 : f32 to vector<8x1xf32>
    %40 = arith.addf %37, %39 : vector<8x1xf32>
    %41 = math.rsqrt %40 : vector<8x1xf32>
    %42 = arith.mulf %38, %41 : vector<8x1xf32>
    %43 = vector.extract_strided_slice %3 {offsets = [0, 2], sizes = [8, 1], strides = [1, 1]} : vector<8x3xf32> to vector<8x1xf32>
    %44 = arith.mulf %28, %42 : vector<8x1xf32>
    %45 = arith.subf %43, %44 : vector<8x1xf32>
    %46 = vector.broadcast %42 : vector<8x1xf32> to vector<8x768xf32>
    %47 = arith.mulf %22, %46 : vector<8x768xf32>
    %48 = vector.broadcast %45 : vector<8x1xf32> to vector<8x768xf32>
    %49 = arith.addf %47, %48 : vector<8x768xf32>
    %50 = vector.broadcast %0 : vector<1x768xf32> to vector<8x768xf32>
    %51 = arith.mulf %49, %50 : vector<8x768xf32>
    %c0_14 = arith.constant 0 : index
    %c0_15 = arith.constant 0 : index
    %52 = vector.load %arg4[%c0_14, %c0_15] : memref<16x72xbf16, #tpu.memory_space<vmem>>, vector<16x72xbf16>
    %c0_16 = arith.constant 0 : index
    %c0_17 = arith.constant 0 : index
    %53 = vector.load %arg5[%c0_16, %c0_17] : memref<16x3xf32, #tpu.memory_space<vmem>>, vector<16x3xf32>
    %cst_18 = arith.constant 0.000000e+00 : bf16
    %54 = vector.broadcast %cst_18 : bf16 to vector<8x128xbf16>
    %55 = arith.truncf %51 : vector<8x768xf32> to vector<8x768xbf16>
    %56 = tpu.concatenate %54, %55, %54 in 1 : vector<8x128xbf16>, vector<8x768xbf16>, vector<8x128xbf16> -> vector<8x1024xbf16>
    %57 = vector.extract_strided_slice %56 {offsets = [0, 109], sizes = [8, 768], strides = [1, 1]} : vector<8x1024xbf16> to vector<8x768xbf16>
    %58 = vector.extract_strided_slice %56 {offsets = [0, 110], sizes = [8, 768], strides = [1, 1]} : vector<8x1024xbf16> to vector<8x768xbf16>
    %59 = vector.extract_strided_slice %56 {offsets = [0, 111], sizes = [8, 768], strides = [1, 1]} : vector<8x1024xbf16> to vector<8x768xbf16>
    %60 = vector.extract_strided_slice %56 {offsets = [0, 127], sizes = [8, 768], strides = [1, 1]} : vector<8x1024xbf16> to vector<8x768xbf16>
    %61 = vector.extract_strided_slice %56 {offsets = [0, 128], sizes = [8, 768], strides = [1, 1]} : vector<8x1024xbf16> to vector<8x768xbf16>
    %62 = vector.extract_strided_slice %56 {offsets = [0, 129], sizes = [8, 768], strides = [1, 1]} : vector<8x1024xbf16> to vector<8x768xbf16>
    %63 = vector.extract_strided_slice %56 {offsets = [0, 145], sizes = [8, 768], strides = [1, 1]} : vector<8x1024xbf16> to vector<8x768xbf16>
    %64 = vector.extract_strided_slice %56 {offsets = [0, 146], sizes = [8, 768], strides = [1, 1]} : vector<8x1024xbf16> to vector<8x768xbf16>
    %65 = vector.extract_strided_slice %56 {offsets = [0, 147], sizes = [8, 768], strides = [1, 1]} : vector<8x1024xbf16> to vector<8x768xbf16>
    %66 = tpu.concatenate %57, %58, %59, %60, %61, %62, %63, %64, %65 in 0 : vector<8x768xbf16>, vector<8x768xbf16>, vector<8x768xbf16>, vector<8x768xbf16>, vector<8x768xbf16>, vector<8x768xbf16>, vector<8x768xbf16>, vector<8x768xbf16>, vector<8x768xbf16> -> vector<72x768xbf16>
    %cst_19 = arith.constant dense<0.000000e+00> : vector<16x768xf32>
    %67 = tpu.matmul %52, %66, %cst_19 {dimension_numbers = #tpu.dot_dimension_numbers<[1], [0], [0], [1], [0, 0, 1, 1], [], []>} : vector<16x72xbf16>, vector<72x768xbf16>, vector<16x768xf32> -> vector<16x768xf32>
    %68 = vector.extract_strided_slice %53 {offsets = [0, 0], sizes = [16, 1], strides = [1, 1]} : vector<16x3xf32> to vector<16x1xf32>
    %69 = vector.broadcast %68 : vector<16x1xf32> to vector<16x768xf32>
    %70 = arith.addf %67, %69 : vector<16x768xf32>
    %cst_20 = arith.constant 0.000000e+00 : f32
    %71 = vector.broadcast %cst_20 : f32 to vector<16x768xf32>
    %72 = arith.maximumf %70, %71 : vector<16x768xf32>
    %73 = vector.broadcast %0 : vector<1x768xf32> to vector<16x768xf32>
    %74 = arith.mulf %72, %73 : vector<16x768xf32>
    %cst_21 = arith.constant dense<0.000000e+00> : vector<16xf32>
    %75 = vector.multi_reduction <add>, %74, %cst_21 [1] : vector<16x768xf32> to vector<16xf32>
    %76 = vector.shape_cast %75 : vector<16xf32> to vector<16x1xf32>
    %cst_22 = arith.constant 0.001953125 : f32
    %77 = vector.broadcast %cst_22 : f32 to vector<16x1xf32>
    %78 = arith.mulf %76, %77 : vector<16x1xf32>
    %79 = vector.broadcast %78 : vector<16x1xf32> to vector<16x768xf32>
    %80 = arith.subf %72, %79 : vector<16x768xf32>
    %81 = vector.broadcast %0 : vector<1x768xf32> to vector<16x768xf32>
    %82 = arith.mulf %80, %81 : vector<16x768xf32>
    %83 = arith.mulf %82, %82 : vector<16x768xf32>
    %cst_23 = arith.constant dense<0.000000e+00> : vector<16xf32>
    %84 = vector.multi_reduction <add>, %83, %cst_23 [1] : vector<16x768xf32> to vector<16xf32>
    %85 = vector.shape_cast %84 : vector<16xf32> to vector<16x1xf32>
    %cst_24 = arith.constant 0.001953125 : f32
    %86 = vector.broadcast %cst_24 : f32 to vector<16x1xf32>
    %87 = arith.mulf %85, %86 : vector<16x1xf32>
    %88 = vector.extract_strided_slice %53 {offsets = [0, 1], sizes = [16, 1], strides = [1, 1]} : vector<16x3xf32> to vector<16x1xf32>
    %cst_25 = arith.constant 9.99999974E-6 : f32
    %89 = vector.broadcast %cst_25 : f32 to vector<16x1xf32>
    %90 = arith.addf %87, %89 : vector<16x1xf32>
    %91 = math.rsqrt %90 : vector<16x1xf32>
    %92 = arith.mulf %88, %91 : vector<16x1xf32>
    %93 = vector.extract_strided_slice %53 {offsets = [0, 2], sizes = [16, 1], strides = [1, 1]} : vector<16x3xf32> to vector<16x1xf32>
    %94 = arith.mulf %78, %92 : vector<16x1xf32>
    %95 = arith.subf %93, %94 : vector<16x1xf32>
    %96 = vector.broadcast %92 : vector<16x1xf32> to vector<16x768xf32>
    %97 = arith.mulf %72, %96 : vector<16x768xf32>
    %98 = vector.broadcast %95 : vector<16x1xf32> to vector<16x768xf32>
    %99 = arith.addf %97, %98 : vector<16x768xf32>
    %100 = vector.broadcast %0 : vector<1x768xf32> to vector<16x768xf32>
    %101 = arith.mulf %99, %100 : vector<16x768xf32>
    %c0_26 = arith.constant 0 : index
    %c0_27 = arith.constant 0 : index
    %102 = vector.load %arg6[%c0_26, %c0_27] : memref<16x144xbf16, #tpu.memory_space<vmem>>, vector<16x144xbf16>
    %c0_28 = arith.constant 0 : index
    %c0_29 = arith.constant 0 : index
    %103 = vector.load %arg7[%c0_28, %c0_29] : memref<16x3xf32, #tpu.memory_space<vmem>>, vector<16x3xf32>
    %cst_30 = arith.constant 0.000000e+00 : bf16
    %104 = vector.broadcast %cst_30 : bf16 to vector<16x128xbf16>
    %105 = arith.truncf %101 : vector<16x768xf32> to vector<16x768xbf16>
    %106 = tpu.concatenate %104, %105, %104 in 1 : vector<16x128xbf16>, vector<16x768xbf16>, vector<16x128xbf16> -> vector<16x1024xbf16>
    %107 = vector.extract_strided_slice %106 {offsets = [0, 109], sizes = [16, 768], strides = [1, 1]} : vector<16x1024xbf16> to vector<16x768xbf16>
    %108 = vector.extract_strided_slice %106 {offsets = [0, 110], sizes = [16, 768], strides = [1, 1]} : vector<16x1024xbf16> to vector<16x768xbf16>
    %109 = vector.extract_strided_slice %106 {offsets = [0, 111], sizes = [16, 768], strides = [1, 1]} : vector<16x1024xbf16> to vector<16x768xbf16>
    %110 = vector.extract_strided_slice %106 {offsets = [0, 127], sizes = [16, 768], strides = [1, 1]} : vector<16x1024xbf16> to vector<16x768xbf16>
    %111 = vector.extract_strided_slice %106 {offsets = [0, 128], sizes = [16, 768], strides = [1, 1]} : vector<16x1024xbf16> to vector<16x768xbf16>
    %112 = vector.extract_strided_slice %106 {offsets = [0, 129], sizes = [16, 768], strides = [1, 1]} : vector<16x1024xbf16> to vector<16x768xbf16>
    %113 = vector.extract_strided_slice %106 {offsets = [0, 145], sizes = [16, 768], strides = [1, 1]} : vector<16x1024xbf16> to vector<16x768xbf16>
    %114 = vector.extract_strided_slice %106 {offsets = [0, 146], sizes = [16, 768], strides = [1, 1]} : vector<16x1024xbf16> to vector<16x768xbf16>
    %115 = vector.extract_strided_slice %106 {offsets = [0, 147], sizes = [16, 768], strides = [1, 1]} : vector<16x1024xbf16> to vector<16x768xbf16>
    %116 = tpu.concatenate %107, %108, %109, %110, %111, %112, %113, %114, %115 in 0 : vector<16x768xbf16>, vector<16x768xbf16>, vector<16x768xbf16>, vector<16x768xbf16>, vector<16x768xbf16>, vector<16x768xbf16>, vector<16x768xbf16>, vector<16x768xbf16>, vector<16x768xbf16> -> vector<144x768xbf16>
    %cst_31 = arith.constant dense<0.000000e+00> : vector<16x768xf32>
    %117 = tpu.matmul %102, %116, %cst_31 {dimension_numbers = #tpu.dot_dimension_numbers<[1], [0], [0], [1], [0, 0, 1, 1], [], []>} : vector<16x144xbf16>, vector<144x768xbf16>, vector<16x768xf32> -> vector<16x768xf32>
    %118 = vector.extract_strided_slice %103 {offsets = [0, 0], sizes = [16, 1], strides = [1, 1]} : vector<16x3xf32> to vector<16x1xf32>
    %119 = vector.broadcast %118 : vector<16x1xf32> to vector<16x768xf32>
    %120 = arith.addf %117, %119 : vector<16x768xf32>
    %cst_32 = arith.constant 0.000000e+00 : f32
    %121 = vector.broadcast %cst_32 : f32 to vector<16x768xf32>
    %122 = arith.maximumf %120, %121 : vector<16x768xf32>
    %123 = vector.broadcast %0 : vector<1x768xf32> to vector<16x768xf32>
    %124 = arith.mulf %122, %123 : vector<16x768xf32>
    %cst_33 = arith.constant dense<0.000000e+00> : vector<16xf32>
    %125 = vector.multi_reduction <add>, %124, %cst_33 [1] : vector<16x768xf32> to vector<16xf32>
    %126 = vector.shape_cast %125 : vector<16xf32> to vector<16x1xf32>
    %cst_34 = arith.constant 0.001953125 : f32
    %127 = vector.broadcast %cst_34 : f32 to vector<16x1xf32>
    %128 = arith.mulf %126, %127 : vector<16x1xf32>
    %129 = vector.broadcast %128 : vector<16x1xf32> to vector<16x768xf32>
    %130 = arith.subf %122, %129 : vector<16x768xf32>
    %131 = vector.broadcast %0 : vector<1x768xf32> to vector<16x768xf32>
    %132 = arith.mulf %130, %131 : vector<16x768xf32>
    %133 = arith.mulf %132, %132 : vector<16x768xf32>
    %cst_35 = arith.constant dense<0.000000e+00> : vector<16xf32>
    %134 = vector.multi_reduction <add>, %133, %cst_35 [1] : vector<16x768xf32> to vector<16xf32>
    %135 = vector.shape_cast %134 : vector<16xf32> to vector<16x1xf32>
    %cst_36 = arith.constant 0.001953125 : f32
    %136 = vector.broadcast %cst_36 : f32 to vector<16x1xf32>
    %137 = arith.mulf %135, %136 : vector<16x1xf32>
    %138 = vector.extract_strided_slice %103 {offsets = [0, 1], sizes = [16, 1], strides = [1, 1]} : vector<16x3xf32> to vector<16x1xf32>
    %cst_37 = arith.constant 9.99999974E-6 : f32
    %139 = vector.broadcast %cst_37 : f32 to vector<16x1xf32>
    %140 = arith.addf %137, %139 : vector<16x1xf32>
    %141 = math.rsqrt %140 : vector<16x1xf32>
    %142 = arith.mulf %138, %141 : vector<16x1xf32>
    %143 = vector.extract_strided_slice %103 {offsets = [0, 2], sizes = [16, 1], strides = [1, 1]} : vector<16x3xf32> to vector<16x1xf32>
    %144 = arith.mulf %128, %142 : vector<16x1xf32>
    %145 = arith.subf %143, %144 : vector<16x1xf32>
    %146 = vector.broadcast %142 : vector<16x1xf32> to vector<16x768xf32>
    %147 = arith.mulf %122, %146 : vector<16x768xf32>
    %148 = vector.broadcast %145 : vector<16x1xf32> to vector<16x768xf32>
    %149 = arith.addf %147, %148 : vector<16x768xf32>
    %150 = vector.broadcast %0 : vector<1x768xf32> to vector<16x768xf32>
    %151 = arith.mulf %149, %150 : vector<16x768xf32>
    %c0_38 = arith.constant 0 : index
    %c0_39 = arith.constant 0 : index
    %152 = vector.load %arg8[%c0_38, %c0_39] : memref<32x144xbf16, #tpu.memory_space<vmem>>, vector<32x144xbf16>
    %c0_40 = arith.constant 0 : index
    %c0_41 = arith.constant 0 : index
    %153 = vector.load %arg9[%c0_40, %c0_41] : memref<32x3xf32, #tpu.memory_space<vmem>>, vector<32x3xf32>
    %cst_42 = arith.constant 0.000000e+00 : bf16
    %154 = vector.broadcast %cst_42 : bf16 to vector<16x128xbf16>
    %155 = arith.truncf %151 : vector<16x768xf32> to vector<16x768xbf16>
    %156 = tpu.concatenate %154, %155, %154 in 1 : vector<16x128xbf16>, vector<16x768xbf16>, vector<16x128xbf16> -> vector<16x1024xbf16>
    %157 = vector.extract_strided_slice %156 {offsets = [0, 109], sizes = [16, 768], strides = [1, 1]} : vector<16x1024xbf16> to vector<16x768xbf16>
    %158 = vector.extract_strided_slice %156 {offsets = [0, 110], sizes = [16, 768], strides = [1, 1]} : vector<16x1024xbf16> to vector<16x768xbf16>
    %159 = vector.extract_strided_slice %156 {offsets = [0, 111], sizes = [16, 768], strides = [1, 1]} : vector<16x1024xbf16> to vector<16x768xbf16>
    %160 = vector.extract_strided_slice %156 {offsets = [0, 127], sizes = [16, 768], strides = [1, 1]} : vector<16x1024xbf16> to vector<16x768xbf16>
    %161 = vector.extract_strided_slice %156 {offsets = [0, 128], sizes = [16, 768], strides = [1, 1]} : vector<16x1024xbf16> to vector<16x768xbf16>
    %162 = vector.extract_strided_slice %156 {offsets = [0, 129], sizes = [16, 768], strides = [1, 1]} : vector<16x1024xbf16> to vector<16x768xbf16>
    %163 = vector.extract_strided_slice %156 {offsets = [0, 145], sizes = [16, 768], strides = [1, 1]} : vector<16x1024xbf16> to vector<16x768xbf16>
    %164 = vector.extract_strided_slice %156 {offsets = [0, 146], sizes = [16, 768], strides = [1, 1]} : vector<16x1024xbf16> to vector<16x768xbf16>
    %165 = vector.extract_strided_slice %156 {offsets = [0, 147], sizes = [16, 768], strides = [1, 1]} : vector<16x1024xbf16> to vector<16x768xbf16>
    %166 = tpu.concatenate %157, %158, %159, %160, %161, %162, %163, %164, %165 in 0 : vector<16x768xbf16>, vector<16x768xbf16>, vector<16x768xbf16>, vector<16x768xbf16>, vector<16x768xbf16>, vector<16x768xbf16>, vector<16x768xbf16>, vector<16x768xbf16>, vector<16x768xbf16> -> vector<144x768xbf16>
    %cst_43 = arith.constant dense<0.000000e+00> : vector<32x768xf32>
    %167 = tpu.matmul %152, %166, %cst_43 {dimension_numbers = #tpu.dot_dimension_numbers<[1], [0], [0], [1], [0, 0, 1, 1], [], []>} : vector<32x144xbf16>, vector<144x768xbf16>, vector<32x768xf32> -> vector<32x768xf32>
    %168 = vector.extract_strided_slice %153 {offsets = [0, 0], sizes = [32, 1], strides = [1, 1]} : vector<32x3xf32> to vector<32x1xf32>
    %169 = vector.broadcast %168 : vector<32x1xf32> to vector<32x768xf32>
    %170 = arith.addf %167, %169 : vector<32x768xf32>
    %cst_44 = arith.constant 0.000000e+00 : f32
    %171 = vector.broadcast %cst_44 : f32 to vector<32x768xf32>
    %172 = arith.maximumf %170, %171 : vector<32x768xf32>
    %173 = vector.broadcast %0 : vector<1x768xf32> to vector<32x768xf32>
    %174 = arith.mulf %172, %173 : vector<32x768xf32>
    %cst_45 = arith.constant dense<0.000000e+00> : vector<32xf32>
    %175 = vector.multi_reduction <add>, %174, %cst_45 [1] : vector<32x768xf32> to vector<32xf32>
    %176 = vector.shape_cast %175 : vector<32xf32> to vector<32x1xf32>
    %cst_46 = arith.constant 0.001953125 : f32
    %177 = vector.broadcast %cst_46 : f32 to vector<32x1xf32>
    %178 = arith.mulf %176, %177 : vector<32x1xf32>
    %179 = vector.broadcast %178 : vector<32x1xf32> to vector<32x768xf32>
    %180 = arith.subf %172, %179 : vector<32x768xf32>
    %181 = vector.broadcast %0 : vector<1x768xf32> to vector<32x768xf32>
    %182 = arith.mulf %180, %181 : vector<32x768xf32>
    %183 = arith.mulf %182, %182 : vector<32x768xf32>
    %cst_47 = arith.constant dense<0.000000e+00> : vector<32xf32>
    %184 = vector.multi_reduction <add>, %183, %cst_47 [1] : vector<32x768xf32> to vector<32xf32>
    %185 = vector.shape_cast %184 : vector<32xf32> to vector<32x1xf32>
    %cst_48 = arith.constant 0.001953125 : f32
    %186 = vector.broadcast %cst_48 : f32 to vector<32x1xf32>
    %187 = arith.mulf %185, %186 : vector<32x1xf32>
    %188 = vector.extract_strided_slice %153 {offsets = [0, 1], sizes = [32, 1], strides = [1, 1]} : vector<32x3xf32> to vector<32x1xf32>
    %cst_49 = arith.constant 9.99999974E-6 : f32
    %189 = vector.broadcast %cst_49 : f32 to vector<32x1xf32>
    %190 = arith.addf %187, %189 : vector<32x1xf32>
    %191 = math.rsqrt %190 : vector<32x1xf32>
    %192 = arith.mulf %188, %191 : vector<32x1xf32>
    %193 = vector.extract_strided_slice %153 {offsets = [0, 2], sizes = [32, 1], strides = [1, 1]} : vector<32x3xf32> to vector<32x1xf32>
    %194 = arith.mulf %178, %192 : vector<32x1xf32>
    %195 = arith.subf %193, %194 : vector<32x1xf32>
    %196 = vector.broadcast %192 : vector<32x1xf32> to vector<32x768xf32>
    %197 = arith.mulf %172, %196 : vector<32x768xf32>
    %198 = vector.broadcast %195 : vector<32x1xf32> to vector<32x768xf32>
    %199 = arith.addf %197, %198 : vector<32x768xf32>
    %200 = vector.broadcast %0 : vector<1x768xf32> to vector<32x768xf32>
    %201 = arith.mulf %199, %200 : vector<32x768xf32>
    %c0_50 = arith.constant 0 : index
    %c0_51 = arith.constant 0 : index
    %202 = vector.load %arg10[%c0_50, %c0_51] : memref<32x768xf32, #tpu.memory_space<vmem>>, vector<32x768xf32>
    tpu.vector_store %arg10[%c0_50, %c0_51], %201 {strides = array<i32>} : memref<32x768xf32, #tpu.memory_space<vmem>>, vector<32x768xf32>,
    return
  }
}

module attributes {stable_mosaic.version = 11 : i64} {
  func.func @kernel(%arg0: i32, %arg1: memref<32x768xf32, #tpu.memory_space<vmem>>, %arg2: memref<1x768xf32, #tpu.memory_space<vmem>>, %arg3: memref<1x16x288xbf16, #tpu.memory_space<vmem>>, %arg4: memref<1x16x3xf32, #tpu.memory_space<vmem>>, %arg5: memref<1x16x144xbf16, #tpu.memory_space<vmem>>, %arg6: memref<1x16x3xf32, #tpu.memory_space<vmem>>, %arg7: memref<1x8x144xbf16, #tpu.memory_space<vmem>>, %arg8: memref<1x8x3xf32, #tpu.memory_space<vmem>>, %arg9: memref<1x1x72xbf16, #tpu.memory_space<vmem>>, %arg10: memref<1x1x3xf32, #tpu.memory_space<vmem>>, %arg11: memref<1x1x768xf32, #tpu.memory_space<vmem>>) attributes {dimension_semantics = [#tpu.dimension_semantics<parallel>], iteration_bounds = array<i64: 4>, scalar_prefetch = 0 : i64, scratch_operands = 0 : i64, tpu.core_type = #tpu.core_type<tc>, window_params = [{pipeline_mode = #tpu.pipeline_mode<synchronous>, transform_indices = @transform_0, window_bounds = array<i64: 32, 768>}, {pipeline_mode = #tpu.pipeline_mode<synchronous>, transform_indices = @transform_1, window_bounds = array<i64: 1, 768>}, {transform_indices = @transform_2, window_bounds = array<i64: 1, 16, 288>}, {transform_indices = @transform_3, window_bounds = array<i64: 1, 16, 3>}, {transform_indices = @transform_4, window_bounds = array<i64: 1, 16, 144>}, {transform_indices = @transform_5, window_bounds = array<i64: 1, 16, 3>}, {transform_indices = @transform_6, window_bounds = array<i64: 1, 8, 144>}, {transform_indices = @transform_7, window_bounds = array<i64: 1, 8, 3>}, {transform_indices = @transform_8, window_bounds = array<i64: 1, 1, 72>}, {transform_indices = @transform_9, window_bounds = array<i64: 1, 1, 3>}, {transform_indices = @transform_10, window_bounds = array<i64: 1, 1, 768>}]} {
    %c0 = arith.constant 0 : index
    %c0_0 = arith.constant 0 : index
    %0 = vector.load %arg2[%c0, %c0_0] : memref<1x768xf32, #tpu.memory_space<vmem>>, vector<1x768xf32>
    %c0_1 = arith.constant 0 : index
    %c0_2 = arith.constant 0 : index
    %1 = vector.load %arg1[%c0_1, %c0_2] : memref<32x768xf32, #tpu.memory_space<vmem>>, vector<32x768xf32>
    %c0_3 = arith.constant 0 : index
    %c0_4 = arith.constant 0 : index
    %c0_5 = arith.constant 0 : index
    %2 = vector.load %arg3[%c0_3, %c0_4, %c0_5] : memref<1x16x288xbf16, #tpu.memory_space<vmem>>, vector<1x16x288xbf16>
    %3 = vector.shape_cast %2 : vector<1x16x288xbf16> to vector<16x288xbf16>
    %c0_6 = arith.constant 0 : index
    %c0_7 = arith.constant 0 : index
    %c0_8 = arith.constant 0 : index
    %4 = vector.load %arg4[%c0_6, %c0_7, %c0_8] : memref<1x16x3xf32, #tpu.memory_space<vmem>>, vector<1x16x3xf32>
    %5 = vector.shape_cast %4 : vector<1x16x3xf32> to vector<16x3xf32>
    %cst = arith.constant 0.000000e+00 : bf16
    %6 = vector.broadcast %cst : bf16 to vector<32x128xbf16>
    %7 = arith.truncf %1 : vector<32x768xf32> to vector<32x768xbf16>
    %8 = tpu.concatenate %6, %7, %6 in 1 : vector<32x128xbf16>, vector<32x768xbf16>, vector<32x128xbf16> -> vector<32x1024xbf16>
    %9 = vector.extract_strided_slice %8 {offsets = [0, 109], sizes = [32, 768], strides = [1, 1]} : vector<32x1024xbf16> to vector<32x768xbf16>
    %10 = vector.extract_strided_slice %8 {offsets = [0, 110], sizes = [32, 768], strides = [1, 1]} : vector<32x1024xbf16> to vector<32x768xbf16>
    %11 = vector.extract_strided_slice %8 {offsets = [0, 111], sizes = [32, 768], strides = [1, 1]} : vector<32x1024xbf16> to vector<32x768xbf16>
    %12 = vector.extract_strided_slice %8 {offsets = [0, 127], sizes = [32, 768], strides = [1, 1]} : vector<32x1024xbf16> to vector<32x768xbf16>
    %13 = vector.extract_strided_slice %8 {offsets = [0, 128], sizes = [32, 768], strides = [1, 1]} : vector<32x1024xbf16> to vector<32x768xbf16>
    %14 = vector.extract_strided_slice %8 {offsets = [0, 129], sizes = [32, 768], strides = [1, 1]} : vector<32x1024xbf16> to vector<32x768xbf16>
    %15 = vector.extract_strided_slice %8 {offsets = [0, 145], sizes = [32, 768], strides = [1, 1]} : vector<32x1024xbf16> to vector<32x768xbf16>
    %16 = vector.extract_strided_slice %8 {offsets = [0, 146], sizes = [32, 768], strides = [1, 1]} : vector<32x1024xbf16> to vector<32x768xbf16>
    %17 = vector.extract_strided_slice %8 {offsets = [0, 147], sizes = [32, 768], strides = [1, 1]} : vector<32x1024xbf16> to vector<32x768xbf16>
    %18 = tpu.concatenate %9, %10, %11, %12, %13, %14, %15, %16, %17 in 0 : vector<32x768xbf16>, vector<32x768xbf16>, vector<32x768xbf16>, vector<32x768xbf16>, vector<32x768xbf16>, vector<32x768xbf16>, vector<32x768xbf16>, vector<32x768xbf16>, vector<32x768xbf16> -> vector<288x768xbf16>
    %cst_9 = arith.constant dense<0.000000e+00> : vector<16x768xf32>
    %19 = tpu.matmul %3, %18, %cst_9 {dimension_numbers = #tpu.dot_dimension_numbers<[1], [0], [0], [1], [0, 0, 1, 1], [], []>} : vector<16x288xbf16>, vector<288x768xbf16>, vector<16x768xf32> -> vector<16x768xf32>
    %20 = vector.extract_strided_slice %5 {offsets = [0, 0], sizes = [16, 1], strides = [1, 1]} : vector<16x3xf32> to vector<16x1xf32>
    %21 = vector.broadcast %20 : vector<16x1xf32> to vector<16x768xf32>
    %22 = arith.addf %19, %21 : vector<16x768xf32>
    %cst_10 = arith.constant 0.000000e+00 : f32
    %23 = vector.broadcast %cst_10 : f32 to vector<16x768xf32>
    %24 = arith.maximumf %22, %23 : vector<16x768xf32>
    %25 = vector.broadcast %0 : vector<1x768xf32> to vector<16x768xf32>
    %26 = arith.mulf %24, %25 : vector<16x768xf32>
    %cst_11 = arith.constant dense<0.000000e+00> : vector<16xf32>
    %27 = vector.multi_reduction <add>, %26, %cst_11 [1] : vector<16x768xf32> to vector<16xf32>
    %28 = vector.shape_cast %27 : vector<16xf32> to vector<16x1xf32>
    %cst_12 = arith.constant 0.001953125 : f32
    %29 = vector.broadcast %cst_12 : f32 to vector<16x1xf32>
    %30 = arith.mulf %28, %29 : vector<16x1xf32>
    %31 = vector.broadcast %30 : vector<16x1xf32> to vector<16x768xf32>
    %32 = arith.subf %24, %31 : vector<16x768xf32>
    %33 = vector.broadcast %0 : vector<1x768xf32> to vector<16x768xf32>
    %34 = arith.mulf %32, %33 : vector<16x768xf32>
    %35 = arith.mulf %34, %34 : vector<16x768xf32>
    %cst_13 = arith.constant dense<0.000000e+00> : vector<16xf32>
    %36 = vector.multi_reduction <add>, %35, %cst_13 [1] : vector<16x768xf32> to vector<16xf32>
    %37 = vector.shape_cast %36 : vector<16xf32> to vector<16x1xf32>
    %cst_14 = arith.constant 0.001953125 : f32
    %38 = vector.broadcast %cst_14 : f32 to vector<16x1xf32>
    %39 = arith.mulf %37, %38 : vector<16x1xf32>
    %40 = vector.extract_strided_slice %5 {offsets = [0, 1], sizes = [16, 1], strides = [1, 1]} : vector<16x3xf32> to vector<16x1xf32>
    %cst_15 = arith.constant 9.99999974E-6 : f32
    %41 = vector.broadcast %cst_15 : f32 to vector<16x1xf32>
    %42 = arith.addf %39, %41 : vector<16x1xf32>
    %43 = math.rsqrt %42 : vector<16x1xf32>
    %44 = arith.mulf %40, %43 : vector<16x1xf32>
    %45 = vector.extract_strided_slice %5 {offsets = [0, 2], sizes = [16, 1], strides = [1, 1]} : vector<16x3xf32> to vector<16x1xf32>
    %46 = arith.mulf %30, %44 : vector<16x1xf32>
    %47 = arith.subf %45, %46 : vector<16x1xf32>
    %48 = vector.broadcast %44 : vector<16x1xf32> to vector<16x768xf32>
    %49 = arith.mulf %24, %48 : vector<16x768xf32>
    %50 = vector.broadcast %47 : vector<16x1xf32> to vector<16x768xf32>
    %51 = arith.addf %49, %50 : vector<16x768xf32>
    %52 = vector.broadcast %0 : vector<1x768xf32> to vector<16x768xf32>
    %53 = arith.mulf %51, %52 : vector<16x768xf32>
    %c0_16 = arith.constant 0 : index
    %c0_17 = arith.constant 0 : index
    %c0_18 = arith.constant 0 : index
    %54 = vector.load %arg5[%c0_16, %c0_17, %c0_18] : memref<1x16x144xbf16, #tpu.memory_space<vmem>>, vector<1x16x144xbf16>
    %55 = vector.shape_cast %54 : vector<1x16x144xbf16> to vector<16x144xbf16>
    %c0_19 = arith.constant 0 : index
    %c0_20 = arith.constant 0 : index
    %c0_21 = arith.constant 0 : index
    %56 = vector.load %arg6[%c0_19, %c0_20, %c0_21] : memref<1x16x3xf32, #tpu.memory_space<vmem>>, vector<1x16x3xf32>
    %57 = vector.shape_cast %56 : vector<1x16x3xf32> to vector<16x3xf32>
    %cst_22 = arith.constant 0.000000e+00 : bf16
    %58 = vector.broadcast %cst_22 : bf16 to vector<16x128xbf16>
    %59 = arith.truncf %53 : vector<16x768xf32> to vector<16x768xbf16>
    %60 = tpu.concatenate %58, %59, %58 in 1 : vector<16x128xbf16>, vector<16x768xbf16>, vector<16x128xbf16> -> vector<16x1024xbf16>
    %61 = vector.extract_strided_slice %60 {offsets = [0, 109], sizes = [16, 768], strides = [1, 1]} : vector<16x1024xbf16> to vector<16x768xbf16>
    %62 = vector.extract_strided_slice %60 {offsets = [0, 110], sizes = [16, 768], strides = [1, 1]} : vector<16x1024xbf16> to vector<16x768xbf16>
    %63 = vector.extract_strided_slice %60 {offsets = [0, 111], sizes = [16, 768], strides = [1, 1]} : vector<16x1024xbf16> to vector<16x768xbf16>
    %64 = vector.extract_strided_slice %60 {offsets = [0, 127], sizes = [16, 768], strides = [1, 1]} : vector<16x1024xbf16> to vector<16x768xbf16>
    %65 = vector.extract_strided_slice %60 {offsets = [0, 128], sizes = [16, 768], strides = [1, 1]} : vector<16x1024xbf16> to vector<16x768xbf16>
    %66 = vector.extract_strided_slice %60 {offsets = [0, 129], sizes = [16, 768], strides = [1, 1]} : vector<16x1024xbf16> to vector<16x768xbf16>
    %67 = vector.extract_strided_slice %60 {offsets = [0, 145], sizes = [16, 768], strides = [1, 1]} : vector<16x1024xbf16> to vector<16x768xbf16>
    %68 = vector.extract_strided_slice %60 {offsets = [0, 146], sizes = [16, 768], strides = [1, 1]} : vector<16x1024xbf16> to vector<16x768xbf16>
    %69 = vector.extract_strided_slice %60 {offsets = [0, 147], sizes = [16, 768], strides = [1, 1]} : vector<16x1024xbf16> to vector<16x768xbf16>
    %70 = tpu.concatenate %61, %62, %63, %64, %65, %66, %67, %68, %69 in 0 : vector<16x768xbf16>, vector<16x768xbf16>, vector<16x768xbf16>, vector<16x768xbf16>, vector<16x768xbf16>, vector<16x768xbf16>, vector<16x768xbf16>, vector<16x768xbf16>, vector<16x768xbf16> -> vector<144x768xbf16>
    %cst_23 = arith.constant dense<0.000000e+00> : vector<16x768xf32>
    %71 = tpu.matmul %55, %70, %cst_23 {dimension_numbers = #tpu.dot_dimension_numbers<[1], [0], [0], [1], [0, 0, 1, 1], [], []>} : vector<16x144xbf16>, vector<144x768xbf16>, vector<16x768xf32> -> vector<16x768xf32>
    %72 = vector.extract_strided_slice %57 {offsets = [0, 0], sizes = [16, 1], strides = [1, 1]} : vector<16x3xf32> to vector<16x1xf32>
    %73 = vector.broadcast %72 : vector<16x1xf32> to vector<16x768xf32>
    %74 = arith.addf %71, %73 : vector<16x768xf32>
    %cst_24 = arith.constant 0.000000e+00 : f32
    %75 = vector.broadcast %cst_24 : f32 to vector<16x768xf32>
    %76 = arith.maximumf %74, %75 : vector<16x768xf32>
    %77 = vector.broadcast %0 : vector<1x768xf32> to vector<16x768xf32>
    %78 = arith.mulf %76, %77 : vector<16x768xf32>
    %cst_25 = arith.constant dense<0.000000e+00> : vector<16xf32>
    %79 = vector.multi_reduction <add>, %78, %cst_25 [1] : vector<16x768xf32> to vector<16xf32>
    %80 = vector.shape_cast %79 : vector<16xf32> to vector<16x1xf32>
    %cst_26 = arith.constant 0.001953125 : f32
    %81 = vector.broadcast %cst_26 : f32 to vector<16x1xf32>
    %82 = arith.mulf %80, %81 : vector<16x1xf32>
    %83 = vector.broadcast %82 : vector<16x1xf32> to vector<16x768xf32>
    %84 = arith.subf %76, %83 : vector<16x768xf32>
    %85 = vector.broadcast %0 : vector<1x768xf32> to vector<16x768xf32>
    %86 = arith.mulf %84, %85 : vector<16x768xf32>
    %87 = arith.mulf %86, %86 : vector<16x768xf32>
    %cst_27 = arith.constant dense<0.000000e+00> : vector<16xf32>
    %88 = vector.multi_reduction <add>, %87, %cst_27 [1] : vector<16x768xf32> to vector<16xf32>
    %89 = vector.shape_cast %88 : vector<16xf32> to vector<16x1xf32>
    %cst_28 = arith.constant 0.001953125 : f32
    %90 = vector.broadcast %cst_28 : f32 to vector<16x1xf32>
    %91 = arith.mulf %89, %90 : vector<16x1xf32>
    %92 = vector.extract_strided_slice %57 {offsets = [0, 1], sizes = [16, 1], strides = [1, 1]} : vector<16x3xf32> to vector<16x1xf32>
    %cst_29 = arith.constant 9.99999974E-6 : f32
    %93 = vector.broadcast %cst_29 : f32 to vector<16x1xf32>
    %94 = arith.addf %91, %93 : vector<16x1xf32>
    %95 = math.rsqrt %94 : vector<16x1xf32>
    %96 = arith.mulf %92, %95 : vector<16x1xf32>
    %97 = vector.extract_strided_slice %57 {offsets = [0, 2], sizes = [16, 1], strides = [1, 1]} : vector<16x3xf32> to vector<16x1xf32>
    %98 = arith.mulf %82, %96 : vector<16x1xf32>
    %99 = arith.subf %97, %98 : vector<16x1xf32>
    %100 = vector.broadcast %96 : vector<16x1xf32> to vector<16x768xf32>
    %101 = arith.mulf %76, %100 : vector<16x768xf32>
    %102 = vector.broadcast %99 : vector<16x1xf32> to vector<16x768xf32>
    %103 = arith.addf %101, %102 : vector<16x768xf32>
    %104 = vector.broadcast %0 : vector<1x768xf32> to vector<16x768xf32>
    %105 = arith.mulf %103, %104 : vector<16x768xf32>
    %c0_30 = arith.constant 0 : index
    %c0_31 = arith.constant 0 : index
    %c0_32 = arith.constant 0 : index
    %106 = vector.load %arg7[%c0_30, %c0_31, %c0_32] : memref<1x8x144xbf16, #tpu.memory_space<vmem>>, vector<1x8x144xbf16>
    %107 = vector.shape_cast %106 : vector<1x8x144xbf16> to vector<8x144xbf16>
    %c0_33 = arith.constant 0 : index
    %c0_34 = arith.constant 0 : index
    %c0_35 = arith.constant 0 : index
    %108 = vector.load %arg8[%c0_33, %c0_34, %c0_35] : memref<1x8x3xf32, #tpu.memory_space<vmem>>, vector<1x8x3xf32>
    %109 = vector.shape_cast %108 : vector<1x8x3xf32> to vector<8x3xf32>
    %cst_36 = arith.constant 0.000000e+00 : bf16
    %110 = vector.broadcast %cst_36 : bf16 to vector<16x128xbf16>
    %111 = arith.truncf %105 : vector<16x768xf32> to vector<16x768xbf16>
    %112 = tpu.concatenate %110, %111, %110 in 1 : vector<16x128xbf16>, vector<16x768xbf16>, vector<16x128xbf16> -> vector<16x1024xbf16>
    %113 = vector.extract_strided_slice %112 {offsets = [0, 109], sizes = [16, 768], strides = [1, 1]} : vector<16x1024xbf16> to vector<16x768xbf16>
    %114 = vector.extract_strided_slice %112 {offsets = [0, 110], sizes = [16, 768], strides = [1, 1]} : vector<16x1024xbf16> to vector<16x768xbf16>
    %115 = vector.extract_strided_slice %112 {offsets = [0, 111], sizes = [16, 768], strides = [1, 1]} : vector<16x1024xbf16> to vector<16x768xbf16>
    %116 = vector.extract_strided_slice %112 {offsets = [0, 127], sizes = [16, 768], strides = [1, 1]} : vector<16x1024xbf16> to vector<16x768xbf16>
    %117 = vector.extract_strided_slice %112 {offsets = [0, 128], sizes = [16, 768], strides = [1, 1]} : vector<16x1024xbf16> to vector<16x768xbf16>
    %118 = vector.extract_strided_slice %112 {offsets = [0, 129], sizes = [16, 768], strides = [1, 1]} : vector<16x1024xbf16> to vector<16x768xbf16>
    %119 = vector.extract_strided_slice %112 {offsets = [0, 145], sizes = [16, 768], strides = [1, 1]} : vector<16x1024xbf16> to vector<16x768xbf16>
    %120 = vector.extract_strided_slice %112 {offsets = [0, 146], sizes = [16, 768], strides = [1, 1]} : vector<16x1024xbf16> to vector<16x768xbf16>
    %121 = vector.extract_strided_slice %112 {offsets = [0, 147], sizes = [16, 768], strides = [1, 1]} : vector<16x1024xbf16> to vector<16x768xbf16>
    %122 = tpu.concatenate %113, %114, %115, %116, %117, %118, %119, %120, %121 in 0 : vector<16x768xbf16>, vector<16x768xbf16>, vector<16x768xbf16>, vector<16x768xbf16>, vector<16x768xbf16>, vector<16x768xbf16>, vector<16x768xbf16>, vector<16x768xbf16>, vector<16x768xbf16> -> vector<144x768xbf16>
    %cst_37 = arith.constant dense<0.000000e+00> : vector<8x768xf32>
    %123 = tpu.matmul %107, %122, %cst_37 {dimension_numbers = #tpu.dot_dimension_numbers<[1], [0], [0], [1], [0, 0, 1, 1], [], []>} : vector<8x144xbf16>, vector<144x768xbf16>, vector<8x768xf32> -> vector<8x768xf32>
    %124 = vector.extract_strided_slice %109 {offsets = [0, 0], sizes = [8, 1], strides = [1, 1]} : vector<8x3xf32> to vector<8x1xf32>
    %125 = vector.broadcast %124 : vector<8x1xf32> to vector<8x768xf32>
    %126 = arith.addf %123, %125 : vector<8x768xf32>
    %cst_38 = arith.constant 0.000000e+00 : f32
    %127 = vector.broadcast %cst_38 : f32 to vector<8x768xf32>
    %128 = arith.maximumf %126, %127 : vector<8x768xf32>
    %129 = vector.broadcast %0 : vector<1x768xf32> to vector<8x768xf32>
    %130 = arith.mulf %128, %129 : vector<8x768xf32>
    %cst_39 = arith.constant dense<0.000000e+00> : vector<8xf32>
    %131 = vector.multi_reduction <add>, %130, %cst_39 [1] : vector<8x768xf32> to vector<8xf32>
    %132 = vector.shape_cast %131 : vector<8xf32> to vector<8x1xf32>
    %cst_40 = arith.constant 0.001953125 : f32
    %133 = vector.broadcast %cst_40 : f32 to vector<8x1xf32>
    %134 = arith.mulf %132, %133 : vector<8x1xf32>
    %135 = vector.broadcast %134 : vector<8x1xf32> to vector<8x768xf32>
    %136 = arith.subf %128, %135 : vector<8x768xf32>
    %137 = vector.broadcast %0 : vector<1x768xf32> to vector<8x768xf32>
    %138 = arith.mulf %136, %137 : vector<8x768xf32>
    %139 = arith.mulf %138, %138 : vector<8x768xf32>
    %cst_41 = arith.constant dense<0.000000e+00> : vector<8xf32>
    %140 = vector.multi_reduction <add>, %139, %cst_41 [1] : vector<8x768xf32> to vector<8xf32>
    %141 = vector.shape_cast %140 : vector<8xf32> to vector<8x1xf32>
    %cst_42 = arith.constant 0.001953125 : f32
    %142 = vector.broadcast %cst_42 : f32 to vector<8x1xf32>
    %143 = arith.mulf %141, %142 : vector<8x1xf32>
    %144 = vector.extract_strided_slice %109 {offsets = [0, 1], sizes = [8, 1], strides = [1, 1]} : vector<8x3xf32> to vector<8x1xf32>
    %cst_43 = arith.constant 9.99999974E-6 : f32
    %145 = vector.broadcast %cst_43 : f32 to vector<8x1xf32>
    %146 = arith.addf %143, %145 : vector<8x1xf32>
    %147 = math.rsqrt %146 : vector<8x1xf32>
    %148 = arith.mulf %144, %147 : vector<8x1xf32>
    %149 = vector.extract_strided_slice %109 {offsets = [0, 2], sizes = [8, 1], strides = [1, 1]} : vector<8x3xf32> to vector<8x1xf32>
    %150 = arith.mulf %134, %148 : vector<8x1xf32>
    %151 = arith.subf %149, %150 : vector<8x1xf32>
    %152 = vector.broadcast %148 : vector<8x1xf32> to vector<8x768xf32>
    %153 = arith.mulf %128, %152 : vector<8x768xf32>
    %154 = vector.broadcast %151 : vector<8x1xf32> to vector<8x768xf32>
    %155 = arith.addf %153, %154 : vector<8x768xf32>
    %156 = vector.broadcast %0 : vector<1x768xf32> to vector<8x768xf32>
    %157 = arith.mulf %155, %156 : vector<8x768xf32>
    %c0_44 = arith.constant 0 : index
    %c0_45 = arith.constant 0 : index
    %c0_46 = arith.constant 0 : index
    %158 = vector.load %arg9[%c0_44, %c0_45, %c0_46] : memref<1x1x72xbf16, #tpu.memory_space<vmem>>, vector<1x1x72xbf16>
    %159 = vector.shape_cast %158 : vector<1x1x72xbf16> to vector<1x72xbf16>
    %c0_47 = arith.constant 0 : index
    %c0_48 = arith.constant 0 : index
    %c0_49 = arith.constant 0 : index
    %160 = vector.load %arg10[%c0_47, %c0_48, %c0_49] : memref<1x1x3xf32, #tpu.memory_space<vmem>>, vector<1x1x3xf32>
    %161 = vector.shape_cast %160 : vector<1x1x3xf32> to vector<1x3xf32>
    %cst_50 = arith.constant 0.000000e+00 : bf16
    %162 = vector.broadcast %cst_50 : bf16 to vector<8x128xbf16>
    %163 = arith.truncf %157 : vector<8x768xf32> to vector<8x768xbf16>
    %164 = tpu.concatenate %162, %163, %162 in 1 : vector<8x128xbf16>, vector<8x768xbf16>, vector<8x128xbf16> -> vector<8x1024xbf16>
    %165 = vector.extract_strided_slice %164 {offsets = [0, 109], sizes = [8, 768], strides = [1, 1]} : vector<8x1024xbf16> to vector<8x768xbf16>
    %166 = vector.extract_strided_slice %164 {offsets = [0, 110], sizes = [8, 768], strides = [1, 1]} : vector<8x1024xbf16> to vector<8x768xbf16>
    %167 = vector.extract_strided_slice %164 {offsets = [0, 111], sizes = [8, 768], strides = [1, 1]} : vector<8x1024xbf16> to vector<8x768xbf16>
    %168 = vector.extract_strided_slice %164 {offsets = [0, 127], sizes = [8, 768], strides = [1, 1]} : vector<8x1024xbf16> to vector<8x768xbf16>
    %169 = vector.extract_strided_slice %164 {offsets = [0, 128], sizes = [8, 768], strides = [1, 1]} : vector<8x1024xbf16> to vector<8x768xbf16>
    %170 = vector.extract_strided_slice %164 {offsets = [0, 129], sizes = [8, 768], strides = [1, 1]} : vector<8x1024xbf16> to vector<8x768xbf16>
    %171 = vector.extract_strided_slice %164 {offsets = [0, 145], sizes = [8, 768], strides = [1, 1]} : vector<8x1024xbf16> to vector<8x768xbf16>
    %172 = vector.extract_strided_slice %164 {offsets = [0, 146], sizes = [8, 768], strides = [1, 1]} : vector<8x1024xbf16> to vector<8x768xbf16>
    %173 = vector.extract_strided_slice %164 {offsets = [0, 147], sizes = [8, 768], strides = [1, 1]} : vector<8x1024xbf16> to vector<8x768xbf16>
    %174 = tpu.concatenate %165, %166, %167, %168, %169, %170, %171, %172, %173 in 0 : vector<8x768xbf16>, vector<8x768xbf16>, vector<8x768xbf16>, vector<8x768xbf16>, vector<8x768xbf16>, vector<8x768xbf16>, vector<8x768xbf16>, vector<8x768xbf16>, vector<8x768xbf16> -> vector<72x768xbf16>
    %cst_51 = arith.constant dense<0.000000e+00> : vector<1x768xf32>
    %175 = tpu.matmul %159, %174, %cst_51 {dimension_numbers = #tpu.dot_dimension_numbers<[1], [0], [0], [1], [0, 0, 1, 1], [], []>} : vector<1x72xbf16>, vector<72x768xbf16>, vector<1x768xf32> -> vector<1x768xf32>
    %176 = vector.extract_strided_slice %161 {offsets = [0, 0], sizes = [1, 1], strides = [1, 1]} : vector<1x3xf32> to vector<1x1xf32>
    %177 = vector.broadcast %176 : vector<1x1xf32> to vector<1x768xf32>
    %178 = arith.addf %175, %177 : vector<1x768xf32>
    %179 = arith.mulf %178, %0 : vector<1x768xf32>
    %c0_52 = arith.constant 0 : index
    %c0_53 = arith.constant 0 : index
    %c0_54 = arith.constant 0 : index
    %180 = vector.load %arg11[%c0_52, %c0_53, %c0_54] : memref<1x1x768xf32, #tpu.memory_space<vmem>>, vector<1x1x768xf32>
    %181 = vector.shape_cast %180 : vector<1x1x768xf32> to vector<1x768xf32>
    %182 = vector.shape_cast %179 : vector<1x768xf32> to vector<1x1x768xf32>
    tpu.vector_store %arg11[%c0_52, %c0_53, %c0_54], %182 {strides = array<i32>} : memref<1x1x768xf32, #tpu.memory_space<vmem>>, vector<1x1x768xf32>,
    return
  }
  func.func @transform_0(%arg0: i32) -> (i32, i32) {
    %c0_i32 = arith.constant 0 : i32
    %c0_i32_0 = arith.constant 0 : i32
    %c0_i32_1 = arith.constant 0 : i32
    return %c0_i32, %c0_i32_0 : i32, i32
  }
  func.func @transform_1(%arg0: i32) -> (i32, i32) {
    %c0_i32 = arith.constant 0 : i32
    %c0_i32_0 = arith.constant 0 : i32
    %c0_i32_1 = arith.constant 0 : i32
    return %c0_i32, %c0_i32_0 : i32, i32
  }
  func.func @transform_2(%arg0: i32) -> (i32, i32, i32) {
    %c0_i32 = arith.constant 0 : i32
    %c0_i32_0 = arith.constant 0 : i32
    %c0_i32_1 = arith.constant 0 : i32
    return %arg0, %c0_i32, %c0_i32_0 : i32, i32, i32
  }
  func.func @transform_3(%arg0: i32) -> (i32, i32, i32) {
    %c0_i32 = arith.constant 0 : i32
    %c0_i32_0 = arith.constant 0 : i32
    %c0_i32_1 = arith.constant 0 : i32
    return %arg0, %c0_i32, %c0_i32_0 : i32, i32, i32
  }
  func.func @transform_4(%arg0: i32) -> (i32, i32, i32) {
    %c0_i32 = arith.constant 0 : i32
    %c0_i32_0 = arith.constant 0 : i32
    %c0_i32_1 = arith.constant 0 : i32
    return %arg0, %c0_i32, %c0_i32_0 : i32, i32, i32
  }
  func.func @transform_5(%arg0: i32) -> (i32, i32, i32) {
    %c0_i32 = arith.constant 0 : i32
    %c0_i32_0 = arith.constant 0 : i32
    %c0_i32_1 = arith.constant 0 : i32
    return %arg0, %c0_i32, %c0_i32_0 : i32, i32, i32
  }
  func.func @transform_6(%arg0: i32) -> (i32, i32, i32) {
    %c0_i32 = arith.constant 0 : i32
    %c0_i32_0 = arith.constant 0 : i32
    %c0_i32_1 = arith.constant 0 : i32
    return %arg0, %c0_i32, %c0_i32_0 : i32, i32, i32
  }
  func.func @transform_7(%arg0: i32) -> (i32, i32, i32) {
    %c0_i32 = arith.constant 0 : i32
    %c0_i32_0 = arith.constant 0 : i32
    %c0_i32_1 = arith.constant 0 : i32
    return %arg0, %c0_i32, %c0_i32_0 : i32, i32, i32
  }
  func.func @transform_8(%arg0: i32) -> (i32, i32, i32) {
    %c0_i32 = arith.constant 0 : i32
    %c0_i32_0 = arith.constant 0 : i32
    %c0_i32_1 = arith.constant 0 : i32
    return %arg0, %c0_i32, %c0_i32_0 : i32, i32, i32
  }
  func.func @transform_9(%arg0: i32) -> (i32, i32, i32) {
    %c0_i32 = arith.constant 0 : i32
    %c0_i32_0 = arith.constant 0 : i32
    %c0_i32_1 = arith.constant 0 : i32
    return %arg0, %c0_i32, %c0_i32_0 : i32, i32, i32
  }
  func.func @transform_10(%arg0: i32) -> (i32, i32, i32) {
    %c0_i32 = arith.constant 0 : i32
    %c0_i32_0 = arith.constant 0 : i32
    %c0_i32_1 = arith.constant 0 : i32
    return %arg0, %c0_i32, %c0_i32_0 : i32, i32, i32
  }
}

</mosaic_0001>

<llo_original>
// kernel: squeeze.1
$region0: #{squeeze.1}
  %s0 = inlined_call_operand.vmem [shape: f32[4,648], index: 0, kind: input, shape index: {}]
  %s1 = inlined_call_operand.vmem [shape: f32[4,2,18,18], index: 1, kind: output, shape index: {}]
  $region1: #{squeeze.1} parent=0
    #allocation0 [shape = 'u8[24576]{0}', space=vmem, size = 0x6000, scoped, tag = 'scoped mem for input reshape']
    %s3 = ssub.s32 16, 1
    %s4 = scalar_lea.vmem %s0, 20
    %v5 = vld [vmem:[%s4] sm:%s3]
    %s6 = scalar_lea.vmem [#allocation0], 40
    %7 = vst [vmem:[%s6] sm:%s3] %v5
    %s8 = scalar_lea.vmem %s0, 16
    %v9 = vld [vmem:[%s8] sm:%s3]
    %s10 = scalar_lea.vmem [#allocation0], 32
    %11 = vst [vmem:[%s10] sm:%s3] %v9
    %s12 = scalar_lea.vmem %s0, 12
    %v13 = vld [vmem:[%s12] sm:%s3]
    %s14 = scalar_lea.vmem [#allocation0], 24
    %15 = vst [vmem:[%s14] sm:%s3] %v13
    %s16 = scalar_lea.vmem %s0, 8
    %v17 = vld [vmem:[%s16] sm:%s3]
    %s18 = scalar_lea.vmem [#allocation0], 16
    %19 = vst [vmem:[%s18] sm:%s3] %v17
    %s20 = scalar_lea.vmem %s0, 4
    %v21 = vld [vmem:[%s20] sm:%s3]
    %s22 = scalar_lea.vmem [#allocation0], 8
    %23 = vst [vmem:[%s22] sm:%s3] %v21
    %v24 = vld [vmem:[%s0] sm:%s3]
    %25 = vst [vmem:[#allocation0] sm:%s3] %v24
    %v26 = vld [vmem:[#allocation0] sm:$0xf]
    %vm27 = vcmask 146432
    %28 = vst.msk [vmem:[%s1] ss:$48 sm:$0x3] %vm27, %v26
    %29 = vst.msk [vmem:[%s1] ss:$48 sm:$0xc] %vm27, %v26
    %s30 = scalar_lea.vmem [#allocation0], 32
    %v31 = vld [vmem:[%s30] sm:$0xf]
    %32 = vrot.lane.b32.xlu0 %v31, 118
    %v33 = vpop.permute.xlu0 %32
    %vm34 = vcmask 146432
    %s35 = scalar_lea.vmem %s1, 35
    %36 = vst.msk [vmem:[%s35] ss:$48 sm:$0x3] %vm34, %v33
    %s37 = scalar_lea.vmem %s1, 35
    %38 = vst.msk [vmem:[%s37] ss:$48 sm:$0xc] %vm34, %v33
    %s39 = scalar_lea.vmem [#allocation0], 24
    %v40 = vld.sshfl [vmem:[%s39] sm:$0xff pattern:$0x22222301]
    %41 = vrot.lane.b32.xlu0 %v40, 116
    %v42 = vpop.permute.xlu0 %41
    %vm43 = vcmask 146432
    %s44 = scalar_lea.vmem %s1, 76
    %45 = vst.msk [vmem:[%s44] ss:$-48 sm:$0x3] %vm43, %v42
    %s46 = scalar_lea.vmem %s1, 268
    %47 = vst.msk [vmem:[%s46] ss:$-48 sm:$0xc] %vm43, %v42
    %s48 = scalar_lea.vmem [#allocation0], 16
    %v49 = vld [vmem:[%s48] sm:$0xf]
    %50 = vrot.lane.b32.xlu0 %v49, 114
    %v51 = vpop.permute.xlu0 %50
    %vm52 = vcmask 146432
    %s53 = scalar_lea.vmem %s1, 15
    %54 = vst.msk [vmem:[%s53] ss:$48 sm:$0x3] %vm52, %v51
    %s55 = scalar_lea.vmem %s1, 15
    %56 = vst.msk [vmem:[%s55] ss:$48 sm:$0xc] %vm52, %v51
    %s57 = scalar_lea.vmem [#allocation0], 8
    %v58 = vld [vmem:[%s57] sm:$0xf]
    %59 = vrot.lane.b32.xlu0 %v58, 112
    %v60 = vpop.permute.xlu0 %59
    %vm61 = vcmask 146432
    %s62 = scalar_lea.vmem %s1, 8
    %63 = vst.msk [vmem:[%s62] ss:$48 sm:$0x3] %vm61, %v60
    %s64 = scalar_lea.vmem %s1, 8
    %65 = vst.msk [vmem:[%s64] ss:$48 sm:$0xc] %vm61, %v60
    %v66 = vld [vmem:[#allocation0] sm:$0xf]
    %67 = vrot.lane.b32.xlu0 %v66, 110
    %v68 = vpop.permute.xlu0 %67
    %vm69 = vcmask 146432
    %s70 = scalar_lea.vmem %s1, 1
    %71 = vst.msk [vmem:[%s70] ss:$48 sm:$0x3] %vm69, %v68
    %s72 = scalar_lea.vmem %s1, 1
    %73 = vst.msk [vmem:[%s72] ss:$48 sm:$0xc] %vm69, %v68
    %s74 = scalar_lea.vmem [#allocation0], 32
    %v75 = vld [vmem:[%s74] sm:$0xf]
    %76 = vrot.lane.b32.xlu0 %v75, 100
    %v77 = vpop.permute.xlu0 %76
    %vm78 = vcmask 146432
    %s79 = scalar_lea.vmem %s1, 36
    %80 = vst.msk [vmem:[%s79] ss:$48 sm:$0x3] %vm78, %v77
    %s81 = scalar_lea.vmem %s1, 36
    %82 = vst.msk [vmem:[%s81] ss:$48 sm:$0xc] %vm78, %v77
    %s83 = scalar_lea.vmem [#allocation0], 24
    %v84 = vld.sshfl [vmem:[%s83] sm:$0xff pattern:$0x22222301]
    %85 = vrot.lane.b32.xlu0 %v84, 98
    %v86 = vpop.permute.xlu0 %85
    %vm87 = vcmask 146432
    %s88 = scalar_lea.vmem %s1, 77
    %89 = vst.msk [vmem:[%s88] ss:$-48 sm:$0x3] %vm87, %v86
    %s90 = scalar_lea.vmem %s1, 269
    %91 = vst.msk [vmem:[%s90] ss:$-48 sm:$0xc] %vm87, %v86
    %s92 = scalar_lea.vmem [#allocation0], 16
    %v93 = vld.sshfl [vmem:[%s92] sm:$0xff pattern:$0x22222301]
    %94 = vrot.lane.b32.xlu0 %v93, 96
    %v95 = vpop.permute.xlu0 %94
    %vm96 = vcmask 146432
    %s97 = scalar_lea.vmem %s1, 64
    %98 = vst.msk [vmem:[%s97] ss:$-48 sm:$0x3] %vm96, %v95
    %s99 = scalar_lea.vmem %s1, 256
    %100 = vst.msk [vmem:[%s99] ss:$-48 sm:$0xc] %vm96, %v95
    %s101 = scalar_lea.vmem [#allocation0], 8
    %v102 = vld [vmem:[%s101] sm:$0xf]
    %103 = vrot.lane.b32.xlu0 %v102, 94
    %v104 = vpop.permute.xlu0 %103
    %vm105 = vcmask 146432
    %s106 = scalar_lea.vmem %s1, 9
    %107 = vst.msk [vmem:[%s106] ss:$48 sm:$0x3] %vm105, %v104
    %s108 = scalar_lea.vmem %s1, 9
    %109 = vst.msk [vmem:[%s108] ss:$48 sm:$0xc] %vm105, %v104
    %v110 = vld [vmem:[#allocation0] sm:$0xf]
    %111 = vrot.lane.b32.xlu0 %v110, 92
    %v112 = vpop.permute.xlu0 %111
    %vm113 = vcmask 146432
    %s114 = scalar_lea.vmem %s1, 2
    %115 = vst.msk [vmem:[%s114] ss:$48 sm:$0x3] %vm113, %v112
    %s116 = scalar_lea.vmem %s1, 2
    %117 = vst.msk [vmem:[%s116] ss:$48 sm:$0xc] %vm113, %v112
    %s118 = scalar_lea.vmem [#allocation0], 32
    %v119 = vld [vmem:[%s118] sm:$0xf]
    %120 = vrot.lane.b32.xlu0 %v119, 82
    %v121 = vpop.permute.xlu0 %120
    %vm122 = vcmask 146432
    %s123 = scalar_lea.vmem %s1, 37
    %124 = vst.msk [vmem:[%s123] ss:$48 sm:$0x3] %vm122, %v121
    %s125 = scalar_lea.vmem %s1, 37
    %126 = vst.msk [vmem:[%s125] ss:$48 sm:$0xc] %vm122, %v121
    %s127 = scalar_lea.vmem [#allocation0], 24
    %v128 = vld.sshfl [vmem:[%s127] sm:$0xff pattern:$0x22222301]
    %129 = vrot.lane.b32.xlu0 %v128, 80
    %v130 = vpop.permute.xlu0 %129
    %vm131 = vcmask 146432
    %s132 = scalar_lea.vmem %s1, 78
    %133 = vst.msk [vmem:[%s132] ss:$-48 sm:$0x3] %vm131, %v130
    %s134 = scalar_lea.vmem %s1, 270
    %135 = vst.msk [vmem:[%s134] ss:$-48 sm:$0xc] %vm131, %v130
    %s136 = scalar_lea.vmem [#allocation0], 16
    %v137 = vld.sshfl [vmem:[%s136] sm:$0xff pattern:$0x22222301]
    %138 = vrot.lane.b32.xlu0 %v137, 78
    %v139 = vpop.permute.xlu0 %138
    %vm140 = vcmask 146432
    %s141 = scalar_lea.vmem %s1, 65
    %142 = vst.msk [vmem:[%s141] ss:$-48 sm:$0x3] %vm140, %v139
    %s143 = scalar_lea.vmem %s1, 257
    %144 = vst.msk [vmem:[%s143] ss:$-48 sm:$0xc] %vm140, %v139
    %s145 = scalar_lea.vmem [#allocation0], 8
    %v146 = vld [vmem:[%s145] sm:$0xf]
    %147 = vrot.lane.b32.xlu0 %v146, 76
    %v148 = vpop.permute.xlu0 %147
    %vm149 = vcmask 146432
    %s150 = scalar_lea.vmem %s1, 10
    %151 = vst.msk [vmem:[%s150] ss:$48 sm:$0x3] %vm149, %v148
    %s152 = scalar_lea.vmem %s1, 10
    %153 = vst.msk [vmem:[%s152] ss:$48 sm:$0xc] %vm149, %v148
    %v154 = vld [vmem:[#allocation0] sm:$0xf]
    %155 = vrot.lane.b32.xlu0 %v154, 74
    %v156 = vpop.permute.xlu0 %155
    %vm157 = vcmask 146432
    %s158 = scalar_lea.vmem %s1, 3
    %159 = vst.msk [vmem:[%s158] ss:$48 sm:$0x3] %vm157, %v156
    %s160 = scalar_lea.vmem %s1, 3
    %161 = vst.msk [vmem:[%s160] ss:$48 sm:$0xc] %vm157, %v156
    %s162 = scalar_lea.vmem [#allocation0], 32
    %v163 = vld [vmem:[%s162] sm:$0xf]
    %164 = vrot.lane.b32.xlu0 %v163, 64
    %v165 = vpop.permute.xlu0 %164
    %vm166 = vcmask 146432
    %s167 = scalar_lea.vmem %s1, 38
    %168 = vst.msk [vmem:[%s167] ss:$48 sm:$0x3] %vm166, %v165
    %s169 = scalar_lea.vmem %s1, 38
    %170 = vst.msk [vmem:[%s169] ss:$48 sm:$0xc] %vm166, %v165
    %s171 = scalar_lea.vmem [#allocation0], 24
    %v172 = vld.sshfl [vmem:[%s171] sm:$0xff pattern:$0x22222301]
    %173 = vrot.lane.b32.xlu0 %v172, 62
    %v174 = vpop.permute.xlu0 %173
    %vm175 = vcmask 146432
    %s176 = scalar_lea.vmem %s1, 79
    %177 = vst.msk [vmem:[%s176] ss:$-48 sm:$0x3] %vm175, %v174
    %s178 = scalar_lea.vmem %s1, 271
    %179 = vst.msk [vmem:[%s178] ss:$-48 sm:$0xc] %vm175, %v174
    %s180 = scalar_lea.vmem [#allocation0], 16
    %v181 = vld.sshfl [vmem:[%s180] sm:$0xff pattern:$0x22222301]
    %182 = vrot.lane.b32.xlu0 %v181, 60
    %v183 = vpop.permute.xlu0 %182
    %vm184 = vcmask 146432
    %s185 = scalar_lea.vmem %s1, 72
    %186 = vst.msk [vmem:[%s185] ss:$-48 sm:$0x3] %vm184, %v183
    %s187 = scalar_lea.vmem %s1, 264
    %188 = vst.msk [vmem:[%s187] ss:$-48 sm:$0xc] %vm184, %v183
    %s189 = scalar_lea.vmem [#allocation0], 8
    %v190 = vld [vmem:[%s189] sm:$0xf]
    %191 = vrot.lane.b32.xlu0 %v190, 58
    %v192 = vpop.permute.xlu0 %191
    %vm193 = vcmask 146432
    %s194 = scalar_lea.vmem %s1, 11
    %195 = vst.msk [vmem:[%s194] ss:$48 sm:$0x3] %vm193, %v192
    %s196 = scalar_lea.vmem %s1, 11
    %197 = vst.msk [vmem:[%s196] ss:$48 sm:$0xc] %vm193, %v192
    %v198 = vld [vmem:[#allocation0] sm:$0xf]
    %199 = vrot.lane.b32.xlu0 %v198, 56
    %v200 = vpop.permute.xlu0 %199
    %vm201 = vcmask 146432
    %s202 = scalar_lea.vmem %s1, 4
    %203 = vst.msk [vmem:[%s202] ss:$48 sm:$0x3] %vm201, %v200
    %s204 = scalar_lea.vmem %s1, 4
    %205 = vst.msk [vmem:[%s204] ss:$48 sm:$0xc] %vm201, %v200
    %s206 = scalar_lea.vmem [#allocation0], 32
    %v207 = vld [vmem:[%s206] sm:$0xf]
    %208 = vrot.lane.b32.xlu0 %v207, 46
    %v209 = vpop.permute.xlu0 %208
    %vm210 = vcmask 146432
    %s211 = scalar_lea.vmem %s1, 39
    %212 = vst.msk [vmem:[%s211] ss:$48 sm:$0x3] %vm210, %v209
    %s213 = scalar_lea.vmem %s1, 39
    %214 = vst.msk [vmem:[%s213] ss:$48 sm:$0xc] %vm210, %v209
    %s215 = scalar_lea.vmem [#allocation0], 24
    %v216 = vld [vmem:[%s215] sm:$0xf]
    %217 = vrot.lane.b32.xlu0 %v216, 44
    %v218 = vpop.permute.xlu0 %217
    %vm219 = vcmask 146432
    %s220 = scalar_lea.vmem %s1, 32
    %221 = vst.msk [vmem:[%s220] ss:$48 sm:$0x3] %vm219, %v218
    %s222 = scalar_lea.vmem %s1, 32
    %223 = vst.msk [vmem:[%s222] ss:$48 sm:$0xc] %vm219, %v218
    %s224 = scalar_lea.vmem [#allocation0], 16
    %v225 = vld.sshfl [vmem:[%s224] sm:$0xff pattern:$0x22222301]
    %226 = vrot.lane.b32.xlu0 %v225, 42
    %v227 = vpop.permute.xlu0 %226
    %vm228 = vcmask 146432
    %s229 = scalar_lea.vmem %s1, 73
    %230 = vst.msk [vmem:[%s229] ss:$-48 sm:$0x3] %vm228, %v227
    %s231 = scalar_lea.vmem %s1, 265
    %232 = vst.msk [vmem:[%s231] ss:$-48 sm:$0xc] %vm228, %v227
    %s233 = scalar_lea.vmem [#allocation0], 8
    %v234 = vld [vmem:[%s233] sm:$0xf]
    %235 = vrot.lane.b32.xlu0 %v234, 40
    %v236 = vpop.permute.xlu0 %235
    %vm237 = vcmask 146432
    %s238 = scalar_lea.vmem %s1, 12
    %239 = vst.msk [vmem:[%s238] ss:$48 sm:$0x3] %vm237, %v236
    %s240 = scalar_lea.vmem %s1, 12
    %241 = vst.msk [vmem:[%s240] ss:$48 sm:$0xc] %vm237, %v236
    %v242 = vld [vmem:[#allocation0] sm:$0xf]
    %243 = vrot.lane.b32.xlu0 %v242, 38
    %v244 = vpop.permute.xlu0 %243
    %vm245 = vcmask 146432
    %s246 = scalar_lea.vmem %s1, 5
    %247 = vst.msk [vmem:[%s246] ss:$48 sm:$0x3] %vm245, %v244
    %s248 = scalar_lea.vmem %s1, 5
    %249 = vst.msk [vmem:[%s248] ss:$48 sm:$0xc] %vm245, %v244
    %s250 = scalar_lea.vmem [#allocation0], 32
    %v251 = vld [vmem:[%s250] sm:$0xf]
    %252 = vrot.lane.b32.xlu0 %v251, 28
    %v253 = vpop.permute.xlu0 %252
    %vm254 = vcmask 146432
    %s255 = scalar_lea.vmem %s1, 40
    %256 = vst.msk [vmem:[%s255] ss:$48 sm:$0x3] %vm254, %v253
    %s257 = scalar_lea.vmem %s1, 40
    %258 = vst.msk [vmem:[%s257] ss:$48 sm:$0xc] %vm254, %v253
    %s259 = scalar_lea.vmem [#allocation0], 24
    %v260 = vld [vmem:[%s259] sm:$0xf]
    %261 = vrot.lane.b32.xlu0 %v260, 26
    %v262 = vpop.permute.xlu0 %261
    %vm263 = vcmask 146432
    %s264 = scalar_lea.vmem %s1, 33
    %265 = vst.msk [vmem:[%s264] ss:$48 sm:$0x3] %vm263, %v262
    %s266 = scalar_lea.vmem %s1, 33
    %267 = vst.msk [vmem:[%s266] ss:$48 sm:$0xc] %vm263, %v262
    %s268 = scalar_lea.vmem [#allocation0], 16
    %v269 = vld.sshfl [vmem:[%s268] sm:$0xff pattern:$0x22222301]
    %270 = vrot.lane.b32.xlu0 %v269, 24
    %v271 = vpop.permute.xlu0 %270
    %vm272 = vcmask 146432
    %s273 = scalar_lea.vmem %s1, 74
    %274 = vst.msk [vmem:[%s273] ss:$-48 sm:$0x3] %vm272, %v271
    %s275 = scalar_lea.vmem %s1, 266
    %276 = vst.msk [vmem:[%s275] ss:$-48 sm:$0xc] %vm272, %v271
    %s277 = scalar_lea.vmem [#allocation0], 8
    %v278 = vld [vmem:[%s277] sm:$0xf]
    %279 = vrot.lane.b32.xlu0 %v278, 22
    %v280 = vpop.permute.xlu0 %279
    %vm281 = vcmask 146432
    %s282 = scalar_lea.vmem %s1, 13
    %283 = vst.msk [vmem:[%s282] ss:$48 sm:$0x3] %vm281, %v280
    %s284 = scalar_lea.vmem %s1, 13
    %285 = vst.msk [vmem:[%s284] ss:$48 sm:$0xc] %vm281, %v280
    %v286 = vld [vmem:[#allocation0] sm:$0xf]
    %287 = vrot.lane.b32.xlu0 %v286, 20
    %v288 = vpop.permute.xlu0 %287
    %vm289 = vcmask 146432
    %s290 = scalar_lea.vmem %s1, 6
    %291 = vst.msk [vmem:[%s290] ss:$48 sm:$0x3] %vm289, %v288
    %s292 = scalar_lea.vmem %s1, 6
    %293 = vst.msk [vmem:[%s292] ss:$48 sm:$0xc] %vm289, %v288
    %s294 = scalar_lea.vmem [#allocation0], 32
    %v295 = vld [vmem:[%s294] sm:$0xf]
    %s296 = scalar_lea.vmem [#allocation0], 40
    %v297 = vld [vmem:[%s296] sm:$0xf]
    %vm298 = vcmask 965632
    %v299 = vsel %vm298, %v297, %v295
    %300 = vrot.lane.b32.xlu0 %v299, 10
    %v301 = vpop.permute.xlu0 %300
    %vm302 = vcmask 80896
    %s303 = scalar_lea.vmem %s1, 41
    %304 = vst.msk [vmem:[%s303] ss:$48 sm:$0x3] %vm302, %v301
    %s305 = scalar_lea.vmem %s1, 41
    %306 = vst.msk [vmem:[%s305] ss:$48 sm:$0xc] %vm302, %v301
    %vm307 = vcmask 146512
    %s308 = scalar_lea.vmem %s1, 41
    %309 = vst.msk [vmem:[%s308] ss:$48 sm:$0x3] %vm307, %v301
    %s310 = scalar_lea.vmem %s1, 41
    %311 = vst.msk [vmem:[%s310] ss:$48 sm:$0xc] %vm307, %v301
    %s312 = scalar_lea.vmem [#allocation0], 24
    %v313 = vld [vmem:[%s312] sm:$0xf]
    %s314 = scalar_lea.vmem [#allocation0], 32
    %v315 = vld [vmem:[%s314] sm:$0xf]
    %vm316 = vcmask 982016
    %v317 = vsel %vm316, %v315, %v313
    %318 = vrot.lane.b32.xlu0 %v317, 8
    %v319 = vpop.permute.xlu0 %318
    %vm320 = vcmask 64512
    %s321 = scalar_lea.vmem %s1, 34
    %322 = vst.msk [vmem:[%s321] ss:$48 sm:$0x3] %vm320, %v319
    %s323 = scalar_lea.vmem %s1, 34
    %324 = vst.msk [vmem:[%s323] ss:$48 sm:$0xc] %vm320, %v319
    %vm325 = vcmask 146496
    %s326 = scalar_lea.vmem %s1, 34
    %327 = vst.msk [vmem:[%s326] ss:$48 sm:$0x3] %vm325, %v319
    %s328 = scalar_lea.vmem %s1, 34
    %329 = vst.msk [vmem:[%s328] ss:$48 sm:$0xc] %vm325, %v319
    %s330 = scalar_lea.vmem [#allocation0], 16
    %v331 = vld.sshfl [vmem:[%s330] sm:$0xff pattern:$0x22222301]
    %s332 = scalar_lea.vmem [#allocation0], 24
    %v333 = vld.sshfl [vmem:[%s332] sm:$0xff pattern:$0x22222301]
    %vm334 = vcmask 998400
    %v335 = vsel %vm334, %v333, %v331
    %336 = vrot.lane.b32.xlu0 %v335, 6
    %v337 = vpop.permute.xlu0 %336
    %vm338 = vcmask 48128
    %s339 = scalar_lea.vmem %s1, 75
    %340 = vst.msk [vmem:[%s339] ss:$-48 sm:$0x3] %vm338, %v337
    %s341 = scalar_lea.vmem %s1, 267
    %342 = vst.msk [vmem:[%s341] ss:$-48 sm:$0xc] %vm338, %v337
    %vm343 = vcmask 146480
    %s344 = scalar_lea.vmem %s1, 75
    %345 = vst.msk [vmem:[%s344] ss:$-48 sm:$0x3] %vm343, %v337
    %s346 = scalar_lea.vmem %s1, 267
    %347 = vst.msk [vmem:[%s346] ss:$-48 sm:$0xc] %vm343, %v337
    %s348 = scalar_lea.vmem [#allocation0], 8
    %v349 = vld [vmem:[%s348] sm:$0xf]
    %s350 = scalar_lea.vmem [#allocation0], 16
    %v351 = vld [vmem:[%s350] sm:$0xf]
    %vm352 = vcmask 1014784
    %v353 = vsel %vm352, %v351, %v349
    %354 = vrot.lane.b32.xlu0 %v353, 4
    %v355 = vpop.permute.xlu0 %354
    %vm356 = vcmask 31744
    %s357 = scalar_lea.vmem %s1, 14
    %358 = vst.msk [vmem:[%s357] ss:$48 sm:$0x3] %vm356, %v355
    %s359 = scalar_lea.vmem %s1, 14
    %360 = vst.msk [vmem:[%s359] ss:$48 sm:$0xc] %vm356, %v355
    %vm361 = vcmask 146464
    %s362 = scalar_lea.vmem %s1, 14
    %363 = vst.msk [vmem:[%s362] ss:$48 sm:$0x3] %vm361, %v355
    %s364 = scalar_lea.vmem %s1, 14
    %365 = vst.msk [vmem:[%s364] ss:$48 sm:$0xc] %vm361, %v355
    %v366 = vld [vmem:[#allocation0] sm:$0xf]
    %s367 = scalar_lea.vmem [#allocation0], 8
    %v368 = vld [vmem:[%s367] sm:$0xf]
    %vm369 = vcmask 1031168
    %v370 = vsel %vm369, %v368, %v366
    %371 = vrot.lane.b32.xlu0 %v370, 2
    %v372 = vpop.permute.xlu0 %371
    %vm373 = vcmask 15360
    %s374 = scalar_lea.vmem %s1, 7
    %375 = vst.msk [vmem:[%s374] ss:$48 sm:$0x3] %vm373, %v372
    %s376 = scalar_lea.vmem %s1, 7
    %377 = vst.msk [vmem:[%s376] ss:$48 sm:$0xc] %vm373, %v372
    %vm378 = vcmask 146448
    %s379 = scalar_lea.vmem %s1, 7
    %380 = vst.msk [vmem:[%s379] ss:$48 sm:$0x3] %vm378, %v372
    %s381 = scalar_lea.vmem %s1, 7
    %382 = vst.msk [vmem:[%s381] ss:$48 sm:$0xc] %vm378, %v372

// kernel: autoencoder_ex_forward.3
$region0: #{autoencoder_ex_forward.3}
  #allocation0 [shape = 'u32[]', space=smem, size = 0x4, offset = 0x4, fixed_abs, tag = 'smem constant byte address 0x4 - core index']
  #allocation1 [shape = 'u32[72,128]{1,0:T(1,128)}', space=vmem, size = 0x9000, scoped, tag = 'internal scratch']
  %s0 = inlined_call_operand.vmem [shape: f32[32,768], index: 0, kind: input, shape index: {}]
  %s1 = inlined_call_operand.vmem [shape: f32[1,768], index: 1, kind: input, shape index: {}]
  %s2 = inlined_call_operand.vmem [shape: bf16[4,16,288], index: 2, kind: input, shape index: {}]
  %s3 = inlined_call_operand.vmem [shape: f32[4,16,3], index: 3, kind: input, shape index: {}]
  %s4 = inlined_call_operand.vmem [shape: bf16[4,16,144], index: 4, kind: input, shape index: {}]
  %s5 = inlined_call_operand.vmem [shape: f32[4,16,3], index: 5, kind: input, shape index: {}]
  %s6 = inlined_call_operand.vmem [shape: bf16[4,8,144], index: 6, kind: input, shape index: {}]
  %s7 = inlined_call_operand.vmem [shape: f32[4,8,3], index: 7, kind: input, shape index: {}]
  %s8 = inlined_call_operand.vmem [shape: bf16[4,1,72], index: 8, kind: input, shape index: {}]
  %s9 = inlined_call_operand.vmem [shape: f32[4,1,3], index: 9, kind: input, shape index: {}]
  %s10 = inlined_call_operand.vmem [shape: f32[4,1,768], index: 10, kind: output, shape index: {}]
  %s11 = sld [smem:[#allocation0]]
  $region73: #{autoencoder_ex_forward.3} parent=0
    _
  %s13 = ssub.s32 1, %s11
  %s14 = scalar_select 0, %s13, %s11
  loop: start=0, step=1, limit=6
  $region2: #{autoencoder_ex_forward.3} parent=0 // loop_pre_header
    _
  $region3: #{autoencoder_ex_forward.3} parent=0 // loop_header
    %s16 = sphi 0, %s20
    %p17 = scmp.ge.s32.totalorder %s16, 6
    %s24 = sphi 0, %s24
    %s26 = sphi 0, %s24
    %s27 = sphi 0, %s26
    %s41 = sphi 0, %s27
    %s45 = sphi 0, %s45
    %s47 = sphi 0, %s45
    %s48 = sphi 0, %s47
    %s62 = sphi 0, %s48
    %s68 = sphi 0, %s70
    %s71 = sphi 0, %s68
    %s72 = sphi 0, %s71
    %s88 = sphi 0, %s72
    %s94 = sphi 0, %s96
    %s97 = sphi 0, %s94
    %s98 = sphi 0, %s97
    %s114 = sphi 0, %s98
    %s120 = sphi 0, %s122
    %s123 = sphi 0, %s120
    %s124 = sphi 0, %s123
    %s140 = sphi 0, %s124
    %s146 = sphi 0, %s148
    %s149 = sphi 0, %s146
    %s150 = sphi 0, %s149
    %s166 = sphi 0, %s150
    %s172 = sphi 0, %s174
    %s175 = sphi 0, %s172
    %s176 = sphi 0, %s175
    %s192 = sphi 0, %s176
    %s198 = sphi 0, %s200
    %s201 = sphi 0, %s198
    %s202 = sphi 0, %s201
    %s218 = sphi 0, %s202
    %s224 = sphi 0, %s226
    %s227 = sphi 0, %s224
    %s228 = sphi 0, %s227
    %s244 = sphi 0, %s228
    %s250 = sphi 0, %s252
    %s253 = sphi 0, %s250
    %s254 = sphi 0, %s253
    %s270 = sphi 0, %s254
    %s276 = sphi 0, %s278
    %s279 = sphi 0, %s276
    %s280 = sphi 0, %s279
    %s296 = sphi 0, %s280
  $region4: #{autoencoder_ex_forward.3} parent=0 // loop_header_branch
    %19 = sbr.rel (%p17) target = $region8
  $region5: #{autoencoder_ex_forward.3} parent=0 // loop_body
    %s21 = ssub.s32 %s16, 1
    %s22 = ssub.s32 %s16, 2
    %s23 = sadd.s32 %s16, 1
    %s25 = sadd.s32 %s24, 1
    %p28 = scmp.eq.s32.totalorder %s16, 3
    %p29 = scmp.ne.s32.totalorder %s24, %s26
    %p30 = scmp.eq.s32.totalorder %s16, 0
    %p31 = por %p29, %p30
    %p32 = scmp.ne.s32.totalorder %s24, %s26
    %p33 = scmp.eq.s32.totalorder %s21, 3
    %p34 = por %p32, %p33
    %p35 = scmp.ne.s32.totalorder %s26, %s27
    %p36 = scmp.eq.s32.totalorder %s21, 0
    %p37 = por %p35, %p36
    %p38 = scmp.ne.s32.totalorder %s26, %s27
    %p39 = scmp.eq.s32.totalorder %s22, 3
    %p40 = por %p38, %p39
    %p42 = scmp.ne.s32.totalorder %s27, %s41
    %p43 = scmp.eq.s32.totalorder %s22, 0
    %p44 = por %p42, %p43
    %s46 = sadd.s32 %s45, 1
    %p49 = scmp.eq.s32.totalorder %s16, 3
    %p50 = scmp.ne.s32.totalorder %s45, %s47
    %p51 = scmp.eq.s32.totalorder %s16, 0
    %p52 = por %p50, %p51
    %p53 = scmp.ne.s32.totalorder %s45, %s47
    %p54 = scmp.eq.s32.totalorder %s21, 3
    %p55 = por %p53, %p54
    %p56 = scmp.ne.s32.totalorder %s47, %s48
    %p57 = scmp.eq.s32.totalorder %s21, 0
    %p58 = por %p56, %p57
    %p59 = scmp.ne.s32.totalorder %s47, %s48
    %p60 = scmp.eq.s32.totalorder %s22, 3
    %p61 = por %p59, %p60
    %p63 = scmp.ne.s32.totalorder %s48, %s62
    %p64 = scmp.eq.s32.totalorder %s22, 0
    %p65 = por %p63, %p64
    %s66 = ssub.s32 %s16, %s23
    %p67 = scmp.eq.s32.totalorder %s66, 0
    %s69 = sadd.s32 %s68, 1
    %s70 = scalar_select %p67, %s68, %s69
    %p73 = pneg %p67
    %p74 = scmp.eq.s32.totalorder %s16, 3
    %p75 = por %p73, %p74
    %p76 = scmp.ne.s32.totalorder %s68, %s71
    %p77 = scmp.eq.s32.totalorder %s16, 0
    %p78 = por %p76, %p77
    %p79 = scmp.ne.s32.totalorder %s68, %s71
    %p80 = scmp.eq.s32.totalorder %s21, 3
    %p81 = por %p79, %p80
    %p82 = scmp.ne.s32.totalorder %s71, %s72
    %p83 = scmp.eq.s32.totalorder %s21, 0
    %p84 = por %p82, %p83
    %p85 = scmp.ne.s32.totalorder %s71, %s72
    %p86 = scmp.eq.s32.totalorder %s22, 3
    %p87 = por %p85, %p86
    %p89 = scmp.ne.s32.totalorder %s72, %s88
    %p90 = scmp.eq.s32.totalorder %s22, 0
    %p91 = por %p89, %p90
    %s92 = ssub.s32 %s16, %s23
    %p93 = scmp.eq.s32.totalorder %s92, 0
    %s95 = sadd.s32 %s94, 1
    %s96 = scalar_select %p93, %s94, %s95
    %p99 = pneg %p93
    %p100 = scmp.eq.s32.totalorder %s16, 3
    %p101 = por %p99, %p100
    %p102 = scmp.ne.s32.totalorder %s94, %s97
    %p103 = scmp.eq.s32.totalorder %s16, 0
    %p104 = por %p102, %p103
    %p105 = scmp.ne.s32.totalorder %s94, %s97
    %p106 = scmp.eq.s32.totalorder %s21, 3
    %p107 = por %p105, %p106
    %p108 = scmp.ne.s32.totalorder %s97, %s98
    %p109 = scmp.eq.s32.totalorder %s21, 0
    %p110 = por %p108, %p109
    %p111 = scmp.ne.s32.totalorder %s97, %s98
    %p112 = scmp.eq.s32.totalorder %s22, 3
    %p113 = por %p111, %p112
    %p115 = scmp.ne.s32.totalorder %s98, %s114
    %p116 = scmp.eq.s32.totalorder %s22, 0
    %p117 = por %p115, %p116
    %s118 = ssub.s32 %s16, %s23
    %p119 = scmp.eq.s32.totalorder %s118, 0
    %s121 = sadd.s32 %s120, 1
    %s122 = scalar_select %p119, %s120, %s121
    %p125 = pneg %p119
    %p126 = scmp.eq.s32.totalorder %s16, 3
    %p127 = por %p125, %p126
    %p128 = scmp.ne.s32.totalorder %s120, %s123
    %p129 = scmp.eq.s32.totalorder %s16, 0
    %p130 = por %p128, %p129
    %p131 = scmp.ne.s32.totalorder %s120, %s123
    %p132 = scmp.eq.s32.totalorder %s21, 3
    %p133 = por %p131, %p132
    %p134 = scmp.ne.s32.totalorder %s123, %s124
    %p135 = scmp.eq.s32.totalorder %s21, 0
    %p136 = por %p134, %p135
    %p137 = scmp.ne.s32.totalorder %s123, %s124
    %p138 = scmp.eq.s32.totalorder %s22, 3
    %p139 = por %p137, %p138
    %p141 = scmp.ne.s32.totalorder %s124, %s140
    %p142 = scmp.eq.s32.totalorder %s22, 0
    %p143 = por %p141, %p142
    %s144 = ssub.s32 %s16, %s23
    %p145 = scmp.eq.s32.totalorder %s144, 0
    %s147 = sadd.s32 %s146, 1
    %s148 = scalar_select %p145, %s146, %s147
    %p151 = pneg %p145
    %p152 = scmp.eq.s32.totalorder %s16, 3
    %p153 = por %p151, %p152
    %p154 = scmp.ne.s32.totalorder %s146, %s149
    %p155 = scmp.eq.s32.totalorder %s16, 0
    %p156 = por %p154, %p155
    %p157 = scmp.ne.s32.totalorder %s146, %s149
    %p158 = scmp.eq.s32.totalorder %s21, 3
    %p159 = por %p157, %p158
    %p160 = scmp.ne.s32.totalorder %s149, %s150
    %p161 = scmp.eq.s32.totalorder %s21, 0
    %p162 = por %p160, %p161
    %p163 = scmp.ne.s32.totalorder %s149, %s150
    %p164 = scmp.eq.s32.totalorder %s22, 3
    %p165 = por %p163, %p164
    %p167 = scmp.ne.s32.totalorder %s150, %s166
    %p168 = scmp.eq.s32.totalorder %s22, 0
    %p169 = por %p167, %p168
    %s170 = ssub.s32 %s16, %s23
    %p171 = scmp.eq.s32.totalorder %s170, 0
    %s173 = sadd.s32 %s172, 1
    %s174 = scalar_select %p171, %s172, %s173
    %p177 = pneg %p171
    %p178 = scmp.eq.s32.totalorder %s16, 3
    %p179 = por %p177, %p178
    %p180 = scmp.ne.s32.totalorder %s172, %s175
    %p181 = scmp.eq.s32.totalorder %s16, 0
    %p182 = por %p180, %p181
    %p183 = scmp.ne.s32.totalorder %s172, %s175
    %p184 = scmp.eq.s32.totalorder %s21, 3
    %p185 = por %p183, %p184
    %p186 = scmp.ne.s32.totalorder %s175, %s176
    %p187 = scmp.eq.s32.totalorder %s21, 0
    %p188 = por %p186, %p187
    %p189 = scmp.ne.s32.totalorder %s175, %s176
    %p190 = scmp.eq.s32.totalorder %s22, 3
    %p191 = por %p189, %p190
    %p193 = scmp.ne.s32.totalorder %s176, %s192
    %p194 = scmp.eq.s32.totalorder %s22, 0
    %p195 = por %p193, %p194
    %s196 = ssub.s32 %s16, %s23
    %p197 = scmp.eq.s32.totalorder %s196, 0
    %s199 = sadd.s32 %s198, 1
    %s200 = scalar_select %p197, %s198, %s199
    %p203 = pneg %p197
    %p204 = scmp.eq.s32.totalorder %s16, 3
    %p205 = por %p203, %p204
    %p206 = scmp.ne.s32.totalorder %s198, %s201
    %p207 = scmp.eq.s32.totalorder %s16, 0
    %p208 = por %p206, %p207
    %p209 = scmp.ne.s32.totalorder %s198, %s201
    %p210 = scmp.eq.s32.totalorder %s21, 3
    %p211 = por %p209, %p210
    %p212 = scmp.ne.s32.totalorder %s201, %s202
    %p213 = scmp.eq.s32.totalorder %s21, 0
    %p214 = por %p212, %p213
    %p215 = scmp.ne.s32.totalorder %s201, %s202
    %p216 = scmp.eq.s32.totalorder %s22, 3
    %p217 = por %p215, %p216
    %p219 = scmp.ne.s32.totalorder %s202, %s218
    %p220 = scmp.eq.s32.totalorder %s22, 0
    %p221 = por %p219, %p220
    %s222 = ssub.s32 %s16, %s23
    %p223 = scmp.eq.s32.totalorder %s222, 0
    %s225 = sadd.s32 %s224, 1
    %s226 = scalar_select %p223, %s224, %s225
    %p229 = pneg %p223
    %p230 = scmp.eq.s32.totalorder %s16, 3
    %p231 = por %p229, %p230
    %p232 = scmp.ne.s32.totalorder %s224, %s227
    %p233 = scmp.eq.s32.totalorder %s16, 0
    %p234 = por %p232, %p233
    %p235 = scmp.ne.s32.totalorder %s224, %s227
    %p236 = scmp.eq.s32.totalorder %s21, 3
    %p237 = por %p235, %p236
    %p238 = scmp.ne.s32.totalorder %s227, %s228
    %p239 = scmp.eq.s32.totalorder %s21, 0
    %p240 = por %p238, %p239
    %p241 = scmp.ne.s32.totalorder %s227, %s228
    %p242 = scmp.eq.s32.totalorder %s22, 3
    %p243 = por %p241, %p242
    %p245 = scmp.ne.s32.totalorder %s228, %s244
    %p246 = scmp.eq.s32.totalorder %s22, 0
    %p247 = por %p245, %p246
    %s248 = ssub.s32 %s16, %s23
    %p249 = scmp.eq.s32.totalorder %s248, 0
    %s251 = sadd.s32 %s250, 1
    %s252 = scalar_select %p249, %s250, %s251
    %p255 = pneg %p249
    %p256 = scmp.eq.s32.totalorder %s16, 3
    %p257 = por %p255, %p256
    %p258 = scmp.ne.s32.totalorder %s250, %s253
    %p259 = scmp.eq.s32.totalorder %s16, 0
    %p260 = por %p258, %p259
    %p261 = scmp.ne.s32.totalorder %s250, %s253
    %p262 = scmp.eq.s32.totalorder %s21, 3
    %p263 = por %p261, %p262
    %p264 = scmp.ne.s32.totalorder %s253, %s254
    %p265 = scmp.eq.s32.totalorder %s21, 0
    %p266 = por %p264, %p265
    %p267 = scmp.ne.s32.totalorder %s253, %s254
    %p268 = scmp.eq.s32.totalorder %s22, 3
    %p269 = por %p267, %p268
    %p271 = scmp.ne.s32.totalorder %s254, %s270
    %p272 = scmp.eq.s32.totalorder %s22, 0
    %p273 = por %p271, %p272
    %s274 = ssub.s32 %s16, %s23
    %p275 = scmp.eq.s32.totalorder %s274, 0
    %s277 = sadd.s32 %s276, 1
    %s278 = scalar_select %p275, %s276, %s277
    %p281 = pneg %p275
    %p282 = scmp.eq.s32.totalorder %s16, 3
    %p283 = por %p281, %p282
    %p284 = scmp.ne.s32.totalorder %s276, %s279
    %p285 = scmp.eq.s32.totalorder %s16, 0
    %p286 = por %p284, %p285
    %p287 = scmp.ne.s32.totalorder %s276, %s279
    %p288 = scmp.eq.s32.totalorder %s21, 3
    %p289 = por %p287, %p288
    %p290 = scmp.ne.s32.totalorder %s279, %s280
    %p291 = scmp.eq.s32.totalorder %s21, 0
    %p292 = por %p290, %p291
    %p293 = scmp.ne.s32.totalorder %s279, %s280
    %p294 = scmp.eq.s32.totalorder %s22, 3
    %p295 = por %p293, %p294
    %p297 = scmp.ne.s32.totalorder %s280, %s296
    %p298 = scmp.eq.s32.totalorder %s22, 0
    %p299 = por %p297, %p298
    %p300 = scmp.le.s32.totalorder 1, %s16
    %p301 = scmp.lt.s32.totalorder %s16, 5
    %p302 = pnand %p300, %p301
    %p303 = pneg %p302
    // Predicated region
    $region9: #{autoencoder_ex_forward.3} parent=5 // pred_check
      _
    $region10: #{autoencoder_ex_forward.3} parent=5 // pred_check_branch
      %305 = sbr.rel (%p302) target = $region12
    $region11: #{autoencoder_ex_forward.3} parent=5 // pred_region
      %s306 = ssub.s32 %s16, 1
      // Predicated region
      $region13: #{autoencoder_ex_forward.3} parent=11 // pred_check
        %p307 = pneg %p37
      $region14: #{autoencoder_ex_forward.3} parent=11 // pred_check_branch
        %309 = sbr.rel (%p307) target = $region16
      $region15: #{autoencoder_ex_forward.3} parent=11 // pred_region
        _
      $region16: #{autoencoder_ex_forward.3} parent=11 // pred_fallthru
        _
      // Predicated region
      $region17: #{autoencoder_ex_forward.3} parent=11 // pred_check
        %p310 = pneg %p58
      $region18: #{autoencoder_ex_forward.3} parent=11 // pred_check_branch
        %312 = sbr.rel (%p310) target = $region20
      $region19: #{autoencoder_ex_forward.3} parent=11 // pred_region
        _
      $region20: #{autoencoder_ex_forward.3} parent=11 // pred_fallthru
        _
    $region12: #{autoencoder_ex_forward.3} parent=5 // pred_fallthru
      _
    %p313 = scmp.lt.s32.totalorder %s16, 4
    // Predicated region
    $region21: #{autoencoder_ex_forward.3} parent=5 // pred_check
      %p314 = pneg %p313
    $region22: #{autoencoder_ex_forward.3} parent=5 // pred_check_branch
      %316 = sbr.rel (%p314) target = $region24
    $region23: #{autoencoder_ex_forward.3} parent=5 // pred_region
      // Predicated region
      $region25: #{autoencoder_ex_forward.3} parent=23 // pred_check
        %p317 = pneg %p78
      $region26: #{autoencoder_ex_forward.3} parent=23 // pred_check_branch
        %319 = sbr.rel (%p317) target = $region28
      $region27: #{autoencoder_ex_forward.3} parent=23 // pred_region
        %p320 = scmp.lt.s32.totalorder %s16, 3
        %s321 = scalar_select %p320, %s16, 3
        %s322 = smul.addr %s321, 6
        %s323 = smul.addr %s322, 4
        %s324 = scalar_lea.vmem %s2, %s323
      $region28: #{autoencoder_ex_forward.3} parent=23 // pred_fallthru
        _
      // Predicated region
      $region29: #{autoencoder_ex_forward.3} parent=23 // pred_check
        %p325 = pneg %p104
      $region30: #{autoencoder_ex_forward.3} parent=23 // pred_check_branch
        %327 = sbr.rel (%p325) target = $region32
      $region31: #{autoencoder_ex_forward.3} parent=23 // pred_region
        %p328 = scmp.lt.s32.totalorder %s16, 3
        %s329 = scalar_select %p328, %s16, 3
        %s330 = smul.addr %s329, 2
        %s331 = smul.addr %s330, 8
        %s332 = scalar_lea.vmem %s3, %s331
      $region32: #{autoencoder_ex_forward.3} parent=23 // pred_fallthru
        _
      // Predicated region
      $region33: #{autoencoder_ex_forward.3} parent=23 // pred_check
        %p333 = pneg %p130
      $region34: #{autoencoder_ex_forward.3} parent=23 // pred_check_branch
        %335 = sbr.rel (%p333) target = $region36
      $region35: #{autoencoder_ex_forward.3} parent=23 // pred_region
        %p336 = scmp.lt.s32.totalorder %s16, 3
        %s337 = scalar_select %p336, %s16, 3
        %s338 = smul.addr %s337, 4
        %s339 = smul.addr %s338, 4
        %s340 = scalar_lea.vmem %s4, %s339
      $region36: #{autoencoder_ex_forward.3} parent=23 // pred_fallthru
        _
      // Predicated region
      $region37: #{autoencoder_ex_forward.3} parent=23 // pred_check
        %p341 = pneg %p156
      $region38: #{autoencoder_ex_forward.3} parent=23 // pred_check_branch
        %343 = sbr.rel (%p341) target = $region40
      $region39: #{autoencoder_ex_forward.3} parent=23 // pred_region
        %p344 = scmp.lt.s32.totalorder %s16, 3
        %s345 = scalar_select %p344, %s16, 3
        %s346 = smul.addr %s345, 2
        %s347 = smul.addr %s346, 8
        %s348 = scalar_lea.vmem %s5, %s347
      $region40: #{autoencoder_ex_forward.3} parent=23 // pred_fallthru
        _
      // Predicated region
      $region41: #{autoencoder_ex_forward.3} parent=23 // pred_check
        %p349 = pneg %p182
      $region42: #{autoencoder_ex_forward.3} parent=23 // pred_check_branch
        %351 = sbr.rel (%p349) target = $region44
      $region43: #{autoencoder_ex_forward.3} parent=23 // pred_region
        %p352 = scmp.lt.s32.totalorder %s16, 3
        %s353 = scalar_select %p352, %s16, 3
        %s354 = smul.addr %s353, 2
        %s355 = smul.addr %s354, 4
        %s356 = scalar_lea.vmem %s6, %s355
      $region44: #{autoencoder_ex_forward.3} parent=23 // pred_fallthru
        _
      // Predicated region
      $region45: #{autoencoder_ex_forward.3} parent=23 // pred_check
        %p357 = pneg %p208
      $region46: #{autoencoder_ex_forward.3} parent=23 // pred_check_branch
        %359 = sbr.rel (%p357) target = $region48
      $region47: #{autoencoder_ex_forward.3} parent=23 // pred_region
        %p360 = scmp.lt.s32.totalorder %s16, 3
        %s361 = scalar_select %p360, %s16, 3
        %s362 = smul.addr %s361, 8
        %s363 = scalar_lea.vmem %s7, %s362
      $region48: #{autoencoder_ex_forward.3} parent=23 // pred_fallthru
        _
      // Predicated region
      $region49: #{autoencoder_ex_forward.3} parent=23 // pred_check
        %p364 = pneg %p234
      $region50: #{autoencoder_ex_forward.3} parent=23 // pred_check_branch
        %366 = sbr.rel (%p364) target = $region52
      $region51: #{autoencoder_ex_forward.3} parent=23 // pred_region
        %p367 = scmp.lt.s32.totalorder %s16, 3
        %s368 = scalar_select %p367, %s16, 3
        %s369 = scalar_lea.vmem %s8, %s368
      $region52: #{autoencoder_ex_forward.3} parent=23 // pred_fallthru
        _
      // Predicated region
      $region53: #{autoencoder_ex_forward.3} parent=23 // pred_check
        %p370 = pneg %p260
      $region54: #{autoencoder_ex_forward.3} parent=23 // pred_check_branch
        %372 = sbr.rel (%p370) target = $region56
      $region55: #{autoencoder_ex_forward.3} parent=23 // pred_region
        %p373 = scmp.lt.s32.totalorder %s16, 3
        %s374 = scalar_select %p373, %s16, 3
        %s375 = scalar_lea.vmem %s9, %s374
      $region56: #{autoencoder_ex_forward.3} parent=23 // pred_fallthru
        _
    $region24: #{autoencoder_ex_forward.3} parent=5 // pred_fallthru
      _
    %p376 = scmp.le.s32.totalorder 1, %s16
    %p377 = scmp.lt.s32.totalorder %s16, 5
    %p378 = pnand %p376, %p377
    %p379 = pneg %p378
    // Predicated region
    $region57: #{autoencoder_ex_forward.3} parent=5 // pred_check
      _
    $region58: #{autoencoder_ex_forward.3} parent=5 // pred_check_branch
      %381 = sbr.rel (%p378) target = $region60
    $region59: #{autoencoder_ex_forward.3} parent=5 // pred_region
      %s382 = ssub.s32 %s16, 1
      %p383 = pneg %p37
      %p384 = pneg %p34
      %p385 = pneg %p58
      %p386 = pneg %p55
      %p387 = scmp.lt.s32.totalorder %s21, 3
      %s388 = scalar_select %p387, %s21, 3
      %s389 = smul.addr %s388, 6
      %s390 = smul.addr %s389, 4
      %s391 = scalar_lea.vmem %s2, %s390
      %p392 = pneg %p84
      %p393 = pneg %p81
      %p394 = scmp.lt.s32.totalorder %s21, 3
      %s395 = scalar_select %p394, %s21, 3
      %s396 = smul.addr %s395, 2
      %s397 = smul.addr %s396, 8
      %s398 = scalar_lea.vmem %s3, %s397
      %p399 = pneg %p110
      %p400 = pneg %p107
      %p401 = scmp.lt.s32.totalorder %s21, 3
      %s402 = scalar_select %p401, %s21, 3
      %s403 = smul.addr %s402, 4
      %s404 = smul.addr %s403, 4
      %s405 = scalar_lea.vmem %s4, %s404
      %p406 = pneg %p136
      %p407 = pneg %p133
      %p408 = scmp.lt.s32.totalorder %s21, 3
      %s409 = scalar_select %p408, %s21, 3
      %s410 = smul.addr %s409, 2
      %s411 = smul.addr %s410, 8
      %s412 = scalar_lea.vmem %s5, %s411
      %p413 = pneg %p162
      %p414 = pneg %p159
      %p415 = scmp.lt.s32.totalorder %s21, 3
      %s416 = scalar_select %p415, %s21, 3
      %s417 = smul.addr %s416, 2
      %s418 = smul.addr %s417, 4
      %s419 = scalar_lea.vmem %s6, %s418
      %p420 = pneg %p188
      %p421 = pneg %p185
      %p422 = scmp.lt.s32.totalorder %s21, 3
      %s423 = scalar_select %p422, %s21, 3
      %s424 = smul.addr %s423, 8
      %s425 = scalar_lea.vmem %s7, %s424
      %p426 = pneg %p214
      %p427 = pneg %p211
      %p428 = scmp.lt.s32.totalorder %s21, 3
      %s429 = scalar_select %p428, %s21, 3
      %s430 = scalar_lea.vmem %s8, %s429
      %p431 = pneg %p240
      %p432 = pneg %p237
      %p433 = scmp.lt.s32.totalorder %s21, 3
      %s434 = scalar_select %p433, %s21, 3
      %s435 = scalar_lea.vmem %s9, %s434
      %p436 = pneg %p266
      %p437 = pneg %p263
      %p438 = pneg %p292
      %p439 = pneg %p289
      %p440 = scmp.lt.s32.totalorder %s21, 3
      %s441 = scalar_select %p440, %s21, 3
      %s442 = smul.addr %s441, 6
      %s443 = scalar_lea.vmem %s10, %s442
      %p444 = scmp.lt.s32.totalorder %s21, 3
      %s445 = scalar_select %p444, %s21, 3
      %s446 = smul.addr %s445, 6
      %s447 = smul.addr %s446, 4
      %s448 = scalar_lea.vmem %s2, %s447
      %p449 = scmp.lt.s32.totalorder %s21, 3
      %s450 = scalar_select %p449, %s21, 3
      %s451 = smul.addr %s450, 2
      %s452 = smul.addr %s451, 8
      %s453 = scalar_lea.vmem %s3, %s452
      %p454 = scmp.lt.s32.totalorder %s21, 3
      %s455 = scalar_select %p454, %s21, 3
      %s456 = smul.addr %s455, 4
      %s457 = smul.addr %s456, 4
      %s458 = scalar_lea.vmem %s4, %s457
      %p459 = scmp.lt.s32.totalorder %s21, 3
      %s460 = scalar_select %p459, %s21, 3
      %s461 = smul.addr %s460, 2
      %s462 = smul.addr %s461, 8
      %s463 = scalar_lea.vmem %s5, %s462
      %p464 = scmp.lt.s32.totalorder %s21, 3
      %s465 = scalar_select %p464, %s21, 3
      %s466 = smul.addr %s465, 2
      %s467 = smul.addr %s466, 4
      %s468 = scalar_lea.vmem %s6, %s467
      %p469 = scmp.lt.s32.totalorder %s21, 3
      %s470 = scalar_select %p469, %s21, 3
      %s471 = smul.addr %s470, 8
      %s472 = scalar_lea.vmem %s7, %s471
      %p473 = scmp.lt.s32.totalorder %s21, 3
      %s474 = scalar_select %p473, %s21, 3
      %s475 = scalar_lea.vmem %s8, %s474
      %p476 = scmp.lt.s32.totalorder %s21, 3
      %s477 = scalar_select %p476, %s21, 3
      %s478 = scalar_lea.vmem %s9, %s477
      %p479 = scmp.lt.s32.totalorder %s21, 3
      %s480 = scalar_select %p479, %s21, 3
      %s481 = smul.addr %s480, 6
      %s482 = scalar_lea.vmem %s10, %s481
      %v484 = vld [vmem:[%s1] sm:$0x3f]
      %v485 = vld [vmem:[%s0] sm:$0xff]
      %v486 = vld [vmem:[%s0 + $0x8] sm:$0xff]
      %v487 = vld [vmem:[%s0 + $0x10] sm:$0xff]
      %v488 = vld [vmem:[%s0 + $0x18] sm:$0xff]
      %v489 = vld [vmem:[%s0 + $0x20] sm:$0xff]
      %v490 = vld [vmem:[%s0 + $0x28] sm:$0xff]
      %v491 = vld [vmem:[%s0 + $0x30] sm:$0xff]
      %v492 = vld [vmem:[%s0 + $0x38] sm:$0xff]
      %v493 = vld [vmem:[%s0 + $0x40] sm:$0xff]
      %v494 = vld [vmem:[%s0 + $0x48] sm:$0xff]
      %v495 = vld [vmem:[%s0 + $0x50] sm:$0xff]
      %v496 = vld [vmem:[%s0 + $0x58] sm:$0xff]
      %v497 = vld [vmem:[%s0 + $0x60] sm:$0xff]
      %v498 = vld [vmem:[%s0 + $0x68] sm:$0xff]
      %v499 = vld [vmem:[%s0 + $0x70] sm:$0xff]
      %v500 = vld [vmem:[%s0 + $0x78] sm:$0xff]
      %v501 = vld [vmem:[%s0 + $0x80] sm:$0xff]
      %v502 = vld [vmem:[%s0 + $0x88] sm:$0xff]
      %v503 = vld [vmem:[%s0 + $0x90] sm:$0xff]
      %v504 = vld [vmem:[%s0 + $0x98] sm:$0xff]
      %v505 = vld [vmem:[%s0 + $0xa0] sm:$0xff]
      %v506 = vld [vmem:[%s0 + $0xa8] sm:$0xff]
      %v507 = vld [vmem:[%s0 + $0xb0] sm:$0xff]
      %v508 = vld [vmem:[%s0 + $0xb8] sm:$0xff]
      %v509 = vld [vmem:[%s448] sm:$0xff]
      %v510 = vld [vmem:[%s448 + $0x8] sm:$0xf]
      %v511 = vld [vmem:[%s448 + $0xc] sm:$0xff]
      %v512 = vld [vmem:[%s448 + $0x14] sm:$0xf]
      %v513 = vld [vmem:[%s453] sm:$0xff]
      %v514 = vld [vmem:[%s453 + $0x8] sm:$0xff]
      %v515 = vpack.c.bf16 %v486, %v485
      %v516 = vpack.c.bf16 %v488, %v487
      %v517 = vpack.c.bf16 %v490, %v489
      %v518 = vpack.c.bf16 %v492, %v491
      %v519 = vpack.c.bf16 %v494, %v493
      %v520 = vpack.c.bf16 %v496, %v495
      %v521 = vpack.c.bf16 %v498, %v497
      %v522 = vpack.c.bf16 %v500, %v499
      %v523 = vpack.c.bf16 %v502, %v501
      %v524 = vpack.c.bf16 %v504, %v503
      %v525 = vpack.c.bf16 %v506, %v505
      %v526 = vpack.c.bf16 %v508, %v507
      %v539 = vunpack.c.l.b16 %v515
      %v540 = vunpack.c.h.b16 %v515
      %v541 = vunpack.c.l.b16 %v516
      %v542 = vunpack.c.h.b16 %v516
      %v543 = vunpack.c.l.b16 %v517
      %v544 = vunpack.c.h.b16 %v517
      %v545 = vunpack.c.l.b16 %v518
      %v546 = vunpack.c.h.b16 %v518
      %v547 = vunpack.c.l.b16 %v519
      %v548 = vunpack.c.h.b16 %v519
      %v549 = vunpack.c.l.b16 %v520
      %v550 = vunpack.c.h.b16 %v520
      %v551 = vunpack.c.l.b16 %v521
      %v552 = vunpack.c.h.b16 %v521
      %v553 = vunpack.c.l.b16 %v522
      %v554 = vunpack.c.h.b16 %v522
      %v555 = vunpack.c.l.b16 %v523
      %v556 = vunpack.c.h.b16 %v523
      %v557 = vunpack.c.l.b16 %v524
      %v558 = vunpack.c.h.b16 %v524
      %v559 = vunpack.c.l.b16 %v525
      %v560 = vunpack.c.h.b16 %v525
      %v561 = vunpack.c.l.b16 %v526
      %v562 = vunpack.c.h.b16 %v526
      %v563 = vpack.c.b16 %v545, %v539
      %v564 = vpack.c.b16 %v546, %v540
      %v565 = vpack.c.b16 %v547, %v541
      %v566 = vpack.c.b16 %v548, %v542
      %v567 = vpack.c.b16 %v549, %v543
      %v568 = vpack.c.b16 %v550, %v544
      %v569 = vpack.c.b16 %v557, %v551
      %v570 = vpack.c.b16 %v558, %v552
      %v571 = vpack.c.b16 %v559, %v553
      %v572 = vpack.c.b16 %v560, %v554
      %v573 = vpack.c.b16 %v561, %v555
      %v574 = vpack.c.b16 %v562, %v556
      %576 = vrot.lane.b32.xlu0 0, 127
      %v577 = vpop.permute.xlu0 %576
      %578 = vrot.lane.b32.xlu0 %v563, 127
      %v579 = vpop.permute.xlu0 %578
      %580 = vrot.lane.b32.xlu0 %v564, 127
      %v581 = vpop.permute.xlu0 %580
      %582 = vrot.lane.b32.xlu0 %v565, 127
      %v583 = vpop.permute.xlu0 %582
      %584 = vrot.lane.b32.xlu0 %v566, 127
      %v585 = vpop.permute.xlu0 %584
      %586 = vrot.lane.b32.xlu0 %v567, 127
      %v587 = vpop.permute.xlu0 %586
      %588 = vrot.lane.b32.xlu0 %v568, 127
      %v589 = vpop.permute.xlu0 %588
      %590 = vrot.lane.b32.xlu0 %v569, 127
      %v591 = vpop.permute.xlu0 %590
      %592 = vrot.lane.b32.xlu0 %v570, 127
      %v593 = vpop.permute.xlu0 %592
      %594 = vrot.lane.b32.xlu0 %v571, 127
      %v595 = vpop.permute.xlu0 %594
      %596 = vrot.lane.b32.xlu0 %v572, 127
      %v597 = vpop.permute.xlu0 %596
      %598 = vrot.lane.b32.xlu0 %v573, 127
      %v599 = vpop.permute.xlu0 %598
      %600 = vrot.lane.b32.xlu0 %v574, 127
      %v601 = vpop.permute.xlu0 %600
      %vm602 = vcmask 1039360
      %v603 = vsel %vm602, %v577, %v579
      %v604 = vsel %vm602, %v579, %v581
      %v605 = vsel %vm602, %v581, %v583
      %v606 = vsel %vm602, %v583, %v585
      %v607 = vsel %vm602, %v585, %v587
      %v608 = vsel %vm602, %v587, %v589
      %v609 = vsel %vm602, %v577, %v591
      %v610 = vsel %vm602, %v591, %v593
      %v611 = vsel %vm602, %v593, %v595
      %v612 = vsel %vm602, %v595, %v597
      %v613 = vsel %vm602, %v597, %v599
      %v614 = vsel %vm602, %v599, %v601
      %615 = vrot.lane.b32.xlu0 0, 126
      %v616 = vpop.permute.xlu0 %615
      %617 = vrot.lane.b32.xlu0 %v563, 126
      %v618 = vpop.permute.xlu0 %617
      %619 = vrot.lane.b32.xlu0 %v564, 126
      %v620 = vpop.permute.xlu0 %619
      %621 = vrot.lane.b32.xlu0 %v565, 126
      %v622 = vpop.permute.xlu0 %621
      %623 = vrot.lane.b32.xlu0 %v566, 126
      %v624 = vpop.permute.xlu0 %623
      %625 = vrot.lane.b32.xlu0 %v567, 126
      %v626 = vpop.permute.xlu0 %625
      %627 = vrot.lane.b32.xlu0 %v568, 126
      %v628 = vpop.permute.xlu0 %627
      %629 = vrot.lane.b32.xlu0 %v569, 126
      %v630 = vpop.permute.xlu0 %629
      %631 = vrot.lane.b32.xlu0 %v570, 126
      %v632 = vpop.permute.xlu0 %631
      %633 = vrot.lane.b32.xlu0 %v571, 126
      %v634 = vpop.permute.xlu0 %633
      %635 = vrot.lane.b32.xlu0 %v572, 126
      %v636 = vpop.permute.xlu0 %635
      %637 = vrot.lane.b32.xlu0 %v573, 126
      %v638 = vpop.permute.xlu0 %637
      %639 = vrot.lane.b32.xlu0 %v574, 126
      %v640 = vpop.permute.xlu0 %639
      %vm641 = vcmask 1031168
      %v642 = vsel %vm641, %v616, %v618
      %v643 = vsel %vm641, %v618, %v620
      %v644 = vsel %vm641, %v620, %v622
      %v645 = vsel %vm641, %v622, %v624
      %v646 = vsel %vm641, %v624, %v626
      %v647 = vsel %vm641, %v626, %v628
      %v648 = vsel %vm641, %v616, %v630
      %v649 = vsel %vm641, %v630, %v632
      %v650 = vsel %vm641, %v632, %v634
      %v651 = vsel %vm641, %v634, %v636
      %v652 = vsel %vm641, %v636, %v638
      %v653 = vsel %vm641, %v638, %v640
      %654 = vrot.lane.b32.xlu0 0, 110
      %v655 = vpop.permute.xlu0 %654
      %656 = vrot.lane.b32.xlu0 %v563, 110
      %v657 = vpop.permute.xlu0 %656
      %658 = vrot.lane.b32.xlu0 %v564, 110
      %v659 = vpop.permute.xlu0 %658
      %660 = vrot.lane.b32.xlu0 %v565, 110
      %v661 = vpop.permute.xlu0 %660
      %662 = vrot.lane.b32.xlu0 %v566, 110
      %v663 = vpop.permute.xlu0 %662
      %664 = vrot.lane.b32.xlu0 %v567, 110
      %v665 = vpop.permute.xlu0 %664
      %666 = vrot.lane.b32.xlu0 %v568, 110
      %v667 = vpop.permute.xlu0 %666
      %668 = vrot.lane.b32.xlu0 %v569, 110
      %v669 = vpop.permute.xlu0 %668
      %670 = vrot.lane.b32.xlu0 %v570, 110
      %v671 = vpop.permute.xlu0 %670
      %672 = vrot.lane.b32.xlu0 %v571, 110
      %v673 = vpop.permute.xlu0 %672
      %674 = vrot.lane.b32.xlu0 %v572, 110
      %v675 = vpop.permute.xlu0 %674
      %676 = vrot.lane.b32.xlu0 %v573, 110
      %v677 = vpop.permute.xlu0 %676
      %678 = vrot.lane.b32.xlu0 %v574, 110
      %v679 = vpop.permute.xlu0 %678
      %vm680 = vcmask 900096
      %v681 = vsel %vm680, %v655, %v657
      %v682 = vsel %vm680, %v657, %v659
      %v683 = vsel %vm680, %v659, %v661
      %v684 = vsel %vm680, %v661, %v663
      %v685 = vsel %vm680, %v663, %v665
      %v686 = vsel %vm680, %v665, %v667
      %v687 = vsel %vm680, %v655, %v669
      %v688 = vsel %vm680, %v669, %v671
      %v689 = vsel %vm680, %v671, %v673
      %v690 = vsel %vm680, %v673, %v675
      %v691 = vsel %vm680, %v675, %v677
      %v692 = vsel %vm680, %v677, %v679
      %693 = vrot.lane.b32.xlu0 %v563, 109
      %v694 = vpop.permute.xlu0 %693
      %695 = vrot.lane.b32.xlu0 %v564, 109
      %v696 = vpop.permute.xlu0 %695
      %697 = vrot.lane.b32.xlu0 %v565, 109
      %v698 = vpop.permute.xlu0 %697
      %699 = vrot.lane.b32.xlu0 %v566, 109
      %v700 = vpop.permute.xlu0 %699
      %701 = vrot.lane.b32.xlu0 %v567, 109
      %v702 = vpop.permute.xlu0 %701
      %703 = vrot.lane.b32.xlu0 %v568, 109
      %v704 = vpop.permute.xlu0 %703
      %705 = vrot.lane.b32.xlu0 %v569, 109
      %v706 = vpop.permute.xlu0 %705
      %707 = vrot.lane.b32.xlu0 %v570, 109
      %v708 = vpop.permute.xlu0 %707
      %709 = vrot.lane.b32.xlu0 %v571, 109
      %v710 = vpop.permute.xlu0 %709
      %711 = vrot.lane.b32.xlu0 %v572, 109
      %v712 = vpop.permute.xlu0 %711
      %713 = vrot.lane.b32.xlu0 %v573, 109
      %v714 = vpop.permute.xlu0 %713
      %715 = vrot.lane.b32.xlu0 %v574, 109
      %v716 = vpop.permute.xlu0 %715
      %vm717 = vcmask 891904
      %v718 = vsel %vm717, %v694, %v696
      %v719 = vsel %vm717, %v696, %v698
      %v720 = vsel %vm717, %v698, %v700
      %v721 = vsel %vm717, %v700, %v702
      %v722 = vsel %vm717, %v702, %v704
      %v723 = vsel %vm717, %v706, %v708
      %v724 = vsel %vm717, %v708, %v710
      %v725 = vsel %vm717, %v710, %v712
      %v726 = vsel %vm717, %v712, %v714
      %v727 = vsel %vm717, %v714, %v716
      %728 = vrot.lane.b32.xlu0 %v563, 108
      %v729 = vpop.permute.xlu0 %728
      %730 = vrot.lane.b32.xlu0 %v564, 108
      %v731 = vpop.permute.xlu0 %730
      %732 = vrot.lane.b32.xlu0 %v565, 108
      %v733 = vpop.permute.xlu0 %732
      %734 = vrot.lane.b32.xlu0 %v566, 108
      %v735 = vpop.permute.xlu0 %734
      %736 = vrot.lane.b32.xlu0 %v567, 108
      %v737 = vpop.permute.xlu0 %736
      %738 = vrot.lane.b32.xlu0 %v568, 108
      %v739 = vpop.permute.xlu0 %738
      %740 = vrot.lane.b32.xlu0 0, 108
      %v741 = vpop.permute.xlu0 %740
      %742 = vrot.lane.b32.xlu0 %v569, 108
      %v743 = vpop.permute.xlu0 %742
      %744 = vrot.lane.b32.xlu0 %v570, 108
      %v745 = vpop.permute.xlu0 %744
      %746 = vrot.lane.b32.xlu0 %v571, 108
      %v747 = vpop.permute.xlu0 %746
      %748 = vrot.lane.b32.xlu0 %v572, 108
      %v749 = vpop.permute.xlu0 %748
      %750 = vrot.lane.b32.xlu0 %v573, 108
      %v751 = vpop.permute.xlu0 %750
      %752 = vrot.lane.b32.xlu0 %v574, 108
      %v753 = vpop.permute.xlu0 %752
      %vm754 = vcmask 883712
      %v755 = vsel %vm754, %v729, %v731
      %v756 = vsel %vm754, %v731, %v733
      %v757 = vsel %vm754, %v733, %v735
      %v758 = vsel %vm754, %v735, %v737
      %v759 = vsel %vm754, %v737, %v739
      %v760 = vsel %vm754, %v739, %v741
      %v761 = vsel %vm754, %v743, %v745
      %v762 = vsel %vm754, %v745, %v747
      %v763 = vsel %vm754, %v747, %v749
      %v764 = vsel %vm754, %v749, %v751
      %v765 = vsel %vm754, %v751, %v753
      %v766 = vsel %vm754, %v753, %v741
      %767 = vrot.lane.b32.xlu0 %v563, 92
      %v768 = vpop.permute.xlu0 %767
      %769 = vrot.lane.b32.xlu0 %v564, 92
      %v770 = vpop.permute.xlu0 %769
      %771 = vrot.lane.b32.xlu0 %v565, 92
      %v772 = vpop.permute.xlu0 %771
      %773 = vrot.lane.b32.xlu0 %v566, 92
      %v774 = vpop.permute.xlu0 %773
      %775 = vrot.lane.b32.xlu0 %v567, 92
      %v776 = vpop.permute.xlu0 %775
      %777 = vrot.lane.b32.xlu0 %v568, 92
      %v778 = vpop.permute.xlu0 %777
      %779 = vrot.lane.b32.xlu0 0, 92
      %v780 = vpop.permute.xlu0 %779
      %781 = vrot.lane.b32.xlu0 %v569, 92
      %v782 = vpop.permute.xlu0 %781
      %783 = vrot.lane.b32.xlu0 %v570, 92
      %v784 = vpop.permute.xlu0 %783
      %785 = vrot.lane.b32.xlu0 %v571, 92
      %v786 = vpop.permute.xlu0 %785
      %787 = vrot.lane.b32.xlu0 %v572, 92
      %v788 = vpop.permute.xlu0 %787
      %789 = vrot.lane.b32.xlu0 %v573, 92
      %v790 = vpop.permute.xlu0 %789
      %791 = vrot.lane.b32.xlu0 %v574, 92
      %v792 = vpop.permute.xlu0 %791
      %vm793 = vcmask 752640
      %v794 = vsel %vm793, %v768, %v770
      %v795 = vsel %vm793, %v770, %v772
      %v796 = vsel %vm793, %v772, %v774
      %v797 = vsel %vm793, %v774, %v776
      %v798 = vsel %vm793, %v776, %v778
      %v799 = vsel %vm793, %v778, %v780
      %v800 = vsel %vm793, %v782, %v784
      %v801 = vsel %vm793, %v784, %v786
      %v802 = vsel %vm793, %v786, %v788
      %v803 = vsel %vm793, %v788, %v790
      %v804 = vsel %vm793, %v790, %v792
      %v805 = vsel %vm793, %v792, %v780
      %806 = vrot.lane.b32.xlu0 %v563, 91
      %v807 = vpop.permute.xlu0 %806
      %808 = vrot.lane.b32.xlu0 %v564, 91
      %v809 = vpop.permute.xlu0 %808
      %810 = vrot.lane.b32.xlu0 %v565, 91
      %v811 = vpop.permute.xlu0 %810
      %812 = vrot.lane.b32.xlu0 %v566, 91
      %v813 = vpop.permute.xlu0 %812
      %814 = vrot.lane.b32.xlu0 %v567, 91
      %v815 = vpop.permute.xlu0 %814
      %816 = vrot.lane.b32.xlu0 %v568, 91
      %v817 = vpop.permute.xlu0 %816
      %818 = vrot.lane.b32.xlu0 0, 91
      %v819 = vpop.permute.xlu0 %818
      %820 = vrot.lane.b32.xlu0 %v569, 91
      %v821 = vpop.permute.xlu0 %820
      %822 = vrot.lane.b32.xlu0 %v570, 91
      %v823 = vpop.permute.xlu0 %822
      %824 = vrot.lane.b32.xlu0 %v571, 91
      %v825 = vpop.permute.xlu0 %824
      %826 = vrot.lane.b32.xlu0 %v572, 91
      %v827 = vpop.permute.xlu0 %826
      %828 = vrot.lane.b32.xlu0 %v573, 91
      %v829 = vpop.permute.xlu0 %828
      %830 = vrot.lane.b32.xlu0 %v574, 91
      %v831 = vpop.permute.xlu0 %830
      %vm832 = vcmask 744448
      %v833 = vsel %vm832, %v807, %v809
      %v834 = vsel %vm832, %v809, %v811
      %v835 = vsel %vm832, %v811, %v813
      %v836 = vsel %vm832, %v813, %v815
      %v837 = vsel %vm832, %v815, %v817
      %v838 = vsel %vm832, %v817, %v819
      %v839 = vsel %vm832, %v821, %v823
      %v840 = vsel %vm832, %v823, %v825
      %v841 = vsel %vm832, %v825, %v827
      %v842 = vsel %vm832, %v827, %v829
      %v843 = vsel %vm832, %v829, %v831
      %v844 = vsel %vm832, %v831, %v819
      %845 = vrot.lane.b32.xlu0 %v563, 90
      %v846 = vpop.permute.xlu0 %845
      %847 = vrot.lane.b32.xlu0 %v564, 90
      %v848 = vpop.permute.xlu0 %847
      %849 = vrot.lane.b32.xlu0 %v565, 90
      %v850 = vpop.permute.xlu0 %849
      %851 = vrot.lane.b32.xlu0 %v566, 90
      %v852 = vpop.permute.xlu0 %851
      %853 = vrot.lane.b32.xlu0 %v567, 90
      %v854 = vpop.permute.xlu0 %853
      %855 = vrot.lane.b32.xlu0 %v568, 90
      %v856 = vpop.permute.xlu0 %855
      %857 = vrot.lane.b32.xlu0 0, 90
      %v858 = vpop.permute.xlu0 %857
      %859 = vrot.lane.b32.xlu0 %v569, 90
      %v860 = vpop.permute.xlu0 %859
      %861 = vrot.lane.b32.xlu0 %v570, 90
      %v862 = vpop.permute.xlu0 %861
      %863 = vrot.lane.b32.xlu0 %v571, 90
      %v864 = vpop.permute.xlu0 %863
      %865 = vrot.lane.b32.xlu0 %v572, 90
      %v866 = vpop.permute.xlu0 %865
      %867 = vrot.lane.b32.xlu0 %v573, 90
      %v868 = vpop.permute.xlu0 %867
      %869 = vrot.lane.b32.xlu0 %v574, 90
      %v870 = vpop.permute.xlu0 %869
      %vm871 = vcmask 736256
      %v872 = vsel %vm871, %v846, %v848
      %v873 = vsel %vm871, %v848, %v850
      %v874 = vsel %vm871, %v850, %v852
      %v875 = vsel %vm871, %v852, %v854
      %v876 = vsel %vm871, %v854, %v856
      %v877 = vsel %vm871, %v856, %v858
      %v878 = vsel %vm871, %v860, %v862
      %v879 = vsel %vm871, %v862, %v864
      %v880 = vsel %vm871, %v864, %v866
      %v881 = vsel %vm871, %v866, %v868
      %v882 = vsel %vm871, %v868, %v870
      %v883 = vsel %vm871, %v870, %v858
      %885 = vset.pattern.permute.xlu0 0
      %886 = vperm.xlu0 %885, %v513
      %v887 = vpop.permute.xlu0 %886
      %890 = vset.pattern.permute.xlu0 0
      %891 = vperm.xlu0 %890, %v514
      %v892 = vpop.permute.xlu0 %891
      %v898 = vunpack.c.l.b16 %v509
      %v899 = vunpack.c.h.b16 %v509
      %v900 = vunpack.c.l.b16 %v510
      %v901 = vunpack.c.l.b16 %v511
      %v902 = vunpack.c.h.b16 %v511
      %v903 = vunpack.c.l.b16 %v512
      %v904 = vpack.c.b16 %v901, %v898
      %v905 = vpack.c.b16 %v902, %v899
      %v906 = vpack.c.b16 %v903, %v900
      %909 = vrot.lane.b32.xlu0 0, 19
      %v910 = vpop.permute.xlu0 %909
      %911 = vrot.lane.b32.xlu0 %v563, 19
      %v912 = vpop.permute.xlu0 %911
      %913 = vrot.lane.b32.xlu0 %v564, 19
      %v914 = vpop.permute.xlu0 %913
      %915 = vrot.lane.b32.xlu0 %v565, 19
      %v916 = vpop.permute.xlu0 %915
      %917 = vrot.lane.b32.xlu0 %v566, 19
      %v918 = vpop.permute.xlu0 %917
      %919 = vrot.lane.b32.xlu0 %v567, 19
      %v920 = vpop.permute.xlu0 %919
      %921 = vrot.lane.b32.xlu0 %v568, 19
      %v922 = vpop.permute.xlu0 %921
      %923 = vrot.lane.b32.xlu0 %v569, 19
      %v924 = vpop.permute.xlu0 %923
      %925 = vrot.lane.b32.xlu0 %v570, 19
      %v926 = vpop.permute.xlu0 %925
      %927 = vrot.lane.b32.xlu0 %v571, 19
      %v928 = vpop.permute.xlu0 %927
      %929 = vrot.lane.b32.xlu0 %v572, 19
      %v930 = vpop.permute.xlu0 %929
      %931 = vrot.lane.b32.xlu0 %v573, 19
      %v932 = vpop.permute.xlu0 %931
      %933 = vrot.lane.b32.xlu0 %v574, 19
      %v934 = vpop.permute.xlu0 %933
      %935 = vrot.lane.b32.xlu0 %v603, 19
      %v936 = vpop.permute.xlu0 %935
      %937 = vrot.lane.b32.xlu0 %v604, 19
      %v938 = vpop.permute.xlu0 %937
      %939 = vrot.lane.b32.xlu0 %v605, 19
      %v940 = vpop.permute.xlu0 %939
      %941 = vrot.lane.b32.xlu0 %v606, 19
      %v942 = vpop.permute.xlu0 %941
      %943 = vrot.lane.b32.xlu0 %v607, 19
      %v944 = vpop.permute.xlu0 %943
      %945 = vrot.lane.b32.xlu0 %v608, 19
      %v946 = vpop.permute.xlu0 %945
      %947 = vrot.lane.b32.xlu0 %v589, 19
      %v948 = vpop.permute.xlu0 %947
      %949 = vrot.lane.b32.xlu0 %v609, 19
      %v950 = vpop.permute.xlu0 %949
      %951 = vrot.lane.b32.xlu0 %v610, 19
      %v952 = vpop.permute.xlu0 %951
      %953 = vrot.lane.b32.xlu0 %v611, 19
      %v954 = vpop.permute.xlu0 %953
      %955 = vrot.lane.b32.xlu0 %v612, 19
      %v956 = vpop.permute.xlu0 %955
      %957 = vrot.lane.b32.xlu0 %v613, 19
      %v958 = vpop.permute.xlu0 %957
      %959 = vrot.lane.b32.xlu0 %v614, 19
      %v960 = vpop.permute.xlu0 %959
      %961 = vrot.lane.b32.xlu0 %v601, 19
      %v962 = vpop.permute.xlu0 %961
      %963 = vrot.lane.b32.xlu0 %v642, 19
      %v964 = vpop.permute.xlu0 %963
      %965 = vrot.lane.b32.xlu0 %v643, 19
      %v966 = vpop.permute.xlu0 %965
      %967 = vrot.lane.b32.xlu0 %v644, 19
      %v968 = vpop.permute.xlu0 %967
      %969 = vrot.lane.b32.xlu0 %v645, 19
      %v970 = vpop.permute.xlu0 %969
      %971 = vrot.lane.b32.xlu0 %v646, 19
      %v972 = vpop.permute.xlu0 %971
      %973 = vrot.lane.b32.xlu0 %v647, 19
      %v974 = vpop.permute.xlu0 %973
      %975 = vrot.lane.b32.xlu0 %v628, 19
      %v976 = vpop.permute.xlu0 %975
      %977 = vrot.lane.b32.xlu0 %v648, 19
      %v978 = vpop.permute.xlu0 %977
      %979 = vrot.lane.b32.xlu0 %v649, 19
      %v980 = vpop.permute.xlu0 %979
      %981 = vrot.lane.b32.xlu0 %v650, 19
      %v982 = vpop.permute.xlu0 %981
      %983 = vrot.lane.b32.xlu0 %v651, 19
      %v984 = vpop.permute.xlu0 %983
      %985 = vrot.lane.b32.xlu0 %v652, 19
      %v986 = vpop.permute.xlu0 %985
      %987 = vrot.lane.b32.xlu0 %v653, 19
      %v988 = vpop.permute.xlu0 %987
      %989 = vrot.lane.b32.xlu0 %v640, 19
      %v990 = vpop.permute.xlu0 %989
      %991 = vrot.lane.b32.xlu0 %v681, 19
      %v992 = vpop.permute.xlu0 %991
      %993 = vrot.lane.b32.xlu0 %v682, 19
      %v994 = vpop.permute.xlu0 %993
      %995 = vrot.lane.b32.xlu0 %v683, 19
      %v996 = vpop.permute.xlu0 %995
      %997 = vrot.lane.b32.xlu0 %v684, 19
      %v998 = vpop.permute.xlu0 %997
      %999 = vrot.lane.b32.xlu0 %v685, 19
      %v1000 = vpop.permute.xlu0 %999
      %1001 = vrot.lane.b32.xlu0 %v686, 19
      %v1002 = vpop.permute.xlu0 %1001
      %1003 = vrot.lane.b32.xlu0 %v667, 19
      %v1004 = vpop.permute.xlu0 %1003
      %1005 = vrot.lane.b32.xlu0 %v687, 19
      %v1006 = vpop.permute.xlu0 %1005
      %1007 = vrot.lane.b32.xlu0 %v688, 19
      %v1008 = vpop.permute.xlu0 %1007
      %1009 = vrot.lane.b32.xlu0 %v689, 19
      %v1010 = vpop.permute.xlu0 %1009
      %1011 = vrot.lane.b32.xlu0 %v690, 19
      %v1012 = vpop.permute.xlu0 %1011
      %1013 = vrot.lane.b32.xlu0 %v691, 19
      %v1014 = vpop.permute.xlu0 %1013
      %1015 = vrot.lane.b32.xlu0 %v692, 19
      %v1016 = vpop.permute.xlu0 %1015
      %1017 = vrot.lane.b32.xlu0 %v679, 19
      %v1018 = vpop.permute.xlu0 %1017
      %1019 = vrot.lane.b32.xlu0 %v694, 19
      %v1020 = vpop.permute.xlu0 %1019
      %1021 = vrot.lane.b32.xlu0 %v718, 19
      %v1022 = vpop.permute.xlu0 %1021
      %1023 = vrot.lane.b32.xlu0 %v719, 19
      %v1024 = vpop.permute.xlu0 %1023
      %1025 = vrot.lane.b32.xlu0 %v720, 19
      %v1026 = vpop.permute.xlu0 %1025
      %1027 = vrot.lane.b32.xlu0 %v721, 19
      %v1028 = vpop.permute.xlu0 %1027
      %1029 = vrot.lane.b32.xlu0 %v722, 19
      %v1030 = vpop.permute.xlu0 %1029
      %1031 = vrot.lane.b32.xlu0 %v704, 19
      %v1032 = vpop.permute.xlu0 %1031
      %1033 = vrot.lane.b32.xlu0 %v706, 19
      %v1034 = vpop.permute.xlu0 %1033
      %1035 = vrot.lane.b32.xlu0 %v723, 19
      %v1036 = vpop.permute.xlu0 %1035
      %1037 = vrot.lane.b32.xlu0 %v724, 19
      %v1038 = vpop.permute.xlu0 %1037
      %1039 = vrot.lane.b32.xlu0 %v725, 19
      %v1040 = vpop.permute.xlu0 %1039
      %1041 = vrot.lane.b32.xlu0 %v726, 19
      %v1042 = vpop.permute.xlu0 %1041
      %1043 = vrot.lane.b32.xlu0 %v727, 19
      %v1044 = vpop.permute.xlu0 %1043
      %1045 = vrot.lane.b32.xlu0 %v716, 19
      %v1046 = vpop.permute.xlu0 %1045
      %1047 = vrot.lane.b32.xlu0 %v729, 19
      %v1048 = vpop.permute.xlu0 %1047
      %1049 = vrot.lane.b32.xlu0 %v755, 19
      %v1050 = vpop.permute.xlu0 %1049
      %1051 = vrot.lane.b32.xlu0 %v756, 19
      %v1052 = vpop.permute.xlu0 %1051
      %1053 = vrot.lane.b32.xlu0 %v757, 19
      %v1054 = vpop.permute.xlu0 %1053
      %1055 = vrot.lane.b32.xlu0 %v758, 19
      %v1056 = vpop.permute.xlu0 %1055
      %1057 = vrot.lane.b32.xlu0 %v759, 19
      %v1058 = vpop.permute.xlu0 %1057
      %1059 = vrot.lane.b32.xlu0 %v760, 19
      %v1060 = vpop.permute.xlu0 %1059
      %1061 = vrot.lane.b32.xlu0 %v743, 19
      %v1062 = vpop.permute.xlu0 %1061
      %1063 = vrot.lane.b32.xlu0 %v761, 19
      %v1064 = vpop.permute.xlu0 %1063
      %1065 = vrot.lane.b32.xlu0 %v762, 19
      %v1066 = vpop.permute.xlu0 %1065
      %1067 = vrot.lane.b32.xlu0 %v763, 19
      %v1068 = vpop.permute.xlu0 %1067
      %1069 = vrot.lane.b32.xlu0 %v764, 19
      %v1070 = vpop.permute.xlu0 %1069
      %1071 = vrot.lane.b32.xlu0 %v765, 19
      %v1072 = vpop.permute.xlu0 %1071
      %1073 = vrot.lane.b32.xlu0 %v766, 19
      %v1074 = vpop.permute.xlu0 %1073
      %1075 = vrot.lane.b32.xlu0 %v768, 19
      %v1076 = vpop.permute.xlu0 %1075
      %1077 = vrot.lane.b32.xlu0 %v794, 19
      %v1078 = vpop.permute.xlu0 %1077
      %1079 = vrot.lane.b32.xlu0 %v795, 19
      %v1080 = vpop.permute.xlu0 %1079
      %1081 = vrot.lane.b32.xlu0 %v796, 19
      %v1082 = vpop.permute.xlu0 %1081
      %1083 = vrot.lane.b32.xlu0 %v797, 19
      %v1084 = vpop.permute.xlu0 %1083
      %1085 = vrot.lane.b32.xlu0 %v798, 19
      %v1086 = vpop.permute.xlu0 %1085
      %1087 = vrot.lane.b32.xlu0 %v799, 19
      %v1088 = vpop.permute.xlu0 %1087
      %1089 = vrot.lane.b32.xlu0 %v782, 19
      %v1090 = vpop.permute.xlu0 %1089
      %1091 = vrot.lane.b32.xlu0 %v800, 19
      %v1092 = vpop.permute.xlu0 %1091
      %1093 = vrot.lane.b32.xlu0 %v801, 19
      %v1094 = vpop.permute.xlu0 %1093
      %1095 = vrot.lane.b32.xlu0 %v802, 19
      %v1096 = vpop.permute.xlu0 %1095
      %1097 = vrot.lane.b32.xlu0 %v803, 19
      %v1098 = vpop.permute.xlu0 %1097
      %1099 = vrot.lane.b32.xlu0 %v804, 19
      %v1100 = vpop.permute.xlu0 %1099
      %1101 = vrot.lane.b32.xlu0 %v805, 19
      %v1102 = vpop.permute.xlu0 %1101
      %1103 = vrot.lane.b32.xlu0 %v807, 19
      %v1104 = vpop.permute.xlu0 %1103
      %1105 = vrot.lane.b32.xlu0 %v833, 19
      %v1106 = vpop.permute.xlu0 %1105
      %1107 = vrot.lane.b32.xlu0 %v834, 19
      %v1108 = vpop.permute.xlu0 %1107
      %1109 = vrot.lane.b32.xlu0 %v835, 19
      %v1110 = vpop.permute.xlu0 %1109
      %1111 = vrot.lane.b32.xlu0 %v836, 19
      %v1112 = vpop.permute.xlu0 %1111
      %1113 = vrot.lane.b32.xlu0 %v837, 19
      %v1114 = vpop.permute.xlu0 %1113
      %1115 = vrot.lane.b32.xlu0 %v838, 19
      %v1116 = vpop.permute.xlu0 %1115
      %1117 = vrot.lane.b32.xlu0 %v821, 19
      %v1118 = vpop.permute.xlu0 %1117
      %1119 = vrot.lane.b32.xlu0 %v839, 19
      %v1120 = vpop.permute.xlu0 %1119
      %1121 = vrot.lane.b32.xlu0 %v840, 19
      %v1122 = vpop.permute.xlu0 %1121
      %1123 = vrot.lane.b32.xlu0 %v841, 19
      %v1124 = vpop.permute.xlu0 %1123
      %1125 = vrot.lane.b32.xlu0 %v842, 19
      %v1126 = vpop.permute.xlu0 %1125
      %1127 = vrot.lane.b32.xlu0 %v843, 19
      %v1128 = vpop.permute.xlu0 %1127
      %1129 = vrot.lane.b32.xlu0 %v844, 19
      %v1130 = vpop.permute.xlu0 %1129
      %1131 = vrot.lane.b32.xlu0 %v846, 19
      %v1132 = vpop.permute.xlu0 %1131
      %1133 = vrot.lane.b32.xlu0 %v872, 19
      %v1134 = vpop.permute.xlu0 %1133
      %1135 = vrot.lane.b32.xlu0 %v873, 19
      %v1136 = vpop.permute.xlu0 %1135
      %1137 = vrot.lane.b32.xlu0 %v874, 19
      %v1138 = vpop.permute.xlu0 %1137
      %1139 = vrot.lane.b32.xlu0 %v875, 19
      %v1140 = vpop.permute.xlu0 %1139
      %1141 = vrot.lane.b32.xlu0 %v876, 19
      %v1142 = vpop.permute.xlu0 %1141
      %1143 = vrot.lane.b32.xlu0 %v877, 19
      %v1144 = vpop.permute.xlu0 %1143
      %1145 = vrot.lane.b32.xlu0 %v860, 19
      %v1146 = vpop.permute.xlu0 %1145
      %1147 = vrot.lane.b32.xlu0 %v878, 19
      %v1148 = vpop.permute.xlu0 %1147
      %1149 = vrot.lane.b32.xlu0 %v879, 19
      %v1150 = vpop.permute.xlu0 %1149
      %1151 = vrot.lane.b32.xlu0 %v880, 19
      %v1152 = vpop.permute.xlu0 %1151
      %1153 = vrot.lane.b32.xlu0 %v881, 19
      %v1154 = vpop.permute.xlu0 %1153
      %1155 = vrot.lane.b32.xlu0 %v882, 19
      %v1156 = vpop.permute.xlu0 %1155
      %1157 = vrot.lane.b32.xlu0 %v883, 19
      %v1158 = vpop.permute.xlu0 %1157
      %vm1159 = vcmask 154624
      %v1160 = vsel %vm1159, %v910, %v912
      %v1161 = vsel %vm1159, %v912, %v914
      %v1162 = vsel %vm1159, %v914, %v916
      %v1163 = vsel %vm1159, %v916, %v918
      %v1164 = vsel %vm1159, %v918, %v920
      %v1165 = vsel %vm1159, %v920, %v922
      %v1166 = vsel %vm1159, %v910, %v924
      %v1167 = vsel %vm1159, %v924, %v926
      %v1168 = vsel %vm1159, %v926, %v928
      %v1169 = vsel %vm1159, %v928, %v930
      %v1170 = vsel %vm1159, %v930, %v932
      %v1171 = vsel %vm1159, %v932, %v934
      %v1172 = vsel %vm1159, %v936, %v938
      %v1173 = vsel %vm1159, %v938, %v940
      %v1174 = vsel %vm1159, %v940, %v942
      %v1175 = vsel %vm1159, %v942, %v944
      %v1176 = vsel %vm1159, %v944, %v946
      %v1177 = vsel %vm1159, %v946, %v948
      %v1178 = vsel %vm1159, %v950, %v952
      %v1179 = vsel %vm1159, %v952, %v954
      %v1180 = vsel %vm1159, %v954, %v956
      %v1181 = vsel %vm1159, %v956, %v958
      %v1182 = vsel %vm1159, %v958, %v960
      %v1183 = vsel %vm1159, %v960, %v962
      %v1184 = vsel %vm1159, %v964, %v966
      %v1185 = vsel %vm1159, %v966, %v968
      %v1186 = vsel %vm1159, %v968, %v970
      %v1187 = vsel %vm1159, %v970, %v972
      %v1188 = vsel %vm1159, %v972, %v974
      %v1189 = vsel %vm1159, %v974, %v976
      %v1190 = vsel %vm1159, %v978, %v980
      %v1191 = vsel %vm1159, %v980, %v982
      %v1192 = vsel %vm1159, %v982, %v984
      %v1193 = vsel %vm1159, %v984, %v986
      %v1194 = vsel %vm1159, %v986, %v988
      %v1195 = vsel %vm1159, %v988, %v990
      %v1196 = vsel %vm1159, %v992, %v994
      %v1197 = vsel %vm1159, %v994, %v996
      %v1198 = vsel %vm1159, %v996, %v998
      %v1199 = vsel %vm1159, %v998, %v1000
      %v1200 = vsel %vm1159, %v1000, %v1002
      %v1201 = vsel %vm1159, %v1002, %v1004
      %v1202 = vsel %vm1159, %v1006, %v1008
      %v1203 = vsel %vm1159, %v1008, %v1010
      %v1204 = vsel %vm1159, %v1010, %v1012
      %v1205 = vsel %vm1159, %v1012, %v1014
      %v1206 = vsel %vm1159, %v1014, %v1016
      %v1207 = vsel %vm1159, %v1016, %v1018
      %v1208 = vsel %vm1159, %v1020, %v1022
      %v1209 = vsel %vm1159, %v1022, %v1024
      %v1210 = vsel %vm1159, %v1024, %v1026
      %v1211 = vsel %vm1159, %v1026, %v1028
      %v1212 = vsel %vm1159, %v1028, %v1030
      %v1213 = vsel %vm1159, %v1030, %v1032
      %v1214 = vsel %vm1159, %v1034, %v1036
      %v1215 = vsel %vm1159, %v1036, %v1038
      %v1216 = vsel %vm1159, %v1038, %v1040
      %v1217 = vsel %vm1159, %v1040, %v1042
      %v1218 = vsel %vm1159, %v1042, %v1044
      %v1219 = vsel %vm1159, %v1044, %v1046
      %v1220 = vsel %vm1159, %v1048, %v1050
      %v1221 = vsel %vm1159, %v1050, %v1052
      %v1222 = vsel %vm1159, %v1052, %v1054
      %v1223 = vsel %vm1159, %v1054, %v1056
      %v1224 = vsel %vm1159, %v1056, %v1058
      %v1225 = vsel %vm1159, %v1058, %v1060
      %v1226 = vsel %vm1159, %v1062, %v1064
      %v1227 = vsel %vm1159, %v1064, %v1066
      %v1228 = vsel %vm1159, %v1066, %v1068
      %v1229 = vsel %vm1159, %v1068, %v1070
      %v1230 = vsel %vm1159, %v1070, %v1072
      %v1231 = vsel %vm1159, %v1072, %v1074
      %v1232 = vsel %vm1159, %v1076, %v1078
      %v1233 = vsel %vm1159, %v1078, %v1080
      %v1234 = vsel %vm1159, %v1080, %v1082
      %v1235 = vsel %vm1159, %v1082, %v1084
      %v1236 = vsel %vm1159, %v1084, %v1086
      %v1237 = vsel %vm1159, %v1086, %v1088
      %v1238 = vsel %vm1159, %v1090, %v1092
      %v1239 = vsel %vm1159, %v1092, %v1094
      %v1240 = vsel %vm1159, %v1094, %v1096
      %v1241 = vsel %vm1159, %v1096, %v1098
      %v1242 = vsel %vm1159, %v1098, %v1100
      %v1243 = vsel %vm1159, %v1100, %v1102
      %v1244 = vsel %vm1159, %v1104, %v1106
      %v1245 = vsel %vm1159, %v1106, %v1108
      %v1246 = vsel %vm1159, %v1108, %v1110
      %v1247 = vsel %vm1159, %v1110, %v1112
      %v1248 = vsel %vm1159, %v1112, %v1114
      %v1249 = vsel %vm1159, %v1114, %v1116
      %v1250 = vsel %vm1159, %v1118, %v1120
      %v1251 = vsel %vm1159, %v1120, %v1122
      %v1252 = vsel %vm1159, %v1122, %v1124
      %v1253 = vsel %vm1159, %v1124, %v1126
      %v1254 = vsel %vm1159, %v1126, %v1128
      %v1255 = vsel %vm1159, %v1128, %v1130
      %v1256 = vsel %vm1159, %v1132, %v1134
      %v1257 = vsel %vm1159, %v1134, %v1136
      %v1258 = vsel %vm1159, %v1136, %v1138
      %v1259 = vsel %vm1159, %v1138, %v1140
      %v1260 = vsel %vm1159, %v1140, %v1142
      %v1261 = vsel %vm1159, %v1142, %v1144
      %v1262 = vsel %vm1159, %v1146, %v1148
      %v1263 = vsel %vm1159, %v1148, %v1150
      %v1264 = vsel %vm1159, %v1150, %v1152
      %v1265 = vsel %vm1159, %v1152, %v1154
      %v1266 = vsel %vm1159, %v1154, %v1156
      %v1267 = vsel %vm1159, %v1156, %v1158
      %vm1376 = vcmask 261120
      %v1378 = vsel %vm1376, %v906, 0
      %1380 = vmatpush.bf16.msra.mxu0 %v1202
      %1381 = vmatpush.bf16.msra.mxu0 %v1196
      %1382 = vmatpush.bf16.msra.mxu0 %v1190
      %1383 = vmatpush.bf16.msra.mxu0 %v1184
      %1384 = vmatpush.bf16.msra.mxu0 %v1178
      %1385 = vmatpush.bf16.msra.mxu0 %v1172
      %1386 = vmatpush.bf16.msra.mxu0 %v1166
      %1387 = vmatpush.bf16.msra.mxu0 %v1160
      %1388 = vmatmul.bf16.gmra.mxu0 %v904
      %v1389 = vpop.f32.mrf.mxu0
      %v1390 = vadd.f32 %v887, %v1389
      %v1391 = vpop.f32.mrf.mxu0
      %v1392 = vadd.f32 %v892, %v1391
      %1393 = vdwg.mxu0
      %1394 = vmatpush.bf16.msra.mxu0 %v1250
      %1395 = vmatpush.bf16.msra.mxu0 %v1244
      %1396 = vmatpush.bf16.msra.mxu0 %v1238
      %1397 = vmatpush.bf16.msra.mxu0 %v1232
      %1398 = vmatpush.bf16.msra.mxu0 %v1226
      %1399 = vmatpush.bf16.msra.mxu0 %v1220
      %1400 = vmatpush.bf16.msra.mxu0 %v1214
      %1401 = vmatpush.bf16.msra.mxu0 %v1208
      %1402 = vmatmul.bf16.gmra.mxu0 %v905
      %v1403 = vpop.f32.mrf.mxu0
      %v1404 = vadd.f32 %v1390, %v1403
      %v1405 = vpop.f32.mrf.mxu0
      %v1406 = vadd.f32 %v1392, %v1405
      %1407 = vdwg.mxu0
      %1408 = vmatpush.bf16.msra.mxu0 0
      %1409 = vmatpush.bf16.msra.mxu0 0
      %1410 = vmatpush.bf16.msra.mxu0 0
      %1411 = vmatpush.bf16.msra.mxu0 0
      %1412 = vmatpush.bf16.msra.mxu0 0
      %1413 = vmatpush.bf16.msra.mxu0 0
      %1414 = vmatpush.bf16.msra.mxu0 %v1262
      %1415 = vmatpush.bf16.msra.mxu0 %v1256
      %1416 = vmatmul.bf16.gmra.mxu0 %v1378
      %v1417 = vpop.f32.mrf.mxu0
      %v1418 = vadd.f32 %v1404, %v1417
      %v1419 = vpop.f32.mrf.mxu0
      %v1420 = vadd.f32 %v1406, %v1419
      %1421 = vdwg.mxu0
      %1422 = vmatpush.bf16.msra.mxu0 %v1203
      %1423 = vmatpush.bf16.msra.mxu0 %v1197
      %1424 = vmatpush.bf16.msra.mxu0 %v1191
      %1425 = vmatpush.bf16.msra.mxu0 %v1185
      %1426 = vmatpush.bf16.msra.mxu0 %v1179
      %1427 = vmatpush.bf16.msra.mxu0 %v1173
      %1428 = vmatpush.bf16.msra.mxu0 %v1167
      %1429 = vmatpush.bf16.msra.mxu0 %v1161
      %1430 = vmatmul.bf16.gmra.mxu0 %v904
      %v1431 = vpop.f32.mrf.mxu0
      %v1432 = vadd.f32 %v887, %v1431
      %v1433 = vpop.f32.mrf.mxu0
      %v1434 = vadd.f32 %v892, %v1433
      %1435 = vdwg.mxu0
      %1436 = vmatpush.bf16.msra.mxu0 %v1251
      %1437 = vmatpush.bf16.msra.mxu0 %v1245
      %1438 = vmatpush.bf16.msra.mxu0 %v1239
      %1439 = vmatpush.bf16.msra.mxu0 %v1233
      %1440 = vmatpush.bf16.msra.mxu0 %v1227
      %1441 = vmatpush.bf16.msra.mxu0 %v1221
      %1442 = vmatpush.bf16.msra.mxu0 %v1215
      %1443 = vmatpush.bf16.msra.mxu0 %v1209
      %1444 = vmatmul.bf16.gmra.mxu0 %v905
      %v1445 = vpop.f32.mrf.mxu0
      %v1446 = vadd.f32 %v1432, %v1445
      %v1447 = vpop.f32.mrf.mxu0
      %v1448 = vadd.f32 %v1434, %v1447
      %1449 = vdwg.mxu0
      %1450 = vmatpush.bf16.msra.mxu0 0
      %1451 = vmatpush.bf16.msra.mxu0 0
      %1452 = vmatpush.bf16.msra.mxu0 0
      %1453 = vmatpush.bf16.msra.mxu0 0
      %1454 = vmatpush.bf16.msra.mxu0 0
      %1455 = vmatpush.bf16.msra.mxu0 0
      %1456 = vmatpush.bf16.msra.mxu0 %v1263
      %1457 = vmatpush.bf16.msra.mxu0 %v1257
      %1458 = vmatmul.bf16.gmra.mxu0 %v1378
      %v1459 = vpop.f32.mrf.mxu0
      %v1460 = vadd.f32 %v1446, %v1459
      %v1461 = vpop.f32.mrf.mxu0
      %v1462 = vadd.f32 %v1448, %v1461
      %1463 = vdwg.mxu0
      %1464 = vmatpush.bf16.msra.mxu0 %v1204
      %1465 = vmatpush.bf16.msra.mxu0 %v1198
      %1466 = vmatpush.bf16.msra.mxu0 %v1192
      %1467 = vmatpush.bf16.msra.mxu0 %v1186
      %1468 = vmatpush.bf16.msra.mxu0 %v1180
      %1469 = vmatpush.bf16.msra.mxu0 %v1174
      %1470 = vmatpush.bf16.msra.mxu0 %v1168
      %1471 = vmatpush.bf16.msra.mxu0 %v1162
      %1472 = vmatmul.bf16.gmra.mxu0 %v904
      %v1473 = vpop.f32.mrf.mxu0
      %v1474 = vadd.f32 %v887, %v1473
      %v1475 = vpop.f32.mrf.mxu0
      %v1476 = vadd.f32 %v892, %v1475
      %1477 = vdwg.mxu0
      %1478 = vmatpush.bf16.msra.mxu0 %v1252
      %1479 = vmatpush.bf16.msra.mxu0 %v1246
      %1480 = vmatpush.bf16.msra.mxu0 %v1240
      %1481 = vmatpush.bf16.msra.mxu0 %v1234
      %1482 = vmatpush.bf16.msra.mxu0 %v1228
      %1483 = vmatpush.bf16.msra.mxu0 %v1222
      %1484 = vmatpush.bf16.msra.mxu0 %v1216
      %1485 = vmatpush.bf16.msra.mxu0 %v1210
      %1486 = vmatmul.bf16.gmra.mxu0 %v905
      %v1487 = vpop.f32.mrf.mxu0
      %v1488 = vadd.f32 %v1474, %v1487
      %v1489 = vpop.f32.mrf.mxu0
      %v1490 = vadd.f32 %v1476, %v1489
      %1491 = vdwg.mxu0
      %1492 = vmatpush.bf16.msra.mxu0 0
      %1493 = vmatpush.bf16.msra.mxu0 0
      %1494 = vmatpush.bf16.msra.mxu0 0
      %1495 = vmatpush.bf16.msra.mxu0 0
      %1496 = vmatpush.bf16.msra.mxu0 0
      %1497 = vmatpush.bf16.msra.mxu0 0
      %1498 = vmatpush.bf16.msra.mxu0 %v1264
      %1499 = vmatpush.bf16.msra.mxu0 %v1258
      %1500 = vmatmul.bf16.gmra.mxu0 %v1378
      %v1501 = vpop.f32.mrf.mxu0
      %v1502 = vadd.f32 %v1488, %v1501
      %v1503 = vpop.f32.mrf.mxu0
      %v1504 = vadd.f32 %v1490, %v1503
      %1505 = vdwg.mxu0
      %1506 = vmatpush.bf16.msra.mxu0 %v1205
      %1507 = vmatpush.bf16.msra.mxu0 %v1199
      %1508 = vmatpush.bf16.msra.mxu0 %v1193
      %1509 = vmatpush.bf16.msra.mxu0 %v1187
      %1510 = vmatpush.bf16.msra.mxu0 %v1181
      %1511 = vmatpush.bf16.msra.mxu0 %v1175
      %1512 = vmatpush.bf16.msra.mxu0 %v1169
      %1513 = vmatpush.bf16.msra.mxu0 %v1163
      %1514 = vmatmul.bf16.gmra.mxu0 %v904
      %v1515 = vpop.f32.mrf.mxu0
      %v1516 = vadd.f32 %v887, %v1515
      %v1517 = vpop.f32.mrf.mxu0
      %v1518 = vadd.f32 %v892, %v1517
      %1519 = vdwg.mxu0
      %1520 = vmatpush.bf16.msra.mxu0 %v1253
      %1521 = vmatpush.bf16.msra.mxu0 %v1247
      %1522 = vmatpush.bf16.msra.mxu0 %v1241
      %1523 = vmatpush.bf16.msra.mxu0 %v1235
      %1524 = vmatpush.bf16.msra.mxu0 %v1229
      %1525 = vmatpush.bf16.msra.mxu0 %v1223
      %1526 = vmatpush.bf16.msra.mxu0 %v1217
      %1527 = vmatpush.bf16.msra.mxu0 %v1211
      %1528 = vmatmul.bf16.gmra.mxu0 %v905
      %v1529 = vpop.f32.mrf.mxu0
      %v1530 = vadd.f32 %v1516, %v1529
      %v1531 = vpop.f32.mrf.mxu0
      %v1532 = vadd.f32 %v1518, %v1531
      %1533 = vdwg.mxu0
      %1534 = vmatpush.bf16.msra.mxu0 0
      %1535 = vmatpush.bf16.msra.mxu0 0
      %1536 = vmatpush.bf16.msra.mxu0 0
      %1537 = vmatpush.bf16.msra.mxu0 0
      %1538 = vmatpush.bf16.msra.mxu0 0
      %1539 = vmatpush.bf16.msra.mxu0 0
      %1540 = vmatpush.bf16.msra.mxu0 %v1265
      %1541 = vmatpush.bf16.msra.mxu0 %v1259
      %1542 = vmatmul.bf16.gmra.mxu0 %v1378
      %v1543 = vpop.f32.mrf.mxu0
      %v1544 = vadd.f32 %v1530, %v1543
      %v1545 = vpop.f32.mrf.mxu0
      %v1546 = vadd.f32 %v1532, %v1545
      %1547 = vdwg.mxu0
      %1548 = vmatpush.bf16.msra.mxu0 %v1206
      %1549 = vmatpush.bf16.msra.mxu0 %v1200
      %1550 = vmatpush.bf16.msra.mxu0 %v1194
      %1551 = vmatpush.bf16.msra.mxu0 %v1188
      %1552 = vmatpush.bf16.msra.mxu0 %v1182
      %1553 = vmatpush.bf16.msra.mxu0 %v1176
      %1554 = vmatpush.bf16.msra.mxu0 %v1170
      %1555 = vmatpush.bf16.msra.mxu0 %v1164
      %1556 = vmatmul.bf16.gmra.mxu0 %v904
      %v1557 = vpop.f32.mrf.mxu0
      %v1558 = vadd.f32 %v887, %v1557
      %v1559 = vpop.f32.mrf.mxu0
      %v1560 = vadd.f32 %v892, %v1559
      %1561 = vdwg.mxu0
      %1562 = vmatpush.bf16.msra.mxu0 %v1254
      %1563 = vmatpush.bf16.msra.mxu0 %v1248
      %1564 = vmatpush.bf16.msra.mxu0 %v1242
      %1565 = vmatpush.bf16.msra.mxu0 %v1236
      %1566 = vmatpush.bf16.msra.mxu0 %v1230
      %1567 = vmatpush.bf16.msra.mxu0 %v1224
      %1568 = vmatpush.bf16.msra.mxu0 %v1218
      %1569 = vmatpush.bf16.msra.mxu0 %v1212
      %1570 = vmatmul.bf16.gmra.mxu0 %v905
      %v1571 = vpop.f32.mrf.mxu0
      %v1572 = vadd.f32 %v1558, %v1571
      %v1573 = vpop.f32.mrf.mxu0
      %v1574 = vadd.f32 %v1560, %v1573
      %1575 = vdwg.mxu0
      %1576 = vmatpush.bf16.msra.mxu0 0
      %1577 = vmatpush.bf16.msra.mxu0 0
      %1578 = vmatpush.bf16.msra.mxu0 0
      %1579 = vmatpush.bf16.msra.mxu0 0
      %1580 = vmatpush.bf16.msra.mxu0 0
      %1581 = vmatpush.bf16.msra.mxu0 0
      %1582 = vmatpush.bf16.msra.mxu0 %v1266
      %1583 = vmatpush.bf16.msra.mxu0 %v1260
      %1584 = vmatmul.bf16.gmra.mxu0 %v1378
      %v1585 = vpop.f32.mrf.mxu0
      %v1586 = vadd.f32 %v1572, %v1585
      %v1587 = vpop.f32.mrf.mxu0
      %v1588 = vadd.f32 %v1574, %v1587
      %1589 = vdwg.mxu0
      %1590 = vmatpush.bf16.msra.mxu0 %v1207
      %1591 = vmatpush.bf16.msra.mxu0 %v1201
      %1592 = vmatpush.bf16.msra.mxu0 %v1195
      %1593 = vmatpush.bf16.msra.mxu0 %v1189
      %1594 = vmatpush.bf16.msra.mxu0 %v1183
      %1595 = vmatpush.bf16.msra.mxu0 %v1177
      %1596 = vmatpush.bf16.msra.mxu0 %v1171
      %1597 = vmatpush.bf16.msra.mxu0 %v1165
      %1598 = vmatmul.bf16.gmra.mxu0 %v904
      %v1599 = vpop.f32.mrf.mxu0
      %v1600 = vadd.f32 %v887, %v1599
      %v1601 = vpop.f32.mrf.mxu0
      %v1602 = vadd.f32 %v892, %v1601
      %1603 = vdwg.mxu0
      %1604 = vmatpush.bf16.msra.mxu0 %v1255
      %1605 = vmatpush.bf16.msra.mxu0 %v1249
      %1606 = vmatpush.bf16.msra.mxu0 %v1243
      %1607 = vmatpush.bf16.msra.mxu0 %v1237
      %1608 = vmatpush.bf16.msra.mxu0 %v1231
      %1609 = vmatpush.bf16.msra.mxu0 %v1225
      %1610 = vmatpush.bf16.msra.mxu0 %v1219
      %1611 = vmatpush.bf16.msra.mxu0 %v1213
      %1612 = vmatmul.bf16.gmra.mxu0 %v905
      %v1613 = vpop.f32.mrf.mxu0
      %v1614 = vadd.f32 %v1600, %v1613
      %v1615 = vpop.f32.mrf.mxu0
      %v1616 = vadd.f32 %v1602, %v1615
      %1617 = vdwg.mxu0
      %1618 = vmatpush.bf16.msra.mxu0 0
      %1619 = vmatpush.bf16.msra.mxu0 0
      %1620 = vmatpush.bf16.msra.mxu0 0
      %1621 = vmatpush.bf16.msra.mxu0 0
      %1622 = vmatpush.bf16.msra.mxu0 0
      %1623 = vmatpush.bf16.msra.mxu0 0
      %1624 = vmatpush.bf16.msra.mxu0 %v1267
      %1625 = vmatpush.bf16.msra.mxu0 %v1261
      %1626 = vmatmul.bf16.gmra.mxu0 %v1378
      %v1627 = vpop.f32.mrf.mxu0
      %v1628 = vadd.f32 %v1614, %v1627
      %v1629 = vpop.f32.mrf.mxu0
      %v1630 = vadd.f32 %v1616, %v1629
      %1631 = vdwg.mxu0
      %v1632 = vmax.f32 %v1418, 0.0
      %v1633 = vmax.f32 %v1460, 0.0
      %v1634 = vmax.f32 %v1502, 0.0
      %v1635 = vmax.f32 %v1544, 0.0
      %v1636 = vmax.f32 %v1586, 0.0
      %v1637 = vmax.f32 %v1628, 0.0
      %v1638 = vmax.f32 %v1420, 0.0
      %v1639 = vmax.f32 %v1462, 0.0
      %v1640 = vmax.f32 %v1504, 0.0
      %v1641 = vmax.f32 %v1546, 0.0
      %v1642 = vmax.f32 %v1588, 0.0
      %v1643 = vmax.f32 %v1630, 0.0
      %v1645 = vperm.slane %v484, 0
      %v1646 = vperm.slane %v484, 1
      %v1647 = vperm.slane %v484, 2
      %v1648 = vperm.slane %v484, 3
      %v1649 = vperm.slane %v484, 4
      %v1650 = vperm.slane %v484, 5
      %v1657 = vmul.f32 %v1632, %v1645
      %v1658 = vmul.f32 %v1633, %v1646
      %v1659 = vmul.f32 %v1634, %v1647
      %v1660 = vmul.f32 %v1635, %v1648
      %v1661 = vmul.f32 %v1636, %v1649
      %v1662 = vmul.f32 %v1637, %v1650
      %v1663 = vmul.f32 %v1638, %v1645
      %v1664 = vmul.f32 %v1639, %v1646
      %v1665 = vmul.f32 %v1640, %v1647
      %v1666 = vmul.f32 %v1641, %v1648
      %v1667 = vmul.f32 %v1642, %v1649
      %v1668 = vmul.f32 %v1643, %v1650
      %v1669 = vadd.f32 %v1657, %v1658
      %v1670 = vadd.f32 %v1669, %v1659
      %v1671 = vadd.f32 %v1670, %v1660
      %v1672 = vadd.f32 %v1671, %v1661
      %v1673 = vadd.f32 %v1672, %v1662
      %1674 = vadd.xlane.f32.xlu0 %v1673
      %v1675 = vpop.xlane.xlu0 %1674
      %v1676 = vadd.f32 %v1663, %v1664
      %v1677 = vadd.f32 %v1676, %v1665
      %v1678 = vadd.f32 %v1677, %v1666
      %v1679 = vadd.f32 %v1678, %v1667
      %v1680 = vadd.f32 %v1679, %v1668
      %1681 = vadd.xlane.f32.xlu0 %v1680
      %v1682 = vpop.xlane.xlu0 %1681
      %v1683 = vmul.f32 %v1675, 0.001953125
      %v1684 = vmul.f32 %v1682, 0.001953125
      %v1685 = vsub.f32 %v1632, %v1683
      %v1686 = vsub.f32 %v1633, %v1683
      %v1687 = vsub.f32 %v1634, %v1683
      %v1688 = vsub.f32 %v1635, %v1683
      %v1689 = vsub.f32 %v1636, %v1683
      %v1690 = vsub.f32 %v1637, %v1683
      %v1691 = vsub.f32 %v1638, %v1684
      %v1692 = vsub.f32 %v1639, %v1684
      %v1693 = vsub.f32 %v1640, %v1684
      %v1694 = vsub.f32 %v1641, %v1684
      %v1695 = vsub.f32 %v1642, %v1684
      %v1696 = vsub.f32 %v1643, %v1684
      %v1697 = vmul.f32 %v1685, %v1645
      %v1698 = vmul.f32 %v1686, %v1646
      %v1699 = vmul.f32 %v1687, %v1647
      %v1700 = vmul.f32 %v1688, %v1648
      %v1701 = vmul.f32 %v1689, %v1649
      %v1702 = vmul.f32 %v1690, %v1650
      %v1703 = vmul.f32 %v1691, %v1645
      %v1704 = vmul.f32 %v1692, %v1646
      %v1705 = vmul.f32 %v1693, %v1647
      %v1706 = vmul.f32 %v1694, %v1648
      %v1707 = vmul.f32 %v1695, %v1649
      %v1708 = vmul.f32 %v1696, %v1650
      %v1709 = vmul.f32 %v1697, %v1697
      %v1710 = vmul.f32 %v1698, %v1698
      %v1711 = vmul.f32 %v1699, %v1699
      %v1712 = vmul.f32 %v1700, %v1700
      %v1713 = vmul.f32 %v1701, %v1701
      %v1714 = vmul.f32 %v1702, %v1702
      %v1715 = vmul.f32 %v1703, %v1703
      %v1716 = vmul.f32 %v1704, %v1704
      %v1717 = vmul.f32 %v1705, %v1705
      %v1718 = vmul.f32 %v1706, %v1706
      %v1719 = vmul.f32 %v1707, %v1707
      %v1720 = vmul.f32 %v1708, %v1708
      %v1721 = vadd.f32 %v1709, %v1710
      %v1722 = vadd.f32 %v1721, %v1711
      %v1723 = vadd.f32 %v1722, %v1712
      %v1724 = vadd.f32 %v1723, %v1713
      %v1725 = vadd.f32 %v1724, %v1714
      %1726 = vadd.xlane.f32.xlu0 %v1725
      %v1727 = vpop.xlane.xlu0 %1726
      %v1728 = vadd.f32 %v1715, %v1716
      %v1729 = vadd.f32 %v1728, %v1717
      %v1730 = vadd.f32 %v1729, %v1718
      %v1731 = vadd.f32 %v1730, %v1719
      %v1732 = vadd.f32 %v1731, %v1720
      %1733 = vadd.xlane.f32.xlu0 %v1732
      %v1734 = vpop.xlane.xlu0 %1733
      %v1735 = vmul.f32 %v1727, 0.001953125
      %v1736 = vmul.f32 %v1734, 0.001953125
      %v1737 = vadd.f32 %v1735, 1e-05
      %v1738 = vadd.f32 %v1736, 1e-05
      %v1739 = vrsqrt.pop %v1737
      %v1740 = vmul.f32 %v1739, %v1737
      %v1741 = vmul.f32 %v1740, %v1739
      %v1742 = vmul.f32 0.5, %v1741
      %v1743 = vsub.f32 1.5, %v1742
      %v1744 = vmul.f32 %v1739, %v1743
      %vm1745 = vweird.f32 %v1737
      %vm1746 = vweird.f32 %v1739
      %vm1747 = vmor %vm1745, %vm1746
      %v1748 = vsel %vm1747, %v1739, %v1744
      %v1749 = vrsqrt.pop %v1738
      %v1750 = vmul.f32 %v1749, %v1738
      %v1751 = vmul.f32 %v1750, %v1749
      %v1752 = vmul.f32 0.5, %v1751
      %v1753 = vsub.f32 1.5, %v1752
      %v1754 = vmul.f32 %v1749, %v1753
      %vm1755 = vweird.f32 %v1738
      %vm1756 = vweird.f32 %v1749
      %vm1757 = vmor %vm1755, %vm1756
      %v1758 = vsel %vm1757, %v1749, %v1754
      %v1759 = vmul.f32 %v513, %v1748
      %v1760 = vmul.f32 %v514, %v1758
      %v1761 = vmul.f32 %v1683, %v1759
      %v1762 = vmul.f32 %v1684, %v1760
      %1765 = vrot.lane.b32.xlu0 %v1761, 1
      %v1766 = vpop.permute.xlu0 %1765
      %1767 = vrot.lane.b32.xlu0 %v1762, 1
      %v1768 = vpop.permute.xlu0 %1767
      %v1771 = vsub.f32 %v513, %v1766
      %v1772 = vsub.f32 %v514, %v1768
      %1774 = vset.pattern.permute.xlu0 1
      %1775 = vperm.xlu0 %1774, %v1759
      %v1776 = vpop.permute.xlu0 %1775
      %1779 = vset.pattern.permute.xlu0 1
      %1780 = vperm.xlu0 %1779, %v1760
      %v1781 = vpop.permute.xlu0 %1780
      %v1783 = vmul.f32 %v1632, %v1776
      %v1784 = vmul.f32 %v1633, %v1776
      %v1785 = vmul.f32 %v1634, %v1776
      %v1786 = vmul.f32 %v1635, %v1776
      %v1787 = vmul.f32 %v1636, %v1776
      %v1788 = vmul.f32 %v1637, %v1776
      %v1789 = vmul.f32 %v1638, %v1781
      %v1790 = vmul.f32 %v1639, %v1781
      %v1791 = vmul.f32 %v1640, %v1781
      %v1792 = vmul.f32 %v1641, %v1781
      %v1793 = vmul.f32 %v1642, %v1781
      %v1794 = vmul.f32 %v1643, %v1781
      %1796 = vset.pattern.permute.xlu0 2
      %1797 = vperm.xlu0 %1796, %v1771
      %v1798 = vpop.permute.xlu0 %1797
      %1801 = vset.pattern.permute.xlu0 2
      %1802 = vperm.xlu0 %1801, %v1772
      %v1803 = vpop.permute.xlu0 %1802
      %v1805 = vadd.f32 %v1783, %v1798
      %v1806 = vadd.f32 %v1784, %v1798
      %v1807 = vadd.f32 %v1785, %v1798
      %v1808 = vadd.f32 %v1786, %v1798
      %v1809 = vadd.f32 %v1787, %v1798
      %v1810 = vadd.f32 %v1788, %v1798
      %v1811 = vadd.f32 %v1789, %v1803
      %v1812 = vadd.f32 %v1790, %v1803
      %v1813 = vadd.f32 %v1791, %v1803
      %v1814 = vadd.f32 %v1792, %v1803
      %v1815 = vadd.f32 %v1793, %v1803
      %v1816 = vadd.f32 %v1794, %v1803
      %v1817 = vmul.f32 %v1805, %v1645
      %v1818 = vmul.f32 %v1806, %v1646
      %v1819 = vmul.f32 %v1807, %v1647
      %v1820 = vmul.f32 %v1808, %v1648
      %v1821 = vmul.f32 %v1809, %v1649
      %v1822 = vmul.f32 %v1810, %v1650
      %v1823 = vmul.f32 %v1811, %v1645
      %v1824 = vmul.f32 %v1812, %v1646
      %v1825 = vmul.f32 %v1813, %v1647
      %v1826 = vmul.f32 %v1814, %v1648
      %v1827 = vmul.f32 %v1815, %v1649
      %v1828 = vmul.f32 %v1816, %v1650
      %v1829 = vld [vmem:[%s458] sm:$0xff]
      %v1830 = vld [vmem:[%s458 + $0x8] sm:$0xff]
      %v1831 = vld [vmem:[%s463] sm:$0xff]
      %v1832 = vld [vmem:[%s463 + $0x8] sm:$0xff]
      %v1833 = vpack.c.bf16 %v1818, %v1817
      %v1834 = vpack.c.bf16 %v1820, %v1819
      %v1835 = vpack.c.bf16 %v1822, %v1821
      %v1836 = vpack.c.bf16 %v1824, %v1823
      %v1837 = vpack.c.bf16 %v1826, %v1825
      %v1838 = vpack.c.bf16 %v1828, %v1827
      %v1845 = vunpack.c.l.b16 %v1833
      %v1846 = vunpack.c.h.b16 %v1833
      %v1847 = vunpack.c.l.b16 %v1834
      %v1848 = vunpack.c.h.b16 %v1834
      %v1849 = vunpack.c.l.b16 %v1835
      %v1850 = vunpack.c.h.b16 %v1835
      %v1851 = vunpack.c.l.b16 %v1836
      %v1852 = vunpack.c.h.b16 %v1836
      %v1853 = vunpack.c.l.b16 %v1837
      %v1854 = vunpack.c.h.b16 %v1837
      %v1855 = vunpack.c.l.b16 %v1838
      %v1856 = vunpack.c.h.b16 %v1838
      %v1857 = vpack.c.b16 %v1851, %v1845
      %v1858 = vpack.c.b16 %v1852, %v1846
      %v1859 = vpack.c.b16 %v1853, %v1847
      %v1860 = vpack.c.b16 %v1854, %v1848
      %v1861 = vpack.c.b16 %v1855, %v1849
      %v1862 = vpack.c.b16 %v1856, %v1850
      %1863 = vrot.lane.b32.xlu0 %v1857, 127
      %v1864 = vpop.permute.xlu0 %1863
      %1865 = vrot.lane.b32.xlu0 %v1858, 127
      %v1866 = vpop.permute.xlu0 %1865
      %1867 = vrot.lane.b32.xlu0 %v1859, 127
      %v1868 = vpop.permute.xlu0 %1867
      %1869 = vrot.lane.b32.xlu0 %v1860, 127
      %v1870 = vpop.permute.xlu0 %1869
      %1871 = vrot.lane.b32.xlu0 %v1861, 127
      %v1872 = vpop.permute.xlu0 %1871
      %1873 = vrot.lane.b32.xlu0 %v1862, 127
      %v1874 = vpop.permute.xlu0 %1873
      %v1875 = vsel %vm602, %v577, %v1864
      %v1876 = vsel %vm602, %v1864, %v1866
      %v1877 = vsel %vm602, %v1866, %v1868
      %v1878 = vsel %vm602, %v1868, %v1870
      %v1879 = vsel %vm602, %v1870, %v1872
      %v1880 = vsel %vm602, %v1872, %v1874
      %1881 = vrot.lane.b32.xlu0 %v1857, 126
      %v1882 = vpop.permute.xlu0 %1881
      %1883 = vrot.lane.b32.xlu0 %v1858, 126
      %v1884 = vpop.permute.xlu0 %1883
      %1885 = vrot.lane.b32.xlu0 %v1859, 126
      %v1886 = vpop.permute.xlu0 %1885
      %1887 = vrot.lane.b32.xlu0 %v1860, 126
      %v1888 = vpop.permute.xlu0 %1887
      %1889 = vrot.lane.b32.xlu0 %v1861, 126
      %v1890 = vpop.permute.xlu0 %1889
      %1891 = vrot.lane.b32.xlu0 %v1862, 126
      %v1892 = vpop.permute.xlu0 %1891
      %v1893 = vsel %vm641, %v616, %v1882
      %v1894 = vsel %vm641, %v1882, %v1884
      %v1895 = vsel %vm641, %v1884, %v1886
      %v1896 = vsel %vm641, %v1886, %v1888
      %v1897 = vsel %vm641, %v1888, %v1890
      %v1898 = vsel %vm641, %v1890, %v1892
      %1899 = vrot.lane.b32.xlu0 %v1857, 110
      %v1900 = vpop.permute.xlu0 %1899
      %1901 = vrot.lane.b32.xlu0 %v1858, 110
      %v1902 = vpop.permute.xlu0 %1901
      %1903 = vrot.lane.b32.xlu0 %v1859, 110
      %v1904 = vpop.permute.xlu0 %1903
      %1905 = vrot.lane.b32.xlu0 %v1860, 110
      %v1906 = vpop.permute.xlu0 %1905
      %1907 = vrot.lane.b32.xlu0 %v1861, 110
      %v1908 = vpop.permute.xlu0 %1907
      %1909 = vrot.lane.b32.xlu0 %v1862, 110
      %v1910 = vpop.permute.xlu0 %1909
      %v1911 = vsel %vm680, %v655, %v1900
      %v1912 = vsel %vm680, %v1900, %v1902
      %v1913 = vsel %vm680, %v1902, %v1904
      %v1914 = vsel %vm680, %v1904, %v1906
      %v1915 = vsel %vm680, %v1906, %v1908
      %v1916 = vsel %vm680, %v1908, %v1910
      %1917 = vrot.lane.b32.xlu0 %v1857, 109
      %v1918 = vpop.permute.xlu0 %1917
      %1919 = vrot.lane.b32.xlu0 %v1858, 109
      %v1920 = vpop.permute.xlu0 %1919
      %1921 = vrot.lane.b32.xlu0 %v1859, 109
      %v1922 = vpop.permute.xlu0 %1921
      %1923 = vrot.lane.b32.xlu0 %v1860, 109
      %v1924 = vpop.permute.xlu0 %1923
      %1925 = vrot.lane.b32.xlu0 %v1861, 109
      %v1926 = vpop.permute.xlu0 %1925
      %1927 = vrot.lane.b32.xlu0 %v1862, 109
      %v1928 = vpop.permute.xlu0 %1927
      %v1929 = vsel %vm717, %v1918, %v1920
      %v1930 = vsel %vm717, %v1920, %v1922
      %v1931 = vsel %vm717, %v1922, %v1924
      %v1932 = vsel %vm717, %v1924, %v1926
      %v1933 = vsel %vm717, %v1926, %v1928
      %1934 = vrot.lane.b32.xlu0 %v1857, 108
      %v1935 = vpop.permute.xlu0 %1934
      %1936 = vrot.lane.b32.xlu0 %v1858, 108
      %v1937 = vpop.permute.xlu0 %1936
      %1938 = vrot.lane.b32.xlu0 %v1859, 108
      %v1939 = vpop.permute.xlu0 %1938
      %1940 = vrot.lane.b32.xlu0 %v1860, 108
      %v1941 = vpop.permute.xlu0 %1940
      %1942 = vrot.lane.b32.xlu0 %v1861, 108
      %v1943 = vpop.permute.xlu0 %1942
      %1944 = vrot.lane.b32.xlu0 %v1862, 108
      %v1945 = vpop.permute.xlu0 %1944
      %v1946 = vsel %vm754, %v1935, %v1937
      %v1947 = vsel %vm754, %v1937, %v1939
      %v1948 = vsel %vm754, %v1939, %v1941
      %v1949 = vsel %vm754, %v1941, %v1943
      %v1950 = vsel %vm754, %v1943, %v1945
      %v1951 = vsel %vm754, %v1945, %v741
      %1952 = vrot.lane.b32.xlu0 %v1857, 92
      %v1953 = vpop.permute.xlu0 %1952
      %1954 = vrot.lane.b32.xlu0 %v1858, 92
      %v1955 = vpop.permute.xlu0 %1954
      %1956 = vrot.lane.b32.xlu0 %v1859, 92
      %v1957 = vpop.permute.xlu0 %1956
      %1958 = vrot.lane.b32.xlu0 %v1860, 92
      %v1959 = vpop.permute.xlu0 %1958
      %1960 = vrot.lane.b32.xlu0 %v1861, 92
      %v1961 = vpop.permute.xlu0 %1960
      %1962 = vrot.lane.b32.xlu0 %v1862, 92
      %v1963 = vpop.permute.xlu0 %1962
      %v1964 = vsel %vm793, %v1953, %v1955
      %v1965 = vsel %vm793, %v1955, %v1957
      %v1966 = vsel %vm793, %v1957, %v1959
      %v1967 = vsel %vm793, %v1959, %v1961
      %v1968 = vsel %vm793, %v1961, %v1963
      %v1969 = vsel %vm793, %v1963, %v780
      %1970 = vrot.lane.b32.xlu0 %v1857, 91
      %v1971 = vpop.permute.xlu0 %1970
      %1972 = vrot.lane.b32.xlu0 %v1858, 91
      %v1973 = vpop.permute.xlu0 %1972
      %1974 = vrot.lane.b32.xlu0 %v1859, 91
      %v1975 = vpop.permute.xlu0 %1974
      %1976 = vrot.lane.b32.xlu0 %v1860, 91
      %v1977 = vpop.permute.xlu0 %1976
      %1978 = vrot.lane.b32.xlu0 %v1861, 91
      %v1979 = vpop.permute.xlu0 %1978
      %1980 = vrot.lane.b32.xlu0 %v1862, 91
      %v1981 = vpop.permute.xlu0 %1980
      %v1982 = vsel %vm832, %v1971, %v1973
      %v1983 = vsel %vm832, %v1973, %v1975
      %v1984 = vsel %vm832, %v1975, %v1977
      %v1985 = vsel %vm832, %v1977, %v1979
      %v1986 = vsel %vm832, %v1979, %v1981
      %v1987 = vsel %vm832, %v1981, %v819
      %1988 = vrot.lane.b32.xlu0 %v1857, 90
      %v1989 = vpop.permute.xlu0 %1988
      %1990 = vrot.lane.b32.xlu0 %v1858, 90
      %v1991 = vpop.permute.xlu0 %1990
      %1992 = vrot.lane.b32.xlu0 %v1859, 90
      %v1993 = vpop.permute.xlu0 %1992
      %1994 = vrot.lane.b32.xlu0 %v1860, 90
      %v1995 = vpop.permute.xlu0 %1994
      %1996 = vrot.lane.b32.xlu0 %v1861, 90
      %v1997 = vpop.permute.xlu0 %1996
      %1998 = vrot.lane.b32.xlu0 %v1862, 90
      %v1999 = vpop.permute.xlu0 %1998
      %v2000 = vsel %vm871, %v1989, %v1991
      %v2001 = vsel %vm871, %v1991, %v1993
      %v2002 = vsel %vm871, %v1993, %v1995
      %v2003 = vsel %vm871, %v1995, %v1997
      %v2004 = vsel %vm871, %v1997, %v1999
      %v2005 = vsel %vm871, %v1999, %v858
      %2007 = vset.pattern.permute.xlu0 0
      %2008 = vperm.xlu0 %2007, %v1831
      %v2009 = vpop.permute.xlu0 %2008
      %2012 = vset.pattern.permute.xlu0 0
      %2013 = vperm.xlu0 %2012, %v1832
      %v2014 = vpop.permute.xlu0 %2013
      %v2018 = vunpack.c.l.b16 %v1829
      %v2019 = vunpack.c.h.b16 %v1829
      %v2020 = vunpack.c.l.b16 %v1830
      %v2021 = vunpack.c.h.b16 %v1830
      %v2022 = vpack.c.b16 %v2020, %v2018
      %v2023 = vpack.c.b16 %v2021, %v2019
      %2025 = vrot.lane.b32.xlu0 %v1857, 19
      %v2026 = vpop.permute.xlu0 %2025
      %2027 = vrot.lane.b32.xlu0 %v1858, 19
      %v2028 = vpop.permute.xlu0 %2027
      %2029 = vrot.lane.b32.xlu0 %v1859, 19
      %v2030 = vpop.permute.xlu0 %2029
      %2031 = vrot.lane.b32.xlu0 %v1860, 19
      %v2032 = vpop.permute.xlu0 %2031
      %2033 = vrot.lane.b32.xlu0 %v1861, 19
      %v2034 = vpop.permute.xlu0 %2033
      %2035 = vrot.lane.b32.xlu0 %v1862, 19
      %v2036 = vpop.permute.xlu0 %2035
      %2037 = vrot.lane.b32.xlu0 %v1875, 19
      %v2038 = vpop.permute.xlu0 %2037
      %2039 = vrot.lane.b32.xlu0 %v1876, 19
      %v2040 = vpop.permute.xlu0 %2039
      %2041 = vrot.lane.b32.xlu0 %v1877, 19
      %v2042 = vpop.permute.xlu0 %2041
      %2043 = vrot.lane.b32.xlu0 %v1878, 19
      %v2044 = vpop.permute.xlu0 %2043
      %2045 = vrot.lane.b32.xlu0 %v1879, 19
      %v2046 = vpop.permute.xlu0 %2045
      %2047 = vrot.lane.b32.xlu0 %v1880, 19
      %v2048 = vpop.permute.xlu0 %2047
      %2049 = vrot.lane.b32.xlu0 %v1874, 19
      %v2050 = vpop.permute.xlu0 %2049
      %2051 = vrot.lane.b32.xlu0 %v1893, 19
      %v2052 = vpop.permute.xlu0 %2051
      %2053 = vrot.lane.b32.xlu0 %v1894, 19
      %v2054 = vpop.permute.xlu0 %2053
      %2055 = vrot.lane.b32.xlu0 %v1895, 19
      %v2056 = vpop.permute.xlu0 %2055
      %2057 = vrot.lane.b32.xlu0 %v1896, 19
      %v2058 = vpop.permute.xlu0 %2057
      %2059 = vrot.lane.b32.xlu0 %v1897, 19
      %v2060 = vpop.permute.xlu0 %2059
      %2061 = vrot.lane.b32.xlu0 %v1898, 19
      %v2062 = vpop.permute.xlu0 %2061
      %2063 = vrot.lane.b32.xlu0 %v1892, 19
      %v2064 = vpop.permute.xlu0 %2063
      %2065 = vrot.lane.b32.xlu0 %v1911, 19
      %v2066 = vpop.permute.xlu0 %2065
      %2067 = vrot.lane.b32.xlu0 %v1912, 19
      %v2068 = vpop.permute.xlu0 %2067
      %2069 = vrot.lane.b32.xlu0 %v1913, 19
      %v2070 = vpop.permute.xlu0 %2069
      %2071 = vrot.lane.b32.xlu0 %v1914, 19
      %v2072 = vpop.permute.xlu0 %2071
      %2073 = vrot.lane.b32.xlu0 %v1915, 19
      %v2074 = vpop.permute.xlu0 %2073
      %2075 = vrot.lane.b32.xlu0 %v1916, 19
      %v2076 = vpop.permute.xlu0 %2075
      %2077 = vrot.lane.b32.xlu0 %v1910, 19
      %v2078 = vpop.permute.xlu0 %2077
      %2079 = vrot.lane.b32.xlu0 %v1918, 19
      %v2080 = vpop.permute.xlu0 %2079
      %2081 = vrot.lane.b32.xlu0 %v1929, 19
      %v2082 = vpop.permute.xlu0 %2081
      %2083 = vrot.lane.b32.xlu0 %v1930, 19
      %v2084 = vpop.permute.xlu0 %2083
      %2085 = vrot.lane.b32.xlu0 %v1931, 19
      %v2086 = vpop.permute.xlu0 %2085
      %2087 = vrot.lane.b32.xlu0 %v1932, 19
      %v2088 = vpop.permute.xlu0 %2087
      %2089 = vrot.lane.b32.xlu0 %v1933, 19
      %v2090 = vpop.permute.xlu0 %2089
      %2091 = vrot.lane.b32.xlu0 %v1928, 19
      %v2092 = vpop.permute.xlu0 %2091
      %2093 = vrot.lane.b32.xlu0 %v1935, 19
      %v2094 = vpop.permute.xlu0 %2093
      %2095 = vrot.lane.b32.xlu0 %v1946, 19
      %v2096 = vpop.permute.xlu0 %2095
      %2097 = vrot.lane.b32.xlu0 %v1947, 19
      %v2098 = vpop.permute.xlu0 %2097
      %2099 = vrot.lane.b32.xlu0 %v1948, 19
      %v2100 = vpop.permute.xlu0 %2099
      %2101 = vrot.lane.b32.xlu0 %v1949, 19
      %v2102 = vpop.permute.xlu0 %2101
      %2103 = vrot.lane.b32.xlu0 %v1950, 19
      %v2104 = vpop.permute.xlu0 %2103
      %2105 = vrot.lane.b32.xlu0 %v1951, 19
      %v2106 = vpop.permute.xlu0 %2105
      %2107 = vrot.lane.b32.xlu0 %v1953, 19
      %v2108 = vpop.permute.xlu0 %2107
      %2109 = vrot.lane.b32.xlu0 %v1964, 19
      %v2110 = vpop.permute.xlu0 %2109
      %2111 = vrot.lane.b32.xlu0 %v1965, 19
      %v2112 = vpop.permute.xlu0 %2111
      %2113 = vrot.lane.b32.xlu0 %v1966, 19
      %v2114 = vpop.permute.xlu0 %2113
      %2115 = vrot.lane.b32.xlu0 %v1967, 19
      %v2116 = vpop.permute.xlu0 %2115
      %2117 = vrot.lane.b32.xlu0 %v1968, 19
      %v2118 = vpop.permute.xlu0 %2117
      %2119 = vrot.lane.b32.xlu0 %v1969, 19
      %v2120 = vpop.permute.xlu0 %2119
      %2121 = vrot.lane.b32.xlu0 %v1971, 19
      %v2122 = vpop.permute.xlu0 %2121
      %2123 = vrot.lane.b32.xlu0 %v1982, 19
      %v2124 = vpop.permute.xlu0 %2123
      %2125 = vrot.lane.b32.xlu0 %v1983, 19
      %v2126 = vpop.permute.xlu0 %2125
      %2127 = vrot.lane.b32.xlu0 %v1984, 19
      %v2128 = vpop.permute.xlu0 %2127
      %2129 = vrot.lane.b32.xlu0 %v1985, 19
      %v2130 = vpop.permute.xlu0 %2129
      %2131 = vrot.lane.b32.xlu0 %v1986, 19
      %v2132 = vpop.permute.xlu0 %2131
      %2133 = vrot.lane.b32.xlu0 %v1987, 19
      %v2134 = vpop.permute.xlu0 %2133
      %2135 = vrot.lane.b32.xlu0 %v1989, 19
      %v2136 = vpop.permute.xlu0 %2135
      %2137 = vrot.lane.b32.xlu0 %v2000, 19
      %v2138 = vpop.permute.xlu0 %2137
      %2139 = vrot.lane.b32.xlu0 %v2001, 19
      %v2140 = vpop.permute.xlu0 %2139
      %2141 = vrot.lane.b32.xlu0 %v2002, 19
      %v2142 = vpop.permute.xlu0 %2141
      %2143 = vrot.lane.b32.xlu0 %v2003, 19
      %v2144 = vpop.permute.xlu0 %2143
      %2145 = vrot.lane.b32.xlu0 %v2004, 19
      %v2146 = vpop.permute.xlu0 %2145
      %2147 = vrot.lane.b32.xlu0 %v2005, 19
      %v2148 = vpop.permute.xlu0 %2147
      %v2149 = vsel %vm1159, %v910, %v2026
      %v2150 = vsel %vm1159, %v2026, %v2028
      %v2151 = vsel %vm1159, %v2028, %v2030
      %v2152 = vsel %vm1159, %v2030, %v2032
      %v2153 = vsel %vm1159, %v2032, %v2034
      %v2154 = vsel %vm1159, %v2034, %v2036
      %v2155 = vsel %vm1159, %v2038, %v2040
      %v2156 = vsel %vm1159, %v2040, %v2042
      %v2157 = vsel %vm1159, %v2042, %v2044
      %v2158 = vsel %vm1159, %v2044, %v2046
      %v2159 = vsel %vm1159, %v2046, %v2048
      %v2160 = vsel %vm1159, %v2048, %v2050
      %v2161 = vsel %vm1159, %v2052, %v2054
      %v2162 = vsel %vm1159, %v2054, %v2056
      %v2163 = vsel %vm1159, %v2056, %v2058
      %v2164 = vsel %vm1159, %v2058, %v2060
      %v2165 = vsel %vm1159, %v2060, %v2062
      %v2166 = vsel %vm1159, %v2062, %v2064
      %v2167 = vsel %vm1159, %v2066, %v2068
      %v2168 = vsel %vm1159, %v2068, %v2070
      %v2169 = vsel %vm1159, %v2070, %v2072
      %v2170 = vsel %vm1159, %v2072, %v2074
      %v2171 = vsel %vm1159, %v2074, %v2076
      %v2172 = vsel %vm1159, %v2076, %v2078
      %v2173 = vsel %vm1159, %v2080, %v2082
      %v2174 = vsel %vm1159, %v2082, %v2084
      %v2175 = vsel %vm1159, %v2084, %v2086
      %v2176 = vsel %vm1159, %v2086, %v2088
      %v2177 = vsel %vm1159, %v2088, %v2090
      %v2178 = vsel %vm1159, %v2090, %v2092
      %v2179 = vsel %vm1159, %v2094, %v2096
      %v2180 = vsel %vm1159, %v2096, %v2098
      %v2181 = vsel %vm1159, %v2098, %v2100
      %v2182 = vsel %vm1159, %v2100, %v2102
      %v2183 = vsel %vm1159, %v2102, %v2104
      %v2184 = vsel %vm1159, %v2104, %v2106
      %v2185 = vsel %vm1159, %v2108, %v2110
      %v2186 = vsel %vm1159, %v2110, %v2112
      %v2187 = vsel %vm1159, %v2112, %v2114
      %v2188 = vsel %vm1159, %v2114, %v2116
      %v2189 = vsel %vm1159, %v2116, %v2118
      %v2190 = vsel %vm1159, %v2118, %v2120
      %v2191 = vsel %vm1159, %v2122, %v2124
      %v2192 = vsel %vm1159, %v2124, %v2126
      %v2193 = vsel %vm1159, %v2126, %v2128
      %v2194 = vsel %vm1159, %v2128, %v2130
      %v2195 = vsel %vm1159, %v2130, %v2132
      %v2196 = vsel %vm1159, %v2132, %v2134
      %v2197 = vsel %vm1159, %v2136, %v2138
      %v2198 = vsel %vm1159, %v2138, %v2140
      %v2199 = vsel %vm1159, %v2140, %v2142
      %v2200 = vsel %vm1159, %v2142, %v2144
      %v2201 = vsel %vm1159, %v2144, %v2146
      %v2202 = vsel %vm1159, %v2146, %v2148
      %vm2257 = vcmask 130048
      %v2259 = vsel %vm2257, %v2023, 0
      %2261 = vmatpush.bf16.msra.mxu0 %v2191
      %2262 = vmatpush.bf16.msra.mxu0 %v2185
      %2263 = vmatpush.bf16.msra.mxu0 %v2179
      %2264 = vmatpush.bf16.msra.mxu0 %v2173
      %2265 = vmatpush.bf16.msra.mxu0 %v2167
      %2266 = vmatpush.bf16.msra.mxu0 %v2161
      %2267 = vmatpush.bf16.msra.mxu0 %v2155
      %2268 = vmatpush.bf16.msra.mxu0 %v2149
      %2269 = vmatmul.bf16.gmra.mxu0 %v2022
      %v2270 = vpop.f32.mrf.mxu0
      %v2271 = vadd.f32 %v2009, %v2270
      %v2272 = vpop.f32.mrf.mxu0
      %v2273 = vadd.f32 %v2014, %v2272
      %2274 = vdwg.mxu0
      %2275 = vmatpush.bf16.msra.mxu0 0
      %2276 = vmatpush.bf16.msra.mxu0 0
      %2277 = vmatpush.bf16.msra.mxu0 0
      %2278 = vmatpush.bf16.msra.mxu0 0
      %2279 = vmatpush.bf16.msra.mxu0 0
      %2280 = vmatpush.bf16.msra.mxu0 0
      %2281 = vmatpush.bf16.msra.mxu0 0
      %2282 = vmatpush.bf16.msra.mxu0 %v2197
      %2283 = vmatmul.bf16.gmra.mxu0 %v2259
      %v2284 = vpop.f32.mrf.mxu0
      %v2285 = vadd.f32 %v2271, %v2284
      %v2286 = vpop.f32.mrf.mxu0
      %v2287 = vadd.f32 %v2273, %v2286
      %2288 = vdwg.mxu0
      %2289 = vmatpush.bf16.msra.mxu0 %v2192
      %2290 = vmatpush.bf16.msra.mxu0 %v2186
      %2291 = vmatpush.bf16.msra.mxu0 %v2180
      %2292 = vmatpush.bf16.msra.mxu0 %v2174
      %2293 = vmatpush.bf16.msra.mxu0 %v2168
      %2294 = vmatpush.bf16.msra.mxu0 %v2162
      %2295 = vmatpush.bf16.msra.mxu0 %v2156
      %2296 = vmatpush.bf16.msra.mxu0 %v2150
      %2297 = vmatmul.bf16.gmra.mxu0 %v2022
      %v2298 = vpop.f32.mrf.mxu0
      %v2299 = vadd.f32 %v2009, %v2298
      %v2300 = vpop.f32.mrf.mxu0
      %v2301 = vadd.f32 %v2014, %v2300
      %2302 = vdwg.mxu0
      %2303 = vmatpush.bf16.msra.mxu0 0
      %2304 = vmatpush.bf16.msra.mxu0 0
      %2305 = vmatpush.bf16.msra.mxu0 0
      %2306 = vmatpush.bf16.msra.mxu0 0
      %2307 = vmatpush.bf16.msra.mxu0 0
      %2308 = vmatpush.bf16.msra.mxu0 0
      %2309 = vmatpush.bf16.msra.mxu0 0
      %2310 = vmatpush.bf16.msra.mxu0 %v2198
      %2311 = vmatmul.bf16.gmra.mxu0 %v2259
      %v2312 = vpop.f32.mrf.mxu0
      %v2313 = vadd.f32 %v2299, %v2312
      %v2314 = vpop.f32.mrf.mxu0
      %v2315 = vadd.f32 %v2301, %v2314
      %2316 = vdwg.mxu0
      %2317 = vmatpush.bf16.msra.mxu0 %v2193
      %2318 = vmatpush.bf16.msra.mxu0 %v2187
      %2319 = vmatpush.bf16.msra.mxu0 %v2181
      %2320 = vmatpush.bf16.msra.mxu0 %v2175
      %2321 = vmatpush.bf16.msra.mxu0 %v2169
      %2322 = vmatpush.bf16.msra.mxu0 %v2163
      %2323 = vmatpush.bf16.msra.mxu0 %v2157
      %2324 = vmatpush.bf16.msra.mxu0 %v2151
      %2325 = vmatmul.bf16.gmra.mxu0 %v2022
      %v2326 = vpop.f32.mrf.mxu0
      %v2327 = vadd.f32 %v2009, %v2326
      %v2328 = vpop.f32.mrf.mxu0
      %v2329 = vadd.f32 %v2014, %v2328
      %2330 = vdwg.mxu0
      %2331 = vmatpush.bf16.msra.mxu0 0
      %2332 = vmatpush.bf16.msra.mxu0 0
      %2333 = vmatpush.bf16.msra.mxu0 0
      %2334 = vmatpush.bf16.msra.mxu0 0
      %2335 = vmatpush.bf16.msra.mxu0 0
      %2336 = vmatpush.bf16.msra.mxu0 0
      %2337 = vmatpush.bf16.msra.mxu0 0
      %2338 = vmatpush.bf16.msra.mxu0 %v2199
      %2339 = vmatmul.bf16.gmra.mxu0 %v2259
      %v2340 = vpop.f32.mrf.mxu0
      %v2341 = vadd.f32 %v2327, %v2340
      %v2342 = vpop.f32.mrf.mxu0
      %v2343 = vadd.f32 %v2329, %v2342
      %2344 = vdwg.mxu0
      %2345 = vmatpush.bf16.msra.mxu0 %v2194
      %2346 = vmatpush.bf16.msra.mxu0 %v2188
      %2347 = vmatpush.bf16.msra.mxu0 %v2182
      %2348 = vmatpush.bf16.msra.mxu0 %v2176
      %2349 = vmatpush.bf16.msra.mxu0 %v2170
      %2350 = vmatpush.bf16.msra.mxu0 %v2164
      %2351 = vmatpush.bf16.msra.mxu0 %v2158
      %2352 = vmatpush.bf16.msra.mxu0 %v2152
      %2353 = vmatmul.bf16.gmra.mxu0 %v2022
      %v2354 = vpop.f32.mrf.mxu0
      %v2355 = vadd.f32 %v2009, %v2354
      %v2356 = vpop.f32.mrf.mxu0
      %v2357 = vadd.f32 %v2014, %v2356
      %2358 = vdwg.mxu0
      %2359 = vmatpush.bf16.msra.mxu0 0
      %2360 = vmatpush.bf16.msra.mxu0 0
      %2361 = vmatpush.bf16.msra.mxu0 0
      %2362 = vmatpush.bf16.msra.mxu0 0
      %2363 = vmatpush.bf16.msra.mxu0 0
      %2364 = vmatpush.bf16.msra.mxu0 0
      %2365 = vmatpush.bf16.msra.mxu0 0
      %2366 = vmatpush.bf16.msra.mxu0 %v2200
      %2367 = vmatmul.bf16.gmra.mxu0 %v2259
      %v2368 = vpop.f32.mrf.mxu0
      %v2369 = vadd.f32 %v2355, %v2368
      %v2370 = vpop.f32.mrf.mxu0
      %v2371 = vadd.f32 %v2357, %v2370
      %2372 = vdwg.mxu0
      %2373 = vmatpush.bf16.msra.mxu0 %v2195
      %2374 = vmatpush.bf16.msra.mxu0 %v2189
      %2375 = vmatpush.bf16.msra.mxu0 %v2183
      %2376 = vmatpush.bf16.msra.mxu0 %v2177
      %2377 = vmatpush.bf16.msra.mxu0 %v2171
      %2378 = vmatpush.bf16.msra.mxu0 %v2165
      %2379 = vmatpush.bf16.msra.mxu0 %v2159
      %2380 = vmatpush.bf16.msra.mxu0 %v2153
      %2381 = vmatmul.bf16.gmra.mxu0 %v2022
      %v2382 = vpop.f32.mrf.mxu0
      %v2383 = vadd.f32 %v2009, %v2382
      %v2384 = vpop.f32.mrf.mxu0
      %v2385 = vadd.f32 %v2014, %v2384
      %2386 = vdwg.mxu0
      %2387 = vmatpush.bf16.msra.mxu0 0
      %2388 = vmatpush.bf16.msra.mxu0 0
      %2389 = vmatpush.bf16.msra.mxu0 0
      %2390 = vmatpush.bf16.msra.mxu0 0
      %2391 = vmatpush.bf16.msra.mxu0 0
      %2392 = vmatpush.bf16.msra.mxu0 0
      %2393 = vmatpush.bf16.msra.mxu0 0
      %2394 = vmatpush.bf16.msra.mxu0 %v2201
      %2395 = vmatmul.bf16.gmra.mxu0 %v2259
      %v2396 = vpop.f32.mrf.mxu0
      %v2397 = vadd.f32 %v2383, %v2396
      %v2398 = vpop.f32.mrf.mxu0
      %v2399 = vadd.f32 %v2385, %v2398
      %2400 = vdwg.mxu0
      %2401 = vmatpush.bf16.msra.mxu0 %v2196
      %2402 = vmatpush.bf16.msra.mxu0 %v2190
      %2403 = vmatpush.bf16.msra.mxu0 %v2184
      %2404 = vmatpush.bf16.msra.mxu0 %v2178
      %2405 = vmatpush.bf16.msra.mxu0 %v2172
      %2406 = vmatpush.bf16.msra.mxu0 %v2166
      %2407 = vmatpush.bf16.msra.mxu0 %v2160
      %2408 = vmatpush.bf16.msra.mxu0 %v2154
      %2409 = vmatmul.bf16.gmra.mxu0 %v2022
      %v2410 = vpop.f32.mrf.mxu0
      %v2411 = vadd.f32 %v2009, %v2410
      %v2412 = vpop.f32.mrf.mxu0
      %v2413 = vadd.f32 %v2014, %v2412
      %2414 = vdwg.mxu0
      %2415 = vmatpush.bf16.msra.mxu0 0
      %2416 = vmatpush.bf16.msra.mxu0 0
      %2417 = vmatpush.bf16.msra.mxu0 0
      %2418 = vmatpush.bf16.msra.mxu0 0
      %2419 = vmatpush.bf16.msra.mxu0 0
      %2420 = vmatpush.bf16.msra.mxu0 0
      %2421 = vmatpush.bf16.msra.mxu0 0
      %2422 = vmatpush.bf16.msra.mxu0 %v2202
      %2423 = vmatmul.bf16.gmra.mxu0 %v2259
      %v2424 = vpop.f32.mrf.mxu0
      %v2425 = vadd.f32 %v2411, %v2424
      %v2426 = vpop.f32.mrf.mxu0
      %v2427 = vadd.f32 %v2413, %v2426
      %2428 = vdwg.mxu0
      %v2429 = vmax.f32 %v2285, 0.0
      %v2430 = vmax.f32 %v2313, 0.0
      %v2431 = vmax.f32 %v2341, 0.0
      %v2432 = vmax.f32 %v2369, 0.0
      %v2433 = vmax.f32 %v2397, 0.0
      %v2434 = vmax.f32 %v2425, 0.0
      %v2435 = vmax.f32 %v2287, 0.0
      %v2436 = vmax.f32 %v2315, 0.0
      %v2437 = vmax.f32 %v2343, 0.0
      %v2438 = vmax.f32 %v2371, 0.0
      %v2439 = vmax.f32 %v2399, 0.0
      %v2440 = vmax.f32 %v2427, 0.0
      %v2441 = vmul.f32 %v2429, %v1645
      %v2442 = vmul.f32 %v2430, %v1646
      %v2443 = vmul.f32 %v2431, %v1647
      %v2444 = vmul.f32 %v2432, %v1648
      %v2445 = vmul.f32 %v2433, %v1649
      %v2446 = vmul.f32 %v2434, %v1650
      %v2447 = vmul.f32 %v2435, %v1645
      %v2448 = vmul.f32 %v2436, %v1646
      %v2449 = vmul.f32 %v2437, %v1647
      %v2450 = vmul.f32 %v2438, %v1648
      %v2451 = vmul.f32 %v2439, %v1649
      %v2452 = vmul.f32 %v2440, %v1650
      %v2453 = vadd.f32 %v2441, %v2442
      %v2454 = vadd.f32 %v2453, %v2443
      %v2455 = vadd.f32 %v2454, %v2444
      %v2456 = vadd.f32 %v2455, %v2445
      %v2457 = vadd.f32 %v2456, %v2446
      %2458 = vadd.xlane.f32.xlu0 %v2457
      %v2459 = vpop.xlane.xlu0 %2458
      %v2460 = vadd.f32 %v2447, %v2448
      %v2461 = vadd.f32 %v2460, %v2449
      %v2462 = vadd.f32 %v2461, %v2450
      %v2463 = vadd.f32 %v2462, %v2451
      %v2464 = vadd.f32 %v2463, %v2452
      %2465 = vadd.xlane.f32.xlu0 %v2464
      %v2466 = vpop.xlane.xlu0 %2465
      %v2467 = vmul.f32 %v2459, 0.001953125
      %v2468 = vmul.f32 %v2466, 0.001953125
      %v2469 = vsub.f32 %v2429, %v2467
      %v2470 = vsub.f32 %v2430, %v2467
      %v2471 = vsub.f32 %v2431, %v2467
      %v2472 = vsub.f32 %v2432, %v2467
      %v2473 = vsub.f32 %v2433, %v2467
      %v2474 = vsub.f32 %v2434, %v2467
      %v2475 = vsub.f32 %v2435, %v2468
      %v2476 = vsub.f32 %v2436, %v2468
      %v2477 = vsub.f32 %v2437, %v2468
      %v2478 = vsub.f32 %v2438, %v2468
      %v2479 = vsub.f32 %v2439, %v2468
      %v2480 = vsub.f32 %v2440, %v2468
      %v2481 = vmul.f32 %v2469, %v1645
      %v2482 = vmul.f32 %v2470, %v1646
      %v2483 = vmul.f32 %v2471, %v1647
      %v2484 = vmul.f32 %v2472, %v1648
      %v2485 = vmul.f32 %v2473, %v1649
      %v2486 = vmul.f32 %v2474, %v1650
      %v2487 = vmul.f32 %v2475, %v1645
      %v2488 = vmul.f32 %v2476, %v1646
      %v2489 = vmul.f32 %v2477, %v1647
      %v2490 = vmul.f32 %v2478, %v1648
      %v2491 = vmul.f32 %v2479, %v1649
      %v2492 = vmul.f32 %v2480, %v1650
      %v2493 = vmul.f32 %v2481, %v2481
      %v2494 = vmul.f32 %v2482, %v2482
      %v2495 = vmul.f32 %v2483, %v2483
      %v2496 = vmul.f32 %v2484, %v2484
      %v2497 = vmul.f32 %v2485, %v2485
      %v2498 = vmul.f32 %v2486, %v2486
      %v2499 = vmul.f32 %v2487, %v2487
      %v2500 = vmul.f32 %v2488, %v2488
      %v2501 = vmul.f32 %v2489, %v2489
      %v2502 = vmul.f32 %v2490, %v2490
      %v2503 = vmul.f32 %v2491, %v2491
      %v2504 = vmul.f32 %v2492, %v2492
      %v2505 = vadd.f32 %v2493, %v2494
      %v2506 = vadd.f32 %v2505, %v2495
      %v2507 = vadd.f32 %v2506, %v2496
      %v2508 = vadd.f32 %v2507, %v2497
      %v2509 = vadd.f32 %v2508, %v2498
      %2510 = vadd.xlane.f32.xlu0 %v2509
      %v2511 = vpop.xlane.xlu0 %2510
      %v2512 = vadd.f32 %v2499, %v2500
      %v2513 = vadd.f32 %v2512, %v2501
      %v2514 = vadd.f32 %v2513, %v2502
      %v2515 = vadd.f32 %v2514, %v2503
      %v2516 = vadd.f32 %v2515, %v2504
      %2517 = vadd.xlane.f32.xlu0 %v2516
      %v2518 = vpop.xlane.xlu0 %2517
      %v2519 = vmul.f32 %v2511, 0.001953125
      %v2520 = vmul.f32 %v2518, 0.001953125
      %v2521 = vadd.f32 %v2519, 1e-05
      %v2522 = vadd.f32 %v2520, 1e-05
      %v2523 = vrsqrt.pop %v2521
      %v2524 = vmul.f32 %v2523, %v2521
      %v2525 = vmul.f32 %v2524, %v2523
      %v2526 = vmul.f32 0.5, %v2525
      %v2527 = vsub.f32 1.5, %v2526
      %v2528 = vmul.f32 %v2523, %v2527
      %vm2529 = vweird.f32 %v2521
      %vm2530 = vweird.f32 %v2523
      %vm2531 = vmor %vm2529, %vm2530
      %v2532 = vsel %vm2531, %v2523, %v2528
      %v2533 = vrsqrt.pop %v2522
      %v2534 = vmul.f32 %v2533, %v2522
      %v2535 = vmul.f32 %v2534, %v2533
      %v2536 = vmul.f32 0.5, %v2535
      %v2537 = vsub.f32 1.5, %v2536
      %v2538 = vmul.f32 %v2533, %v2537
      %vm2539 = vweird.f32 %v2522
      %vm2540 = vweird.f32 %v2533
      %vm2541 = vmor %vm2539, %vm2540
      %v2542 = vsel %vm2541, %v2533, %v2538
      %v2543 = vmul.f32 %v1831, %v2532
      %v2544 = vmul.f32 %v1832, %v2542
      %v2545 = vmul.f32 %v2467, %v2543
      %v2546 = vmul.f32 %v2468, %v2544
      %2549 = vrot.lane.b32.xlu0 %v2545, 1
      %v2550 = vpop.permute.xlu0 %2549
      %2551 = vrot.lane.b32.xlu0 %v2546, 1
      %v2552 = vpop.permute.xlu0 %2551
      %v2555 = vsub.f32 %v1831, %v2550
      %v2556 = vsub.f32 %v1832, %v2552
      %2558 = vset.pattern.permute.xlu0 1
      %2559 = vperm.xlu0 %2558, %v2543
      %v2560 = vpop.permute.xlu0 %2559
      %2563 = vset.pattern.permute.xlu0 1
      %2564 = vperm.xlu0 %2563, %v2544
      %v2565 = vpop.permute.xlu0 %2564
      %v2567 = vmul.f32 %v2429, %v2560
      %v2568 = vmul.f32 %v2430, %v2560
      %v2569 = vmul.f32 %v2431, %v2560
      %v2570 = vmul.f32 %v2432, %v2560
      %v2571 = vmul.f32 %v2433, %v2560
      %v2572 = vmul.f32 %v2434, %v2560
      %v2573 = vmul.f32 %v2435, %v2565
      %v2574 = vmul.f32 %v2436, %v2565
      %v2575 = vmul.f32 %v2437, %v2565
      %v2576 = vmul.f32 %v2438, %v2565
      %v2577 = vmul.f32 %v2439, %v2565
      %v2578 = vmul.f32 %v2440, %v2565
      %2580 = vset.pattern.permute.xlu0 2
      %2581 = vperm.xlu0 %2580, %v2555
      %v2582 = vpop.permute.xlu0 %2581
      %2585 = vset.pattern.permute.xlu0 2
      %2586 = vperm.xlu0 %2585, %v2556
      %v2587 = vpop.permute.xlu0 %2586
      %v2589 = vadd.f32 %v2567, %v2582
      %v2590 = vadd.f32 %v2568, %v2582
      %v2591 = vadd.f32 %v2569, %v2582
      %v2592 = vadd.f32 %v2570, %v2582
      %v2593 = vadd.f32 %v2571, %v2582
      %v2594 = vadd.f32 %v2572, %v2582
      %v2595 = vadd.f32 %v2573, %v2587
      %v2596 = vadd.f32 %v2574, %v2587
      %v2597 = vadd.f32 %v2575, %v2587
      %v2598 = vadd.f32 %v2576, %v2587
      %v2599 = vadd.f32 %v2577, %v2587
      %v2600 = vadd.f32 %v2578, %v2587
      %v2601 = vmul.f32 %v2589, %v1645
      %v2602 = vmul.f32 %v2590, %v1646
      %v2603 = vmul.f32 %v2591, %v1647
      %v2604 = vmul.f32 %v2592, %v1648
      %v2605 = vmul.f32 %v2593, %v1649
      %v2606 = vmul.f32 %v2594, %v1650
      %v2607 = vmul.f32 %v2595, %v1645
      %v2608 = vmul.f32 %v2596, %v1646
      %v2609 = vmul.f32 %v2597, %v1647
      %v2610 = vmul.f32 %v2598, %v1648
      %v2611 = vmul.f32 %v2599, %v1649
      %v2612 = vmul.f32 %v2600, %v1650
      %v2613 = vld [vmem:[%s468] sm:$0xff]
      %v2614 = vld [vmem:[%s472] sm:$0xff]
      %v2615 = vpack.c.bf16 %v2602, %v2601
      %v2616 = vpack.c.bf16 %v2604, %v2603
      %v2617 = vpack.c.bf16 %v2606, %v2605
      %v2618 = vpack.c.bf16 %v2608, %v2607
      %v2619 = vpack.c.bf16 %v2610, %v2609
      %v2620 = vpack.c.bf16 %v2612, %v2611
      %v2627 = vunpack.c.l.b16 %v2615
      %v2628 = vunpack.c.h.b16 %v2615
      %v2629 = vunpack.c.l.b16 %v2616
      %v2630 = vunpack.c.h.b16 %v2616
      %v2631 = vunpack.c.l.b16 %v2617
      %v2632 = vunpack.c.h.b16 %v2617
      %v2633 = vunpack.c.l.b16 %v2618
      %v2634 = vunpack.c.h.b16 %v2618
      %v2635 = vunpack.c.l.b16 %v2619
      %v2636 = vunpack.c.h.b16 %v2619
      %v2637 = vunpack.c.l.b16 %v2620
      %v2638 = vunpack.c.h.b16 %v2620
      %v2639 = vpack.c.b16 %v2633, %v2627
      %v2640 = vpack.c.b16 %v2634, %v2628
      %v2641 = vpack.c.b16 %v2635, %v2629
      %v2642 = vpack.c.b16 %v2636, %v2630
      %v2643 = vpack.c.b16 %v2637, %v2631
      %v2644 = vpack.c.b16 %v2638, %v2632
      %2645 = vrot.lane.b32.xlu0 %v2639, 127
      %v2646 = vpop.permute.xlu0 %2645
      %2647 = vrot.lane.b32.xlu0 %v2640, 127
      %v2648 = vpop.permute.xlu0 %2647
      %2649 = vrot.lane.b32.xlu0 %v2641, 127
      %v2650 = vpop.permute.xlu0 %2649
      %2651 = vrot.lane.b32.xlu0 %v2642, 127
      %v2652 = vpop.permute.xlu0 %2651
      %2653 = vrot.lane.b32.xlu0 %v2643, 127
      %v2654 = vpop.permute.xlu0 %2653
      %2655 = vrot.lane.b32.xlu0 %v2644, 127
      %v2656 = vpop.permute.xlu0 %2655
      %v2657 = vsel %vm602, %v577, %v2646
      %v2658 = vsel %vm602, %v2646, %v2648
      %v2659 = vsel %vm602, %v2648, %v2650
      %v2660 = vsel %vm602, %v2650, %v2652
      %v2661 = vsel %vm602, %v2652, %v2654
      %v2662 = vsel %vm602, %v2654, %v2656
      %2663 = vrot.lane.b32.xlu0 %v2639, 126
      %v2664 = vpop.permute.xlu0 %2663
      %2665 = vrot.lane.b32.xlu0 %v2640, 126
      %v2666 = vpop.permute.xlu0 %2665
      %2667 = vrot.lane.b32.xlu0 %v2641, 126
      %v2668 = vpop.permute.xlu0 %2667
      %2669 = vrot.lane.b32.xlu0 %v2642, 126
      %v2670 = vpop.permute.xlu0 %2669
      %2671 = vrot.lane.b32.xlu0 %v2643, 126
      %v2672 = vpop.permute.xlu0 %2671
      %2673 = vrot.lane.b32.xlu0 %v2644, 126
      %v2674 = vpop.permute.xlu0 %2673
      %v2675 = vsel %vm641, %v616, %v2664
      %v2676 = vsel %vm641, %v2664, %v2666
      %v2677 = vsel %vm641, %v2666, %v2668
      %v2678 = vsel %vm641, %v2668, %v2670
      %v2679 = vsel %vm641, %v2670, %v2672
      %v2680 = vsel %vm641, %v2672, %v2674
      %2681 = vrot.lane.b32.xlu0 %v2639, 110
      %v2682 = vpop.permute.xlu0 %2681
      %2683 = vrot.lane.b32.xlu0 %v2640, 110
      %v2684 = vpop.permute.xlu0 %2683
      %2685 = vrot.lane.b32.xlu0 %v2641, 110
      %v2686 = vpop.permute.xlu0 %2685
      %2687 = vrot.lane.b32.xlu0 %v2642, 110
      %v2688 = vpop.permute.xlu0 %2687
      %2689 = vrot.lane.b32.xlu0 %v2643, 110
      %v2690 = vpop.permute.xlu0 %2689
      %2691 = vrot.lane.b32.xlu0 %v2644, 110
      %v2692 = vpop.permute.xlu0 %2691
      %v2693 = vsel %vm680, %v655, %v2682
      %v2694 = vsel %vm680, %v2682, %v2684
      %v2695 = vsel %vm680, %v2684, %v2686
      %v2696 = vsel %vm680, %v2686, %v2688
      %v2697 = vsel %vm680, %v2688, %v2690
      %v2698 = vsel %vm680, %v2690, %v2692
      %2699 = vrot.lane.b32.xlu0 %v2639, 109
      %v2700 = vpop.permute.xlu0 %2699
      %2701 = vrot.lane.b32.xlu0 %v2640, 109
      %v2702 = vpop.permute.xlu0 %2701
      %2703 = vrot.lane.b32.xlu0 %v2641, 109
      %v2704 = vpop.permute.xlu0 %2703
      %2705 = vrot.lane.b32.xlu0 %v2642, 109
      %v2706 = vpop.permute.xlu0 %2705
      %2707 = vrot.lane.b32.xlu0 %v2643, 109
      %v2708 = vpop.permute.xlu0 %2707
      %2709 = vrot.lane.b32.xlu0 %v2644, 109
      %v2710 = vpop.permute.xlu0 %2709
      %v2711 = vsel %vm717, %v2700, %v2702
      %v2712 = vsel %vm717, %v2702, %v2704
      %v2713 = vsel %vm717, %v2704, %v2706
      %v2714 = vsel %vm717, %v2706, %v2708
      %v2715 = vsel %vm717, %v2708, %v2710
      %2716 = vrot.lane.b32.xlu0 %v2639, 108
      %v2717 = vpop.permute.xlu0 %2716
      %2718 = vrot.lane.b32.xlu0 %v2640, 108
      %v2719 = vpop.permute.xlu0 %2718
      %2720 = vrot.lane.b32.xlu0 %v2641, 108
      %v2721 = vpop.permute.xlu0 %2720
      %2722 = vrot.lane.b32.xlu0 %v2642, 108
      %v2723 = vpop.permute.xlu0 %2722
      %2724 = vrot.lane.b32.xlu0 %v2643, 108
      %v2725 = vpop.permute.xlu0 %2724
      %2726 = vrot.lane.b32.xlu0 %v2644, 108
      %v2727 = vpop.permute.xlu0 %2726
      %v2728 = vsel %vm754, %v2717, %v2719
      %v2729 = vsel %vm754, %v2719, %v2721
      %v2730 = vsel %vm754, %v2721, %v2723
      %v2731 = vsel %vm754, %v2723, %v2725
      %v2732 = vsel %vm754, %v2725, %v2727
      %v2733 = vsel %vm754, %v2727, %v741
      %2734 = vrot.lane.b32.xlu0 %v2639, 92
      %v2735 = vpop.permute.xlu0 %2734
      %2736 = vrot.lane.b32.xlu0 %v2640, 92
      %v2737 = vpop.permute.xlu0 %2736
      %2738 = vrot.lane.b32.xlu0 %v2641, 92
      %v2739 = vpop.permute.xlu0 %2738
      %2740 = vrot.lane.b32.xlu0 %v2642, 92
      %v2741 = vpop.permute.xlu0 %2740
      %2742 = vrot.lane.b32.xlu0 %v2643, 92
      %v2743 = vpop.permute.xlu0 %2742
      %2744 = vrot.lane.b32.xlu0 %v2644, 92
      %v2745 = vpop.permute.xlu0 %2744
      %v2746 = vsel %vm793, %v2735, %v2737
      %v2747 = vsel %vm793, %v2737, %v2739
      %v2748 = vsel %vm793, %v2739, %v2741
      %v2749 = vsel %vm793, %v2741, %v2743
      %v2750 = vsel %vm793, %v2743, %v2745
      %v2751 = vsel %vm793, %v2745, %v780
      %2752 = vrot.lane.b32.xlu0 %v2639, 91
      %v2753 = vpop.permute.xlu0 %2752
      %2754 = vrot.lane.b32.xlu0 %v2640, 91
      %v2755 = vpop.permute.xlu0 %2754
      %2756 = vrot.lane.b32.xlu0 %v2641, 91
      %v2757 = vpop.permute.xlu0 %2756
      %2758 = vrot.lane.b32.xlu0 %v2642, 91
      %v2759 = vpop.permute.xlu0 %2758
      %2760 = vrot.lane.b32.xlu0 %v2643, 91
      %v2761 = vpop.permute.xlu0 %2760
      %2762 = vrot.lane.b32.xlu0 %v2644, 91
      %v2763 = vpop.permute.xlu0 %2762
      %v2764 = vsel %vm832, %v2753, %v2755
      %v2765 = vsel %vm832, %v2755, %v2757
      %v2766 = vsel %vm832, %v2757, %v2759
      %v2767 = vsel %vm832, %v2759, %v2761
      %v2768 = vsel %vm832, %v2761, %v2763
      %v2769 = vsel %vm832, %v2763, %v819
      %2770 = vrot.lane.b32.xlu0 %v2639, 90
      %v2771 = vpop.permute.xlu0 %2770
      %2772 = vrot.lane.b32.xlu0 %v2640, 90
      %v2773 = vpop.permute.xlu0 %2772
      %2774 = vrot.lane.b32.xlu0 %v2641, 90
      %v2775 = vpop.permute.xlu0 %2774
      %2776 = vrot.lane.b32.xlu0 %v2642, 90
      %v2777 = vpop.permute.xlu0 %2776
      %2778 = vrot.lane.b32.xlu0 %v2643, 90
      %v2779 = vpop.permute.xlu0 %2778
      %2780 = vrot.lane.b32.xlu0 %v2644, 90
      %v2781 = vpop.permute.xlu0 %2780
      %v2782 = vsel %vm871, %v2771, %v2773
      %v2783 = vsel %vm871, %v2773, %v2775
      %v2784 = vsel %vm871, %v2775, %v2777
      %v2785 = vsel %vm871, %v2777, %v2779
      %v2786 = vsel %vm871, %v2779, %v2781
      %v2787 = vsel %vm871, %v2781, %v858
      %2789 = vset.pattern.permute.xlu0 0
      %2790 = vperm.xlu0 %2789, %v2614
      %v2791 = vpop.permute.xlu0 %2790
      %v2794 = vunpack.c.l.b16 %v2613
      %v2795 = vunpack.c.h.b16 %v2613
      %v2796 = vpack.c.b16 %v2794, %v2794
      %v2797 = vpack.c.b16 %v2795, %v2795
      %2799 = vrot.lane.b32.xlu0 %v2639, 19
      %v2800 = vpop.permute.xlu0 %2799
      %2801 = vrot.lane.b32.xlu0 %v2640, 19
      %v2802 = vpop.permute.xlu0 %2801
      %2803 = vrot.lane.b32.xlu0 %v2641, 19
      %v2804 = vpop.permute.xlu0 %2803
      %2805 = vrot.lane.b32.xlu0 %v2642, 19
      %v2806 = vpop.permute.xlu0 %2805
      %2807 = vrot.lane.b32.xlu0 %v2643, 19
      %v2808 = vpop.permute.xlu0 %2807
      %2809 = vrot.lane.b32.xlu0 %v2644, 19
      %v2810 = vpop.permute.xlu0 %2809
      %2811 = vrot.lane.b32.xlu0 %v2657, 19
      %v2812 = vpop.permute.xlu0 %2811
      %2813 = vrot.lane.b32.xlu0 %v2658, 19
      %v2814 = vpop.permute.xlu0 %2813
      %2815 = vrot.lane.b32.xlu0 %v2659, 19
      %v2816 = vpop.permute.xlu0 %2815
      %2817 = vrot.lane.b32.xlu0 %v2660, 19
      %v2818 = vpop.permute.xlu0 %2817
      %2819 = vrot.lane.b32.xlu0 %v2661, 19
      %v2820 = vpop.permute.xlu0 %2819
      %2821 = vrot.lane.b32.xlu0 %v2662, 19
      %v2822 = vpop.permute.xlu0 %2821
      %2823 = vrot.lane.b32.xlu0 %v2656, 19
      %v2824 = vpop.permute.xlu0 %2823
      %2825 = vrot.lane.b32.xlu0 %v2675, 19
      %v2826 = vpop.permute.xlu0 %2825
      %2827 = vrot.lane.b32.xlu0 %v2676, 19
      %v2828 = vpop.permute.xlu0 %2827
      %2829 = vrot.lane.b32.xlu0 %v2677, 19
      %v2830 = vpop.permute.xlu0 %2829
      %2831 = vrot.lane.b32.xlu0 %v2678, 19
      %v2832 = vpop.permute.xlu0 %2831
      %2833 = vrot.lane.b32.xlu0 %v2679, 19
      %v2834 = vpop.permute.xlu0 %2833
      %2835 = vrot.lane.b32.xlu0 %v2680, 19
      %v2836 = vpop.permute.xlu0 %2835
      %2837 = vrot.lane.b32.xlu0 %v2674, 19
      %v2838 = vpop.permute.xlu0 %2837
      %2839 = vrot.lane.b32.xlu0 %v2693, 19
      %v2840 = vpop.permute.xlu0 %2839
      %2841 = vrot.lane.b32.xlu0 %v2694, 19
      %v2842 = vpop.permute.xlu0 %2841
      %2843 = vrot.lane.b32.xlu0 %v2695, 19
      %v2844 = vpop.permute.xlu0 %2843
      %2845 = vrot.lane.b32.xlu0 %v2696, 19
      %v2846 = vpop.permute.xlu0 %2845
      %2847 = vrot.lane.b32.xlu0 %v2697, 19
      %v2848 = vpop.permute.xlu0 %2847
      %2849 = vrot.lane.b32.xlu0 %v2698, 19
      %v2850 = vpop.permute.xlu0 %2849
      %2851 = vrot.lane.b32.xlu0 %v2692, 19
      %v2852 = vpop.permute.xlu0 %2851
      %2853 = vrot.lane.b32.xlu0 %v2700, 19
      %v2854 = vpop.permute.xlu0 %2853
      %2855 = vrot.lane.b32.xlu0 %v2711, 19
      %v2856 = vpop.permute.xlu0 %2855
      %2857 = vrot.lane.b32.xlu0 %v2712, 19
      %v2858 = vpop.permute.xlu0 %2857
      %2859 = vrot.lane.b32.xlu0 %v2713, 19
      %v2860 = vpop.permute.xlu0 %2859
      %2861 = vrot.lane.b32.xlu0 %v2714, 19
      %v2862 = vpop.permute.xlu0 %2861
      %2863 = vrot.lane.b32.xlu0 %v2715, 19
      %v2864 = vpop.permute.xlu0 %2863
      %2865 = vrot.lane.b32.xlu0 %v2710, 19
      %v2866 = vpop.permute.xlu0 %2865
      %2867 = vrot.lane.b32.xlu0 %v2717, 19
      %v2868 = vpop.permute.xlu0 %2867
      %2869 = vrot.lane.b32.xlu0 %v2728, 19
      %v2870 = vpop.permute.xlu0 %2869
      %2871 = vrot.lane.b32.xlu0 %v2729, 19
      %v2872 = vpop.permute.xlu0 %2871
      %2873 = vrot.lane.b32.xlu0 %v2730, 19
      %v2874 = vpop.permute.xlu0 %2873
      %2875 = vrot.lane.b32.xlu0 %v2731, 19
      %v2876 = vpop.permute.xlu0 %2875
      %2877 = vrot.lane.b32.xlu0 %v2732, 19
      %v2878 = vpop.permute.xlu0 %2877
      %2879 = vrot.lane.b32.xlu0 %v2733, 19
      %v2880 = vpop.permute.xlu0 %2879
      %2881 = vrot.lane.b32.xlu0 %v2735, 19
      %v2882 = vpop.permute.xlu0 %2881
      %2883 = vrot.lane.b32.xlu0 %v2746, 19
      %v2884 = vpop.permute.xlu0 %2883
      %2885 = vrot.lane.b32.xlu0 %v2747, 19
      %v2886 = vpop.permute.xlu0 %2885
      %2887 = vrot.lane.b32.xlu0 %v2748, 19
      %v2888 = vpop.permute.xlu0 %2887
      %2889 = vrot.lane.b32.xlu0 %v2749, 19
      %v2890 = vpop.permute.xlu0 %2889
      %2891 = vrot.lane.b32.xlu0 %v2750, 19
      %v2892 = vpop.permute.xlu0 %2891
      %2893 = vrot.lane.b32.xlu0 %v2751, 19
      %v2894 = vpop.permute.xlu0 %2893
      %2895 = vrot.lane.b32.xlu0 %v2753, 19
      %v2896 = vpop.permute.xlu0 %2895
      %2897 = vrot.lane.b32.xlu0 %v2764, 19
      %v2898 = vpop.permute.xlu0 %2897
      %2899 = vrot.lane.b32.xlu0 %v2765, 19
      %v2900 = vpop.permute.xlu0 %2899
      %2901 = vrot.lane.b32.xlu0 %v2766, 19
      %v2902 = vpop.permute.xlu0 %2901
      %2903 = vrot.lane.b32.xlu0 %v2767, 19
      %v2904 = vpop.permute.xlu0 %2903
      %2905 = vrot.lane.b32.xlu0 %v2768, 19
      %v2906 = vpop.permute.xlu0 %2905
      %2907 = vrot.lane.b32.xlu0 %v2769, 19
      %v2908 = vpop.permute.xlu0 %2907
      %2909 = vrot.lane.b32.xlu0 %v2771, 19
      %v2910 = vpop.permute.xlu0 %2909
      %2911 = vrot.lane.b32.xlu0 %v2782, 19
      %v2912 = vpop.permute.xlu0 %2911
      %2913 = vrot.lane.b32.xlu0 %v2783, 19
      %v2914 = vpop.permute.xlu0 %2913
      %2915 = vrot.lane.b32.xlu0 %v2784, 19
      %v2916 = vpop.permute.xlu0 %2915
      %2917 = vrot.lane.b32.xlu0 %v2785, 19
      %v2918 = vpop.permute.xlu0 %2917
      %2919 = vrot.lane.b32.xlu0 %v2786, 19
      %v2920 = vpop.permute.xlu0 %2919
      %2921 = vrot.lane.b32.xlu0 %v2787, 19
      %v2922 = vpop.permute.xlu0 %2921
      %v2923 = vsel %vm1159, %v910, %v2800
      %v2924 = vsel %vm1159, %v2800, %v2802
      %v2925 = vsel %vm1159, %v2802, %v2804
      %v2926 = vsel %vm1159, %v2804, %v2806
      %v2927 = vsel %vm1159, %v2806, %v2808
      %v2928 = vsel %vm1159, %v2808, %v2810
      %v2929 = vsel %vm1159, %v2812, %v2814
      %v2930 = vsel %vm1159, %v2814, %v2816
      %v2931 = vsel %vm1159, %v2816, %v2818
      %v2932 = vsel %vm1159, %v2818, %v2820
      %v2933 = vsel %vm1159, %v2820, %v2822
      %v2934 = vsel %vm1159, %v2822, %v2824
      %v2935 = vsel %vm1159, %v2826, %v2828
      %v2936 = vsel %vm1159, %v2828, %v2830
      %v2937 = vsel %vm1159, %v2830, %v2832
      %v2938 = vsel %vm1159, %v2832, %v2834
      %v2939 = vsel %vm1159, %v2834, %v2836
      %v2940 = vsel %vm1159, %v2836, %v2838
      %v2941 = vsel %vm1159, %v2840, %v2842
      %v2942 = vsel %vm1159, %v2842, %v2844
      %v2943 = vsel %vm1159, %v2844, %v2846
      %v2944 = vsel %vm1159, %v2846, %v2848
      %v2945 = vsel %vm1159, %v2848, %v2850
      %v2946 = vsel %vm1159, %v2850, %v2852
      %v2947 = vsel %vm1159, %v2854, %v2856
      %v2948 = vsel %vm1159, %v2856, %v2858
      %v2949 = vsel %vm1159, %v2858, %v2860
      %v2950 = vsel %vm1159, %v2860, %v2862
      %v2951 = vsel %vm1159, %v2862, %v2864
      %v2952 = vsel %vm1159, %v2864, %v2866
      %v2953 = vsel %vm1159, %v2868, %v2870
      %v2954 = vsel %vm1159, %v2870, %v2872
      %v2955 = vsel %vm1159, %v2872, %v2874
      %v2956 = vsel %vm1159, %v2874, %v2876
      %v2957 = vsel %vm1159, %v2876, %v2878
      %v2958 = vsel %vm1159, %v2878, %v2880
      %v2959 = vsel %vm1159, %v2882, %v2884
      %v2960 = vsel %vm1159, %v2884, %v2886
      %v2961 = vsel %vm1159, %v2886, %v2888
      %v2962 = vsel %vm1159, %v2888, %v2890
      %v2963 = vsel %vm1159, %v2890, %v2892
      %v2964 = vsel %vm1159, %v2892, %v2894
      %v2965 = vsel %vm1159, %v2896, %v2898
      %v2966 = vsel %vm1159, %v2898, %v2900
      %v2967 = vsel %vm1159, %v2900, %v2902
      %v2968 = vsel %vm1159, %v2902, %v2904
      %v2969 = vsel %vm1159, %v2904, %v2906
      %v2970 = vsel %vm1159, %v2906, %v2908
      %v2971 = vsel %vm1159, %v2910, %v2912
      %v2972 = vsel %vm1159, %v2912, %v2914
      %v2973 = vsel %vm1159, %v2914, %v2916
      %v2974 = vsel %vm1159, %v2916, %v2918
      %v2975 = vsel %vm1159, %v2918, %v2920
      %v2976 = vsel %vm1159, %v2920, %v2922
      %v3032 = vsel %vm2257, %v2797, 0
      %3034 = vmatpush.bf16.msra.mxu0 %v2965
      %3035 = vmatpush.bf16.msra.mxu0 %v2959
      %3036 = vmatpush.bf16.msra.mxu0 %v2953
      %3037 = vmatpush.bf16.msra.mxu0 %v2947
      %3038 = vmatpush.bf16.msra.mxu0 %v2941
      %3039 = vmatpush.bf16.msra.mxu0 %v2935
      %3040 = vmatpush.bf16.msra.mxu0 %v2929
      %3041 = vmatpush.bf16.msra.mxu0 %v2923
      %3042 = vmatmul.bf16.gmra.mxu0 %v2796
      %v3043 = vpop.f32.mrf.mxu0
      %v3044 = vadd.f32 %v2791, %v3043
      %v3045 = vpop.f32.mrf.mxu0
      %3046 = vdwg.mxu0
      %3047 = vmatpush.bf16.msra.mxu0 0
      %3048 = vmatpush.bf16.msra.mxu0 0
      %3049 = vmatpush.bf16.msra.mxu0 0
      %3050 = vmatpush.bf16.msra.mxu0 0
      %3051 = vmatpush.bf16.msra.mxu0 0
      %3052 = vmatpush.bf16.msra.mxu0 0
      %3053 = vmatpush.bf16.msra.mxu0 0
      %3054 = vmatpush.bf16.msra.mxu0 %v2971
      %3055 = vmatmul.bf16.gmra.mxu0 %v3032
      %v3056 = vpop.f32.mrf.mxu0
      %v3057 = vadd.f32 %v3044, %v3056
      %v3058 = vpop.f32.mrf.mxu0
      %3059 = vdwg.mxu0
      %3060 = vmatpush.bf16.msra.mxu0 %v2966
      %3061 = vmatpush.bf16.msra.mxu0 %v2960
      %3062 = vmatpush.bf16.msra.mxu0 %v2954
      %3063 = vmatpush.bf16.msra.mxu0 %v2948
      %3064 = vmatpush.bf16.msra.mxu0 %v2942
      %3065 = vmatpush.bf16.msra.mxu0 %v2936
      %3066 = vmatpush.bf16.msra.mxu0 %v2930
      %3067 = vmatpush.bf16.msra.mxu0 %v2924
      %3068 = vmatmul.bf16.gmra.mxu0 %v2796
      %v3069 = vpop.f32.mrf.mxu0
      %v3070 = vadd.f32 %v2791, %v3069
      %v3071 = vpop.f32.mrf.mxu0
      %3072 = vdwg.mxu0
      %3073 = vmatpush.bf16.msra.mxu0 0
      %3074 = vmatpush.bf16.msra.mxu0 0
      %3075 = vmatpush.bf16.msra.mxu0 0
      %3076 = vmatpush.bf16.msra.mxu0 0
      %3077 = vmatpush.bf16.msra.mxu0 0
      %3078 = vmatpush.bf16.msra.mxu0 0
      %3079 = vmatpush.bf16.msra.mxu0 0
      %3080 = vmatpush.bf16.msra.mxu0 %v2972
      %3081 = vmatmul.bf16.gmra.mxu0 %v3032
      %v3082 = vpop.f32.mrf.mxu0
      %v3083 = vadd.f32 %v3070, %v3082
      %v3084 = vpop.f32.mrf.mxu0
      %3085 = vdwg.mxu0
      %3086 = vmatpush.bf16.msra.mxu0 %v2967
      %3087 = vmatpush.bf16.msra.mxu0 %v2961
      %3088 = vmatpush.bf16.msra.mxu0 %v2955
      %3089 = vmatpush.bf16.msra.mxu0 %v2949
      %3090 = vmatpush.bf16.msra.mxu0 %v2943
      %3091 = vmatpush.bf16.msra.mxu0 %v2937
      %3092 = vmatpush.bf16.msra.mxu0 %v2931
      %3093 = vmatpush.bf16.msra.mxu0 %v2925
      %3094 = vmatmul.bf16.gmra.mxu0 %v2796
      %v3095 = vpop.f32.mrf.mxu0
      %v3096 = vadd.f32 %v2791, %v3095
      %v3097 = vpop.f32.mrf.mxu0
      %3098 = vdwg.mxu0
      %3099 = vmatpush.bf16.msra.mxu0 0
      %3100 = vmatpush.bf16.msra.mxu0 0
      %3101 = vmatpush.bf16.msra.mxu0 0
      %3102 = vmatpush.bf16.msra.mxu0 0
      %3103 = vmatpush.bf16.msra.mxu0 0
      %3104 = vmatpush.bf16.msra.mxu0 0
      %3105 = vmatpush.bf16.msra.mxu0 0
      %3106 = vmatpush.bf16.msra.mxu0 %v2973
      %3107 = vmatmul.bf16.gmra.mxu0 %v3032
      %v3108 = vpop.f32.mrf.mxu0
      %v3109 = vadd.f32 %v3096, %v3108
      %v3110 = vpop.f32.mrf.mxu0
      %3111 = vdwg.mxu0
      %3112 = vmatpush.bf16.msra.mxu0 %v2968
      %3113 = vmatpush.bf16.msra.mxu0 %v2962
      %3114 = vmatpush.bf16.msra.mxu0 %v2956
      %3115 = vmatpush.bf16.msra.mxu0 %v2950
      %3116 = vmatpush.bf16.msra.mxu0 %v2944
      %3117 = vmatpush.bf16.msra.mxu0 %v2938
      %3118 = vmatpush.bf16.msra.mxu0 %v2932
      %3119 = vmatpush.bf16.msra.mxu0 %v2926
      %3120 = vmatmul.bf16.gmra.mxu0 %v2796
      %v3121 = vpop.f32.mrf.mxu0
      %v3122 = vadd.f32 %v2791, %v3121
      %v3123 = vpop.f32.mrf.mxu0
      %3124 = vdwg.mxu0
      %3125 = vmatpush.bf16.msra.mxu0 0
      %3126 = vmatpush.bf16.msra.mxu0 0
      %3127 = vmatpush.bf16.msra.mxu0 0
      %3128 = vmatpush.bf16.msra.mxu0 0
      %3129 = vmatpush.bf16.msra.mxu0 0
      %3130 = vmatpush.bf16.msra.mxu0 0
      %3131 = vmatpush.bf16.msra.mxu0 0
      %3132 = vmatpush.bf16.msra.mxu0 %v2974
      %3133 = vmatmul.bf16.gmra.mxu0 %v3032
      %v3134 = vpop.f32.mrf.mxu0
      %v3135 = vadd.f32 %v3122, %v3134
      %v3136 = vpop.f32.mrf.mxu0
      %3137 = vdwg.mxu0
      %3138 = vmatpush.bf16.msra.mxu0 %v2969
      %3139 = vmatpush.bf16.msra.mxu0 %v2963
      %3140 = vmatpush.bf16.msra.mxu0 %v2957
      %3141 = vmatpush.bf16.msra.mxu0 %v2951
      %3142 = vmatpush.bf16.msra.mxu0 %v2945
      %3143 = vmatpush.bf16.msra.mxu0 %v2939
      %3144 = vmatpush.bf16.msra.mxu0 %v2933
      %3145 = vmatpush.bf16.msra.mxu0 %v2927
      %3146 = vmatmul.bf16.gmra.mxu0 %v2796
      %v3147 = vpop.f32.mrf.mxu0
      %v3148 = vadd.f32 %v2791, %v3147
      %v3149 = vpop.f32.mrf.mxu0
      %3150 = vdwg.mxu0
      %3151 = vmatpush.bf16.msra.mxu0 0
      %3152 = vmatpush.bf16.msra.mxu0 0
      %3153 = vmatpush.bf16.msra.mxu0 0
      %3154 = vmatpush.bf16.msra.mxu0 0
      %3155 = vmatpush.bf16.msra.mxu0 0
      %3156 = vmatpush.bf16.msra.mxu0 0
      %3157 = vmatpush.bf16.msra.mxu0 0
      %3158 = vmatpush.bf16.msra.mxu0 %v2975
      %3159 = vmatmul.bf16.gmra.mxu0 %v3032
      %v3160 = vpop.f32.mrf.mxu0
      %v3161 = vadd.f32 %v3148, %v3160
      %v3162 = vpop.f32.mrf.mxu0
      %3163 = vdwg.mxu0
      %3164 = vmatpush.bf16.msra.mxu0 %v2970
      %3165 = vmatpush.bf16.msra.mxu0 %v2964
      %3166 = vmatpush.bf16.msra.mxu0 %v2958
      %3167 = vmatpush.bf16.msra.mxu0 %v2952
      %3168 = vmatpush.bf16.msra.mxu0 %v2946
      %3169 = vmatpush.bf16.msra.mxu0 %v2940
      %3170 = vmatpush.bf16.msra.mxu0 %v2934
      %3171 = vmatpush.bf16.msra.mxu0 %v2928
      %3172 = vmatmul.bf16.gmra.mxu0 %v2796
      %v3173 = vpop.f32.mrf.mxu0
      %v3174 = vadd.f32 %v2791, %v3173
      %v3175 = vpop.f32.mrf.mxu0
      %3176 = vdwg.mxu0
      %3177 = vmatpush.bf16.msra.mxu0 0
      %3178 = vmatpush.bf16.msra.mxu0 0
      %3179 = vmatpush.bf16.msra.mxu0 0
      %3180 = vmatpush.bf16.msra.mxu0 0
      %3181 = vmatpush.bf16.msra.mxu0 0
      %3182 = vmatpush.bf16.msra.mxu0 0
      %3183 = vmatpush.bf16.msra.mxu0 0
      %3184 = vmatpush.bf16.msra.mxu0 %v2976
      %3185 = vmatmul.bf16.gmra.mxu0 %v3032
      %v3186 = vpop.f32.mrf.mxu0
      %v3187 = vadd.f32 %v3174, %v3186
      %v3188 = vpop.f32.mrf.mxu0
      %3189 = vdwg.mxu0
      %v3190 = vmax.f32 %v3057, 0.0
      %v3191 = vmax.f32 %v3083, 0.0
      %v3192 = vmax.f32 %v3109, 0.0
      %v3193 = vmax.f32 %v3135, 0.0
      %v3194 = vmax.f32 %v3161, 0.0
      %v3195 = vmax.f32 %v3187, 0.0
      %v3196 = vmul.f32 %v3190, %v1645
      %v3197 = vmul.f32 %v3191, %v1646
      %v3198 = vmul.f32 %v3192, %v1647
      %v3199 = vmul.f32 %v3193, %v1648
      %v3200 = vmul.f32 %v3194, %v1649
      %v3201 = vmul.f32 %v3195, %v1650
      %v3202 = vadd.f32 %v3196, %v3197
      %v3203 = vadd.f32 %v3202, %v3198
      %v3204 = vadd.f32 %v3203, %v3199
      %v3205 = vadd.f32 %v3204, %v3200
      %v3206 = vadd.f32 %v3205, %v3201
      %3207 = vadd.xlane.f32.xlu0 %v3206
      %v3208 = vpop.xlane.xlu0 %3207
      %v3209 = vmul.f32 %v3208, 0.001953125
      %v3210 = vsub.f32 %v3190, %v3209
      %v3211 = vsub.f32 %v3191, %v3209
      %v3212 = vsub.f32 %v3192, %v3209
      %v3213 = vsub.f32 %v3193, %v3209
      %v3214 = vsub.f32 %v3194, %v3209
      %v3215 = vsub.f32 %v3195, %v3209
      %v3216 = vmul.f32 %v3210, %v1645
      %v3217 = vmul.f32 %v3211, %v1646
      %v3218 = vmul.f32 %v3212, %v1647
      %v3219 = vmul.f32 %v3213, %v1648
      %v3220 = vmul.f32 %v3214, %v1649
      %v3221 = vmul.f32 %v3215, %v1650
      %v3222 = vmul.f32 %v3216, %v3216
      %v3223 = vmul.f32 %v3217, %v3217
      %v3224 = vmul.f32 %v3218, %v3218
      %v3225 = vmul.f32 %v3219, %v3219
      %v3226 = vmul.f32 %v3220, %v3220
      %v3227 = vmul.f32 %v3221, %v3221
      %v3228 = vadd.f32 %v3222, %v3223
      %v3229 = vadd.f32 %v3228, %v3224
      %v3230 = vadd.f32 %v3229, %v3225
      %v3231 = vadd.f32 %v3230, %v3226
      %v3232 = vadd.f32 %v3231, %v3227
      %3233 = vadd.xlane.f32.xlu0 %v3232
      %v3234 = vpop.xlane.xlu0 %3233
      %v3235 = vmul.f32 %v3234, 0.001953125
      %v3236 = vadd.f32 %v3235, 1e-05
      %v3237 = vrsqrt.pop %v3236
      %v3238 = vmul.f32 %v3237, %v3236
      %v3239 = vmul.f32 %v3238, %v3237
      %v3240 = vmul.f32 0.5, %v3239
      %v3241 = vsub.f32 1.5, %v3240
      %v3242 = vmul.f32 %v3237, %v3241
      %vm3243 = vweird.f32 %v3236
      %vm3244 = vweird.f32 %v3237
      %vm3245 = vmor %vm3243, %vm3244
      %v3246 = vsel %vm3245, %v3237, %v3242
      %v3247 = vmul.f32 %v2614, %v3246
      %v3248 = vmul.f32 %v3209, %v3247
      %3250 = vrot.lane.b32.xlu0 %v3248, 1
      %v3251 = vpop.permute.xlu0 %3250
      %v3253 = vsub.f32 %v2614, %v3251
      %3255 = vset.pattern.permute.xlu0 1
      %3256 = vperm.xlu0 %3255, %v3247
      %v3257 = vpop.permute.xlu0 %3256
      %v3259 = vmul.f32 %v3190, %v3257
      %v3260 = vmul.f32 %v3191, %v3257
      %v3261 = vmul.f32 %v3192, %v3257
      %v3262 = vmul.f32 %v3193, %v3257
      %v3263 = vmul.f32 %v3194, %v3257
      %v3264 = vmul.f32 %v3195, %v3257
      %3266 = vset.pattern.permute.xlu0 2
      %3267 = vperm.xlu0 %3266, %v3253
      %v3268 = vpop.permute.xlu0 %3267
      %v3270 = vadd.f32 %v3259, %v3268
      %v3271 = vadd.f32 %v3260, %v3268
      %v3272 = vadd.f32 %v3261, %v3268
      %v3273 = vadd.f32 %v3262, %v3268
      %v3274 = vadd.f32 %v3263, %v3268
      %v3275 = vadd.f32 %v3264, %v3268
      %v3276 = vmul.f32 %v3270, %v1645
      %v3277 = vmul.f32 %v3271, %v1646
      %v3278 = vmul.f32 %v3272, %v1647
      %v3279 = vmul.f32 %v3273, %v1648
      %v3280 = vmul.f32 %v3274, %v1649
      %v3281 = vmul.f32 %v3275, %v1650
      %v3282 = vld [vmem:[%s475] sm:$0x1]
      %v3283 = vld [vmem:[%s478] sm:$0x1]
      %v3284 = vpack.c.bf16 %v3277, %v3276
      %v3285 = vpack.c.bf16 %v3279, %v3278
      %v3286 = vpack.c.bf16 %v3281, %v3280
      %v3290 = vunpack.c.l.b16 %v3284
      %v3291 = vunpack.c.h.b16 %v3284
      %v3292 = vunpack.c.l.b16 %v3285
      %v3293 = vunpack.c.h.b16 %v3285
      %v3294 = vunpack.c.l.b16 %v3286
      %v3295 = vunpack.c.h.b16 %v3286
      %v3296 = vpack.c.b16 %v3290, %v3290
      %v3297 = vpack.c.b16 %v3291, %v3291
      %v3298 = vpack.c.b16 %v3292, %v3292
      %v3299 = vpack.c.b16 %v3293, %v3293
      %v3300 = vpack.c.b16 %v3294, %v3294
      %v3301 = vpack.c.b16 %v3295, %v3295
      %v3302 = vrot.slane 0, 4
      %v3303 = vrot.slane %v3296, 4
      %v3304 = vrot.slane %v3297, 4
      %v3305 = vrot.slane %v3298, 4
      %v3306 = vrot.slane %v3299, 4
      %v3307 = vrot.slane %v3300, 4
      %v3308 = vrot.slane %v3301, 4
      %3309 = vrot.lane.b32.xlu0 %v3302, 127
      %v3310 = vpop.permute.xlu0 %3309
      %3311 = vrot.lane.b32.xlu0 %v3303, 127
      %v3312 = vpop.permute.xlu0 %3311
      %3313 = vrot.lane.b32.xlu0 %v3304, 127
      %v3314 = vpop.permute.xlu0 %3313
      %3315 = vrot.lane.b32.xlu0 %v3305, 127
      %v3316 = vpop.permute.xlu0 %3315
      %3317 = vrot.lane.b32.xlu0 %v3306, 127
      %v3318 = vpop.permute.xlu0 %3317
      %3319 = vrot.lane.b32.xlu0 %v3307, 127
      %v3320 = vpop.permute.xlu0 %3319
      %3321 = vrot.lane.b32.xlu0 %v3308, 127
      %v3322 = vpop.permute.xlu0 %3321
      %v3323 = vsel %vm602, %v3310, %v3312
      %v3324 = vsel %vm602, %v3312, %v3314
      %v3325 = vsel %vm602, %v3314, %v3316
      %v3326 = vsel %vm602, %v3316, %v3318
      %v3327 = vsel %vm602, %v3318, %v3320
      %v3328 = vsel %vm602, %v3320, %v3322
      %3329 = vrot.lane.b32.xlu0 %v3296, 126
      %v3330 = vpop.permute.xlu0 %3329
      %3331 = vrot.lane.b32.xlu0 %v3297, 126
      %v3332 = vpop.permute.xlu0 %3331
      %3333 = vrot.lane.b32.xlu0 %v3298, 126
      %v3334 = vpop.permute.xlu0 %3333
      %3335 = vrot.lane.b32.xlu0 %v3299, 126
      %v3336 = vpop.permute.xlu0 %3335
      %3337 = vrot.lane.b32.xlu0 %v3300, 126
      %v3338 = vpop.permute.xlu0 %3337
      %3339 = vrot.lane.b32.xlu0 %v3301, 126
      %v3340 = vpop.permute.xlu0 %3339
      %v3341 = vsel %vm641, %v616, %v3330
      %v3342 = vsel %vm641, %v3330, %v3332
      %v3343 = vsel %vm641, %v3332, %v3334
      %v3344 = vsel %vm641, %v3334, %v3336
      %v3345 = vsel %vm641, %v3336, %v3338
      %v3346 = vsel %vm641, %v3338, %v3340
      %3347 = vrot.lane.b32.xlu0 %v3302, 110
      %v3348 = vpop.permute.xlu0 %3347
      %3349 = vrot.lane.b32.xlu0 %v3303, 110
      %v3350 = vpop.permute.xlu0 %3349
      %3351 = vrot.lane.b32.xlu0 %v3304, 110
      %v3352 = vpop.permute.xlu0 %3351
      %3353 = vrot.lane.b32.xlu0 %v3305, 110
      %v3354 = vpop.permute.xlu0 %3353
      %3355 = vrot.lane.b32.xlu0 %v3306, 110
      %v3356 = vpop.permute.xlu0 %3355
      %3357 = vrot.lane.b32.xlu0 %v3307, 110
      %v3358 = vpop.permute.xlu0 %3357
      %3359 = vrot.lane.b32.xlu0 %v3308, 110
      %v3360 = vpop.permute.xlu0 %3359
      %v3361 = vsel %vm680, %v3348, %v3350
      %v3362 = vsel %vm680, %v3350, %v3352
      %v3363 = vsel %vm680, %v3352, %v3354
      %v3364 = vsel %vm680, %v3354, %v3356
      %v3365 = vsel %vm680, %v3356, %v3358
      %v3366 = vsel %vm680, %v3358, %v3360
      %3367 = vrot.lane.b32.xlu0 %v3296, 109
      %v3368 = vpop.permute.xlu0 %3367
      %3369 = vrot.lane.b32.xlu0 %v3297, 109
      %v3370 = vpop.permute.xlu0 %3369
      %3371 = vrot.lane.b32.xlu0 %v3298, 109
      %v3372 = vpop.permute.xlu0 %3371
      %3373 = vrot.lane.b32.xlu0 %v3299, 109
      %v3374 = vpop.permute.xlu0 %3373
      %3375 = vrot.lane.b32.xlu0 %v3300, 109
      %v3376 = vpop.permute.xlu0 %3375
      %3377 = vrot.lane.b32.xlu0 %v3301, 109
      %v3378 = vpop.permute.xlu0 %3377
      %v3379 = vsel %vm717, %v3368, %v3370
      %v3380 = vsel %vm717, %v3370, %v3372
      %v3381 = vsel %vm717, %v3372, %v3374
      %v3382 = vsel %vm717, %v3374, %v3376
      %v3383 = vsel %vm717, %v3376, %v3378
      %3384 = vrot.lane.b32.xlu0 %v3303, 108
      %v3385 = vpop.permute.xlu0 %3384
      %3386 = vrot.lane.b32.xlu0 %v3304, 108
      %v3387 = vpop.permute.xlu0 %3386
      %3388 = vrot.lane.b32.xlu0 %v3305, 108
      %v3389 = vpop.permute.xlu0 %3388
      %3390 = vrot.lane.b32.xlu0 %v3306, 108
      %v3391 = vpop.permute.xlu0 %3390
      %3392 = vrot.lane.b32.xlu0 %v3307, 108
      %v3393 = vpop.permute.xlu0 %3392
      %3394 = vrot.lane.b32.xlu0 %v3308, 108
      %v3395 = vpop.permute.xlu0 %3394
      %3396 = vrot.lane.b32.xlu0 %v3302, 108
      %v3397 = vpop.permute.xlu0 %3396
      %v3398 = vsel %vm754, %v3385, %v3387
      %v3399 = vsel %vm754, %v3387, %v3389
      %v3400 = vsel %vm754, %v3389, %v3391
      %v3401 = vsel %vm754, %v3391, %v3393
      %v3402 = vsel %vm754, %v3393, %v3395
      %v3403 = vsel %vm754, %v3395, %v3397
      %3404 = vrot.lane.b32.xlu0 %v3296, 92
      %v3405 = vpop.permute.xlu0 %3404
      %3406 = vrot.lane.b32.xlu0 %v3297, 92
      %v3407 = vpop.permute.xlu0 %3406
      %3408 = vrot.lane.b32.xlu0 %v3298, 92
      %v3409 = vpop.permute.xlu0 %3408
      %3410 = vrot.lane.b32.xlu0 %v3299, 92
      %v3411 = vpop.permute.xlu0 %3410
      %3412 = vrot.lane.b32.xlu0 %v3300, 92
      %v3413 = vpop.permute.xlu0 %3412
      %3414 = vrot.lane.b32.xlu0 %v3301, 92
      %v3415 = vpop.permute.xlu0 %3414
      %v3416 = vsel %vm793, %v3405, %v3407
      %v3417 = vsel %vm793, %v3407, %v3409
      %v3418 = vsel %vm793, %v3409, %v3411
      %v3419 = vsel %vm793, %v3411, %v3413
      %v3420 = vsel %vm793, %v3413, %v3415
      %v3421 = vsel %vm793, %v3415, %v780
      %3422 = vrot.lane.b32.xlu0 %v3303, 91
      %v3423 = vpop.permute.xlu0 %3422
      %3424 = vrot.lane.b32.xlu0 %v3304, 91
      %v3425 = vpop.permute.xlu0 %3424
      %3426 = vrot.lane.b32.xlu0 %v3305, 91
      %v3427 = vpop.permute.xlu0 %3426
      %3428 = vrot.lane.b32.xlu0 %v3306, 91
      %v3429 = vpop.permute.xlu0 %3428
      %3430 = vrot.lane.b32.xlu0 %v3307, 91
      %v3431 = vpop.permute.xlu0 %3430
      %3432 = vrot.lane.b32.xlu0 %v3308, 91
      %v3433 = vpop.permute.xlu0 %3432
      %3434 = vrot.lane.b32.xlu0 %v3302, 91
      %v3435 = vpop.permute.xlu0 %3434
      %v3436 = vsel %vm832, %v3423, %v3425
      %v3437 = vsel %vm832, %v3425, %v3427
      %v3438 = vsel %vm832, %v3427, %v3429
      %v3439 = vsel %vm832, %v3429, %v3431
      %v3440 = vsel %vm832, %v3431, %v3433
      %v3441 = vsel %vm832, %v3433, %v3435
      %3442 = vrot.lane.b32.xlu0 %v3296, 90
      %v3443 = vpop.permute.xlu0 %3442
      %3444 = vrot.lane.b32.xlu0 %v3297, 90
      %v3445 = vpop.permute.xlu0 %3444
      %3446 = vrot.lane.b32.xlu0 %v3298, 90
      %v3447 = vpop.permute.xlu0 %3446
      %3448 = vrot.lane.b32.xlu0 %v3299, 90
      %v3449 = vpop.permute.xlu0 %3448
      %3450 = vrot.lane.b32.xlu0 %v3300, 90
      %v3451 = vpop.permute.xlu0 %3450
      %3452 = vrot.lane.b32.xlu0 %v3301, 90
      %v3453 = vpop.permute.xlu0 %3452
      %v3454 = vsel %vm871, %v3443, %v3445
      %v3455 = vsel %vm871, %v3445, %v3447
      %v3456 = vsel %vm871, %v3447, %v3449
      %v3457 = vsel %vm871, %v3449, %v3451
      %v3458 = vsel %vm871, %v3451, %v3453
      %v3459 = vsel %vm871, %v3453, %v858
      %vm3460 = vcmask 1043456
      %v3463 = vsel %vm3460, 0, %v3323
      %v3466 = vsel %vm3460, %v3296, %v3324
      %v3469 = vsel %vm3460, %v3297, %v3325
      %v3472 = vsel %vm3460, %v3298, %v3326
      %v3475 = vsel %vm3460, %v3299, %v3327
      %v3478 = vsel %vm3460, %v3300, %v3328
      %v3481 = vsel %vm3460, %v3301, %v3322
      %v3484 = vsel %vm3460, %v3341, %v3361
      %v3487 = vsel %vm3460, %v3342, %v3362
      %v3490 = vsel %vm3460, %v3343, %v3363
      %v3493 = vsel %vm3460, %v3344, %v3364
      %v3496 = vsel %vm3460, %v3345, %v3365
      %v3499 = vsel %vm3460, %v3346, %v3366
      %v3502 = vsel %vm3460, %v3340, %v3360
      %v3505 = vsel %vm3460, %v3368, %v3385
      %v3508 = vsel %vm3460, %v3379, %v3398
      %v3511 = vsel %vm3460, %v3380, %v3399
      %v3514 = vsel %vm3460, %v3381, %v3400
      %v3517 = vsel %vm3460, %v3382, %v3401
      %v3520 = vsel %vm3460, %v3383, %v3402
      %v3523 = vsel %vm3460, %v3378, %v3403
      %v3526 = vsel %vm3460, %v3405, %v3423
      %v3529 = vsel %vm3460, %v3416, %v3436
      %v3532 = vsel %vm3460, %v3417, %v3437
      %v3535 = vsel %vm3460, %v3418, %v3438
      %v3538 = vsel %vm3460, %v3419, %v3439
      %v3541 = vsel %vm3460, %v3420, %v3440
      %v3544 = vsel %vm3460, %v3421, %v3441
      %3546 = vset.pattern.permute.xlu0 0
      %3547 = vperm.xlu0 %3546, %v3283
      %v3548 = vpop.permute.xlu0 %3547
      %v3550 = vperm.slane %v3548, 0
      %3579 = vrot.lane.b32.xlu0 %v3463, 19
      %v3580 = vpop.permute.xlu0 %3579
      %3581 = vrot.lane.b32.xlu0 %v3466, 19
      %v3582 = vpop.permute.xlu0 %3581
      %3583 = vrot.lane.b32.xlu0 %v3469, 19
      %v3584 = vpop.permute.xlu0 %3583
      %3585 = vrot.lane.b32.xlu0 %v3472, 19
      %v3586 = vpop.permute.xlu0 %3585
      %3587 = vrot.lane.b32.xlu0 %v3475, 19
      %v3588 = vpop.permute.xlu0 %3587
      %3589 = vrot.lane.b32.xlu0 %v3478, 19
      %v3590 = vpop.permute.xlu0 %3589
      %3591 = vrot.lane.b32.xlu0 %v3481, 19
      %v3592 = vpop.permute.xlu0 %3591
      %3593 = vrot.lane.b32.xlu0 %v3484, 19
      %v3594 = vpop.permute.xlu0 %3593
      %3595 = vrot.lane.b32.xlu0 %v3487, 19
      %v3596 = vpop.permute.xlu0 %3595
      %3597 = vrot.lane.b32.xlu0 %v3490, 19
      %v3598 = vpop.permute.xlu0 %3597
      %3599 = vrot.lane.b32.xlu0 %v3493, 19
      %v3600 = vpop.permute.xlu0 %3599
      %3601 = vrot.lane.b32.xlu0 %v3496, 19
      %v3602 = vpop.permute.xlu0 %3601
      %3603 = vrot.lane.b32.xlu0 %v3499, 19
      %v3604 = vpop.permute.xlu0 %3603
      %3605 = vrot.lane.b32.xlu0 %v3502, 19
      %v3606 = vpop.permute.xlu0 %3605
      %3607 = vrot.lane.b32.xlu0 %v3505, 19
      %v3608 = vpop.permute.xlu0 %3607
      %3609 = vrot.lane.b32.xlu0 %v3508, 19
      %v3610 = vpop.permute.xlu0 %3609
      %3611 = vrot.lane.b32.xlu0 %v3511, 19
      %v3612 = vpop.permute.xlu0 %3611
      %3613 = vrot.lane.b32.xlu0 %v3514, 19
      %v3614 = vpop.permute.xlu0 %3613
      %3615 = vrot.lane.b32.xlu0 %v3517, 19
      %v3616 = vpop.permute.xlu0 %3615
      %3617 = vrot.lane.b32.xlu0 %v3520, 19
      %v3618 = vpop.permute.xlu0 %3617
      %3619 = vrot.lane.b32.xlu0 %v3523, 19
      %v3620 = vpop.permute.xlu0 %3619
      %3621 = vrot.lane.b32.xlu0 %v3526, 19
      %v3622 = vpop.permute.xlu0 %3621
      %3623 = vrot.lane.b32.xlu0 %v3529, 19
      %v3624 = vpop.permute.xlu0 %3623
      %3625 = vrot.lane.b32.xlu0 %v3532, 19
      %v3626 = vpop.permute.xlu0 %3625
      %3627 = vrot.lane.b32.xlu0 %v3535, 19
      %v3628 = vpop.permute.xlu0 %3627
      %3629 = vrot.lane.b32.xlu0 %v3538, 19
      %v3630 = vpop.permute.xlu0 %3629
      %3631 = vrot.lane.b32.xlu0 %v3541, 19
      %v3632 = vpop.permute.xlu0 %3631
      %3633 = vrot.lane.b32.xlu0 %v3544, 19
      %v3634 = vpop.permute.xlu0 %3633
      %3635 = vrot.lane.b32.xlu0 %v3443, 19
      %v3636 = vpop.permute.xlu0 %3635
      %3637 = vrot.lane.b32.xlu0 %v3454, 19
      %v3638 = vpop.permute.xlu0 %3637
      %3639 = vrot.lane.b32.xlu0 %v3455, 19
      %v3640 = vpop.permute.xlu0 %3639
      %3641 = vrot.lane.b32.xlu0 %v3456, 19
      %v3642 = vpop.permute.xlu0 %3641
      %3643 = vrot.lane.b32.xlu0 %v3457, 19
      %v3644 = vpop.permute.xlu0 %3643
      %3645 = vrot.lane.b32.xlu0 %v3458, 19
      %v3646 = vpop.permute.xlu0 %3645
      %3647 = vrot.lane.b32.xlu0 %v3459, 19
      %v3648 = vpop.permute.xlu0 %3647
      %v3649 = vsel %vm1159, %v3580, %v3582
      %v3650 = vsel %vm1159, %v3582, %v3584
      %v3651 = vsel %vm1159, %v3584, %v3586
      %v3652 = vsel %vm1159, %v3586, %v3588
      %v3653 = vsel %vm1159, %v3588, %v3590
      %v3654 = vsel %vm1159, %v3590, %v3592
      %v3655 = vsel %vm1159, %v3594, %v3596
      %v3656 = vsel %vm1159, %v3596, %v3598
      %v3657 = vsel %vm1159, %v3598, %v3600
      %v3658 = vsel %vm1159, %v3600, %v3602
      %v3659 = vsel %vm1159, %v3602, %v3604
      %v3660 = vsel %vm1159, %v3604, %v3606
      %v3661 = vsel %vm1159, %v3608, %v3610
      %v3662 = vsel %vm1159, %v3610, %v3612
      %v3663 = vsel %vm1159, %v3612, %v3614
      %v3664 = vsel %vm1159, %v3614, %v3616
      %v3665 = vsel %vm1159, %v3616, %v3618
      %v3666 = vsel %vm1159, %v3618, %v3620
      %v3667 = vsel %vm1159, %v3622, %v3624
      %v3668 = vsel %vm1159, %v3624, %v3626
      %v3669 = vsel %vm1159, %v3626, %v3628
      %v3670 = vsel %vm1159, %v3628, %v3630
      %v3671 = vsel %vm1159, %v3630, %v3632
      %v3672 = vsel %vm1159, %v3632, %v3634
      %v3673 = vsel %vm1159, %v3636, %v3638
      %v3674 = vsel %vm1159, %v3638, %v3640
      %v3675 = vsel %vm1159, %v3640, %v3642
      %v3676 = vsel %vm1159, %v3642, %v3644
      %v3677 = vsel %vm1159, %v3644, %v3646
      %v3678 = vsel %vm1159, %v3646, %v3648
      %vm3703 = vcmask 588800
      %v3705 = vsel %vm3703, %v3282, 0
      %v3708 = vsel %vm3460, %v3673, 0
      %v3711 = vsel %vm3460, %v3674, 0
      %v3714 = vsel %vm3460, %v3675, 0
      %v3717 = vsel %vm3460, %v3676, 0
      %v3720 = vsel %vm3460, %v3677, 0
      %v3723 = vsel %vm3460, %v3678, 0
      %3725 = vmatpush.bf16.msra.mxu0 0
      %3726 = vmatpush.bf16.msra.mxu0 0
      %3727 = vmatpush.bf16.msra.mxu0 0
      %3728 = vmatpush.bf16.msra.mxu0 %v3708
      %3729 = vmatpush.bf16.msra.mxu0 %v3667
      %3730 = vmatpush.bf16.msra.mxu0 %v3661
      %3731 = vmatpush.bf16.msra.mxu0 %v3655
      %3732 = vmatpush.bf16.msra.mxu0 %v3649
      %3733 = vmatmul.bf16.gmra.mxu0 %v3705
      %v3734 = vpop.f32.mrf.mxu0
      %v3735 = vadd.f32 %v3550, %v3734
      %v3736 = vpop.f32.mrf.mxu0
      %3737 = vdwg.mxu0
      %3738 = vmatpush.bf16.msra.mxu0 0
      %3739 = vmatpush.bf16.msra.mxu0 0
      %3740 = vmatpush.bf16.msra.mxu0 0
      %3741 = vmatpush.bf16.msra.mxu0 %v3711
      %3742 = vmatpush.bf16.msra.mxu0 %v3668
      %3743 = vmatpush.bf16.msra.mxu0 %v3662
      %3744 = vmatpush.bf16.msra.mxu0 %v3656
      %3745 = vmatpush.bf16.msra.mxu0 %v3650
      %3746 = vmatmul.bf16.gmra.mxu0 %v3705
      %v3747 = vpop.f32.mrf.mxu0
      %v3748 = vadd.f32 %v3550, %v3747
      %v3749 = vpop.f32.mrf.mxu0
      %3750 = vdwg.mxu0
      %3751 = vmatpush.bf16.msra.mxu0 0
      %3752 = vmatpush.bf16.msra.mxu0 0
      %3753 = vmatpush.bf16.msra.mxu0 0
      %3754 = vmatpush.bf16.msra.mxu0 %v3714
      %3755 = vmatpush.bf16.msra.mxu0 %v3669
      %3756 = vmatpush.bf16.msra.mxu0 %v3663
      %3757 = vmatpush.bf16.msra.mxu0 %v3657
      %3758 = vmatpush.bf16.msra.mxu0 %v3651
      %3759 = vmatmul.bf16.gmra.mxu0 %v3705
      %v3760 = vpop.f32.mrf.mxu0
      %v3761 = vadd.f32 %v3550, %v3760
      %v3762 = vpop.f32.mrf.mxu0
      %3763 = vdwg.mxu0
      %3764 = vmatpush.bf16.msra.mxu0 0
      %3765 = vmatpush.bf16.msra.mxu0 0
      %3766 = vmatpush.bf16.msra.mxu0 0
      %3767 = vmatpush.bf16.msra.mxu0 %v3717
      %3768 = vmatpush.bf16.msra.mxu0 %v3670
      %3769 = vmatpush.bf16.msra.mxu0 %v3664
      %3770 = vmatpush.bf16.msra.mxu0 %v3658
      %3771 = vmatpush.bf16.msra.mxu0 %v3652
      %3772 = vmatmul.bf16.gmra.mxu0 %v3705
      %v3773 = vpop.f32.mrf.mxu0
      %v3774 = vadd.f32 %v3550, %v3773
      %v3775 = vpop.f32.mrf.mxu0
      %3776 = vdwg.mxu0
      %3777 = vmatpush.bf16.msra.mxu0 0
      %3778 = vmatpush.bf16.msra.mxu0 0
      %3779 = vmatpush.bf16.msra.mxu0 0
      %3780 = vmatpush.bf16.msra.mxu0 %v3720
      %3781 = vmatpush.bf16.msra.mxu0 %v3671
      %3782 = vmatpush.bf16.msra.mxu0 %v3665
      %3783 = vmatpush.bf16.msra.mxu0 %v3659
      %3784 = vmatpush.bf16.msra.mxu0 %v3653
      %3785 = vmatmul.bf16.gmra.mxu0 %v3705
      %v3786 = vpop.f32.mrf.mxu0
      %v3787 = vadd.f32 %v3550, %v3786
      %v3788 = vpop.f32.mrf.mxu0
      %3789 = vdwg.mxu0
      %3790 = vmatpush.bf16.msra.mxu0 0
      %3791 = vmatpush.bf16.msra.mxu0 0
      %3792 = vmatpush.bf16.msra.mxu0 0
      %3793 = vmatpush.bf16.msra.mxu0 %v3723
      %3794 = vmatpush.bf16.msra.mxu0 %v3672
      %3795 = vmatpush.bf16.msra.mxu0 %v3666
      %3796 = vmatpush.bf16.msra.mxu0 %v3660
      %3797 = vmatpush.bf16.msra.mxu0 %v3654
      %3798 = vmatmul.bf16.gmra.mxu0 %v3705
      %v3799 = vpop.f32.mrf.mxu0
      %v3800 = vadd.f32 %v3550, %v3799
      %v3801 = vpop.f32.mrf.mxu0
      %3802 = vdwg.mxu0
      %v3803 = vmul.f32 %v3735, %v1645
      %v3804 = vmul.f32 %v3748, %v1646
      %v3805 = vmul.f32 %v3761, %v1647
      %v3806 = vmul.f32 %v3774, %v1648
      %v3807 = vmul.f32 %v3787, %v1649
      %v3808 = vmul.f32 %v3800, %v1650
      %v3815 = vrot.slane %v3804, 7
      %v3816 = vrot.slane %v3805, 6
      %v3817 = vrot.slane %v3806, 5
      %v3818 = vrot.slane %v3807, 4
      %v3819 = vrot.slane %v3808, 3
      %vm3820 = vcmask 1040384
      %v3821 = vsel %vm3820, %v3803, %v3815
      %vm3822 = vcmask 1041408
      %v3823 = vsel %vm3822, %v3821, %v3816
      %vm3824 = vcmask 1043459
      %v3825 = vsel %vm3824, %v3817, %v3818
      %vm3826 = vcmask 1044483
      %v3827 = vsel %vm3826, %v3825, %v3819
      %vm3828 = vcmask 1042432
      %v3829 = vsel %vm3828, %v3823, %v3827
      %v3831 = vlaneseq
      %vm3832 = vcmp.ge.s32.totalorder %v3831, 0
      %vm3833 = vcmp.lt.s32.totalorder %v3831, 768
      %vm3834 = vmand %vm3832, %vm3833
      %3835 = vst.msk [vmem:[%s482] sm:$0x3f] %vm3834, %v3829
      %p3836 = scmp.lt.s32.totalorder %s21, 3
      %s3837 = scalar_select %p3836, %s21, 3
      %s3838 = smul.addr %s3837, 6
      %s3839 = scalar_lea.vmem %s10, %s3838
      // Predicated region
      $region61: #{autoencoder_ex_forward.3} parent=59 // pred_check
        %p3840 = pneg %p289
      $region62: #{autoencoder_ex_forward.3} parent=59 // pred_check_branch
        %3842 = sbr.rel (%p3840) target = $region64
      $region63: #{autoencoder_ex_forward.3} parent=59 // pred_region
        _
      $region64: #{autoencoder_ex_forward.3} parent=59 // pred_fallthru
        _
    $region60: #{autoencoder_ex_forward.3} parent=5 // pred_fallthru
      _
    %p3843 = scmp.le.s32.totalorder 2, %s16
    // Predicated region
    $region65: #{autoencoder_ex_forward.3} parent=5 // pred_check
      %p3844 = pneg %p3843
    $region66: #{autoencoder_ex_forward.3} parent=5 // pred_check_branch
      %3846 = sbr.rel (%p3844) target = $region68
    $region67: #{autoencoder_ex_forward.3} parent=5 // pred_region
      %s3847 = ssub.s32 %s16, 2
      // Predicated region
      $region69: #{autoencoder_ex_forward.3} parent=67 // pred_check
        %p3848 = pneg %p295
      $region70: #{autoencoder_ex_forward.3} parent=67 // pred_check_branch
        %3850 = sbr.rel (%p3848) target = $region72
      $region71: #{autoencoder_ex_forward.3} parent=67 // pred_region
        %p3851 = scmp.lt.s32.totalorder %s22, 3
        %s3852 = scalar_select %p3851, %s22, 3
        %s3853 = smul.addr %s3852, 6
        %s3854 = scalar_lea.vmem %s10, %s3853
      $region72: #{autoencoder_ex_forward.3} parent=67 // pred_fallthru
        _
    $region68: #{autoencoder_ex_forward.3} parent=5 // pred_fallthru
      _
  $region6: #{autoencoder_ex_forward.3} parent=0 // loop_footer
    %s20 = sadd.s32 1, %s16
  $region7: #{autoencoder_ex_forward.3} parent=0 // loop_footer_branch
    %15 = sbr.rel target = $region3
  $region8: #{autoencoder_ex_forward.3} parent=0 // loop_exit
    _

// kernel: autoencoder_ex_forward.2
$region0: #{autoencoder_ex_forward.2}
  #allocation0 [shape = 'u32[]', space=smem, size = 0x4, offset = 0x4, fixed_abs, tag = 'smem constant byte address 0x4 - core index']
  #allocation1 [shape = 'u32[72,128]{1,0:T(1,128)}', space=vmem, size = 0x9000, scoped, tag = 'internal scratch']
  %s0 = inlined_call_operand.vmem [shape: f32[8,768], index: 0, kind: input, shape index: {}]
  %s1 = inlined_call_operand.vmem [shape: f32[1,768], index: 1, kind: input, shape index: {}]
  %s2 = inlined_call_operand.vmem [shape: bf16[8,72], index: 2, kind: input, shape index: {}]
  %s3 = inlined_call_operand.vmem [shape: f32[8,3], index: 3, kind: input, shape index: {}]
  %s4 = inlined_call_operand.vmem [shape: bf16[16,72], index: 4, kind: input, shape index: {}]
  %s5 = inlined_call_operand.vmem [shape: f32[16,3], index: 5, kind: input, shape index: {}]
  %s6 = inlined_call_operand.vmem [shape: bf16[16,144], index: 6, kind: input, shape index: {}]
  %s7 = inlined_call_operand.vmem [shape: f32[16,3], index: 7, kind: input, shape index: {}]
  %s8 = inlined_call_operand.vmem [shape: bf16[32,144], index: 8, kind: input, shape index: {}]
  %s9 = inlined_call_operand.vmem [shape: f32[32,3], index: 9, kind: input, shape index: {}]
  %s10 = inlined_call_operand.vmem [shape: f32[32,768], index: 10, kind: output, shape index: {}]
  %s11 = sld [smem:[#allocation0]]
  $region50: #{autoencoder_ex_forward.2} parent=0
    _
  %s13 = ssub.s32 1, %s11
  %s14 = scalar_select 0, %s13, %s11
  // Predicated region
  $region2: #{autoencoder_ex_forward.2} parent=0 // pred_check
    _
  $region3: #{autoencoder_ex_forward.2} parent=0 // pred_check_branch
    %16 = sbr.rel (0) target = $region5
  $region4: #{autoencoder_ex_forward.2} parent=0 // pred_region
    _
  $region5: #{autoencoder_ex_forward.2} parent=0 // pred_fallthru
    _
  // Predicated region
  $region6: #{autoencoder_ex_forward.2} parent=0 // pred_check
    _
  $region7: #{autoencoder_ex_forward.2} parent=0 // pred_check_branch
    %18 = sbr.rel (0) target = $region9
  $region8: #{autoencoder_ex_forward.2} parent=0 // pred_region
    _
  $region9: #{autoencoder_ex_forward.2} parent=0 // pred_fallthru
    _
  // Predicated region
  $region10: #{autoencoder_ex_forward.2} parent=0 // pred_check
    _
  $region11: #{autoencoder_ex_forward.2} parent=0 // pred_check_branch
    %20 = sbr.rel (0) target = $region13
  $region12: #{autoencoder_ex_forward.2} parent=0 // pred_region
    _
  $region13: #{autoencoder_ex_forward.2} parent=0 // pred_fallthru
    _
  // Predicated region
  $region14: #{autoencoder_ex_forward.2} parent=0 // pred_check
    _
  $region15: #{autoencoder_ex_forward.2} parent=0 // pred_check_branch
    %22 = sbr.rel (0) target = $region17
  $region16: #{autoencoder_ex_forward.2} parent=0 // pred_region
    _
  $region17: #{autoencoder_ex_forward.2} parent=0 // pred_fallthru
    _
  // Predicated region
  $region18: #{autoencoder_ex_forward.2} parent=0 // pred_check
    _
  $region19: #{autoencoder_ex_forward.2} parent=0 // pred_check_branch
    %24 = sbr.rel (0) target = $region21
  $region20: #{autoencoder_ex_forward.2} parent=0 // pred_region
    _
  $region21: #{autoencoder_ex_forward.2} parent=0 // pred_fallthru
    _
  // Predicated region
  $region22: #{autoencoder_ex_forward.2} parent=0 // pred_check
    _
  $region23: #{autoencoder_ex_forward.2} parent=0 // pred_check_branch
    %26 = sbr.rel (0) target = $region25
  $region24: #{autoencoder_ex_forward.2} parent=0 // pred_region
    _
  $region25: #{autoencoder_ex_forward.2} parent=0 // pred_fallthru
    _
  // Predicated region
  $region26: #{autoencoder_ex_forward.2} parent=0 // pred_check
    _
  $region27: #{autoencoder_ex_forward.2} parent=0 // pred_check_branch
    %28 = sbr.rel (0) target = $region29
  $region28: #{autoencoder_ex_forward.2} parent=0 // pred_region
    _
  $region29: #{autoencoder_ex_forward.2} parent=0 // pred_fallthru
    _
  // Predicated region
  $region30: #{autoencoder_ex_forward.2} parent=0 // pred_check
    _
  $region31: #{autoencoder_ex_forward.2} parent=0 // pred_check_branch
    %30 = sbr.rel (0) target = $region33
  $region32: #{autoencoder_ex_forward.2} parent=0 // pred_region
    _
  $region33: #{autoencoder_ex_forward.2} parent=0 // pred_fallthru
    _
  // Predicated region
  $region34: #{autoencoder_ex_forward.2} parent=0 // pred_check
    _
  $region35: #{autoencoder_ex_forward.2} parent=0 // pred_check_branch
    %32 = sbr.rel (0) target = $region37
  $region36: #{autoencoder_ex_forward.2} parent=0 // pred_region
    _
  $region37: #{autoencoder_ex_forward.2} parent=0 // pred_fallthru
    _
  // Predicated region
  $region38: #{autoencoder_ex_forward.2} parent=0 // pred_check
    _
  $region39: #{autoencoder_ex_forward.2} parent=0 // pred_check_branch
    %34 = sbr.rel (0) target = $region41
  $region40: #{autoencoder_ex_forward.2} parent=0 // pred_region
    _
  $region41: #{autoencoder_ex_forward.2} parent=0 // pred_fallthru
    _
  %v36 = vld [vmem:[%s1] sm:$0x3f]
  %v37 = vld [vmem:[%s0] sm:$0xff]
  %v38 = vld [vmem:[%s0 + $0x8] sm:$0xff]
  %v39 = vld [vmem:[%s0 + $0x10] sm:$0xff]
  %v40 = vld [vmem:[%s0 + $0x18] sm:$0xff]
  %v41 = vld [vmem:[%s0 + $0x20] sm:$0xff]
  %v42 = vld [vmem:[%s0 + $0x28] sm:$0xff]
  %v43 = vld [vmem:[%s2] sm:$0xf]
  %v44 = vld [vmem:[%s3] sm:$0xff]
  %v45 = vpack.c.bf16 %v38, %v37
  %v46 = vpack.c.bf16 %v40, %v39
  %v47 = vpack.c.bf16 %v42, %v41
  %v51 = vunpack.c.l.b16 %v45
  %v52 = vunpack.c.h.b16 %v45
  %v53 = vunpack.c.l.b16 %v46
  %v54 = vunpack.c.h.b16 %v46
  %v55 = vunpack.c.l.b16 %v47
  %v56 = vunpack.c.h.b16 %v47
  %v57 = vpack.c.b16 %v51, %v51
  %v58 = vpack.c.b16 %v52, %v52
  %v59 = vpack.c.b16 %v53, %v53
  %v60 = vpack.c.b16 %v54, %v54
  %v61 = vpack.c.b16 %v55, %v55
  %v62 = vpack.c.b16 %v56, %v56
  %v64 = vrot.slane 0, 4
  %v65 = vrot.slane %v57, 4
  %v66 = vrot.slane %v58, 4
  %v67 = vrot.slane %v59, 4
  %v68 = vrot.slane %v60, 4
  %v69 = vrot.slane %v61, 4
  %v70 = vrot.slane %v62, 4
  %71 = vrot.lane.b32.xlu0 %v64, 127
  %v72 = vpop.permute.xlu0 %71
  %73 = vrot.lane.b32.xlu0 %v65, 127
  %v74 = vpop.permute.xlu0 %73
  %75 = vrot.lane.b32.xlu0 %v66, 127
  %v76 = vpop.permute.xlu0 %75
  %77 = vrot.lane.b32.xlu0 %v67, 127
  %v78 = vpop.permute.xlu0 %77
  %79 = vrot.lane.b32.xlu0 %v68, 127
  %v80 = vpop.permute.xlu0 %79
  %81 = vrot.lane.b32.xlu0 %v69, 127
  %v82 = vpop.permute.xlu0 %81
  %83 = vrot.lane.b32.xlu0 %v70, 127
  %v84 = vpop.permute.xlu0 %83
  %vm85 = vcmask 1039360
  %v86 = vsel %vm85, %v72, %v74
  %v87 = vsel %vm85, %v74, %v76
  %v88 = vsel %vm85, %v76, %v78
  %v89 = vsel %vm85, %v78, %v80
  %v90 = vsel %vm85, %v80, %v82
  %v91 = vsel %vm85, %v82, %v84
  %92 = vrot.lane.b32.xlu0 0, 126
  %v93 = vpop.permute.xlu0 %92
  %94 = vrot.lane.b32.xlu0 %v57, 126
  %v95 = vpop.permute.xlu0 %94
  %96 = vrot.lane.b32.xlu0 %v58, 126
  %v97 = vpop.permute.xlu0 %96
  %98 = vrot.lane.b32.xlu0 %v59, 126
  %v99 = vpop.permute.xlu0 %98
  %100 = vrot.lane.b32.xlu0 %v60, 126
  %v101 = vpop.permute.xlu0 %100
  %102 = vrot.lane.b32.xlu0 %v61, 126
  %v103 = vpop.permute.xlu0 %102
  %104 = vrot.lane.b32.xlu0 %v62, 126
  %v105 = vpop.permute.xlu0 %104
  %vm106 = vcmask 1031168
  %v107 = vsel %vm106, %v93, %v95
  %v108 = vsel %vm106, %v95, %v97
  %v109 = vsel %vm106, %v97, %v99
  %v110 = vsel %vm106, %v99, %v101
  %v111 = vsel %vm106, %v101, %v103
  %v112 = vsel %vm106, %v103, %v105
  %113 = vrot.lane.b32.xlu0 %v64, 110
  %v114 = vpop.permute.xlu0 %113
  %115 = vrot.lane.b32.xlu0 %v65, 110
  %v116 = vpop.permute.xlu0 %115
  %117 = vrot.lane.b32.xlu0 %v66, 110
  %v118 = vpop.permute.xlu0 %117
  %119 = vrot.lane.b32.xlu0 %v67, 110
  %v120 = vpop.permute.xlu0 %119
  %121 = vrot.lane.b32.xlu0 %v68, 110
  %v122 = vpop.permute.xlu0 %121
  %123 = vrot.lane.b32.xlu0 %v69, 110
  %v124 = vpop.permute.xlu0 %123
  %125 = vrot.lane.b32.xlu0 %v70, 110
  %v126 = vpop.permute.xlu0 %125
  %vm127 = vcmask 900096
  %v128 = vsel %vm127, %v114, %v116
  %v129 = vsel %vm127, %v116, %v118
  %v130 = vsel %vm127, %v118, %v120
  %v131 = vsel %vm127, %v120, %v122
  %v132 = vsel %vm127, %v122, %v124
  %v133 = vsel %vm127, %v124, %v126
  %134 = vrot.lane.b32.xlu0 %v57, 109
  %v135 = vpop.permute.xlu0 %134
  %136 = vrot.lane.b32.xlu0 %v58, 109
  %v137 = vpop.permute.xlu0 %136
  %138 = vrot.lane.b32.xlu0 %v59, 109
  %v139 = vpop.permute.xlu0 %138
  %140 = vrot.lane.b32.xlu0 %v60, 109
  %v141 = vpop.permute.xlu0 %140
  %142 = vrot.lane.b32.xlu0 %v61, 109
  %v143 = vpop.permute.xlu0 %142
  %144 = vrot.lane.b32.xlu0 %v62, 109
  %v145 = vpop.permute.xlu0 %144
  %vm146 = vcmask 891904
  %v147 = vsel %vm146, %v135, %v137
  %v148 = vsel %vm146, %v137, %v139
  %v149 = vsel %vm146, %v139, %v141
  %v150 = vsel %vm146, %v141, %v143
  %v151 = vsel %vm146, %v143, %v145
  %152 = vrot.lane.b32.xlu0 %v65, 108
  %v153 = vpop.permute.xlu0 %152
  %154 = vrot.lane.b32.xlu0 %v66, 108
  %v155 = vpop.permute.xlu0 %154
  %156 = vrot.lane.b32.xlu0 %v67, 108
  %v157 = vpop.permute.xlu0 %156
  %158 = vrot.lane.b32.xlu0 %v68, 108
  %v159 = vpop.permute.xlu0 %158
  %160 = vrot.lane.b32.xlu0 %v69, 108
  %v161 = vpop.permute.xlu0 %160
  %162 = vrot.lane.b32.xlu0 %v70, 108
  %v163 = vpop.permute.xlu0 %162
  %164 = vrot.lane.b32.xlu0 %v64, 108
  %v165 = vpop.permute.xlu0 %164
  %vm166 = vcmask 883712
  %v167 = vsel %vm166, %v153, %v155
  %v168 = vsel %vm166, %v155, %v157
  %v169 = vsel %vm166, %v157, %v159
  %v170 = vsel %vm166, %v159, %v161
  %v171 = vsel %vm166, %v161, %v163
  %v172 = vsel %vm166, %v163, %v165
  %173 = vrot.lane.b32.xlu0 %v57, 92
  %v174 = vpop.permute.xlu0 %173
  %175 = vrot.lane.b32.xlu0 %v58, 92
  %v176 = vpop.permute.xlu0 %175
  %177 = vrot.lane.b32.xlu0 %v59, 92
  %v178 = vpop.permute.xlu0 %177
  %179 = vrot.lane.b32.xlu0 %v60, 92
  %v180 = vpop.permute.xlu0 %179
  %181 = vrot.lane.b32.xlu0 %v61, 92
  %v182 = vpop.permute.xlu0 %181
  %183 = vrot.lane.b32.xlu0 %v62, 92
  %v184 = vpop.permute.xlu0 %183
  %185 = vrot.lane.b32.xlu0 0, 92
  %v186 = vpop.permute.xlu0 %185
  %vm187 = vcmask 752640
  %v188 = vsel %vm187, %v174, %v176
  %v189 = vsel %vm187, %v176, %v178
  %v190 = vsel %vm187, %v178, %v180
  %v191 = vsel %vm187, %v180, %v182
  %v192 = vsel %vm187, %v182, %v184
  %v193 = vsel %vm187, %v184, %v186
  %194 = vrot.lane.b32.xlu0 %v65, 91
  %v195 = vpop.permute.xlu0 %194
  %196 = vrot.lane.b32.xlu0 %v66, 91
  %v197 = vpop.permute.xlu0 %196
  %198 = vrot.lane.b32.xlu0 %v67, 91
  %v199 = vpop.permute.xlu0 %198
  %200 = vrot.lane.b32.xlu0 %v68, 91
  %v201 = vpop.permute.xlu0 %200
  %202 = vrot.lane.b32.xlu0 %v69, 91
  %v203 = vpop.permute.xlu0 %202
  %204 = vrot.lane.b32.xlu0 %v70, 91
  %v205 = vpop.permute.xlu0 %204
  %206 = vrot.lane.b32.xlu0 %v64, 91
  %v207 = vpop.permute.xlu0 %206
  %vm208 = vcmask 744448
  %v209 = vsel %vm208, %v195, %v197
  %v210 = vsel %vm208, %v197, %v199
  %v211 = vsel %vm208, %v199, %v201
  %v212 = vsel %vm208, %v201, %v203
  %v213 = vsel %vm208, %v203, %v205
  %v214 = vsel %vm208, %v205, %v207
  %215 = vrot.lane.b32.xlu0 %v57, 90
  %v216 = vpop.permute.xlu0 %215
  %217 = vrot.lane.b32.xlu0 %v58, 90
  %v218 = vpop.permute.xlu0 %217
  %219 = vrot.lane.b32.xlu0 %v59, 90
  %v220 = vpop.permute.xlu0 %219
  %221 = vrot.lane.b32.xlu0 %v60, 90
  %v222 = vpop.permute.xlu0 %221
  %223 = vrot.lane.b32.xlu0 %v61, 90
  %v224 = vpop.permute.xlu0 %223
  %225 = vrot.lane.b32.xlu0 %v62, 90
  %v226 = vpop.permute.xlu0 %225
  %227 = vrot.lane.b32.xlu0 0, 90
  %v228 = vpop.permute.xlu0 %227
  %vm229 = vcmask 736256
  %v230 = vsel %vm229, %v216, %v218
  %v231 = vsel %vm229, %v218, %v220
  %v232 = vsel %vm229, %v220, %v222
  %v233 = vsel %vm229, %v222, %v224
  %v234 = vsel %vm229, %v224, %v226
  %v235 = vsel %vm229, %v226, %v228
  %vm236 = vcmask 1043456
  %v239 = vsel %vm236, 0, %v86
  %v242 = vsel %vm236, %v57, %v87
  %v245 = vsel %vm236, %v58, %v88
  %v248 = vsel %vm236, %v59, %v89
  %v251 = vsel %vm236, %v60, %v90
  %v254 = vsel %vm236, %v61, %v91
  %v257 = vsel %vm236, %v62, %v84
  %v260 = vsel %vm236, %v107, %v128
  %v263 = vsel %vm236, %v108, %v129
  %v266 = vsel %vm236, %v109, %v130
  %v269 = vsel %vm236, %v110, %v131
  %v272 = vsel %vm236, %v111, %v132
  %v275 = vsel %vm236, %v112, %v133
  %v278 = vsel %vm236, %v105, %v126
  %v281 = vsel %vm236, %v135, %v153
  %v284 = vsel %vm236, %v147, %v167
  %v287 = vsel %vm236, %v148, %v168
  %v290 = vsel %vm236, %v149, %v169
  %v293 = vsel %vm236, %v150, %v170
  %v296 = vsel %vm236, %v151, %v171
  %v299 = vsel %vm236, %v145, %v172
  %v302 = vsel %vm236, %v174, %v195
  %v305 = vsel %vm236, %v188, %v209
  %v308 = vsel %vm236, %v189, %v210
  %v311 = vsel %vm236, %v190, %v211
  %v314 = vsel %vm236, %v191, %v212
  %v317 = vsel %vm236, %v192, %v213
  %v320 = vsel %vm236, %v193, %v214
  %322 = vset.pattern.permute.xlu0 0
  %323 = vperm.xlu0 %322, %v44
  %v324 = vpop.permute.xlu0 %323
  %354 = vrot.lane.b32.xlu0 %v239, 19
  %v355 = vpop.permute.xlu0 %354
  %356 = vrot.lane.b32.xlu0 %v242, 19
  %v357 = vpop.permute.xlu0 %356
  %358 = vrot.lane.b32.xlu0 %v245, 19
  %v359 = vpop.permute.xlu0 %358
  %360 = vrot.lane.b32.xlu0 %v248, 19
  %v361 = vpop.permute.xlu0 %360
  %362 = vrot.lane.b32.xlu0 %v251, 19
  %v363 = vpop.permute.xlu0 %362
  %364 = vrot.lane.b32.xlu0 %v254, 19
  %v365 = vpop.permute.xlu0 %364
  %366 = vrot.lane.b32.xlu0 %v257, 19
  %v367 = vpop.permute.xlu0 %366
  %368 = vrot.lane.b32.xlu0 %v260, 19
  %v369 = vpop.permute.xlu0 %368
  %370 = vrot.lane.b32.xlu0 %v263, 19
  %v371 = vpop.permute.xlu0 %370
  %372 = vrot.lane.b32.xlu0 %v266, 19
  %v373 = vpop.permute.xlu0 %372
  %374 = vrot.lane.b32.xlu0 %v269, 19
  %v375 = vpop.permute.xlu0 %374
  %376 = vrot.lane.b32.xlu0 %v272, 19
  %v377 = vpop.permute.xlu0 %376
  %378 = vrot.lane.b32.xlu0 %v275, 19
  %v379 = vpop.permute.xlu0 %378
  %380 = vrot.lane.b32.xlu0 %v278, 19
  %v381 = vpop.permute.xlu0 %380
  %382 = vrot.lane.b32.xlu0 %v281, 19
  %v383 = vpop.permute.xlu0 %382
  %384 = vrot.lane.b32.xlu0 %v284, 19
  %v385 = vpop.permute.xlu0 %384
  %386 = vrot.lane.b32.xlu0 %v287, 19
  %v387 = vpop.permute.xlu0 %386
  %388 = vrot.lane.b32.xlu0 %v290, 19
  %v389 = vpop.permute.xlu0 %388
  %390 = vrot.lane.b32.xlu0 %v293, 19
  %v391 = vpop.permute.xlu0 %390
  %392 = vrot.lane.b32.xlu0 %v296, 19
  %v393 = vpop.permute.xlu0 %392
  %394 = vrot.lane.b32.xlu0 %v299, 19
  %v395 = vpop.permute.xlu0 %394
  %396 = vrot.lane.b32.xlu0 %v302, 19
  %v397 = vpop.permute.xlu0 %396
  %398 = vrot.lane.b32.xlu0 %v305, 19
  %v399 = vpop.permute.xlu0 %398
  %400 = vrot.lane.b32.xlu0 %v308, 19
  %v401 = vpop.permute.xlu0 %400
  %402 = vrot.lane.b32.xlu0 %v311, 19
  %v403 = vpop.permute.xlu0 %402
  %404 = vrot.lane.b32.xlu0 %v314, 19
  %v405 = vpop.permute.xlu0 %404
  %406 = vrot.lane.b32.xlu0 %v317, 19
  %v407 = vpop.permute.xlu0 %406
  %408 = vrot.lane.b32.xlu0 %v320, 19
  %v409 = vpop.permute.xlu0 %408
  %410 = vrot.lane.b32.xlu0 %v216, 19
  %v411 = vpop.permute.xlu0 %410
  %412 = vrot.lane.b32.xlu0 %v230, 19
  %v413 = vpop.permute.xlu0 %412
  %414 = vrot.lane.b32.xlu0 %v231, 19
  %v415 = vpop.permute.xlu0 %414
  %416 = vrot.lane.b32.xlu0 %v232, 19
  %v417 = vpop.permute.xlu0 %416
  %418 = vrot.lane.b32.xlu0 %v233, 19
  %v419 = vpop.permute.xlu0 %418
  %420 = vrot.lane.b32.xlu0 %v234, 19
  %v421 = vpop.permute.xlu0 %420
  %422 = vrot.lane.b32.xlu0 %v235, 19
  %v423 = vpop.permute.xlu0 %422
  %vm424 = vcmask 154624
  %v425 = vsel %vm424, %v355, %v357
  %v426 = vsel %vm424, %v357, %v359
  %v427 = vsel %vm424, %v359, %v361
  %v428 = vsel %vm424, %v361, %v363
  %v429 = vsel %vm424, %v363, %v365
  %v430 = vsel %vm424, %v365, %v367
  %v431 = vsel %vm424, %v369, %v371
  %v432 = vsel %vm424, %v371, %v373
  %v433 = vsel %vm424, %v373, %v375
  %v434 = vsel %vm424, %v375, %v377
  %v435 = vsel %vm424, %v377, %v379
  %v436 = vsel %vm424, %v379, %v381
  %v437 = vsel %vm424, %v383, %v385
  %v438 = vsel %vm424, %v385, %v387
  %v439 = vsel %vm424, %v387, %v389
  %v440 = vsel %vm424, %v389, %v391
  %v441 = vsel %vm424, %v391, %v393
  %v442 = vsel %vm424, %v393, %v395
  %v443 = vsel %vm424, %v397, %v399
  %v444 = vsel %vm424, %v399, %v401
  %v445 = vsel %vm424, %v401, %v403
  %v446 = vsel %vm424, %v403, %v405
  %v447 = vsel %vm424, %v405, %v407
  %v448 = vsel %vm424, %v407, %v409
  %v449 = vsel %vm424, %v411, %v413
  %v450 = vsel %vm424, %v413, %v415
  %v451 = vsel %vm424, %v415, %v417
  %v452 = vsel %vm424, %v417, %v419
  %v453 = vsel %vm424, %v419, %v421
  %v454 = vsel %vm424, %v421, %v423
  %vm479 = vcmask 588800
  %v481 = vsel %vm479, %v43, 0
  %v484 = vsel %vm236, %v449, 0
  %v487 = vsel %vm236, %v450, 0
  %v490 = vsel %vm236, %v451, 0
  %v493 = vsel %vm236, %v452, 0
  %v496 = vsel %vm236, %v453, 0
  %v499 = vsel %vm236, %v454, 0
  %501 = vmatpush.bf16.msra.mxu0 0
  %502 = vmatpush.bf16.msra.mxu0 0
  %503 = vmatpush.bf16.msra.mxu0 0
  %504 = vmatpush.bf16.msra.mxu0 %v484
  %505 = vmatpush.bf16.msra.mxu0 %v443
  %506 = vmatpush.bf16.msra.mxu0 %v437
  %507 = vmatpush.bf16.msra.mxu0 %v431
  %508 = vmatpush.bf16.msra.mxu0 %v425
  %509 = vmatmul.bf16.gmra.mxu0 %v481
  %v510 = vpop.f32.mrf.mxu0
  %v511 = vadd.f32 %v324, %v510
  %v512 = vpop.f32.mrf.mxu0
  %513 = vdwg.mxu0
  %514 = vmatpush.bf16.msra.mxu0 0
  %515 = vmatpush.bf16.msra.mxu0 0
  %516 = vmatpush.bf16.msra.mxu0 0
  %517 = vmatpush.bf16.msra.mxu0 %v487
  %518 = vmatpush.bf16.msra.mxu0 %v444
  %519 = vmatpush.bf16.msra.mxu0 %v438
  %520 = vmatpush.bf16.msra.mxu0 %v432
  %521 = vmatpush.bf16.msra.mxu0 %v426
  %522 = vmatmul.bf16.gmra.mxu0 %v481
  %v523 = vpop.f32.mrf.mxu0
  %v524 = vadd.f32 %v324, %v523
  %v525 = vpop.f32.mrf.mxu0
  %526 = vdwg.mxu0
  %527 = vmatpush.bf16.msra.mxu0 0
  %528 = vmatpush.bf16.msra.mxu0 0
  %529 = vmatpush.bf16.msra.mxu0 0
  %530 = vmatpush.bf16.msra.mxu0 %v490
  %531 = vmatpush.bf16.msra.mxu0 %v445
  %532 = vmatpush.bf16.msra.mxu0 %v439
  %533 = vmatpush.bf16.msra.mxu0 %v433
  %534 = vmatpush.bf16.msra.mxu0 %v427
  %535 = vmatmul.bf16.gmra.mxu0 %v481
  %v536 = vpop.f32.mrf.mxu0
  %v537 = vadd.f32 %v324, %v536
  %v538 = vpop.f32.mrf.mxu0
  %539 = vdwg.mxu0
  %540 = vmatpush.bf16.msra.mxu0 0
  %541 = vmatpush.bf16.msra.mxu0 0
  %542 = vmatpush.bf16.msra.mxu0 0
  %543 = vmatpush.bf16.msra.mxu0 %v493
  %544 = vmatpush.bf16.msra.mxu0 %v446
  %545 = vmatpush.bf16.msra.mxu0 %v440
  %546 = vmatpush.bf16.msra.mxu0 %v434
  %547 = vmatpush.bf16.msra.mxu0 %v428
  %548 = vmatmul.bf16.gmra.mxu0 %v481
  %v549 = vpop.f32.mrf.mxu0
  %v550 = vadd.f32 %v324, %v549
  %v551 = vpop.f32.mrf.mxu0
  %552 = vdwg.mxu0
  %553 = vmatpush.bf16.msra.mxu0 0
  %554 = vmatpush.bf16.msra.mxu0 0
  %555 = vmatpush.bf16.msra.mxu0 0
  %556 = vmatpush.bf16.msra.mxu0 %v496
  %557 = vmatpush.bf16.msra.mxu0 %v447
  %558 = vmatpush.bf16.msra.mxu0 %v441
  %559 = vmatpush.bf16.msra.mxu0 %v435
  %560 = vmatpush.bf16.msra.mxu0 %v429
  %561 = vmatmul.bf16.gmra.mxu0 %v481
  %v562 = vpop.f32.mrf.mxu0
  %v563 = vadd.f32 %v324, %v562
  %v564 = vpop.f32.mrf.mxu0
  %565 = vdwg.mxu0
  %566 = vmatpush.bf16.msra.mxu0 0
  %567 = vmatpush.bf16.msra.mxu0 0
  %568 = vmatpush.bf16.msra.mxu0 0
  %569 = vmatpush.bf16.msra.mxu0 %v499
  %570 = vmatpush.bf16.msra.mxu0 %v448
  %571 = vmatpush.bf16.msra.mxu0 %v442
  %572 = vmatpush.bf16.msra.mxu0 %v436
  %573 = vmatpush.bf16.msra.mxu0 %v430
  %574 = vmatmul.bf16.gmra.mxu0 %v481
  %v575 = vpop.f32.mrf.mxu0
  %v576 = vadd.f32 %v324, %v575
  %v577 = vpop.f32.mrf.mxu0
  %578 = vdwg.mxu0
  %v579 = vmax.f32 %v511, 0.0
  %v580 = vmax.f32 %v524, 0.0
  %v581 = vmax.f32 %v537, 0.0
  %v582 = vmax.f32 %v550, 0.0
  %v583 = vmax.f32 %v563, 0.0
  %v584 = vmax.f32 %v576, 0.0
  %v586 = vperm.slane %v36, 0
  %v587 = vperm.slane %v36, 1
  %v588 = vperm.slane %v36, 2
  %v589 = vperm.slane %v36, 3
  %v590 = vperm.slane %v36, 4
  %v591 = vperm.slane %v36, 5
  %v598 = vmul.f32 %v579, %v586
  %v599 = vmul.f32 %v580, %v587
  %v600 = vmul.f32 %v581, %v588
  %v601 = vmul.f32 %v582, %v589
  %v602 = vmul.f32 %v583, %v590
  %v603 = vmul.f32 %v584, %v591
  %v604 = vadd.f32 %v598, %v599
  %v605 = vadd.f32 %v604, %v600
  %v606 = vadd.f32 %v605, %v601
  %v607 = vadd.f32 %v606, %v602
  %v608 = vadd.f32 %v607, %v603
  %609 = vadd.xlane.f32.xlu0 %v608
  %v610 = vpop.xlane.xlu0 %609
  %v611 = vmul.f32 %v610, 0.001953125
  %v612 = vsub.f32 %v579, %v611
  %v613 = vsub.f32 %v580, %v611
  %v614 = vsub.f32 %v581, %v611
  %v615 = vsub.f32 %v582, %v611
  %v616 = vsub.f32 %v583, %v611
  %v617 = vsub.f32 %v584, %v611
  %v618 = vmul.f32 %v612, %v586
  %v619 = vmul.f32 %v613, %v587
  %v620 = vmul.f32 %v614, %v588
  %v621 = vmul.f32 %v615, %v589
  %v622 = vmul.f32 %v616, %v590
  %v623 = vmul.f32 %v617, %v591
  %v624 = vmul.f32 %v618, %v618
  %v625 = vmul.f32 %v619, %v619
  %v626 = vmul.f32 %v620, %v620
  %v627 = vmul.f32 %v621, %v621
  %v628 = vmul.f32 %v622, %v622
  %v629 = vmul.f32 %v623, %v623
  %v630 = vadd.f32 %v624, %v625
  %v631 = vadd.f32 %v630, %v626
  %v632 = vadd.f32 %v631, %v627
  %v633 = vadd.f32 %v632, %v628
  %v634 = vadd.f32 %v633, %v629
  %635 = vadd.xlane.f32.xlu0 %v634
  %v636 = vpop.xlane.xlu0 %635
  %v637 = vmul.f32 %v636, 0.001953125
  %v638 = vadd.f32 %v637, 1e-05
  %v639 = vrsqrt.pop %v638
  %v640 = vmul.f32 %v639, %v638
  %v641 = vmul.f32 %v640, %v639
  %v642 = vmul.f32 0.5, %v641
  %v643 = vsub.f32 1.5, %v642
  %v644 = vmul.f32 %v639, %v643
  %vm645 = vweird.f32 %v638
  %vm646 = vweird.f32 %v639
  %vm647 = vmor %vm645, %vm646
  %v648 = vsel %vm647, %v639, %v644
  %v649 = vmul.f32 %v44, %v648
  %v650 = vmul.f32 %v611, %v649
  %652 = vrot.lane.b32.xlu0 %v650, 1
  %v653 = vpop.permute.xlu0 %652
  %v655 = vsub.f32 %v44, %v653
  %657 = vset.pattern.permute.xlu0 1
  %658 = vperm.xlu0 %657, %v649
  %v659 = vpop.permute.xlu0 %658
  %v661 = vmul.f32 %v579, %v659
  %v662 = vmul.f32 %v580, %v659
  %v663 = vmul.f32 %v581, %v659
  %v664 = vmul.f32 %v582, %v659
  %v665 = vmul.f32 %v583, %v659
  %v666 = vmul.f32 %v584, %v659
  %668 = vset.pattern.permute.xlu0 2
  %669 = vperm.xlu0 %668, %v655
  %v670 = vpop.permute.xlu0 %669
  %v672 = vadd.f32 %v661, %v670
  %v673 = vadd.f32 %v662, %v670
  %v674 = vadd.f32 %v663, %v670
  %v675 = vadd.f32 %v664, %v670
  %v676 = vadd.f32 %v665, %v670
  %v677 = vadd.f32 %v666, %v670
  %v678 = vmul.f32 %v672, %v586
  %v679 = vmul.f32 %v673, %v587
  %v680 = vmul.f32 %v674, %v588
  %v681 = vmul.f32 %v675, %v589
  %v682 = vmul.f32 %v676, %v590
  %v683 = vmul.f32 %v677, %v591
  %v684 = vld [vmem:[%s4] sm:$0xf]
  %v685 = vld [vmem:[%s4 + $0x4] sm:$0xf]
  %v686 = vld [vmem:[%s5] sm:$0xff]
  %v687 = vld [vmem:[%s5 + $0x8] sm:$0xff]
  %v688 = vpack.c.bf16 %v679, %v678
  %v689 = vpack.c.bf16 %v681, %v680
  %v690 = vpack.c.bf16 %v683, %v682
  %v694 = vunpack.c.l.b16 %v688
  %v695 = vunpack.c.h.b16 %v688
  %v696 = vunpack.c.l.b16 %v689
  %v697 = vunpack.c.h.b16 %v689
  %v698 = vunpack.c.l.b16 %v690
  %v699 = vunpack.c.h.b16 %v690
  %v700 = vpack.c.b16 %v694, %v694
  %v701 = vpack.c.b16 %v695, %v695
  %v702 = vpack.c.b16 %v696, %v696
  %v703 = vpack.c.b16 %v697, %v697
  %v704 = vpack.c.b16 %v698, %v698
  %v705 = vpack.c.b16 %v699, %v699
  %v706 = vrot.slane %v700, 4
  %v707 = vrot.slane %v701, 4
  %v708 = vrot.slane %v702, 4
  %v709 = vrot.slane %v703, 4
  %v710 = vrot.slane %v704, 4
  %v711 = vrot.slane %v705, 4
  %712 = vrot.lane.b32.xlu0 %v706, 127
  %v713 = vpop.permute.xlu0 %712
  %714 = vrot.lane.b32.xlu0 %v707, 127
  %v715 = vpop.permute.xlu0 %714
  %716 = vrot.lane.b32.xlu0 %v708, 127
  %v717 = vpop.permute.xlu0 %716
  %718 = vrot.lane.b32.xlu0 %v709, 127
  %v719 = vpop.permute.xlu0 %718
  %720 = vrot.lane.b32.xlu0 %v710, 127
  %v721 = vpop.permute.xlu0 %720
  %722 = vrot.lane.b32.xlu0 %v711, 127
  %v723 = vpop.permute.xlu0 %722
  %v724 = vsel %vm85, %v72, %v713
  %v725 = vsel %vm85, %v713, %v715
  %v726 = vsel %vm85, %v715, %v717
  %v727 = vsel %vm85, %v717, %v719
  %v728 = vsel %vm85, %v719, %v721
  %v729 = vsel %vm85, %v721, %v723
  %730 = vrot.lane.b32.xlu0 %v700, 126
  %v731 = vpop.permute.xlu0 %730
  %732 = vrot.lane.b32.xlu0 %v701, 126
  %v733 = vpop.permute.xlu0 %732
  %734 = vrot.lane.b32.xlu0 %v702, 126
  %v735 = vpop.permute.xlu0 %734
  %736 = vrot.lane.b32.xlu0 %v703, 126
  %v737 = vpop.permute.xlu0 %736
  %738 = vrot.lane.b32.xlu0 %v704, 126
  %v739 = vpop.permute.xlu0 %738
  %740 = vrot.lane.b32.xlu0 %v705, 126
  %v741 = vpop.permute.xlu0 %740
  %v742 = vsel %vm106, %v93, %v731
  %v743 = vsel %vm106, %v731, %v733
  %v744 = vsel %vm106, %v733, %v735
  %v745 = vsel %vm106, %v735, %v737
  %v746 = vsel %vm106, %v737, %v739
  %v747 = vsel %vm106, %v739, %v741
  %748 = vrot.lane.b32.xlu0 %v706, 110
  %v749 = vpop.permute.xlu0 %748
  %750 = vrot.lane.b32.xlu0 %v707, 110
  %v751 = vpop.permute.xlu0 %750
  %752 = vrot.lane.b32.xlu0 %v708, 110
  %v753 = vpop.permute.xlu0 %752
  %754 = vrot.lane.b32.xlu0 %v709, 110
  %v755 = vpop.permute.xlu0 %754
  %756 = vrot.lane.b32.xlu0 %v710, 110
  %v757 = vpop.permute.xlu0 %756
  %758 = vrot.lane.b32.xlu0 %v711, 110
  %v759 = vpop.permute.xlu0 %758
  %v760 = vsel %vm127, %v114, %v749
  %v761 = vsel %vm127, %v749, %v751
  %v762 = vsel %vm127, %v751, %v753
  %v763 = vsel %vm127, %v753, %v755
  %v764 = vsel %vm127, %v755, %v757
  %v765 = vsel %vm127, %v757, %v759
  %766 = vrot.lane.b32.xlu0 %v700, 109
  %v767 = vpop.permute.xlu0 %766
  %768 = vrot.lane.b32.xlu0 %v701, 109
  %v769 = vpop.permute.xlu0 %768
  %770 = vrot.lane.b32.xlu0 %v702, 109
  %v771 = vpop.permute.xlu0 %770
  %772 = vrot.lane.b32.xlu0 %v703, 109
  %v773 = vpop.permute.xlu0 %772
  %774 = vrot.lane.b32.xlu0 %v704, 109
  %v775 = vpop.permute.xlu0 %774
  %776 = vrot.lane.b32.xlu0 %v705, 109
  %v777 = vpop.permute.xlu0 %776
  %v778 = vsel %vm146, %v767, %v769
  %v779 = vsel %vm146, %v769, %v771
  %v780 = vsel %vm146, %v771, %v773
  %v781 = vsel %vm146, %v773, %v775
  %v782 = vsel %vm146, %v775, %v777
  %783 = vrot.lane.b32.xlu0 %v706, 108
  %v784 = vpop.permute.xlu0 %783
  %785 = vrot.lane.b32.xlu0 %v707, 108
  %v786 = vpop.permute.xlu0 %785
  %787 = vrot.lane.b32.xlu0 %v708, 108
  %v788 = vpop.permute.xlu0 %787
  %789 = vrot.lane.b32.xlu0 %v709, 108
  %v790 = vpop.permute.xlu0 %789
  %791 = vrot.lane.b32.xlu0 %v710, 108
  %v792 = vpop.permute.xlu0 %791
  %793 = vrot.lane.b32.xlu0 %v711, 108
  %v794 = vpop.permute.xlu0 %793
  %v795 = vsel %vm166, %v784, %v786
  %v796 = vsel %vm166, %v786, %v788
  %v797 = vsel %vm166, %v788, %v790
  %v798 = vsel %vm166, %v790, %v792
  %v799 = vsel %vm166, %v792, %v794
  %v800 = vsel %vm166, %v794, %v165
  %801 = vrot.lane.b32.xlu0 %v700, 92
  %v802 = vpop.permute.xlu0 %801
  %803 = vrot.lane.b32.xlu0 %v701, 92
  %v804 = vpop.permute.xlu0 %803
  %805 = vrot.lane.b32.xlu0 %v702, 92
  %v806 = vpop.permute.xlu0 %805
  %807 = vrot.lane.b32.xlu0 %v703, 92
  %v808 = vpop.permute.xlu0 %807
  %809 = vrot.lane.b32.xlu0 %v704, 92
  %v810 = vpop.permute.xlu0 %809
  %811 = vrot.lane.b32.xlu0 %v705, 92
  %v812 = vpop.permute.xlu0 %811
  %v813 = vsel %vm187, %v802, %v804
  %v814 = vsel %vm187, %v804, %v806
  %v815 = vsel %vm187, %v806, %v808
  %v816 = vsel %vm187, %v808, %v810
  %v817 = vsel %vm187, %v810, %v812
  %v818 = vsel %vm187, %v812, %v186
  %819 = vrot.lane.b32.xlu0 %v706, 91
  %v820 = vpop.permute.xlu0 %819
  %821 = vrot.lane.b32.xlu0 %v707, 91
  %v822 = vpop.permute.xlu0 %821
  %823 = vrot.lane.b32.xlu0 %v708, 91
  %v824 = vpop.permute.xlu0 %823
  %825 = vrot.lane.b32.xlu0 %v709, 91
  %v826 = vpop.permute.xlu0 %825
  %827 = vrot.lane.b32.xlu0 %v710, 91
  %v828 = vpop.permute.xlu0 %827
  %829 = vrot.lane.b32.xlu0 %v711, 91
  %v830 = vpop.permute.xlu0 %829
  %v831 = vsel %vm208, %v820, %v822
  %v832 = vsel %vm208, %v822, %v824
  %v833 = vsel %vm208, %v824, %v826
  %v834 = vsel %vm208, %v826, %v828
  %v835 = vsel %vm208, %v828, %v830
  %v836 = vsel %vm208, %v830, %v207
  %837 = vrot.lane.b32.xlu0 %v700, 90
  %v838 = vpop.permute.xlu0 %837
  %839 = vrot.lane.b32.xlu0 %v701, 90
  %v840 = vpop.permute.xlu0 %839
  %841 = vrot.lane.b32.xlu0 %v702, 90
  %v842 = vpop.permute.xlu0 %841
  %843 = vrot.lane.b32.xlu0 %v703, 90
  %v844 = vpop.permute.xlu0 %843
  %845 = vrot.lane.b32.xlu0 %v704, 90
  %v846 = vpop.permute.xlu0 %845
  %847 = vrot.lane.b32.xlu0 %v705, 90
  %v848 = vpop.permute.xlu0 %847
  %v849 = vsel %vm229, %v838, %v840
  %v850 = vsel %vm229, %v840, %v842
  %v851 = vsel %vm229, %v842, %v844
  %v852 = vsel %vm229, %v844, %v846
  %v853 = vsel %vm229, %v846, %v848
  %v854 = vsel %vm229, %v848, %v228
  %v856 = vsel %vm236, 0, %v724
  %v859 = vsel %vm236, %v700, %v725
  %v862 = vsel %vm236, %v701, %v726
  %v865 = vsel %vm236, %v702, %v727
  %v868 = vsel %vm236, %v703, %v728
  %v871 = vsel %vm236, %v704, %v729
  %v874 = vsel %vm236, %v705, %v723
  %v877 = vsel %vm236, %v742, %v760
  %v880 = vsel %vm236, %v743, %v761
  %v883 = vsel %vm236, %v744, %v762
  %v886 = vsel %vm236, %v745, %v763
  %v889 = vsel %vm236, %v746, %v764
  %v892 = vsel %vm236, %v747, %v765
  %v895 = vsel %vm236, %v741, %v759
  %v898 = vsel %vm236, %v767, %v784
  %v901 = vsel %vm236, %v778, %v795
  %v904 = vsel %vm236, %v779, %v796
  %v907 = vsel %vm236, %v780, %v797
  %v910 = vsel %vm236, %v781, %v798
  %v913 = vsel %vm236, %v782, %v799
  %v916 = vsel %vm236, %v777, %v800
  %v919 = vsel %vm236, %v802, %v820
  %v922 = vsel %vm236, %v813, %v831
  %v925 = vsel %vm236, %v814, %v832
  %v928 = vsel %vm236, %v815, %v833
  %v931 = vsel %vm236, %v816, %v834
  %v934 = vsel %vm236, %v817, %v835
  %v937 = vsel %vm236, %v818, %v836
  %939 = vset.pattern.permute.xlu0 0
  %940 = vperm.xlu0 %939, %v686
  %v941 = vpop.permute.xlu0 %940
  %944 = vset.pattern.permute.xlu0 0
  %945 = vperm.xlu0 %944, %v687
  %v946 = vpop.permute.xlu0 %945
  %v950 = vunpack.c.l.b16 %v684
  %v951 = vunpack.c.l.b16 %v685
  %v952 = vpack.c.b16 %v951, %v950
  %981 = vrot.lane.b32.xlu0 %v856, 19
  %v982 = vpop.permute.xlu0 %981
  %983 = vrot.lane.b32.xlu0 %v859, 19
  %v984 = vpop.permute.xlu0 %983
  %985 = vrot.lane.b32.xlu0 %v862, 19
  %v986 = vpop.permute.xlu0 %985
  %987 = vrot.lane.b32.xlu0 %v865, 19
  %v988 = vpop.permute.xlu0 %987
  %989 = vrot.lane.b32.xlu0 %v868, 19
  %v990 = vpop.permute.xlu0 %989
  %991 = vrot.lane.b32.xlu0 %v871, 19
  %v992 = vpop.permute.xlu0 %991
  %993 = vrot.lane.b32.xlu0 %v874, 19
  %v994 = vpop.permute.xlu0 %993
  %995 = vrot.lane.b32.xlu0 %v877, 19
  %v996 = vpop.permute.xlu0 %995
  %997 = vrot.lane.b32.xlu0 %v880, 19
  %v998 = vpop.permute.xlu0 %997
  %999 = vrot.lane.b32.xlu0 %v883, 19
  %v1000 = vpop.permute.xlu0 %999
  %1001 = vrot.lane.b32.xlu0 %v886, 19
  %v1002 = vpop.permute.xlu0 %1001
  %1003 = vrot.lane.b32.xlu0 %v889, 19
  %v1004 = vpop.permute.xlu0 %1003
  %1005 = vrot.lane.b32.xlu0 %v892, 19
  %v1006 = vpop.permute.xlu0 %1005
  %1007 = vrot.lane.b32.xlu0 %v895, 19
  %v1008 = vpop.permute.xlu0 %1007
  %1009 = vrot.lane.b32.xlu0 %v898, 19
  %v1010 = vpop.permute.xlu0 %1009
  %1011 = vrot.lane.b32.xlu0 %v901, 19
  %v1012 = vpop.permute.xlu0 %1011
  %1013 = vrot.lane.b32.xlu0 %v904, 19
  %v1014 = vpop.permute.xlu0 %1013
  %1015 = vrot.lane.b32.xlu0 %v907, 19
  %v1016 = vpop.permute.xlu0 %1015
  %1017 = vrot.lane.b32.xlu0 %v910, 19
  %v1018 = vpop.permute.xlu0 %1017
  %1019 = vrot.lane.b32.xlu0 %v913, 19
  %v1020 = vpop.permute.xlu0 %1019
  %1021 = vrot.lane.b32.xlu0 %v916, 19
  %v1022 = vpop.permute.xlu0 %1021
  %1023 = vrot.lane.b32.xlu0 %v919, 19
  %v1024 = vpop.permute.xlu0 %1023
  %1025 = vrot.lane.b32.xlu0 %v922, 19
  %v1026 = vpop.permute.xlu0 %1025
  %1027 = vrot.lane.b32.xlu0 %v925, 19
  %v1028 = vpop.permute.xlu0 %1027
  %1029 = vrot.lane.b32.xlu0 %v928, 19
  %v1030 = vpop.permute.xlu0 %1029
  %1031 = vrot.lane.b32.xlu0 %v931, 19
  %v1032 = vpop.permute.xlu0 %1031
  %1033 = vrot.lane.b32.xlu0 %v934, 19
  %v1034 = vpop.permute.xlu0 %1033
  %1035 = vrot.lane.b32.xlu0 %v937, 19
  %v1036 = vpop.permute.xlu0 %1035
  %1037 = vrot.lane.b32.xlu0 %v838, 19
  %v1038 = vpop.permute.xlu0 %1037
  %1039 = vrot.lane.b32.xlu0 %v849, 19
  %v1040 = vpop.permute.xlu0 %1039
  %1041 = vrot.lane.b32.xlu0 %v850, 19
  %v1042 = vpop.permute.xlu0 %1041
  %1043 = vrot.lane.b32.xlu0 %v851, 19
  %v1044 = vpop.permute.xlu0 %1043
  %1045 = vrot.lane.b32.xlu0 %v852, 19
  %v1046 = vpop.permute.xlu0 %1045
  %1047 = vrot.lane.b32.xlu0 %v853, 19
  %v1048 = vpop.permute.xlu0 %1047
  %1049 = vrot.lane.b32.xlu0 %v854, 19
  %v1050 = vpop.permute.xlu0 %1049
  %v1051 = vsel %vm424, %v982, %v984
  %v1052 = vsel %vm424, %v984, %v986
  %v1053 = vsel %vm424, %v986, %v988
  %v1054 = vsel %vm424, %v988, %v990
  %v1055 = vsel %vm424, %v990, %v992
  %v1056 = vsel %vm424, %v992, %v994
  %v1057 = vsel %vm424, %v996, %v998
  %v1058 = vsel %vm424, %v998, %v1000
  %v1059 = vsel %vm424, %v1000, %v1002
  %v1060 = vsel %vm424, %v1002, %v1004
  %v1061 = vsel %vm424, %v1004, %v1006
  %v1062 = vsel %vm424, %v1006, %v1008
  %v1063 = vsel %vm424, %v1010, %v1012
  %v1064 = vsel %vm424, %v1012, %v1014
  %v1065 = vsel %vm424, %v1014, %v1016
  %v1066 = vsel %vm424, %v1016, %v1018
  %v1067 = vsel %vm424, %v1018, %v1020
  %v1068 = vsel %vm424, %v1020, %v1022
  %v1069 = vsel %vm424, %v1024, %v1026
  %v1070 = vsel %vm424, %v1026, %v1028
  %v1071 = vsel %vm424, %v1028, %v1030
  %v1072 = vsel %vm424, %v1030, %v1032
  %v1073 = vsel %vm424, %v1032, %v1034
  %v1074 = vsel %vm424, %v1034, %v1036
  %v1075 = vsel %vm424, %v1038, %v1040
  %v1076 = vsel %vm424, %v1040, %v1042
  %v1077 = vsel %vm424, %v1042, %v1044
  %v1078 = vsel %vm424, %v1044, %v1046
  %v1079 = vsel %vm424, %v1046, %v1048
  %v1080 = vsel %vm424, %v1048, %v1050
  %v1106 = vsel %vm479, %v952, 0
  %v1109 = vsel %vm236, %v1075, 0
  %v1112 = vsel %vm236, %v1076, 0
  %v1115 = vsel %vm236, %v1077, 0
  %v1118 = vsel %vm236, %v1078, 0
  %v1121 = vsel %vm236, %v1079, 0
  %v1124 = vsel %vm236, %v1080, 0
  %1126 = vmatpush.bf16.msra.mxu0 0
  %1127 = vmatpush.bf16.msra.mxu0 0
  %1128 = vmatpush.bf16.msra.mxu0 0
  %1129 = vmatpush.bf16.msra.mxu0 %v1109
  %1130 = vmatpush.bf16.msra.mxu0 %v1069
  %1131 = vmatpush.bf16.msra.mxu0 %v1063
  %1132 = vmatpush.bf16.msra.mxu0 %v1057
  %1133 = vmatpush.bf16.msra.mxu0 %v1051
  %1134 = vmatmul.bf16.gmra.mxu0 %v1106
  %v1135 = vpop.f32.mrf.mxu0
  %v1136 = vadd.f32 %v941, %v1135
  %v1137 = vpop.f32.mrf.mxu0
  %v1138 = vadd.f32 %v946, %v1137
  %1139 = vdwg.mxu0
  %1140 = vmatpush.bf16.msra.mxu0 0
  %1141 = vmatpush.bf16.msra.mxu0 0
  %1142 = vmatpush.bf16.msra.mxu0 0
  %1143 = vmatpush.bf16.msra.mxu0 %v1112
  %1144 = vmatpush.bf16.msra.mxu0 %v1070
  %1145 = vmatpush.bf16.msra.mxu0 %v1064
  %1146 = vmatpush.bf16.msra.mxu0 %v1058
  %1147 = vmatpush.bf16.msra.mxu0 %v1052
  %1148 = vmatmul.bf16.gmra.mxu0 %v1106
  %v1149 = vpop.f32.mrf.mxu0
  %v1150 = vadd.f32 %v941, %v1149
  %v1151 = vpop.f32.mrf.mxu0
  %v1152 = vadd.f32 %v946, %v1151
  %1153 = vdwg.mxu0
  %1154 = vmatpush.bf16.msra.mxu0 0
  %1155 = vmatpush.bf16.msra.mxu0 0
  %1156 = vmatpush.bf16.msra.mxu0 0
  %1157 = vmatpush.bf16.msra.mxu0 %v1115
  %1158 = vmatpush.bf16.msra.mxu0 %v1071
  %1159 = vmatpush.bf16.msra.mxu0 %v1065
  %1160 = vmatpush.bf16.msra.mxu0 %v1059
  %1161 = vmatpush.bf16.msra.mxu0 %v1053
  %1162 = vmatmul.bf16.gmra.mxu0 %v1106
  %v1163 = vpop.f32.mrf.mxu0
  %v1164 = vadd.f32 %v941, %v1163
  %v1165 = vpop.f32.mrf.mxu0
  %v1166 = vadd.f32 %v946, %v1165
  %1167 = vdwg.mxu0
  %1168 = vmatpush.bf16.msra.mxu0 0
  %1169 = vmatpush.bf16.msra.mxu0 0
  %1170 = vmatpush.bf16.msra.mxu0 0
  %1171 = vmatpush.bf16.msra.mxu0 %v1118
  %1172 = vmatpush.bf16.msra.mxu0 %v1072
  %1173 = vmatpush.bf16.msra.mxu0 %v1066
  %1174 = vmatpush.bf16.msra.mxu0 %v1060
  %1175 = vmatpush.bf16.msra.mxu0 %v1054
  %1176 = vmatmul.bf16.gmra.mxu0 %v1106
  %v1177 = vpop.f32.mrf.mxu0
  %v1178 = vadd.f32 %v941, %v1177
  %v1179 = vpop.f32.mrf.mxu0
  %v1180 = vadd.f32 %v946, %v1179
  %1181 = vdwg.mxu0
  %1182 = vmatpush.bf16.msra.mxu0 0
  %1183 = vmatpush.bf16.msra.mxu0 0
  %1184 = vmatpush.bf16.msra.mxu0 0
  %1185 = vmatpush.bf16.msra.mxu0 %v1121
  %1186 = vmatpush.bf16.msra.mxu0 %v1073
  %1187 = vmatpush.bf16.msra.mxu0 %v1067
  %1188 = vmatpush.bf16.msra.mxu0 %v1061
  %1189 = vmatpush.bf16.msra.mxu0 %v1055
  %1190 = vmatmul.bf16.gmra.mxu0 %v1106
  %v1191 = vpop.f32.mrf.mxu0
  %v1192 = vadd.f32 %v941, %v1191
  %v1193 = vpop.f32.mrf.mxu0
  %v1194 = vadd.f32 %v946, %v1193
  %1195 = vdwg.mxu0
  %1196 = vmatpush.bf16.msra.mxu0 0
  %1197 = vmatpush.bf16.msra.mxu0 0
  %1198 = vmatpush.bf16.msra.mxu0 0
  %1199 = vmatpush.bf16.msra.mxu0 %v1124
  %1200 = vmatpush.bf16.msra.mxu0 %v1074
  %1201 = vmatpush.bf16.msra.mxu0 %v1068
  %1202 = vmatpush.bf16.msra.mxu0 %v1062
  %1203 = vmatpush.bf16.msra.mxu0 %v1056
  %1204 = vmatmul.bf16.gmra.mxu0 %v1106
  %v1205 = vpop.f32.mrf.mxu0
  %v1206 = vadd.f32 %v941, %v1205
  %v1207 = vpop.f32.mrf.mxu0
  %v1208 = vadd.f32 %v946, %v1207
  %1209 = vdwg.mxu0
  %v1210 = vmax.f32 %v1136, 0.0
  %v1211 = vmax.f32 %v1150, 0.0
  %v1212 = vmax.f32 %v1164, 0.0
  %v1213 = vmax.f32 %v1178, 0.0
  %v1214 = vmax.f32 %v1192, 0.0
  %v1215 = vmax.f32 %v1206, 0.0
  %v1216 = vmax.f32 %v1138, 0.0
  %v1217 = vmax.f32 %v1152, 0.0
  %v1218 = vmax.f32 %v1166, 0.0
  %v1219 = vmax.f32 %v1180, 0.0
  %v1220 = vmax.f32 %v1194, 0.0
  %v1221 = vmax.f32 %v1208, 0.0
  %v1222 = vmul.f32 %v1210, %v586
  %v1223 = vmul.f32 %v1211, %v587
  %v1224 = vmul.f32 %v1212, %v588
  %v1225 = vmul.f32 %v1213, %v589
  %v1226 = vmul.f32 %v1214, %v590
  %v1227 = vmul.f32 %v1215, %v591
  %v1228 = vmul.f32 %v1216, %v586
  %v1229 = vmul.f32 %v1217, %v587
  %v1230 = vmul.f32 %v1218, %v588
  %v1231 = vmul.f32 %v1219, %v589
  %v1232 = vmul.f32 %v1220, %v590
  %v1233 = vmul.f32 %v1221, %v591
  %v1234 = vadd.f32 %v1222, %v1223
  %v1235 = vadd.f32 %v1234, %v1224
  %v1236 = vadd.f32 %v1235, %v1225
  %v1237 = vadd.f32 %v1236, %v1226
  %v1238 = vadd.f32 %v1237, %v1227
  %1239 = vadd.xlane.f32.xlu0 %v1238
  %v1240 = vpop.xlane.xlu0 %1239
  %v1241 = vadd.f32 %v1228, %v1229
  %v1242 = vadd.f32 %v1241, %v1230
  %v1243 = vadd.f32 %v1242, %v1231
  %v1244 = vadd.f32 %v1243, %v1232
  %v1245 = vadd.f32 %v1244, %v1233
  %1246 = vadd.xlane.f32.xlu0 %v1245
  %v1247 = vpop.xlane.xlu0 %1246
  %v1248 = vmul.f32 %v1240, 0.001953125
  %v1249 = vmul.f32 %v1247, 0.001953125
  %v1250 = vsub.f32 %v1210, %v1248
  %v1251 = vsub.f32 %v1211, %v1248
  %v1252 = vsub.f32 %v1212, %v1248
  %v1253 = vsub.f32 %v1213, %v1248
  %v1254 = vsub.f32 %v1214, %v1248
  %v1255 = vsub.f32 %v1215, %v1248
  %v1256 = vsub.f32 %v1216, %v1249
  %v1257 = vsub.f32 %v1217, %v1249
  %v1258 = vsub.f32 %v1218, %v1249
  %v1259 = vsub.f32 %v1219, %v1249
  %v1260 = vsub.f32 %v1220, %v1249
  %v1261 = vsub.f32 %v1221, %v1249
  %v1262 = vmul.f32 %v1250, %v586
  %v1263 = vmul.f32 %v1251, %v587
  %v1264 = vmul.f32 %v1252, %v588
  %v1265 = vmul.f32 %v1253, %v589
  %v1266 = vmul.f32 %v1254, %v590
  %v1267 = vmul.f32 %v1255, %v591
  %v1268 = vmul.f32 %v1256, %v586
  %v1269 = vmul.f32 %v1257, %v587
  %v1270 = vmul.f32 %v1258, %v588
  %v1271 = vmul.f32 %v1259, %v589
  %v1272 = vmul.f32 %v1260, %v590
  %v1273 = vmul.f32 %v1261, %v591
  %v1274 = vmul.f32 %v1262, %v1262
  %v1275 = vmul.f32 %v1263, %v1263
  %v1276 = vmul.f32 %v1264, %v1264
  %v1277 = vmul.f32 %v1265, %v1265
  %v1278 = vmul.f32 %v1266, %v1266
  %v1279 = vmul.f32 %v1267, %v1267
  %v1280 = vmul.f32 %v1268, %v1268
  %v1281 = vmul.f32 %v1269, %v1269
  %v1282 = vmul.f32 %v1270, %v1270
  %v1283 = vmul.f32 %v1271, %v1271
  %v1284 = vmul.f32 %v1272, %v1272
  %v1285 = vmul.f32 %v1273, %v1273
  %v1286 = vadd.f32 %v1274, %v1275
  %v1287 = vadd.f32 %v1286, %v1276
  %v1288 = vadd.f32 %v1287, %v1277
  %v1289 = vadd.f32 %v1288, %v1278
  %v1290 = vadd.f32 %v1289, %v1279
  %1291 = vadd.xlane.f32.xlu0 %v1290
  %v1292 = vpop.xlane.xlu0 %1291
  %v1293 = vadd.f32 %v1280, %v1281
  %v1294 = vadd.f32 %v1293, %v1282
  %v1295 = vadd.f32 %v1294, %v1283
  %v1296 = vadd.f32 %v1295, %v1284
  %v1297 = vadd.f32 %v1296, %v1285
  %1298 = vadd.xlane.f32.xlu0 %v1297
  %v1299 = vpop.xlane.xlu0 %1298
  %v1300 = vmul.f32 %v1292, 0.001953125
  %v1301 = vmul.f32 %v1299, 0.001953125
  %v1302 = vadd.f32 %v1300, 1e-05
  %v1303 = vadd.f32 %v1301, 1e-05
  %v1304 = vrsqrt.pop %v1302
  %v1305 = vmul.f32 %v1304, %v1302
  %v1306 = vmul.f32 %v1305, %v1304
  %v1307 = vmul.f32 0.5, %v1306
  %v1308 = vsub.f32 1.5, %v1307
  %v1309 = vmul.f32 %v1304, %v1308
  %vm1310 = vweird.f32 %v1302
  %vm1311 = vweird.f32 %v1304
  %vm1312 = vmor %vm1310, %vm1311
  %v1313 = vsel %vm1312, %v1304, %v1309
  %v1314 = vrsqrt.pop %v1303
  %v1315 = vmul.f32 %v1314, %v1303
  %v1316 = vmul.f32 %v1315, %v1314
  %v1317 = vmul.f32 0.5, %v1316
  %v1318 = vsub.f32 1.5, %v1317
  %v1319 = vmul.f32 %v1314, %v1318
  %vm1320 = vweird.f32 %v1303
  %vm1321 = vweird.f32 %v1314
  %vm1322 = vmor %vm1320, %vm1321
  %v1323 = vsel %vm1322, %v1314, %v1319
  %v1324 = vmul.f32 %v686, %v1313
  %v1325 = vmul.f32 %v687, %v1323
  %v1326 = vmul.f32 %v1248, %v1324
  %v1327 = vmul.f32 %v1249, %v1325
  %1330 = vrot.lane.b32.xlu0 %v1326, 1
  %v1331 = vpop.permute.xlu0 %1330
  %1332 = vrot.lane.b32.xlu0 %v1327, 1
  %v1333 = vpop.permute.xlu0 %1332
  %v1336 = vsub.f32 %v686, %v1331
  %v1337 = vsub.f32 %v687, %v1333
  %1339 = vset.pattern.permute.xlu0 1
  %1340 = vperm.xlu0 %1339, %v1324
  %v1341 = vpop.permute.xlu0 %1340
  %1344 = vset.pattern.permute.xlu0 1
  %1345 = vperm.xlu0 %1344, %v1325
  %v1346 = vpop.permute.xlu0 %1345
  %v1348 = vmul.f32 %v1210, %v1341
  %v1349 = vmul.f32 %v1211, %v1341
  %v1350 = vmul.f32 %v1212, %v1341
  %v1351 = vmul.f32 %v1213, %v1341
  %v1352 = vmul.f32 %v1214, %v1341
  %v1353 = vmul.f32 %v1215, %v1341
  %v1354 = vmul.f32 %v1216, %v1346
  %v1355 = vmul.f32 %v1217, %v1346
  %v1356 = vmul.f32 %v1218, %v1346
  %v1357 = vmul.f32 %v1219, %v1346
  %v1358 = vmul.f32 %v1220, %v1346
  %v1359 = vmul.f32 %v1221, %v1346
  %1361 = vset.pattern.permute.xlu0 2
  %1362 = vperm.xlu0 %1361, %v1336
  %v1363 = vpop.permute.xlu0 %1362
  %1366 = vset.pattern.permute.xlu0 2
  %1367 = vperm.xlu0 %1366, %v1337
  %v1368 = vpop.permute.xlu0 %1367
  %v1370 = vadd.f32 %v1348, %v1363
  %v1371 = vadd.f32 %v1349, %v1363
  %v1372 = vadd.f32 %v1350, %v1363
  %v1373 = vadd.f32 %v1351, %v1363
  %v1374 = vadd.f32 %v1352, %v1363
  %v1375 = vadd.f32 %v1353, %v1363
  %v1376 = vadd.f32 %v1354, %v1368
  %v1377 = vadd.f32 %v1355, %v1368
  %v1378 = vadd.f32 %v1356, %v1368
  %v1379 = vadd.f32 %v1357, %v1368
  %v1380 = vadd.f32 %v1358, %v1368
  %v1381 = vadd.f32 %v1359, %v1368
  %v1382 = vmul.f32 %v1370, %v586
  %v1383 = vmul.f32 %v1371, %v587
  %v1384 = vmul.f32 %v1372, %v588
  %v1385 = vmul.f32 %v1373, %v589
  %v1386 = vmul.f32 %v1374, %v590
  %v1387 = vmul.f32 %v1375, %v591
  %v1388 = vmul.f32 %v1376, %v586
  %v1389 = vmul.f32 %v1377, %v587
  %v1390 = vmul.f32 %v1378, %v588
  %v1391 = vmul.f32 %v1379, %v589
  %v1392 = vmul.f32 %v1380, %v590
  %v1393 = vmul.f32 %v1381, %v591
  %v1394 = vld [vmem:[%s6] sm:$0xff]
  %v1395 = vld [vmem:[%s6 + $0x8] sm:$0xff]
  %v1396 = vld [vmem:[%s7] sm:$0xff]
  %v1397 = vld [vmem:[%s7 + $0x8] sm:$0xff]
  %v1398 = vpack.c.bf16 %v1383, %v1382
  %v1399 = vpack.c.bf16 %v1385, %v1384
  %v1400 = vpack.c.bf16 %v1387, %v1386
  %v1401 = vpack.c.bf16 %v1389, %v1388
  %v1402 = vpack.c.bf16 %v1391, %v1390
  %v1403 = vpack.c.bf16 %v1393, %v1392
  %v1410 = vunpack.c.l.b16 %v1398
  %v1411 = vunpack.c.h.b16 %v1398
  %v1412 = vunpack.c.l.b16 %v1399
  %v1413 = vunpack.c.h.b16 %v1399
  %v1414 = vunpack.c.l.b16 %v1400
  %v1415 = vunpack.c.h.b16 %v1400
  %v1416 = vunpack.c.l.b16 %v1401
  %v1417 = vunpack.c.h.b16 %v1401
  %v1418 = vunpack.c.l.b16 %v1402
  %v1419 = vunpack.c.h.b16 %v1402
  %v1420 = vunpack.c.l.b16 %v1403
  %v1421 = vunpack.c.h.b16 %v1403
  %v1422 = vpack.c.b16 %v1416, %v1410
  %v1423 = vpack.c.b16 %v1417, %v1411
  %v1424 = vpack.c.b16 %v1418, %v1412
  %v1425 = vpack.c.b16 %v1419, %v1413
  %v1426 = vpack.c.b16 %v1420, %v1414
  %v1427 = vpack.c.b16 %v1421, %v1415
  %1428 = vrot.lane.b32.xlu0 0, 127
  %v1429 = vpop.permute.xlu0 %1428
  %1430 = vrot.lane.b32.xlu0 %v1422, 127
  %v1431 = vpop.permute.xlu0 %1430
  %1432 = vrot.lane.b32.xlu0 %v1423, 127
  %v1433 = vpop.permute.xlu0 %1432
  %1434 = vrot.lane.b32.xlu0 %v1424, 127
  %v1435 = vpop.permute.xlu0 %1434
  %1436 = vrot.lane.b32.xlu0 %v1425, 127
  %v1437 = vpop.permute.xlu0 %1436
  %1438 = vrot.lane.b32.xlu0 %v1426, 127
  %v1439 = vpop.permute.xlu0 %1438
  %1440 = vrot.lane.b32.xlu0 %v1427, 127
  %v1441 = vpop.permute.xlu0 %1440
  %v1442 = vsel %vm85, %v1429, %v1431
  %v1443 = vsel %vm85, %v1431, %v1433
  %v1444 = vsel %vm85, %v1433, %v1435
  %v1445 = vsel %vm85, %v1435, %v1437
  %v1446 = vsel %vm85, %v1437, %v1439
  %v1447 = vsel %vm85, %v1439, %v1441
  %1448 = vrot.lane.b32.xlu0 %v1422, 126
  %v1449 = vpop.permute.xlu0 %1448
  %1450 = vrot.lane.b32.xlu0 %v1423, 126
  %v1451 = vpop.permute.xlu0 %1450
  %1452 = vrot.lane.b32.xlu0 %v1424, 126
  %v1453 = vpop.permute.xlu0 %1452
  %1454 = vrot.lane.b32.xlu0 %v1425, 126
  %v1455 = vpop.permute.xlu0 %1454
  %1456 = vrot.lane.b32.xlu0 %v1426, 126
  %v1457 = vpop.permute.xlu0 %1456
  %1458 = vrot.lane.b32.xlu0 %v1427, 126
  %v1459 = vpop.permute.xlu0 %1458
  %v1460 = vsel %vm106, %v93, %v1449
  %v1461 = vsel %vm106, %v1449, %v1451
  %v1462 = vsel %vm106, %v1451, %v1453
  %v1463 = vsel %vm106, %v1453, %v1455
  %v1464 = vsel %vm106, %v1455, %v1457
  %v1465 = vsel %vm106, %v1457, %v1459
  %1466 = vrot.lane.b32.xlu0 0, 110
  %v1467 = vpop.permute.xlu0 %1466
  %1468 = vrot.lane.b32.xlu0 %v1422, 110
  %v1469 = vpop.permute.xlu0 %1468
  %1470 = vrot.lane.b32.xlu0 %v1423, 110
  %v1471 = vpop.permute.xlu0 %1470
  %1472 = vrot.lane.b32.xlu0 %v1424, 110
  %v1473 = vpop.permute.xlu0 %1472
  %1474 = vrot.lane.b32.xlu0 %v1425, 110
  %v1475 = vpop.permute.xlu0 %1474
  %1476 = vrot.lane.b32.xlu0 %v1426, 110
  %v1477 = vpop.permute.xlu0 %1476
  %1478 = vrot.lane.b32.xlu0 %v1427, 110
  %v1479 = vpop.permute.xlu0 %1478
  %v1480 = vsel %vm127, %v1467, %v1469
  %v1481 = vsel %vm127, %v1469, %v1471
  %v1482 = vsel %vm127, %v1471, %v1473
  %v1483 = vsel %vm127, %v1473, %v1475
  %v1484 = vsel %vm127, %v1475, %v1477
  %v1485 = vsel %vm127, %v1477, %v1479
  %1486 = vrot.lane.b32.xlu0 %v1422, 109
  %v1487 = vpop.permute.xlu0 %1486
  %1488 = vrot.lane.b32.xlu0 %v1423, 109
  %v1489 = vpop.permute.xlu0 %1488
  %1490 = vrot.lane.b32.xlu0 %v1424, 109
  %v1491 = vpop.permute.xlu0 %1490
  %1492 = vrot.lane.b32.xlu0 %v1425, 109
  %v1493 = vpop.permute.xlu0 %1492
  %1494 = vrot.lane.b32.xlu0 %v1426, 109
  %v1495 = vpop.permute.xlu0 %1494
  %1496 = vrot.lane.b32.xlu0 %v1427, 109
  %v1497 = vpop.permute.xlu0 %1496
  %v1498 = vsel %vm146, %v1487, %v1489
  %v1499 = vsel %vm146, %v1489, %v1491
  %v1500 = vsel %vm146, %v1491, %v1493
  %v1501 = vsel %vm146, %v1493, %v1495
  %v1502 = vsel %vm146, %v1495, %v1497
  %1503 = vrot.lane.b32.xlu0 %v1422, 108
  %v1504 = vpop.permute.xlu0 %1503
  %1505 = vrot.lane.b32.xlu0 %v1423, 108
  %v1506 = vpop.permute.xlu0 %1505
  %1507 = vrot.lane.b32.xlu0 %v1424, 108
  %v1508 = vpop.permute.xlu0 %1507
  %1509 = vrot.lane.b32.xlu0 %v1425, 108
  %v1510 = vpop.permute.xlu0 %1509
  %1511 = vrot.lane.b32.xlu0 %v1426, 108
  %v1512 = vpop.permute.xlu0 %1511
  %1513 = vrot.lane.b32.xlu0 %v1427, 108
  %v1514 = vpop.permute.xlu0 %1513
  %1515 = vrot.lane.b32.xlu0 0, 108
  %v1516 = vpop.permute.xlu0 %1515
  %v1517 = vsel %vm166, %v1504, %v1506
  %v1518 = vsel %vm166, %v1506, %v1508
  %v1519 = vsel %vm166, %v1508, %v1510
  %v1520 = vsel %vm166, %v1510, %v1512
  %v1521 = vsel %vm166, %v1512, %v1514
  %v1522 = vsel %vm166, %v1514, %v1516
  %1523 = vrot.lane.b32.xlu0 %v1422, 92
  %v1524 = vpop.permute.xlu0 %1523
  %1525 = vrot.lane.b32.xlu0 %v1423, 92
  %v1526 = vpop.permute.xlu0 %1525
  %1527 = vrot.lane.b32.xlu0 %v1424, 92
  %v1528 = vpop.permute.xlu0 %1527
  %1529 = vrot.lane.b32.xlu0 %v1425, 92
  %v1530 = vpop.permute.xlu0 %1529
  %1531 = vrot.lane.b32.xlu0 %v1426, 92
  %v1532 = vpop.permute.xlu0 %1531
  %1533 = vrot.lane.b32.xlu0 %v1427, 92
  %v1534 = vpop.permute.xlu0 %1533
  %v1535 = vsel %vm187, %v1524, %v1526
  %v1536 = vsel %vm187, %v1526, %v1528
  %v1537 = vsel %vm187, %v1528, %v1530
  %v1538 = vsel %vm187, %v1530, %v1532
  %v1539 = vsel %vm187, %v1532, %v1534
  %v1540 = vsel %vm187, %v1534, %v186
  %1541 = vrot.lane.b32.xlu0 %v1422, 91
  %v1542 = vpop.permute.xlu0 %1541
  %1543 = vrot.lane.b32.xlu0 %v1423, 91
  %v1544 = vpop.permute.xlu0 %1543
  %1545 = vrot.lane.b32.xlu0 %v1424, 91
  %v1546 = vpop.permute.xlu0 %1545
  %1547 = vrot.lane.b32.xlu0 %v1425, 91
  %v1548 = vpop.permute.xlu0 %1547
  %1549 = vrot.lane.b32.xlu0 %v1426, 91
  %v1550 = vpop.permute.xlu0 %1549
  %1551 = vrot.lane.b32.xlu0 %v1427, 91
  %v1552 = vpop.permute.xlu0 %1551
  %1553 = vrot.lane.b32.xlu0 0, 91
  %v1554 = vpop.permute.xlu0 %1553
  %v1555 = vsel %vm208, %v1542, %v1544
  %v1556 = vsel %vm208, %v1544, %v1546
  %v1557 = vsel %vm208, %v1546, %v1548
  %v1558 = vsel %vm208, %v1548, %v1550
  %v1559 = vsel %vm208, %v1550, %v1552
  %v1560 = vsel %vm208, %v1552, %v1554
  %1561 = vrot.lane.b32.xlu0 %v1422, 90
  %v1562 = vpop.permute.xlu0 %1561
  %1563 = vrot.lane.b32.xlu0 %v1423, 90
  %v1564 = vpop.permute.xlu0 %1563
  %1565 = vrot.lane.b32.xlu0 %v1424, 90
  %v1566 = vpop.permute.xlu0 %1565
  %1567 = vrot.lane.b32.xlu0 %v1425, 90
  %v1568 = vpop.permute.xlu0 %1567
  %1569 = vrot.lane.b32.xlu0 %v1426, 90
  %v1570 = vpop.permute.xlu0 %1569
  %1571 = vrot.lane.b32.xlu0 %v1427, 90
  %v1572 = vpop.permute.xlu0 %1571
  %v1573 = vsel %vm229, %v1562, %v1564
  %v1574 = vsel %vm229, %v1564, %v1566
  %v1575 = vsel %vm229, %v1566, %v1568
  %v1576 = vsel %vm229, %v1568, %v1570
  %v1577 = vsel %vm229, %v1570, %v1572
  %v1578 = vsel %vm229, %v1572, %v228
  %1580 = vset.pattern.permute.xlu0 0
  %1581 = vperm.xlu0 %1580, %v1396
  %v1582 = vpop.permute.xlu0 %1581
  %1585 = vset.pattern.permute.xlu0 0
  %1586 = vperm.xlu0 %1585, %v1397
  %v1587 = vpop.permute.xlu0 %1586
  %v1591 = vunpack.c.l.b16 %v1394
  %v1592 = vunpack.c.h.b16 %v1394
  %v1593 = vunpack.c.l.b16 %v1395
  %v1594 = vunpack.c.h.b16 %v1395
  %v1595 = vpack.c.b16 %v1593, %v1591
  %v1596 = vpack.c.b16 %v1594, %v1592
  %1598 = vrot.lane.b32.xlu0 0, 19
  %v1599 = vpop.permute.xlu0 %1598
  %1600 = vrot.lane.b32.xlu0 %v1422, 19
  %v1601 = vpop.permute.xlu0 %1600
  %1602 = vrot.lane.b32.xlu0 %v1423, 19
  %v1603 = vpop.permute.xlu0 %1602
  %1604 = vrot.lane.b32.xlu0 %v1424, 19
  %v1605 = vpop.permute.xlu0 %1604
  %1606 = vrot.lane.b32.xlu0 %v1425, 19
  %v1607 = vpop.permute.xlu0 %1606
  %1608 = vrot.lane.b32.xlu0 %v1426, 19
  %v1609 = vpop.permute.xlu0 %1608
  %1610 = vrot.lane.b32.xlu0 %v1427, 19
  %v1611 = vpop.permute.xlu0 %1610
  %1612 = vrot.lane.b32.xlu0 %v1442, 19
  %v1613 = vpop.permute.xlu0 %1612
  %1614 = vrot.lane.b32.xlu0 %v1443, 19
  %v1615 = vpop.permute.xlu0 %1614
  %1616 = vrot.lane.b32.xlu0 %v1444, 19
  %v1617 = vpop.permute.xlu0 %1616
  %1618 = vrot.lane.b32.xlu0 %v1445, 19
  %v1619 = vpop.permute.xlu0 %1618
  %1620 = vrot.lane.b32.xlu0 %v1446, 19
  %v1621 = vpop.permute.xlu0 %1620
  %1622 = vrot.lane.b32.xlu0 %v1447, 19
  %v1623 = vpop.permute.xlu0 %1622
  %1624 = vrot.lane.b32.xlu0 %v1441, 19
  %v1625 = vpop.permute.xlu0 %1624
  %1626 = vrot.lane.b32.xlu0 %v1460, 19
  %v1627 = vpop.permute.xlu0 %1626
  %1628 = vrot.lane.b32.xlu0 %v1461, 19
  %v1629 = vpop.permute.xlu0 %1628
  %1630 = vrot.lane.b32.xlu0 %v1462, 19
  %v1631 = vpop.permute.xlu0 %1630
  %1632 = vrot.lane.b32.xlu0 %v1463, 19
  %v1633 = vpop.permute.xlu0 %1632
  %1634 = vrot.lane.b32.xlu0 %v1464, 19
  %v1635 = vpop.permute.xlu0 %1634
  %1636 = vrot.lane.b32.xlu0 %v1465, 19
  %v1637 = vpop.permute.xlu0 %1636
  %1638 = vrot.lane.b32.xlu0 %v1459, 19
  %v1639 = vpop.permute.xlu0 %1638
  %1640 = vrot.lane.b32.xlu0 %v1480, 19
  %v1641 = vpop.permute.xlu0 %1640
  %1642 = vrot.lane.b32.xlu0 %v1481, 19
  %v1643 = vpop.permute.xlu0 %1642
  %1644 = vrot.lane.b32.xlu0 %v1482, 19
  %v1645 = vpop.permute.xlu0 %1644
  %1646 = vrot.lane.b32.xlu0 %v1483, 19
  %v1647 = vpop.permute.xlu0 %1646
  %1648 = vrot.lane.b32.xlu0 %v1484, 19
  %v1649 = vpop.permute.xlu0 %1648
  %1650 = vrot.lane.b32.xlu0 %v1485, 19
  %v1651 = vpop.permute.xlu0 %1650
  %1652 = vrot.lane.b32.xlu0 %v1479, 19
  %v1653 = vpop.permute.xlu0 %1652
  %1654 = vrot.lane.b32.xlu0 %v1487, 19
  %v1655 = vpop.permute.xlu0 %1654
  %1656 = vrot.lane.b32.xlu0 %v1498, 19
  %v1657 = vpop.permute.xlu0 %1656
  %1658 = vrot.lane.b32.xlu0 %v1499, 19
  %v1659 = vpop.permute.xlu0 %1658
  %1660 = vrot.lane.b32.xlu0 %v1500, 19
  %v1661 = vpop.permute.xlu0 %1660
  %1662 = vrot.lane.b32.xlu0 %v1501, 19
  %v1663 = vpop.permute.xlu0 %1662
  %1664 = vrot.lane.b32.xlu0 %v1502, 19
  %v1665 = vpop.permute.xlu0 %1664
  %1666 = vrot.lane.b32.xlu0 %v1497, 19
  %v1667 = vpop.permute.xlu0 %1666
  %1668 = vrot.lane.b32.xlu0 %v1504, 19
  %v1669 = vpop.permute.xlu0 %1668
  %1670 = vrot.lane.b32.xlu0 %v1517, 19
  %v1671 = vpop.permute.xlu0 %1670
  %1672 = vrot.lane.b32.xlu0 %v1518, 19
  %v1673 = vpop.permute.xlu0 %1672
  %1674 = vrot.lane.b32.xlu0 %v1519, 19
  %v1675 = vpop.permute.xlu0 %1674
  %1676 = vrot.lane.b32.xlu0 %v1520, 19
  %v1677 = vpop.permute.xlu0 %1676
  %1678 = vrot.lane.b32.xlu0 %v1521, 19
  %v1679 = vpop.permute.xlu0 %1678
  %1680 = vrot.lane.b32.xlu0 %v1522, 19
  %v1681 = vpop.permute.xlu0 %1680
  %1682 = vrot.lane.b32.xlu0 %v1524, 19
  %v1683 = vpop.permute.xlu0 %1682
  %1684 = vrot.lane.b32.xlu0 %v1535, 19
  %v1685 = vpop.permute.xlu0 %1684
  %1686 = vrot.lane.b32.xlu0 %v1536, 19
  %v1687 = vpop.permute.xlu0 %1686
  %1688 = vrot.lane.b32.xlu0 %v1537, 19
  %v1689 = vpop.permute.xlu0 %1688
  %1690 = vrot.lane.b32.xlu0 %v1538, 19
  %v1691 = vpop.permute.xlu0 %1690
  %1692 = vrot.lane.b32.xlu0 %v1539, 19
  %v1693 = vpop.permute.xlu0 %1692
  %1694 = vrot.lane.b32.xlu0 %v1540, 19
  %v1695 = vpop.permute.xlu0 %1694
  %1696 = vrot.lane.b32.xlu0 %v1542, 19
  %v1697 = vpop.permute.xlu0 %1696
  %1698 = vrot.lane.b32.xlu0 %v1555, 19
  %v1699 = vpop.permute.xlu0 %1698
  %1700 = vrot.lane.b32.xlu0 %v1556, 19
  %v1701 = vpop.permute.xlu0 %1700
  %1702 = vrot.lane.b32.xlu0 %v1557, 19
  %v1703 = vpop.permute.xlu0 %1702
  %1704 = vrot.lane.b32.xlu0 %v1558, 19
  %v1705 = vpop.permute.xlu0 %1704
  %1706 = vrot.lane.b32.xlu0 %v1559, 19
  %v1707 = vpop.permute.xlu0 %1706
  %1708 = vrot.lane.b32.xlu0 %v1560, 19
  %v1709 = vpop.permute.xlu0 %1708
  %1710 = vrot.lane.b32.xlu0 %v1562, 19
  %v1711 = vpop.permute.xlu0 %1710
  %1712 = vrot.lane.b32.xlu0 %v1573, 19
  %v1713 = vpop.permute.xlu0 %1712
  %1714 = vrot.lane.b32.xlu0 %v1574, 19
  %v1715 = vpop.permute.xlu0 %1714
  %1716 = vrot.lane.b32.xlu0 %v1575, 19
  %v1717 = vpop.permute.xlu0 %1716
  %1718 = vrot.lane.b32.xlu0 %v1576, 19
  %v1719 = vpop.permute.xlu0 %1718
  %1720 = vrot.lane.b32.xlu0 %v1577, 19
  %v1721 = vpop.permute.xlu0 %1720
  %1722 = vrot.lane.b32.xlu0 %v1578, 19
  %v1723 = vpop.permute.xlu0 %1722
  %v1724 = vsel %vm424, %v1599, %v1601
  %v1725 = vsel %vm424, %v1601, %v1603
  %v1726 = vsel %vm424, %v1603, %v1605
  %v1727 = vsel %vm424, %v1605, %v1607
  %v1728 = vsel %vm424, %v1607, %v1609
  %v1729 = vsel %vm424, %v1609, %v1611
  %v1730 = vsel %vm424, %v1613, %v1615
  %v1731 = vsel %vm424, %v1615, %v1617
  %v1732 = vsel %vm424, %v1617, %v1619
  %v1733 = vsel %vm424, %v1619, %v1621
  %v1734 = vsel %vm424, %v1621, %v1623
  %v1735 = vsel %vm424, %v1623, %v1625
  %v1736 = vsel %vm424, %v1627, %v1629
  %v1737 = vsel %vm424, %v1629, %v1631
  %v1738 = vsel %vm424, %v1631, %v1633
  %v1739 = vsel %vm424, %v1633, %v1635
  %v1740 = vsel %vm424, %v1635, %v1637
  %v1741 = vsel %vm424, %v1637, %v1639
  %v1742 = vsel %vm424, %v1641, %v1643
  %v1743 = vsel %vm424, %v1643, %v1645
  %v1744 = vsel %vm424, %v1645, %v1647
  %v1745 = vsel %vm424, %v1647, %v1649
  %v1746 = vsel %vm424, %v1649, %v1651
  %v1747 = vsel %vm424, %v1651, %v1653
  %v1748 = vsel %vm424, %v1655, %v1657
  %v1749 = vsel %vm424, %v1657, %v1659
  %v1750 = vsel %vm424, %v1659, %v1661
  %v1751 = vsel %vm424, %v1661, %v1663
  %v1752 = vsel %vm424, %v1663, %v1665
  %v1753 = vsel %vm424, %v1665, %v1667
  %v1754 = vsel %vm424, %v1669, %v1671
  %v1755 = vsel %vm424, %v1671, %v1673
  %v1756 = vsel %vm424, %v1673, %v1675
  %v1757 = vsel %vm424, %v1675, %v1677
  %v1758 = vsel %vm424, %v1677, %v1679
  %v1759 = vsel %vm424, %v1679, %v1681
  %v1760 = vsel %vm424, %v1683, %v1685
  %v1761 = vsel %vm424, %v1685, %v1687
  %v1762 = vsel %vm424, %v1687, %v1689
  %v1763 = vsel %vm424, %v1689, %v1691
  %v1764 = vsel %vm424, %v1691, %v1693
  %v1765 = vsel %vm424, %v1693, %v1695
  %v1766 = vsel %vm424, %v1697, %v1699
  %v1767 = vsel %vm424, %v1699, %v1701
  %v1768 = vsel %vm424, %v1701, %v1703
  %v1769 = vsel %vm424, %v1703, %v1705
  %v1770 = vsel %vm424, %v1705, %v1707
  %v1771 = vsel %vm424, %v1707, %v1709
  %v1772 = vsel %vm424, %v1711, %v1713
  %v1773 = vsel %vm424, %v1713, %v1715
  %v1774 = vsel %vm424, %v1715, %v1717
  %v1775 = vsel %vm424, %v1717, %v1719
  %v1776 = vsel %vm424, %v1719, %v1721
  %v1777 = vsel %vm424, %v1721, %v1723
  %vm1832 = vcmask 130048
  %v1834 = vsel %vm1832, %v1596, 0
  %1836 = vmatpush.bf16.msra.mxu0 %v1766
  %1837 = vmatpush.bf16.msra.mxu0 %v1760
  %1838 = vmatpush.bf16.msra.mxu0 %v1754
  %1839 = vmatpush.bf16.msra.mxu0 %v1748
  %1840 = vmatpush.bf16.msra.mxu0 %v1742
  %1841 = vmatpush.bf16.msra.mxu0 %v1736
  %1842 = vmatpush.bf16.msra.mxu0 %v1730
  %1843 = vmatpush.bf16.msra.mxu0 %v1724
  %1844 = vmatmul.bf16.gmra.mxu0 %v1595
  %v1845 = vpop.f32.mrf.mxu0
  %v1846 = vadd.f32 %v1582, %v1845
  %v1847 = vpop.f32.mrf.mxu0
  %v1848 = vadd.f32 %v1587, %v1847
  %1849 = vdwg.mxu0
  %1850 = vmatpush.bf16.msra.mxu0 0
  %1851 = vmatpush.bf16.msra.mxu0 0
  %1852 = vmatpush.bf16.msra.mxu0 0
  %1853 = vmatpush.bf16.msra.mxu0 0
  %1854 = vmatpush.bf16.msra.mxu0 0
  %1855 = vmatpush.bf16.msra.mxu0 0
  %1856 = vmatpush.bf16.msra.mxu0 0
  %1857 = vmatpush.bf16.msra.mxu0 %v1772
  %1858 = vmatmul.bf16.gmra.mxu0 %v1834
  %v1859 = vpop.f32.mrf.mxu0
  %v1860 = vadd.f32 %v1846, %v1859
  %v1861 = vpop.f32.mrf.mxu0
  %v1862 = vadd.f32 %v1848, %v1861
  %1863 = vdwg.mxu0
  %1864 = vmatpush.bf16.msra.mxu0 %v1767
  %1865 = vmatpush.bf16.msra.mxu0 %v1761
  %1866 = vmatpush.bf16.msra.mxu0 %v1755
  %1867 = vmatpush.bf16.msra.mxu0 %v1749
  %1868 = vmatpush.bf16.msra.mxu0 %v1743
  %1869 = vmatpush.bf16.msra.mxu0 %v1737
  %1870 = vmatpush.bf16.msra.mxu0 %v1731
  %1871 = vmatpush.bf16.msra.mxu0 %v1725
  %1872 = vmatmul.bf16.gmra.mxu0 %v1595
  %v1873 = vpop.f32.mrf.mxu0
  %v1874 = vadd.f32 %v1582, %v1873
  %v1875 = vpop.f32.mrf.mxu0
  %v1876 = vadd.f32 %v1587, %v1875
  %1877 = vdwg.mxu0
  %1878 = vmatpush.bf16.msra.mxu0 0
  %1879 = vmatpush.bf16.msra.mxu0 0
  %1880 = vmatpush.bf16.msra.mxu0 0
  %1881 = vmatpush.bf16.msra.mxu0 0
  %1882 = vmatpush.bf16.msra.mxu0 0
  %1883 = vmatpush.bf16.msra.mxu0 0
  %1884 = vmatpush.bf16.msra.mxu0 0
  %1885 = vmatpush.bf16.msra.mxu0 %v1773
  %1886 = vmatmul.bf16.gmra.mxu0 %v1834
  %v1887 = vpop.f32.mrf.mxu0
  %v1888 = vadd.f32 %v1874, %v1887
  %v1889 = vpop.f32.mrf.mxu0
  %v1890 = vadd.f32 %v1876, %v1889
  %1891 = vdwg.mxu0
  %1892 = vmatpush.bf16.msra.mxu0 %v1768
  %1893 = vmatpush.bf16.msra.mxu0 %v1762
  %1894 = vmatpush.bf16.msra.mxu0 %v1756
  %1895 = vmatpush.bf16.msra.mxu0 %v1750
  %1896 = vmatpush.bf16.msra.mxu0 %v1744
  %1897 = vmatpush.bf16.msra.mxu0 %v1738
  %1898 = vmatpush.bf16.msra.mxu0 %v1732
  %1899 = vmatpush.bf16.msra.mxu0 %v1726
  %1900 = vmatmul.bf16.gmra.mxu0 %v1595
  %v1901 = vpop.f32.mrf.mxu0
  %v1902 = vadd.f32 %v1582, %v1901
  %v1903 = vpop.f32.mrf.mxu0
  %v1904 = vadd.f32 %v1587, %v1903
  %1905 = vdwg.mxu0
  %1906 = vmatpush.bf16.msra.mxu0 0
  %1907 = vmatpush.bf16.msra.mxu0 0
  %1908 = vmatpush.bf16.msra.mxu0 0
  %1909 = vmatpush.bf16.msra.mxu0 0
  %1910 = vmatpush.bf16.msra.mxu0 0
  %1911 = vmatpush.bf16.msra.mxu0 0
  %1912 = vmatpush.bf16.msra.mxu0 0
  %1913 = vmatpush.bf16.msra.mxu0 %v1774
  %1914 = vmatmul.bf16.gmra.mxu0 %v1834
  %v1915 = vpop.f32.mrf.mxu0
  %v1916 = vadd.f32 %v1902, %v1915
  %v1917 = vpop.f32.mrf.mxu0
  %v1918 = vadd.f32 %v1904, %v1917
  %1919 = vdwg.mxu0
  %1920 = vmatpush.bf16.msra.mxu0 %v1769
  %1921 = vmatpush.bf16.msra.mxu0 %v1763
  %1922 = vmatpush.bf16.msra.mxu0 %v1757
  %1923 = vmatpush.bf16.msra.mxu0 %v1751
  %1924 = vmatpush.bf16.msra.mxu0 %v1745
  %1925 = vmatpush.bf16.msra.mxu0 %v1739
  %1926 = vmatpush.bf16.msra.mxu0 %v1733
  %1927 = vmatpush.bf16.msra.mxu0 %v1727
  %1928 = vmatmul.bf16.gmra.mxu0 %v1595
  %v1929 = vpop.f32.mrf.mxu0
  %v1930 = vadd.f32 %v1582, %v1929
  %v1931 = vpop.f32.mrf.mxu0
  %v1932 = vadd.f32 %v1587, %v1931
  %1933 = vdwg.mxu0
  %1934 = vmatpush.bf16.msra.mxu0 0
  %1935 = vmatpush.bf16.msra.mxu0 0
  %1936 = vmatpush.bf16.msra.mxu0 0
  %1937 = vmatpush.bf16.msra.mxu0 0
  %1938 = vmatpush.bf16.msra.mxu0 0
  %1939 = vmatpush.bf16.msra.mxu0 0
  %1940 = vmatpush.bf16.msra.mxu0 0
  %1941 = vmatpush.bf16.msra.mxu0 %v1775
  %1942 = vmatmul.bf16.gmra.mxu0 %v1834
  %v1943 = vpop.f32.mrf.mxu0
  %v1944 = vadd.f32 %v1930, %v1943
  %v1945 = vpop.f32.mrf.mxu0
  %v1946 = vadd.f32 %v1932, %v1945
  %1947 = vdwg.mxu0
  %1948 = vmatpush.bf16.msra.mxu0 %v1770
  %1949 = vmatpush.bf16.msra.mxu0 %v1764
  %1950 = vmatpush.bf16.msra.mxu0 %v1758
  %1951 = vmatpush.bf16.msra.mxu0 %v1752
  %1952 = vmatpush.bf16.msra.mxu0 %v1746
  %1953 = vmatpush.bf16.msra.mxu0 %v1740
  %1954 = vmatpush.bf16.msra.mxu0 %v1734
  %1955 = vmatpush.bf16.msra.mxu0 %v1728
  %1956 = vmatmul.bf16.gmra.mxu0 %v1595
  %v1957 = vpop.f32.mrf.mxu0
  %v1958 = vadd.f32 %v1582, %v1957
  %v1959 = vpop.f32.mrf.mxu0
  %v1960 = vadd.f32 %v1587, %v1959
  %1961 = vdwg.mxu0
  %1962 = vmatpush.bf16.msra.mxu0 0
  %1963 = vmatpush.bf16.msra.mxu0 0
  %1964 = vmatpush.bf16.msra.mxu0 0
  %1965 = vmatpush.bf16.msra.mxu0 0
  %1966 = vmatpush.bf16.msra.mxu0 0
  %1967 = vmatpush.bf16.msra.mxu0 0
  %1968 = vmatpush.bf16.msra.mxu0 0
  %1969 = vmatpush.bf16.msra.mxu0 %v1776
  %1970 = vmatmul.bf16.gmra.mxu0 %v1834
  %v1971 = vpop.f32.mrf.mxu0
  %v1972 = vadd.f32 %v1958, %v1971
  %v1973 = vpop.f32.mrf.mxu0
  %v1974 = vadd.f32 %v1960, %v1973
  %1975 = vdwg.mxu0
  %1976 = vmatpush.bf16.msra.mxu0 %v1771
  %1977 = vmatpush.bf16.msra.mxu0 %v1765
  %1978 = vmatpush.bf16.msra.mxu0 %v1759
  %1979 = vmatpush.bf16.msra.mxu0 %v1753
  %1980 = vmatpush.bf16.msra.mxu0 %v1747
  %1981 = vmatpush.bf16.msra.mxu0 %v1741
  %1982 = vmatpush.bf16.msra.mxu0 %v1735
  %1983 = vmatpush.bf16.msra.mxu0 %v1729
  %1984 = vmatmul.bf16.gmra.mxu0 %v1595
  %v1985 = vpop.f32.mrf.mxu0
  %v1986 = vadd.f32 %v1582, %v1985
  %v1987 = vpop.f32.mrf.mxu0
  %v1988 = vadd.f32 %v1587, %v1987
  %1989 = vdwg.mxu0
  %1990 = vmatpush.bf16.msra.mxu0 0
  %1991 = vmatpush.bf16.msra.mxu0 0
  %1992 = vmatpush.bf16.msra.mxu0 0
  %1993 = vmatpush.bf16.msra.mxu0 0
  %1994 = vmatpush.bf16.msra.mxu0 0
  %1995 = vmatpush.bf16.msra.mxu0 0
  %1996 = vmatpush.bf16.msra.mxu0 0
  %1997 = vmatpush.bf16.msra.mxu0 %v1777
  %1998 = vmatmul.bf16.gmra.mxu0 %v1834
  %v1999 = vpop.f32.mrf.mxu0
  %v2000 = vadd.f32 %v1986, %v1999
  %v2001 = vpop.f32.mrf.mxu0
  %v2002 = vadd.f32 %v1988, %v2001
  %2003 = vdwg.mxu0
  %v2004 = vmax.f32 %v1860, 0.0
  %v2005 = vmax.f32 %v1888, 0.0
  %v2006 = vmax.f32 %v1916, 0.0
  %v2007 = vmax.f32 %v1944, 0.0
  %v2008 = vmax.f32 %v1972, 0.0
  %v2009 = vmax.f32 %v2000, 0.0
  %v2010 = vmax.f32 %v1862, 0.0
  %v2011 = vmax.f32 %v1890, 0.0
  %v2012 = vmax.f32 %v1918, 0.0
  %v2013 = vmax.f32 %v1946, 0.0
  %v2014 = vmax.f32 %v1974, 0.0
  %v2015 = vmax.f32 %v2002, 0.0
  %v2016 = vmul.f32 %v2004, %v586
  %v2017 = vmul.f32 %v2005, %v587
  %v2018 = vmul.f32 %v2006, %v588
  %v2019 = vmul.f32 %v2007, %v589
  %v2020 = vmul.f32 %v2008, %v590
  %v2021 = vmul.f32 %v2009, %v591
  %v2022 = vmul.f32 %v2010, %v586
  %v2023 = vmul.f32 %v2011, %v587
  %v2024 = vmul.f32 %v2012, %v588
  %v2025 = vmul.f32 %v2013, %v589
  %v2026 = vmul.f32 %v2014, %v590
  %v2027 = vmul.f32 %v2015, %v591
  %v2028 = vadd.f32 %v2016, %v2017
  %v2029 = vadd.f32 %v2028, %v2018
  %v2030 = vadd.f32 %v2029, %v2019
  %v2031 = vadd.f32 %v2030, %v2020
  %v2032 = vadd.f32 %v2031, %v2021
  %2033 = vadd.xlane.f32.xlu0 %v2032
  %v2034 = vpop.xlane.xlu0 %2033
  %v2035 = vadd.f32 %v2022, %v2023
  %v2036 = vadd.f32 %v2035, %v2024
  %v2037 = vadd.f32 %v2036, %v2025
  %v2038 = vadd.f32 %v2037, %v2026
  %v2039 = vadd.f32 %v2038, %v2027
  %2040 = vadd.xlane.f32.xlu0 %v2039
  %v2041 = vpop.xlane.xlu0 %2040
  %v2042 = vmul.f32 %v2034, 0.001953125
  %v2043 = vmul.f32 %v2041, 0.001953125
  %v2044 = vsub.f32 %v2004, %v2042
  %v2045 = vsub.f32 %v2005, %v2042
  %v2046 = vsub.f32 %v2006, %v2042
  %v2047 = vsub.f32 %v2007, %v2042
  %v2048 = vsub.f32 %v2008, %v2042
  %v2049 = vsub.f32 %v2009, %v2042
  %v2050 = vsub.f32 %v2010, %v2043
  %v2051 = vsub.f32 %v2011, %v2043
  %v2052 = vsub.f32 %v2012, %v2043
  %v2053 = vsub.f32 %v2013, %v2043
  %v2054 = vsub.f32 %v2014, %v2043
  %v2055 = vsub.f32 %v2015, %v2043
  %v2056 = vmul.f32 %v2044, %v586
  %v2057 = vmul.f32 %v2045, %v587
  %v2058 = vmul.f32 %v2046, %v588
  %v2059 = vmul.f32 %v2047, %v589
  %v2060 = vmul.f32 %v2048, %v590
  %v2061 = vmul.f32 %v2049, %v591
  %v2062 = vmul.f32 %v2050, %v586
  %v2063 = vmul.f32 %v2051, %v587
  %v2064 = vmul.f32 %v2052, %v588
  %v2065 = vmul.f32 %v2053, %v589
  %v2066 = vmul.f32 %v2054, %v590
  %v2067 = vmul.f32 %v2055, %v591
  %v2068 = vmul.f32 %v2056, %v2056
  %v2069 = vmul.f32 %v2057, %v2057
  %v2070 = vmul.f32 %v2058, %v2058
  %v2071 = vmul.f32 %v2059, %v2059
  %v2072 = vmul.f32 %v2060, %v2060
  %v2073 = vmul.f32 %v2061, %v2061
  %v2074 = vmul.f32 %v2062, %v2062
  %v2075 = vmul.f32 %v2063, %v2063
  %v2076 = vmul.f32 %v2064, %v2064
  %v2077 = vmul.f32 %v2065, %v2065
  %v2078 = vmul.f32 %v2066, %v2066
  %v2079 = vmul.f32 %v2067, %v2067
  %v2080 = vadd.f32 %v2068, %v2069
  %v2081 = vadd.f32 %v2080, %v2070
  %v2082 = vadd.f32 %v2081, %v2071
  %v2083 = vadd.f32 %v2082, %v2072
  %v2084 = vadd.f32 %v2083, %v2073
  %2085 = vadd.xlane.f32.xlu0 %v2084
  %v2086 = vpop.xlane.xlu0 %2085
  %v2087 = vadd.f32 %v2074, %v2075
  %v2088 = vadd.f32 %v2087, %v2076
  %v2089 = vadd.f32 %v2088, %v2077
  %v2090 = vadd.f32 %v2089, %v2078
  %v2091 = vadd.f32 %v2090, %v2079
  %2092 = vadd.xlane.f32.xlu0 %v2091
  %v2093 = vpop.xlane.xlu0 %2092
  %v2094 = vmul.f32 %v2086, 0.001953125
  %v2095 = vmul.f32 %v2093, 0.001953125
  %v2096 = vadd.f32 %v2094, 1e-05
  %v2097 = vadd.f32 %v2095, 1e-05
  %v2098 = vrsqrt.pop %v2096
  %v2099 = vmul.f32 %v2098, %v2096
  %v2100 = vmul.f32 %v2099, %v2098
  %v2101 = vmul.f32 0.5, %v2100
  %v2102 = vsub.f32 1.5, %v2101
  %v2103 = vmul.f32 %v2098, %v2102
  %vm2104 = vweird.f32 %v2096
  %vm2105 = vweird.f32 %v2098
  %vm2106 = vmor %vm2104, %vm2105
  %v2107 = vsel %vm2106, %v2098, %v2103
  %v2108 = vrsqrt.pop %v2097
  %v2109 = vmul.f32 %v2108, %v2097
  %v2110 = vmul.f32 %v2109, %v2108
  %v2111 = vmul.f32 0.5, %v2110
  %v2112 = vsub.f32 1.5, %v2111
  %v2113 = vmul.f32 %v2108, %v2112
  %vm2114 = vweird.f32 %v2097
  %vm2115 = vweird.f32 %v2108
  %vm2116 = vmor %vm2114, %vm2115
  %v2117 = vsel %vm2116, %v2108, %v2113
  %v2118 = vmul.f32 %v1396, %v2107
  %v2119 = vmul.f32 %v1397, %v2117
  %v2120 = vmul.f32 %v2042, %v2118
  %v2121 = vmul.f32 %v2043, %v2119
  %2124 = vrot.lane.b32.xlu0 %v2120, 1
  %v2125 = vpop.permute.xlu0 %2124
  %2126 = vrot.lane.b32.xlu0 %v2121, 1
  %v2127 = vpop.permute.xlu0 %2126
  %v2130 = vsub.f32 %v1396, %v2125
  %v2131 = vsub.f32 %v1397, %v2127
  %2133 = vset.pattern.permute.xlu0 1
  %2134 = vperm.xlu0 %2133, %v2118
  %v2135 = vpop.permute.xlu0 %2134
  %2138 = vset.pattern.permute.xlu0 1
  %2139 = vperm.xlu0 %2138, %v2119
  %v2140 = vpop.permute.xlu0 %2139
  %v2142 = vmul.f32 %v2004, %v2135
  %v2143 = vmul.f32 %v2005, %v2135
  %v2144 = vmul.f32 %v2006, %v2135
  %v2145 = vmul.f32 %v2007, %v2135
  %v2146 = vmul.f32 %v2008, %v2135
  %v2147 = vmul.f32 %v2009, %v2135
  %v2148 = vmul.f32 %v2010, %v2140
  %v2149 = vmul.f32 %v2011, %v2140
  %v2150 = vmul.f32 %v2012, %v2140
  %v2151 = vmul.f32 %v2013, %v2140
  %v2152 = vmul.f32 %v2014, %v2140
  %v2153 = vmul.f32 %v2015, %v2140
  %2155 = vset.pattern.permute.xlu0 2
  %2156 = vperm.xlu0 %2155, %v2130
  %v2157 = vpop.permute.xlu0 %2156
  %2160 = vset.pattern.permute.xlu0 2
  %2161 = vperm.xlu0 %2160, %v2131
  %v2162 = vpop.permute.xlu0 %2161
  %v2164 = vadd.f32 %v2142, %v2157
  %v2165 = vadd.f32 %v2143, %v2157
  %v2166 = vadd.f32 %v2144, %v2157
  %v2167 = vadd.f32 %v2145, %v2157
  %v2168 = vadd.f32 %v2146, %v2157
  %v2169 = vadd.f32 %v2147, %v2157
  %v2170 = vadd.f32 %v2148, %v2162
  %v2171 = vadd.f32 %v2149, %v2162
  %v2172 = vadd.f32 %v2150, %v2162
  %v2173 = vadd.f32 %v2151, %v2162
  %v2174 = vadd.f32 %v2152, %v2162
  %v2175 = vadd.f32 %v2153, %v2162
  %v2176 = vmul.f32 %v2164, %v586
  %v2177 = vmul.f32 %v2165, %v587
  %v2178 = vmul.f32 %v2166, %v588
  %v2179 = vmul.f32 %v2167, %v589
  %v2180 = vmul.f32 %v2168, %v590
  %v2181 = vmul.f32 %v2169, %v591
  %v2182 = vmul.f32 %v2170, %v586
  %v2183 = vmul.f32 %v2171, %v587
  %v2184 = vmul.f32 %v2172, %v588
  %v2185 = vmul.f32 %v2173, %v589
  %v2186 = vmul.f32 %v2174, %v590
  %v2187 = vmul.f32 %v2175, %v591
  %v2188 = vld [vmem:[%s8] sm:$0xff]
  %v2189 = vld [vmem:[%s8 + $0x8] sm:$0xff]
  %v2190 = vld [vmem:[%s8 + $0x10] sm:$0xff]
  %v2191 = vld [vmem:[%s8 + $0x18] sm:$0xff]
  %v2192 = vld [vmem:[%s9] sm:$0xff]
  %v2193 = vld [vmem:[%s9 + $0x8] sm:$0xff]
  %v2194 = vld [vmem:[%s9 + $0x10] sm:$0xff]
  %v2195 = vld [vmem:[%s9 + $0x18] sm:$0xff]
  %v2196 = vpack.c.bf16 %v2177, %v2176
  %v2197 = vpack.c.bf16 %v2179, %v2178
  %v2198 = vpack.c.bf16 %v2181, %v2180
  %v2199 = vpack.c.bf16 %v2183, %v2182
  %v2200 = vpack.c.bf16 %v2185, %v2184
  %v2201 = vpack.c.bf16 %v2187, %v2186
  %v2208 = vunpack.c.l.b16 %v2196
  %v2209 = vunpack.c.h.b16 %v2196
  %v2210 = vunpack.c.l.b16 %v2197
  %v2211 = vunpack.c.h.b16 %v2197
  %v2212 = vunpack.c.l.b16 %v2198
  %v2213 = vunpack.c.h.b16 %v2198
  %v2214 = vunpack.c.l.b16 %v2199
  %v2215 = vunpack.c.h.b16 %v2199
  %v2216 = vunpack.c.l.b16 %v2200
  %v2217 = vunpack.c.h.b16 %v2200
  %v2218 = vunpack.c.l.b16 %v2201
  %v2219 = vunpack.c.h.b16 %v2201
  %v2220 = vpack.c.b16 %v2214, %v2208
  %v2221 = vpack.c.b16 %v2215, %v2209
  %v2222 = vpack.c.b16 %v2216, %v2210
  %v2223 = vpack.c.b16 %v2217, %v2211
  %v2224 = vpack.c.b16 %v2218, %v2212
  %v2225 = vpack.c.b16 %v2219, %v2213
  %2226 = vrot.lane.b32.xlu0 %v2220, 127
  %v2227 = vpop.permute.xlu0 %2226
  %2228 = vrot.lane.b32.xlu0 %v2221, 127
  %v2229 = vpop.permute.xlu0 %2228
  %2230 = vrot.lane.b32.xlu0 %v2222, 127
  %v2231 = vpop.permute.xlu0 %2230
  %2232 = vrot.lane.b32.xlu0 %v2223, 127
  %v2233 = vpop.permute.xlu0 %2232
  %2234 = vrot.lane.b32.xlu0 %v2224, 127
  %v2235 = vpop.permute.xlu0 %2234
  %2236 = vrot.lane.b32.xlu0 %v2225, 127
  %v2237 = vpop.permute.xlu0 %2236
  %v2238 = vsel %vm85, %v1429, %v2227
  %v2239 = vsel %vm85, %v2227, %v2229
  %v2240 = vsel %vm85, %v2229, %v2231
  %v2241 = vsel %vm85, %v2231, %v2233
  %v2242 = vsel %vm85, %v2233, %v2235
  %v2243 = vsel %vm85, %v2235, %v2237
  %2244 = vrot.lane.b32.xlu0 %v2220, 126
  %v2245 = vpop.permute.xlu0 %2244
  %2246 = vrot.lane.b32.xlu0 %v2221, 126
  %v2247 = vpop.permute.xlu0 %2246
  %2248 = vrot.lane.b32.xlu0 %v2222, 126
  %v2249 = vpop.permute.xlu0 %2248
  %2250 = vrot.lane.b32.xlu0 %v2223, 126
  %v2251 = vpop.permute.xlu0 %2250
  %2252 = vrot.lane.b32.xlu0 %v2224, 126
  %v2253 = vpop.permute.xlu0 %2252
  %2254 = vrot.lane.b32.xlu0 %v2225, 126
  %v2255 = vpop.permute.xlu0 %2254
  %v2256 = vsel %vm106, %v93, %v2245
  %v2257 = vsel %vm106, %v2245, %v2247
  %v2258 = vsel %vm106, %v2247, %v2249
  %v2259 = vsel %vm106, %v2249, %v2251
  %v2260 = vsel %vm106, %v2251, %v2253
  %v2261 = vsel %vm106, %v2253, %v2255
  %2262 = vrot.lane.b32.xlu0 %v2220, 110
  %v2263 = vpop.permute.xlu0 %2262
  %2264 = vrot.lane.b32.xlu0 %v2221, 110
  %v2265 = vpop.permute.xlu0 %2264
  %2266 = vrot.lane.b32.xlu0 %v2222, 110
  %v2267 = vpop.permute.xlu0 %2266
  %2268 = vrot.lane.b32.xlu0 %v2223, 110
  %v2269 = vpop.permute.xlu0 %2268
  %2270 = vrot.lane.b32.xlu0 %v2224, 110
  %v2271 = vpop.permute.xlu0 %2270
  %2272 = vrot.lane.b32.xlu0 %v2225, 110
  %v2273 = vpop.permute.xlu0 %2272
  %v2274 = vsel %vm127, %v1467, %v2263
  %v2275 = vsel %vm127, %v2263, %v2265
  %v2276 = vsel %vm127, %v2265, %v2267
  %v2277 = vsel %vm127, %v2267, %v2269
  %v2278 = vsel %vm127, %v2269, %v2271
  %v2279 = vsel %vm127, %v2271, %v2273
  %2280 = vrot.lane.b32.xlu0 %v2220, 109
  %v2281 = vpop.permute.xlu0 %2280
  %2282 = vrot.lane.b32.xlu0 %v2221, 109
  %v2283 = vpop.permute.xlu0 %2282
  %2284 = vrot.lane.b32.xlu0 %v2222, 109
  %v2285 = vpop.permute.xlu0 %2284
  %2286 = vrot.lane.b32.xlu0 %v2223, 109
  %v2287 = vpop.permute.xlu0 %2286
  %2288 = vrot.lane.b32.xlu0 %v2224, 109
  %v2289 = vpop.permute.xlu0 %2288
  %2290 = vrot.lane.b32.xlu0 %v2225, 109
  %v2291 = vpop.permute.xlu0 %2290
  %v2292 = vsel %vm146, %v2281, %v2283
  %v2293 = vsel %vm146, %v2283, %v2285
  %v2294 = vsel %vm146, %v2285, %v2287
  %v2295 = vsel %vm146, %v2287, %v2289
  %v2296 = vsel %vm146, %v2289, %v2291
  %2297 = vrot.lane.b32.xlu0 %v2220, 108
  %v2298 = vpop.permute.xlu0 %2297
  %2299 = vrot.lane.b32.xlu0 %v2221, 108
  %v2300 = vpop.permute.xlu0 %2299
  %2301 = vrot.lane.b32.xlu0 %v2222, 108
  %v2302 = vpop.permute.xlu0 %2301
  %2303 = vrot.lane.b32.xlu0 %v2223, 108
  %v2304 = vpop.permute.xlu0 %2303
  %2305 = vrot.lane.b32.xlu0 %v2224, 108
  %v2306 = vpop.permute.xlu0 %2305
  %2307 = vrot.lane.b32.xlu0 %v2225, 108
  %v2308 = vpop.permute.xlu0 %2307
  %v2309 = vsel %vm166, %v2298, %v2300
  %v2310 = vsel %vm166, %v2300, %v2302
  %v2311 = vsel %vm166, %v2302, %v2304
  %v2312 = vsel %vm166, %v2304, %v2306
  %v2313 = vsel %vm166, %v2306, %v2308
  %v2314 = vsel %vm166, %v2308, %v1516
  %2315 = vrot.lane.b32.xlu0 %v2220, 92
  %v2316 = vpop.permute.xlu0 %2315
  %2317 = vrot.lane.b32.xlu0 %v2221, 92
  %v2318 = vpop.permute.xlu0 %2317
  %2319 = vrot.lane.b32.xlu0 %v2222, 92
  %v2320 = vpop.permute.xlu0 %2319
  %2321 = vrot.lane.b32.xlu0 %v2223, 92
  %v2322 = vpop.permute.xlu0 %2321
  %2323 = vrot.lane.b32.xlu0 %v2224, 92
  %v2324 = vpop.permute.xlu0 %2323
  %2325 = vrot.lane.b32.xlu0 %v2225, 92
  %v2326 = vpop.permute.xlu0 %2325
  %v2327 = vsel %vm187, %v2316, %v2318
  %v2328 = vsel %vm187, %v2318, %v2320
  %v2329 = vsel %vm187, %v2320, %v2322
  %v2330 = vsel %vm187, %v2322, %v2324
  %v2331 = vsel %vm187, %v2324, %v2326
  %v2332 = vsel %vm187, %v2326, %v186
  %2333 = vrot.lane.b32.xlu0 %v2220, 91
  %v2334 = vpop.permute.xlu0 %2333
  %2335 = vrot.lane.b32.xlu0 %v2221, 91
  %v2336 = vpop.permute.xlu0 %2335
  %2337 = vrot.lane.b32.xlu0 %v2222, 91
  %v2338 = vpop.permute.xlu0 %2337
  %2339 = vrot.lane.b32.xlu0 %v2223, 91
  %v2340 = vpop.permute.xlu0 %2339
  %2341 = vrot.lane.b32.xlu0 %v2224, 91
  %v2342 = vpop.permute.xlu0 %2341
  %2343 = vrot.lane.b32.xlu0 %v2225, 91
  %v2344 = vpop.permute.xlu0 %2343
  %v2345 = vsel %vm208, %v2334, %v2336
  %v2346 = vsel %vm208, %v2336, %v2338
  %v2347 = vsel %vm208, %v2338, %v2340
  %v2348 = vsel %vm208, %v2340, %v2342
  %v2349 = vsel %vm208, %v2342, %v2344
  %v2350 = vsel %vm208, %v2344, %v1554
  %2351 = vrot.lane.b32.xlu0 %v2220, 90
  %v2352 = vpop.permute.xlu0 %2351
  %2353 = vrot.lane.b32.xlu0 %v2221, 90
  %v2354 = vpop.permute.xlu0 %2353
  %2355 = vrot.lane.b32.xlu0 %v2222, 90
  %v2356 = vpop.permute.xlu0 %2355
  %2357 = vrot.lane.b32.xlu0 %v2223, 90
  %v2358 = vpop.permute.xlu0 %2357
  %2359 = vrot.lane.b32.xlu0 %v2224, 90
  %v2360 = vpop.permute.xlu0 %2359
  %2361 = vrot.lane.b32.xlu0 %v2225, 90
  %v2362 = vpop.permute.xlu0 %2361
  %v2363 = vsel %vm229, %v2352, %v2354
  %v2364 = vsel %vm229, %v2354, %v2356
  %v2365 = vsel %vm229, %v2356, %v2358
  %v2366 = vsel %vm229, %v2358, %v2360
  %v2367 = vsel %vm229, %v2360, %v2362
  %v2368 = vsel %vm229, %v2362, %v228
  %2370 = vset.pattern.permute.xlu0 0
  %2371 = vperm.xlu0 %2370, %v2192
  %v2372 = vpop.permute.xlu0 %2371
  %2375 = vset.pattern.permute.xlu0 0
  %2376 = vperm.xlu0 %2375, %v2193
  %v2377 = vpop.permute.xlu0 %2376
  %2380 = vset.pattern.permute.xlu0 0
  %2381 = vperm.xlu0 %2380, %v2194
  %v2382 = vpop.permute.xlu0 %2381
  %2385 = vset.pattern.permute.xlu0 0
  %2386 = vperm.xlu0 %2385, %v2195
  %v2387 = vpop.permute.xlu0 %2386
  %v2393 = vunpack.c.l.b16 %v2188
  %v2394 = vunpack.c.h.b16 %v2188
  %v2395 = vunpack.c.l.b16 %v2189
  %v2396 = vunpack.c.h.b16 %v2189
  %v2397 = vunpack.c.l.b16 %v2190
  %v2398 = vunpack.c.h.b16 %v2190
  %v2399 = vunpack.c.l.b16 %v2191
  %v2400 = vunpack.c.h.b16 %v2191
  %v2401 = vpack.c.b16 %v2395, %v2393
  %v2402 = vpack.c.b16 %v2396, %v2394
  %v2403 = vpack.c.b16 %v2399, %v2397
  %v2404 = vpack.c.b16 %v2400, %v2398
  %2407 = vrot.lane.b32.xlu0 %v2220, 19
  %v2408 = vpop.permute.xlu0 %2407
  %2409 = vrot.lane.b32.xlu0 %v2221, 19
  %v2410 = vpop.permute.xlu0 %2409
  %2411 = vrot.lane.b32.xlu0 %v2222, 19
  %v2412 = vpop.permute.xlu0 %2411
  %2413 = vrot.lane.b32.xlu0 %v2223, 19
  %v2414 = vpop.permute.xlu0 %2413
  %2415 = vrot.lane.b32.xlu0 %v2224, 19
  %v2416 = vpop.permute.xlu0 %2415
  %2417 = vrot.lane.b32.xlu0 %v2225, 19
  %v2418 = vpop.permute.xlu0 %2417
  %2419 = vrot.lane.b32.xlu0 %v2238, 19
  %v2420 = vpop.permute.xlu0 %2419
  %2421 = vrot.lane.b32.xlu0 %v2239, 19
  %v2422 = vpop.permute.xlu0 %2421
  %2423 = vrot.lane.b32.xlu0 %v2240, 19
  %v2424 = vpop.permute.xlu0 %2423
  %2425 = vrot.lane.b32.xlu0 %v2241, 19
  %v2426 = vpop.permute.xlu0 %2425
  %2427 = vrot.lane.b32.xlu0 %v2242, 19
  %v2428 = vpop.permute.xlu0 %2427
  %2429 = vrot.lane.b32.xlu0 %v2243, 19
  %v2430 = vpop.permute.xlu0 %2429
  %2431 = vrot.lane.b32.xlu0 %v2237, 19
  %v2432 = vpop.permute.xlu0 %2431
  %2433 = vrot.lane.b32.xlu0 %v2256, 19
  %v2434 = vpop.permute.xlu0 %2433
  %2435 = vrot.lane.b32.xlu0 %v2257, 19
  %v2436 = vpop.permute.xlu0 %2435
  %2437 = vrot.lane.b32.xlu0 %v2258, 19
  %v2438 = vpop.permute.xlu0 %2437
  %2439 = vrot.lane.b32.xlu0 %v2259, 19
  %v2440 = vpop.permute.xlu0 %2439
  %2441 = vrot.lane.b32.xlu0 %v2260, 19
  %v2442 = vpop.permute.xlu0 %2441
  %2443 = vrot.lane.b32.xlu0 %v2261, 19
  %v2444 = vpop.permute.xlu0 %2443
  %2445 = vrot.lane.b32.xlu0 %v2255, 19
  %v2446 = vpop.permute.xlu0 %2445
  %2447 = vrot.lane.b32.xlu0 %v2274, 19
  %v2448 = vpop.permute.xlu0 %2447
  %2449 = vrot.lane.b32.xlu0 %v2275, 19
  %v2450 = vpop.permute.xlu0 %2449
  %2451 = vrot.lane.b32.xlu0 %v2276, 19
  %v2452 = vpop.permute.xlu0 %2451
  %2453 = vrot.lane.b32.xlu0 %v2277, 19
  %v2454 = vpop.permute.xlu0 %2453
  %2455 = vrot.lane.b32.xlu0 %v2278, 19
  %v2456 = vpop.permute.xlu0 %2455
  %2457 = vrot.lane.b32.xlu0 %v2279, 19
  %v2458 = vpop.permute.xlu0 %2457
  %2459 = vrot.lane.b32.xlu0 %v2273, 19
  %v2460 = vpop.permute.xlu0 %2459
  %2461 = vrot.lane.b32.xlu0 %v2281, 19
  %v2462 = vpop.permute.xlu0 %2461
  %2463 = vrot.lane.b32.xlu0 %v2292, 19
  %v2464 = vpop.permute.xlu0 %2463
  %2465 = vrot.lane.b32.xlu0 %v2293, 19
  %v2466 = vpop.permute.xlu0 %2465
  %2467 = vrot.lane.b32.xlu0 %v2294, 19
  %v2468 = vpop.permute.xlu0 %2467
  %2469 = vrot.lane.b32.xlu0 %v2295, 19
  %v2470 = vpop.permute.xlu0 %2469
  %2471 = vrot.lane.b32.xlu0 %v2296, 19
  %v2472 = vpop.permute.xlu0 %2471
  %2473 = vrot.lane.b32.xlu0 %v2291, 19
  %v2474 = vpop.permute.xlu0 %2473
  %2475 = vrot.lane.b32.xlu0 %v2298, 19
  %v2476 = vpop.permute.xlu0 %2475
  %2477 = vrot.lane.b32.xlu0 %v2309, 19
  %v2478 = vpop.permute.xlu0 %2477
  %2479 = vrot.lane.b32.xlu0 %v2310, 19
  %v2480 = vpop.permute.xlu0 %2479
  %2481 = vrot.lane.b32.xlu0 %v2311, 19
  %v2482 = vpop.permute.xlu0 %2481
  %2483 = vrot.lane.b32.xlu0 %v2312, 19
  %v2484 = vpop.permute.xlu0 %2483
  %2485 = vrot.lane.b32.xlu0 %v2313, 19
  %v2486 = vpop.permute.xlu0 %2485
  %2487 = vrot.lane.b32.xlu0 %v2314, 19
  %v2488 = vpop.permute.xlu0 %2487
  %2489 = vrot.lane.b32.xlu0 %v2316, 19
  %v2490 = vpop.permute.xlu0 %2489
  %2491 = vrot.lane.b32.xlu0 %v2327, 19
  %v2492 = vpop.permute.xlu0 %2491
  %2493 = vrot.lane.b32.xlu0 %v2328, 19
  %v2494 = vpop.permute.xlu0 %2493
  %2495 = vrot.lane.b32.xlu0 %v2329, 19
  %v2496 = vpop.permute.xlu0 %2495
  %2497 = vrot.lane.b32.xlu0 %v2330, 19
  %v2498 = vpop.permute.xlu0 %2497
  %2499 = vrot.lane.b32.xlu0 %v2331, 19
  %v2500 = vpop.permute.xlu0 %2499
  %2501 = vrot.lane.b32.xlu0 %v2332, 19
  %v2502 = vpop.permute.xlu0 %2501
  %2503 = vrot.lane.b32.xlu0 %v2334, 19
  %v2504 = vpop.permute.xlu0 %2503
  %2505 = vrot.lane.b32.xlu0 %v2345, 19
  %v2506 = vpop.permute.xlu0 %2505
  %2507 = vrot.lane.b32.xlu0 %v2346, 19
  %v2508 = vpop.permute.xlu0 %2507
  %2509 = vrot.lane.b32.xlu0 %v2347, 19
  %v2510 = vpop.permute.xlu0 %2509
  %2511 = vrot.lane.b32.xlu0 %v2348, 19
  %v2512 = vpop.permute.xlu0 %2511
  %2513 = vrot.lane.b32.xlu0 %v2349, 19
  %v2514 = vpop.permute.xlu0 %2513
  %2515 = vrot.lane.b32.xlu0 %v2350, 19
  %v2516 = vpop.permute.xlu0 %2515
  %2517 = vrot.lane.b32.xlu0 %v2352, 19
  %v2518 = vpop.permute.xlu0 %2517
  %2519 = vrot.lane.b32.xlu0 %v2363, 19
  %v2520 = vpop.permute.xlu0 %2519
  %2521 = vrot.lane.b32.xlu0 %v2364, 19
  %v2522 = vpop.permute.xlu0 %2521
  %2523 = vrot.lane.b32.xlu0 %v2365, 19
  %v2524 = vpop.permute.xlu0 %2523
  %2525 = vrot.lane.b32.xlu0 %v2366, 19
  %v2526 = vpop.permute.xlu0 %2525
  %2527 = vrot.lane.b32.xlu0 %v2367, 19
  %v2528 = vpop.permute.xlu0 %2527
  %2529 = vrot.lane.b32.xlu0 %v2368, 19
  %v2530 = vpop.permute.xlu0 %2529
  %v2531 = vsel %vm424, %v1599, %v2408
  %v2532 = vsel %vm424, %v2408, %v2410
  %v2533 = vsel %vm424, %v2410, %v2412
  %v2534 = vsel %vm424, %v2412, %v2414
  %v2535 = vsel %vm424, %v2414, %v2416
  %v2536 = vsel %vm424, %v2416, %v2418
  %v2537 = vsel %vm424, %v2420, %v2422
  %v2538 = vsel %vm424, %v2422, %v2424
  %v2539 = vsel %vm424, %v2424, %v2426
  %v2540 = vsel %vm424, %v2426, %v2428
  %v2541 = vsel %vm424, %v2428, %v2430
  %v2542 = vsel %vm424, %v2430, %v2432
  %v2543 = vsel %vm424, %v2434, %v2436
  %v2544 = vsel %vm424, %v2436, %v2438
  %v2545 = vsel %vm424, %v2438, %v2440
  %v2546 = vsel %vm424, %v2440, %v2442
  %v2547 = vsel %vm424, %v2442, %v2444
  %v2548 = vsel %vm424, %v2444, %v2446
  %v2549 = vsel %vm424, %v2448, %v2450
  %v2550 = vsel %vm424, %v2450, %v2452
  %v2551 = vsel %vm424, %v2452, %v2454
  %v2552 = vsel %vm424, %v2454, %v2456
  %v2553 = vsel %vm424, %v2456, %v2458
  %v2554 = vsel %vm424, %v2458, %v2460
  %v2555 = vsel %vm424, %v2462, %v2464
  %v2556 = vsel %vm424, %v2464, %v2466
  %v2557 = vsel %vm424, %v2466, %v2468
  %v2558 = vsel %vm424, %v2468, %v2470
  %v2559 = vsel %vm424, %v2470, %v2472
  %v2560 = vsel %vm424, %v2472, %v2474
  %v2561 = vsel %vm424, %v2476, %v2478
  %v2562 = vsel %vm424, %v2478, %v2480
  %v2563 = vsel %vm424, %v2480, %v2482
  %v2564 = vsel %vm424, %v2482, %v2484
  %v2565 = vsel %vm424, %v2484, %v2486
  %v2566 = vsel %vm424, %v2486, %v2488
  %v2567 = vsel %vm424, %v2490, %v2492
  %v2568 = vsel %vm424, %v2492, %v2494
  %v2569 = vsel %vm424, %v2494, %v2496
  %v2570 = vsel %vm424, %v2496, %v2498
  %v2571 = vsel %vm424, %v2498, %v2500
  %v2572 = vsel %vm424, %v2500, %v2502
  %v2573 = vsel %vm424, %v2504, %v2506
  %v2574 = vsel %vm424, %v2506, %v2508
  %v2575 = vsel %vm424, %v2508, %v2510
  %v2576 = vsel %vm424, %v2510, %v2512
  %v2577 = vsel %vm424, %v2512, %v2514
  %v2578 = vsel %vm424, %v2514, %v2516
  %v2579 = vsel %vm424, %v2518, %v2520
  %v2580 = vsel %vm424, %v2520, %v2522
  %v2581 = vsel %vm424, %v2522, %v2524
  %v2582 = vsel %vm424, %v2524, %v2526
  %v2583 = vsel %vm424, %v2526, %v2528
  %v2584 = vsel %vm424, %v2528, %v2530
  %v2640 = vsel %vm1832, %v2402, 0
  %v2643 = vsel %vm1832, %v2404, 0
  %2645 = vmatpush.bf16.msra.mxu0 %v2573
  %2646 = vmatpush.bf16.msra.mxu0 %v2567
  %2647 = vmatpush.bf16.msra.mxu0 %v2561
  %2648 = vmatpush.bf16.msra.mxu0 %v2555
  %2649 = vmatpush.bf16.msra.mxu0 %v2549
  %2650 = vmatpush.bf16.msra.mxu0 %v2543
  %2651 = vmatpush.bf16.msra.mxu0 %v2537
  %2652 = vmatpush.bf16.msra.mxu0 %v2531
  %2653 = vmatmul.bf16.gmra.mxu0 %v2401
  %v2654 = vpop.f32.mrf.mxu0
  %v2655 = vadd.f32 %v2372, %v2654
  %v2656 = vpop.f32.mrf.mxu0
  %v2657 = vadd.f32 %v2377, %v2656
  %2658 = vmatmul.bf16.gmra.mxu0 %v2403
  %v2659 = vpop.f32.mrf.mxu0
  %v2660 = vadd.f32 %v2382, %v2659
  %v2661 = vpop.f32.mrf.mxu0
  %v2662 = vadd.f32 %v2387, %v2661
  %2663 = vdwg.mxu0
  %2664 = vmatpush.bf16.msra.mxu0 0
  %2665 = vmatpush.bf16.msra.mxu0 0
  %2666 = vmatpush.bf16.msra.mxu0 0
  %2667 = vmatpush.bf16.msra.mxu0 0
  %2668 = vmatpush.bf16.msra.mxu0 0
  %2669 = vmatpush.bf16.msra.mxu0 0
  %2670 = vmatpush.bf16.msra.mxu0 0
  %2671 = vmatpush.bf16.msra.mxu0 %v2579
  %2672 = vmatmul.bf16.gmra.mxu0 %v2640
  %v2673 = vpop.f32.mrf.mxu0
  %v2674 = vadd.f32 %v2655, %v2673
  %v2675 = vpop.f32.mrf.mxu0
  %v2676 = vadd.f32 %v2657, %v2675
  %2677 = vmatmul.bf16.gmra.mxu0 %v2643
  %v2678 = vpop.f32.mrf.mxu0
  %v2679 = vadd.f32 %v2660, %v2678
  %v2680 = vpop.f32.mrf.mxu0
  %v2681 = vadd.f32 %v2662, %v2680
  %2682 = vdwg.mxu0
  %2683 = vmatpush.bf16.msra.mxu0 %v2574
  %2684 = vmatpush.bf16.msra.mxu0 %v2568
  %2685 = vmatpush.bf16.msra.mxu0 %v2562
  %2686 = vmatpush.bf16.msra.mxu0 %v2556
  %2687 = vmatpush.bf16.msra.mxu0 %v2550
  %2688 = vmatpush.bf16.msra.mxu0 %v2544
  %2689 = vmatpush.bf16.msra.mxu0 %v2538
  %2690 = vmatpush.bf16.msra.mxu0 %v2532
  %2691 = vmatmul.bf16.gmra.mxu0 %v2401
  %v2692 = vpop.f32.mrf.mxu0
  %v2693 = vadd.f32 %v2372, %v2692
  %v2694 = vpop.f32.mrf.mxu0
  %v2695 = vadd.f32 %v2377, %v2694
  %2696 = vmatmul.bf16.gmra.mxu0 %v2403
  %v2697 = vpop.f32.mrf.mxu0
  %v2698 = vadd.f32 %v2382, %v2697
  %v2699 = vpop.f32.mrf.mxu0
  %v2700 = vadd.f32 %v2387, %v2699
  %2701 = vdwg.mxu0
  %2702 = vmatpush.bf16.msra.mxu0 0
  %2703 = vmatpush.bf16.msra.mxu0 0
  %2704 = vmatpush.bf16.msra.mxu0 0
  %2705 = vmatpush.bf16.msra.mxu0 0
  %2706 = vmatpush.bf16.msra.mxu0 0
  %2707 = vmatpush.bf16.msra.mxu0 0
  %2708 = vmatpush.bf16.msra.mxu0 0
  %2709 = vmatpush.bf16.msra.mxu0 %v2580
  %2710 = vmatmul.bf16.gmra.mxu0 %v2640
  %v2711 = vpop.f32.mrf.mxu0
  %v2712 = vadd.f32 %v2693, %v2711
  %v2713 = vpop.f32.mrf.mxu0
  %v2714 = vadd.f32 %v2695, %v2713
  %2715 = vmatmul.bf16.gmra.mxu0 %v2643
  %v2716 = vpop.f32.mrf.mxu0
  %v2717 = vadd.f32 %v2698, %v2716
  %v2718 = vpop.f32.mrf.mxu0
  %v2719 = vadd.f32 %v2700, %v2718
  %2720 = vdwg.mxu0
  %2721 = vmatpush.bf16.msra.mxu0 %v2575
  %2722 = vmatpush.bf16.msra.mxu0 %v2569
  %2723 = vmatpush.bf16.msra.mxu0 %v2563
  %2724 = vmatpush.bf16.msra.mxu0 %v2557
  %2725 = vmatpush.bf16.msra.mxu0 %v2551
  %2726 = vmatpush.bf16.msra.mxu0 %v2545
  %2727 = vmatpush.bf16.msra.mxu0 %v2539
  %2728 = vmatpush.bf16.msra.mxu0 %v2533
  %2729 = vmatmul.bf16.gmra.mxu0 %v2401
  %v2730 = vpop.f32.mrf.mxu0
  %v2731 = vadd.f32 %v2372, %v2730
  %v2732 = vpop.f32.mrf.mxu0
  %v2733 = vadd.f32 %v2377, %v2732
  %2734 = vmatmul.bf16.gmra.mxu0 %v2403
  %v2735 = vpop.f32.mrf.mxu0
  %v2736 = vadd.f32 %v2382, %v2735
  %v2737 = vpop.f32.mrf.mxu0
  %v2738 = vadd.f32 %v2387, %v2737
  %2739 = vdwg.mxu0
  %2740 = vmatpush.bf16.msra.mxu0 0
  %2741 = vmatpush.bf16.msra.mxu0 0
  %2742 = vmatpush.bf16.msra.mxu0 0
  %2743 = vmatpush.bf16.msra.mxu0 0
  %2744 = vmatpush.bf16.msra.mxu0 0
  %2745 = vmatpush.bf16.msra.mxu0 0
  %2746 = vmatpush.bf16.msra.mxu0 0
  %2747 = vmatpush.bf16.msra.mxu0 %v2581
  %2748 = vmatmul.bf16.gmra.mxu0 %v2640
  %v2749 = vpop.f32.mrf.mxu0
  %v2750 = vadd.f32 %v2731, %v2749
  %v2751 = vpop.f32.mrf.mxu0
  %v2752 = vadd.f32 %v2733, %v2751
  %2753 = vmatmul.bf16.gmra.mxu0 %v2643
  %v2754 = vpop.f32.mrf.mxu0
  %v2755 = vadd.f32 %v2736, %v2754
  %v2756 = vpop.f32.mrf.mxu0
  %v2757 = vadd.f32 %v2738, %v2756
  %2758 = vdwg.mxu0
  %2759 = vmatpush.bf16.msra.mxu0 %v2576
  %2760 = vmatpush.bf16.msra.mxu0 %v2570
  %2761 = vmatpush.bf16.msra.mxu0 %v2564
  %2762 = vmatpush.bf16.msra.mxu0 %v2558
  %2763 = vmatpush.bf16.msra.mxu0 %v2552
  %2764 = vmatpush.bf16.msra.mxu0 %v2546
  %2765 = vmatpush.bf16.msra.mxu0 %v2540
  %2766 = vmatpush.bf16.msra.mxu0 %v2534
  %2767 = vmatmul.bf16.gmra.mxu0 %v2401
  %v2768 = vpop.f32.mrf.mxu0
  %v2769 = vadd.f32 %v2372, %v2768
  %v2770 = vpop.f32.mrf.mxu0
  %v2771 = vadd.f32 %v2377, %v2770
  %2772 = vmatmul.bf16.gmra.mxu0 %v2403
  %v2773 = vpop.f32.mrf.mxu0
  %v2774 = vadd.f32 %v2382, %v2773
  %v2775 = vpop.f32.mrf.mxu0
  %v2776 = vadd.f32 %v2387, %v2775
  %2777 = vdwg.mxu0
  %2778 = vmatpush.bf16.msra.mxu0 0
  %2779 = vmatpush.bf16.msra.mxu0 0
  %2780 = vmatpush.bf16.msra.mxu0 0
  %2781 = vmatpush.bf16.msra.mxu0 0
  %2782 = vmatpush.bf16.msra.mxu0 0
  %2783 = vmatpush.bf16.msra.mxu0 0
  %2784 = vmatpush.bf16.msra.mxu0 0
  %2785 = vmatpush.bf16.msra.mxu0 %v2582
  %2786 = vmatmul.bf16.gmra.mxu0 %v2640
  %v2787 = vpop.f32.mrf.mxu0
  %v2788 = vadd.f32 %v2769, %v2787
  %v2789 = vpop.f32.mrf.mxu0
  %v2790 = vadd.f32 %v2771, %v2789
  %2791 = vmatmul.bf16.gmra.mxu0 %v2643
  %v2792 = vpop.f32.mrf.mxu0
  %v2793 = vadd.f32 %v2774, %v2792
  %v2794 = vpop.f32.mrf.mxu0
  %v2795 = vadd.f32 %v2776, %v2794
  %2796 = vdwg.mxu0
  %2797 = vmatpush.bf16.msra.mxu0 %v2577
  %2798 = vmatpush.bf16.msra.mxu0 %v2571
  %2799 = vmatpush.bf16.msra.mxu0 %v2565
  %2800 = vmatpush.bf16.msra.mxu0 %v2559
  %2801 = vmatpush.bf16.msra.mxu0 %v2553
  %2802 = vmatpush.bf16.msra.mxu0 %v2547
  %2803 = vmatpush.bf16.msra.mxu0 %v2541
  %2804 = vmatpush.bf16.msra.mxu0 %v2535
  %2805 = vmatmul.bf16.gmra.mxu0 %v2401
  %v2806 = vpop.f32.mrf.mxu0
  %v2807 = vadd.f32 %v2372, %v2806
  %v2808 = vpop.f32.mrf.mxu0
  %v2809 = vadd.f32 %v2377, %v2808
  %2810 = vmatmul.bf16.gmra.mxu0 %v2403
  %v2811 = vpop.f32.mrf.mxu0
  %v2812 = vadd.f32 %v2382, %v2811
  %v2813 = vpop.f32.mrf.mxu0
  %v2814 = vadd.f32 %v2387, %v2813
  %2815 = vdwg.mxu0
  %2816 = vmatpush.bf16.msra.mxu0 0
  %2817 = vmatpush.bf16.msra.mxu0 0
  %2818 = vmatpush.bf16.msra.mxu0 0
  %2819 = vmatpush.bf16.msra.mxu0 0
  %2820 = vmatpush.bf16.msra.mxu0 0
  %2821 = vmatpush.bf16.msra.mxu0 0
  %2822 = vmatpush.bf16.msra.mxu0 0
  %2823 = vmatpush.bf16.msra.mxu0 %v2583
  %2824 = vmatmul.bf16.gmra.mxu0 %v2640
  %v2825 = vpop.f32.mrf.mxu0
  %v2826 = vadd.f32 %v2807, %v2825
  %v2827 = vpop.f32.mrf.mxu0
  %v2828 = vadd.f32 %v2809, %v2827
  %2829 = vmatmul.bf16.gmra.mxu0 %v2643
  %v2830 = vpop.f32.mrf.mxu0
  %v2831 = vadd.f32 %v2812, %v2830
  %v2832 = vpop.f32.mrf.mxu0
  %v2833 = vadd.f32 %v2814, %v2832
  %2834 = vdwg.mxu0
  %2835 = vmatpush.bf16.msra.mxu0 %v2578
  %2836 = vmatpush.bf16.msra.mxu0 %v2572
  %2837 = vmatpush.bf16.msra.mxu0 %v2566
  %2838 = vmatpush.bf16.msra.mxu0 %v2560
  %2839 = vmatpush.bf16.msra.mxu0 %v2554
  %2840 = vmatpush.bf16.msra.mxu0 %v2548
  %2841 = vmatpush.bf16.msra.mxu0 %v2542
  %2842 = vmatpush.bf16.msra.mxu0 %v2536
  %2843 = vmatmul.bf16.gmra.mxu0 %v2401
  %v2844 = vpop.f32.mrf.mxu0
  %v2845 = vadd.f32 %v2372, %v2844
  %v2846 = vpop.f32.mrf.mxu0
  %v2847 = vadd.f32 %v2377, %v2846
  %2848 = vmatmul.bf16.gmra.mxu0 %v2403
  %v2849 = vpop.f32.mrf.mxu0
  %v2850 = vadd.f32 %v2382, %v2849
  %v2851 = vpop.f32.mrf.mxu0
  %v2852 = vadd.f32 %v2387, %v2851
  %2853 = vdwg.mxu0
  %2854 = vmatpush.bf16.msra.mxu0 0
  %2855 = vmatpush.bf16.msra.mxu0 0
  %2856 = vmatpush.bf16.msra.mxu0 0
  %2857 = vmatpush.bf16.msra.mxu0 0
  %2858 = vmatpush.bf16.msra.mxu0 0
  %2859 = vmatpush.bf16.msra.mxu0 0
  %2860 = vmatpush.bf16.msra.mxu0 0
  %2861 = vmatpush.bf16.msra.mxu0 %v2584
  %2862 = vmatmul.bf16.gmra.mxu0 %v2640
  %v2863 = vpop.f32.mrf.mxu0
  %v2864 = vadd.f32 %v2845, %v2863
  %v2865 = vpop.f32.mrf.mxu0
  %v2866 = vadd.f32 %v2847, %v2865
  %2867 = vmatmul.bf16.gmra.mxu0 %v2643
  %v2868 = vpop.f32.mrf.mxu0
  %v2869 = vadd.f32 %v2850, %v2868
  %v2870 = vpop.f32.mrf.mxu0
  %v2871 = vadd.f32 %v2852, %v2870
  %2872 = vdwg.mxu0
  %v2873 = vmax.f32 %v2674, 0.0
  %v2874 = vmax.f32 %v2712, 0.0
  %v2875 = vmax.f32 %v2750, 0.0
  %v2876 = vmax.f32 %v2788, 0.0
  %v2877 = vmax.f32 %v2826, 0.0
  %v2878 = vmax.f32 %v2864, 0.0
  %v2879 = vmax.f32 %v2676, 0.0
  %v2880 = vmax.f32 %v2714, 0.0
  %v2881 = vmax.f32 %v2752, 0.0
  %v2882 = vmax.f32 %v2790, 0.0
  %v2883 = vmax.f32 %v2828, 0.0
  %v2884 = vmax.f32 %v2866, 0.0
  %v2885 = vmax.f32 %v2679, 0.0
  %v2886 = vmax.f32 %v2717, 0.0
  %v2887 = vmax.f32 %v2755, 0.0
  %v2888 = vmax.f32 %v2793, 0.0
  %v2889 = vmax.f32 %v2831, 0.0
  %v2890 = vmax.f32 %v2869, 0.0
  %v2891 = vmax.f32 %v2681, 0.0
  %v2892 = vmax.f32 %v2719, 0.0
  %v2893 = vmax.f32 %v2757, 0.0
  %v2894 = vmax.f32 %v2795, 0.0
  %v2895 = vmax.f32 %v2833, 0.0
  %v2896 = vmax.f32 %v2871, 0.0
  %v2897 = vmul.f32 %v2873, %v586
  %v2898 = vmul.f32 %v2874, %v587
  %v2899 = vmul.f32 %v2875, %v588
  %v2900 = vmul.f32 %v2876, %v589
  %v2901 = vmul.f32 %v2877, %v590
  %v2902 = vmul.f32 %v2878, %v591
  %v2903 = vmul.f32 %v2879, %v586
  %v2904 = vmul.f32 %v2880, %v587
  %v2905 = vmul.f32 %v2881, %v588
  %v2906 = vmul.f32 %v2882, %v589
  %v2907 = vmul.f32 %v2883, %v590
  %v2908 = vmul.f32 %v2884, %v591
  %v2909 = vmul.f32 %v2885, %v586
  %v2910 = vmul.f32 %v2886, %v587
  %v2911 = vmul.f32 %v2887, %v588
  %v2912 = vmul.f32 %v2888, %v589
  %v2913 = vmul.f32 %v2889, %v590
  %v2914 = vmul.f32 %v2890, %v591
  %v2915 = vmul.f32 %v2891, %v586
  %v2916 = vmul.f32 %v2892, %v587
  %v2917 = vmul.f32 %v2893, %v588
  %v2918 = vmul.f32 %v2894, %v589
  %v2919 = vmul.f32 %v2895, %v590
  %v2920 = vmul.f32 %v2896, %v591
  %v2921 = vadd.f32 %v2897, %v2898
  %v2922 = vadd.f32 %v2921, %v2899
  %v2923 = vadd.f32 %v2922, %v2900
  %v2924 = vadd.f32 %v2923, %v2901
  %v2925 = vadd.f32 %v2924, %v2902
  %2926 = vadd.xlane.f32.xlu0 %v2925
  %v2927 = vpop.xlane.xlu0 %2926
  %v2928 = vadd.f32 %v2903, %v2904
  %v2929 = vadd.f32 %v2928, %v2905
  %v2930 = vadd.f32 %v2929, %v2906
  %v2931 = vadd.f32 %v2930, %v2907
  %v2932 = vadd.f32 %v2931, %v2908
  %2933 = vadd.xlane.f32.xlu0 %v2932
  %v2934 = vpop.xlane.xlu0 %2933
  %v2935 = vadd.f32 %v2909, %v2910
  %v2936 = vadd.f32 %v2935, %v2911
  %v2937 = vadd.f32 %v2936, %v2912
  %v2938 = vadd.f32 %v2937, %v2913
  %v2939 = vadd.f32 %v2938, %v2914
  %2940 = vadd.xlane.f32.xlu0 %v2939
  %v2941 = vpop.xlane.xlu0 %2940
  %v2942 = vadd.f32 %v2915, %v2916
  %v2943 = vadd.f32 %v2942, %v2917
  %v2944 = vadd.f32 %v2943, %v2918
  %v2945 = vadd.f32 %v2944, %v2919
  %v2946 = vadd.f32 %v2945, %v2920
  %2947 = vadd.xlane.f32.xlu0 %v2946
  %v2948 = vpop.xlane.xlu0 %2947
  %v2949 = vmul.f32 %v2927, 0.001953125
  %v2950 = vmul.f32 %v2934, 0.001953125
  %v2951 = vmul.f32 %v2941, 0.001953125
  %v2952 = vmul.f32 %v2948, 0.001953125
  %v2953 = vsub.f32 %v2873, %v2949
  %v2954 = vsub.f32 %v2874, %v2949
  %v2955 = vsub.f32 %v2875, %v2949
  %v2956 = vsub.f32 %v2876, %v2949
  %v2957 = vsub.f32 %v2877, %v2949
  %v2958 = vsub.f32 %v2878, %v2949
  %v2959 = vsub.f32 %v2879, %v2950
  %v2960 = vsub.f32 %v2880, %v2950
  %v2961 = vsub.f32 %v2881, %v2950
  %v2962 = vsub.f32 %v2882, %v2950
  %v2963 = vsub.f32 %v2883, %v2950
  %v2964 = vsub.f32 %v2884, %v2950
  %v2965 = vsub.f32 %v2885, %v2951
  %v2966 = vsub.f32 %v2886, %v2951
  %v2967 = vsub.f32 %v2887, %v2951
  %v2968 = vsub.f32 %v2888, %v2951
  %v2969 = vsub.f32 %v2889, %v2951
  %v2970 = vsub.f32 %v2890, %v2951
  %v2971 = vsub.f32 %v2891, %v2952
  %v2972 = vsub.f32 %v2892, %v2952
  %v2973 = vsub.f32 %v2893, %v2952
  %v2974 = vsub.f32 %v2894, %v2952
  %v2975 = vsub.f32 %v2895, %v2952
  %v2976 = vsub.f32 %v2896, %v2952
  %v2977 = vmul.f32 %v2953, %v586
  %v2978 = vmul.f32 %v2954, %v587
  %v2979 = vmul.f32 %v2955, %v588
  %v2980 = vmul.f32 %v2956, %v589
  %v2981 = vmul.f32 %v2957, %v590
  %v2982 = vmul.f32 %v2958, %v591
  %v2983 = vmul.f32 %v2959, %v586
  %v2984 = vmul.f32 %v2960, %v587
  %v2985 = vmul.f32 %v2961, %v588
  %v2986 = vmul.f32 %v2962, %v589
  %v2987 = vmul.f32 %v2963, %v590
  %v2988 = vmul.f32 %v2964, %v591
  %v2989 = vmul.f32 %v2965, %v586
  %v2990 = vmul.f32 %v2966, %v587
  %v2991 = vmul.f32 %v2967, %v588
  %v2992 = vmul.f32 %v2968, %v589
  %v2993 = vmul.f32 %v2969, %v590
  %v2994 = vmul.f32 %v2970, %v591
  %v2995 = vmul.f32 %v2971, %v586
  %v2996 = vmul.f32 %v2972, %v587
  %v2997 = vmul.f32 %v2973, %v588
  %v2998 = vmul.f32 %v2974, %v589
  %v2999 = vmul.f32 %v2975, %v590
  %v3000 = vmul.f32 %v2976, %v591
  %v3001 = vmul.f32 %v2977, %v2977
  %v3002 = vmul.f32 %v2978, %v2978
  %v3003 = vmul.f32 %v2979, %v2979
  %v3004 = vmul.f32 %v2980, %v2980
  %v3005 = vmul.f32 %v2981, %v2981
  %v3006 = vmul.f32 %v2982, %v2982
  %v3007 = vmul.f32 %v2983, %v2983
  %v3008 = vmul.f32 %v2984, %v2984
  %v3009 = vmul.f32 %v2985, %v2985
  %v3010 = vmul.f32 %v2986, %v2986
  %v3011 = vmul.f32 %v2987, %v2987
  %v3012 = vmul.f32 %v2988, %v2988
  %v3013 = vmul.f32 %v2989, %v2989
  %v3014 = vmul.f32 %v2990, %v2990
  %v3015 = vmul.f32 %v2991, %v2991
  %v3016 = vmul.f32 %v2992, %v2992
  %v3017 = vmul.f32 %v2993, %v2993
  %v3018 = vmul.f32 %v2994, %v2994
  %v3019 = vmul.f32 %v2995, %v2995
  %v3020 = vmul.f32 %v2996, %v2996
  %v3021 = vmul.f32 %v2997, %v2997
  %v3022 = vmul.f32 %v2998, %v2998
  %v3023 = vmul.f32 %v2999, %v2999
  %v3024 = vmul.f32 %v3000, %v3000
  %v3025 = vadd.f32 %v3001, %v3002
  %v3026 = vadd.f32 %v3025, %v3003
  %v3027 = vadd.f32 %v3026, %v3004
  %v3028 = vadd.f32 %v3027, %v3005
  %v3029 = vadd.f32 %v3028, %v3006
  %3030 = vadd.xlane.f32.xlu0 %v3029
  %v3031 = vpop.xlane.xlu0 %3030
  %v3032 = vadd.f32 %v3007, %v3008
  %v3033 = vadd.f32 %v3032, %v3009
  %v3034 = vadd.f32 %v3033, %v3010
  %v3035 = vadd.f32 %v3034, %v3011
  %v3036 = vadd.f32 %v3035, %v3012
  %3037 = vadd.xlane.f32.xlu0 %v3036
  %v3038 = vpop.xlane.xlu0 %3037
  %v3039 = vadd.f32 %v3013, %v3014
  %v3040 = vadd.f32 %v3039, %v3015
  %v3041 = vadd.f32 %v3040, %v3016
  %v3042 = vadd.f32 %v3041, %v3017
  %v3043 = vadd.f32 %v3042, %v3018
  %3044 = vadd.xlane.f32.xlu0 %v3043
  %v3045 = vpop.xlane.xlu0 %3044
  %v3046 = vadd.f32 %v3019, %v3020
  %v3047 = vadd.f32 %v3046, %v3021
  %v3048 = vadd.f32 %v3047, %v3022
  %v3049 = vadd.f32 %v3048, %v3023
  %v3050 = vadd.f32 %v3049, %v3024
  %3051 = vadd.xlane.f32.xlu0 %v3050
  %v3052 = vpop.xlane.xlu0 %3051
  %v3053 = vmul.f32 %v3031, 0.001953125
  %v3054 = vmul.f32 %v3038, 0.001953125
  %v3055 = vmul.f32 %v3045, 0.001953125
  %v3056 = vmul.f32 %v3052, 0.001953125
  %v3057 = vadd.f32 %v3053, 1e-05
  %v3058 = vadd.f32 %v3054, 1e-05
  %v3059 = vadd.f32 %v3055, 1e-05
  %v3060 = vadd.f32 %v3056, 1e-05
  %v3061 = vrsqrt.pop %v3057
  %v3062 = vmul.f32 %v3061, %v3057
  %v3063 = vmul.f32 %v3062, %v3061
  %v3064 = vmul.f32 0.5, %v3063
  %v3065 = vsub.f32 1.5, %v3064
  %v3066 = vmul.f32 %v3061, %v3065
  %vm3067 = vweird.f32 %v3057
  %vm3068 = vweird.f32 %v3061
  %vm3069 = vmor %vm3067, %vm3068
  %v3070 = vsel %vm3069, %v3061, %v3066
  %v3071 = vrsqrt.pop %v3058
  %v3072 = vmul.f32 %v3071, %v3058
  %v3073 = vmul.f32 %v3072, %v3071
  %v3074 = vmul.f32 0.5, %v3073
  %v3075 = vsub.f32 1.5, %v3074
  %v3076 = vmul.f32 %v3071, %v3075
  %vm3077 = vweird.f32 %v3058
  %vm3078 = vweird.f32 %v3071
  %vm3079 = vmor %vm3077, %vm3078
  %v3080 = vsel %vm3079, %v3071, %v3076
  %v3081 = vrsqrt.pop %v3059
  %v3082 = vmul.f32 %v3081, %v3059
  %v3083 = vmul.f32 %v3082, %v3081
  %v3084 = vmul.f32 0.5, %v3083
  %v3085 = vsub.f32 1.5, %v3084
  %v3086 = vmul.f32 %v3081, %v3085
  %vm3087 = vweird.f32 %v3059
  %vm3088 = vweird.f32 %v3081
  %vm3089 = vmor %vm3087, %vm3088
  %v3090 = vsel %vm3089, %v3081, %v3086
  %v3091 = vrsqrt.pop %v3060
  %v3092 = vmul.f32 %v3091, %v3060
  %v3093 = vmul.f32 %v3092, %v3091
  %v3094 = vmul.f32 0.5, %v3093
  %v3095 = vsub.f32 1.5, %v3094
  %v3096 = vmul.f32 %v3091, %v3095
  %vm3097 = vweird.f32 %v3060
  %vm3098 = vweird.f32 %v3091
  %vm3099 = vmor %vm3097, %vm3098
  %v3100 = vsel %vm3099, %v3091, %v3096
  %v3101 = vmul.f32 %v2192, %v3070
  %v3102 = vmul.f32 %v2193, %v3080
  %v3103 = vmul.f32 %v2194, %v3090
  %v3104 = vmul.f32 %v2195, %v3100
  %v3105 = vmul.f32 %v2949, %v3101
  %v3106 = vmul.f32 %v2950, %v3102
  %v3107 = vmul.f32 %v2951, %v3103
  %v3108 = vmul.f32 %v2952, %v3104
  %3113 = vrot.lane.b32.xlu0 %v3105, 1
  %v3114 = vpop.permute.xlu0 %3113
  %3115 = vrot.lane.b32.xlu0 %v3106, 1
  %v3116 = vpop.permute.xlu0 %3115
  %3117 = vrot.lane.b32.xlu0 %v3107, 1
  %v3118 = vpop.permute.xlu0 %3117
  %3119 = vrot.lane.b32.xlu0 %v3108, 1
  %v3120 = vpop.permute.xlu0 %3119
  %v3125 = vsub.f32 %v2192, %v3114
  %v3126 = vsub.f32 %v2193, %v3116
  %v3127 = vsub.f32 %v2194, %v3118
  %v3128 = vsub.f32 %v2195, %v3120
  %3130 = vset.pattern.permute.xlu0 1
  %3131 = vperm.xlu0 %3130, %v3101
  %v3132 = vpop.permute.xlu0 %3131
  %3135 = vset.pattern.permute.xlu0 1
  %3136 = vperm.xlu0 %3135, %v3102
  %v3137 = vpop.permute.xlu0 %3136
  %3140 = vset.pattern.permute.xlu0 1
  %3141 = vperm.xlu0 %3140, %v3103
  %v3142 = vpop.permute.xlu0 %3141
  %3145 = vset.pattern.permute.xlu0 1
  %3146 = vperm.xlu0 %3145, %v3104
  %v3147 = vpop.permute.xlu0 %3146
  %v3149 = vmul.f32 %v2873, %v3132
  %v3150 = vmul.f32 %v2874, %v3132
  %v3151 = vmul.f32 %v2875, %v3132
  %v3152 = vmul.f32 %v2876, %v3132
  %v3153 = vmul.f32 %v2877, %v3132
  %v3154 = vmul.f32 %v2878, %v3132
  %v3155 = vmul.f32 %v2879, %v3137
  %v3156 = vmul.f32 %v2880, %v3137
  %v3157 = vmul.f32 %v2881, %v3137
  %v3158 = vmul.f32 %v2882, %v3137
  %v3159 = vmul.f32 %v2883, %v3137
  %v3160 = vmul.f32 %v2884, %v3137
  %v3161 = vmul.f32 %v2885, %v3142
  %v3162 = vmul.f32 %v2886, %v3142
  %v3163 = vmul.f32 %v2887, %v3142
  %v3164 = vmul.f32 %v2888, %v3142
  %v3165 = vmul.f32 %v2889, %v3142
  %v3166 = vmul.f32 %v2890, %v3142
  %v3167 = vmul.f32 %v2891, %v3147
  %v3168 = vmul.f32 %v2892, %v3147
  %v3169 = vmul.f32 %v2893, %v3147
  %v3170 = vmul.f32 %v2894, %v3147
  %v3171 = vmul.f32 %v2895, %v3147
  %v3172 = vmul.f32 %v2896, %v3147
  %3174 = vset.pattern.permute.xlu0 2
  %3175 = vperm.xlu0 %3174, %v3125
  %v3176 = vpop.permute.xlu0 %3175
  %3179 = vset.pattern.permute.xlu0 2
  %3180 = vperm.xlu0 %3179, %v3126
  %v3181 = vpop.permute.xlu0 %3180
  %3184 = vset.pattern.permute.xlu0 2
  %3185 = vperm.xlu0 %3184, %v3127
  %v3186 = vpop.permute.xlu0 %3185
  %3189 = vset.pattern.permute.xlu0 2
  %3190 = vperm.xlu0 %3189, %v3128
  %v3191 = vpop.permute.xlu0 %3190
  %v3193 = vadd.f32 %v3149, %v3176
  %v3194 = vadd.f32 %v3150, %v3176
  %v3195 = vadd.f32 %v3151, %v3176
  %v3196 = vadd.f32 %v3152, %v3176
  %v3197 = vadd.f32 %v3153, %v3176
  %v3198 = vadd.f32 %v3154, %v3176
  %v3199 = vadd.f32 %v3155, %v3181
  %v3200 = vadd.f32 %v3156, %v3181
  %v3201 = vadd.f32 %v3157, %v3181
  %v3202 = vadd.f32 %v3158, %v3181
  %v3203 = vadd.f32 %v3159, %v3181
  %v3204 = vadd.f32 %v3160, %v3181
  %v3205 = vadd.f32 %v3161, %v3186
  %v3206 = vadd.f32 %v3162, %v3186
  %v3207 = vadd.f32 %v3163, %v3186
  %v3208 = vadd.f32 %v3164, %v3186
  %v3209 = vadd.f32 %v3165, %v3186
  %v3210 = vadd.f32 %v3166, %v3186
  %v3211 = vadd.f32 %v3167, %v3191
  %v3212 = vadd.f32 %v3168, %v3191
  %v3213 = vadd.f32 %v3169, %v3191
  %v3214 = vadd.f32 %v3170, %v3191
  %v3215 = vadd.f32 %v3171, %v3191
  %v3216 = vadd.f32 %v3172, %v3191
  %v3217 = vmul.f32 %v3193, %v586
  %v3218 = vmul.f32 %v3194, %v587
  %v3219 = vmul.f32 %v3195, %v588
  %v3220 = vmul.f32 %v3196, %v589
  %v3221 = vmul.f32 %v3197, %v590
  %v3222 = vmul.f32 %v3198, %v591
  %v3223 = vmul.f32 %v3199, %v586
  %v3224 = vmul.f32 %v3200, %v587
  %v3225 = vmul.f32 %v3201, %v588
  %v3226 = vmul.f32 %v3202, %v589
  %v3227 = vmul.f32 %v3203, %v590
  %v3228 = vmul.f32 %v3204, %v591
  %v3229 = vmul.f32 %v3205, %v586
  %v3230 = vmul.f32 %v3206, %v587
  %v3231 = vmul.f32 %v3207, %v588
  %v3232 = vmul.f32 %v3208, %v589
  %v3233 = vmul.f32 %v3209, %v590
  %v3234 = vmul.f32 %v3210, %v591
  %v3235 = vmul.f32 %v3211, %v586
  %v3236 = vmul.f32 %v3212, %v587
  %v3237 = vmul.f32 %v3213, %v588
  %v3238 = vmul.f32 %v3214, %v589
  %v3239 = vmul.f32 %v3215, %v590
  %v3240 = vmul.f32 %v3216, %v591
  %3241 = vst [vmem:[%s10] sm:$0xff] %v3217
  %3242 = vst [vmem:[%s10 + $0x8] sm:$0xff] %v3218
  %3243 = vst [vmem:[%s10 + $0x10] sm:$0xff] %v3219
  %3244 = vst [vmem:[%s10 + $0x18] sm:$0xff] %v3220
  %3245 = vst [vmem:[%s10 + $0x20] sm:$0xff] %v3221
  %3246 = vst [vmem:[%s10 + $0x28] sm:$0xff] %v3222
  %3247 = vst [vmem:[%s10 + $0x30] sm:$0xff] %v3223
  %3248 = vst [vmem:[%s10 + $0x38] sm:$0xff] %v3224
  %3249 = vst [vmem:[%s10 + $0x40] sm:$0xff] %v3225
  %3250 = vst [vmem:[%s10 + $0x48] sm:$0xff] %v3226
  %3251 = vst [vmem:[%s10 + $0x50] sm:$0xff] %v3227
  %3252 = vst [vmem:[%s10 + $0x58] sm:$0xff] %v3228
  %3253 = vst [vmem:[%s10 + $0x60] sm:$0xff] %v3229
  %3254 = vst [vmem:[%s10 + $0x68] sm:$0xff] %v3230
  %3255 = vst [vmem:[%s10 + $0x70] sm:$0xff] %v3231
  %3256 = vst [vmem:[%s10 + $0x78] sm:$0xff] %v3232
  %3257 = vst [vmem:[%s10 + $0x80] sm:$0xff] %v3233
  %3258 = vst [vmem:[%s10 + $0x88] sm:$0xff] %v3234
  %3259 = vst [vmem:[%s10 + $0x90] sm:$0xff] %v3235
  %3260 = vst [vmem:[%s10 + $0x98] sm:$0xff] %v3236
  %3261 = vst [vmem:[%s10 + $0xa0] sm:$0xff] %v3237
  %3262 = vst [vmem:[%s10 + $0xa8] sm:$0xff] %v3238
  %3263 = vst [vmem:[%s10 + $0xb0] sm:$0xff] %v3239
  %3264 = vst [vmem:[%s10 + $0xb8] sm:$0xff] %v3240
  // Predicated region
  $region42: #{autoencoder_ex_forward.2} parent=0 // pred_check
    _
  $region43: #{autoencoder_ex_forward.2} parent=0 // pred_check_branch
    %3266 = sbr.rel (0) target = $region45
  $region44: #{autoencoder_ex_forward.2} parent=0 // pred_region
    _
  $region45: #{autoencoder_ex_forward.2} parent=0 // pred_fallthru
    _
  // Predicated region
  $region46: #{autoencoder_ex_forward.2} parent=0 // pred_check
    _
  $region47: #{autoencoder_ex_forward.2} parent=0 // pred_check_branch
    %3268 = sbr.rel (0) target = $region49
  $region48: #{autoencoder_ex_forward.2} parent=0 // pred_region
    _
  $region49: #{autoencoder_ex_forward.2} parent=0 // pred_fallthru
    _

</llo_original>
